<compile_context>
chip_gen: v7x
topology: tpu7x:2x2x1
jax: 0.10.0
libtpu: 0.0.40
codegen_flags: <defaults>
</compile_context>

<pallas_src>
import math
import functools

import jax
import jax.numpy as jnp
from jax.experimental import pallas as pl
from jax.experimental.pallas import tpu as pltpu

F32 = jnp.float32


def _vmem_spec(shape):
    nd = len(shape)
    return pl.BlockSpec(shape, lambda i, _nd=nd: (0,) * _nd)


_SMEM_SPEC = pl.BlockSpec(memory_space=pltpu.MemorySpace.SMEM)
_ARB1 = pltpu.CompilerParams(dimension_semantics=("arbitrary",))


# ----------------------------------------------------------------------------
# Front kernel: Subgraphnet branch approximation + deepAGAT input projection.
#   output1 = hardtanh( (adj / deg) @ x @ sub_w + sub_b )
#   h0      = relu( x @ w0 + b0 )
# ----------------------------------------------------------------------------
def front_block(x, adj, sub_w, sub_b, w0, b0):
    n, f = x.shape
    h = sub_w.shape[1]

    def kernel(x_ref, adj_ref, sw_ref, sb_ref, w0_ref, b0_ref, o1_ref, h0_ref):
        x_ = x_ref[...]
        adj_ = adj_ref[...]
        # TODO(synk): Subgraphnet (Graph-U-Net style, ks=[0.7]) class definition
        # was not provided; approximated by one degree-normalised propagation +
        # linear + hardtanh block (act=F.hardtanh, out dim = nhidden).
        deg = jnp.maximum(jnp.sum(adj_, axis=1, keepdims=True), 1.0)
        prop = jnp.dot(adj_ * (1.0 / deg), x_, preferred_element_type=F32)
        o1 = jnp.dot(prop, sw_ref[...], preferred_element_type=F32) + sb_ref[...]
        o1_ref[...] = jnp.clip(o1, -1.0, 1.0)
        # deepAGAT fcs[0] + ReLU
        h0 = jnp.dot(x_, w0_ref[...], preferred_element_type=F32) + b0_ref[...]
        h0_ref[...] = jnp.maximum(h0, 0.0)

    return pl.pallas_call(
        kernel,
        grid=(1,),
        out_shape=(jax.ShapeDtypeStruct((n, h), F32),
                   jax.ShapeDtypeStruct((n, h), F32)),
        in_specs=[_vmem_spec((n, f)), _vmem_spec((n, n)),
                  _vmem_spec((f, h)), _vmem_spec((1, h)),
                  _vmem_spec((f, h)), _vmem_spec((1, h))],
        out_specs=(_vmem_spec((n, h)), _vmem_spec((n, h))),
        compiler_params=_ARB1,
    )(x, adj, sub_w, sub_b, w0, b0)


# ----------------------------------------------------------------------------
# Fused AGAT layer (dense adjacency):
#   z            = h @ fc_w
#   logits[u,v]  = leaky_relu( z[u].w_src + z[v].w_dst + sum_c ex_c[u,v]*coef_c )
#   attn[:,v]    = softmax over in-edges u of v (masked by adj)
#   hi[v]        = sum_u attn[u,v] z[u]  +  (sum_u attn[u,v] ex_c[u,v]) @ e2n_eff
#   out          = relu( theta*[hi,h0]@W + (1-theta)*((1-a)hi + a h0) + h )
# coef / e2n_eff already include the 2x2 fc_edge_for_att_calc mix.
# ----------------------------------------------------------------------------
def agat_layer(h, h0, adj, ex0, ex1, fc_w, w_src, w_dst, coef, e2n_eff, base_w,
               *, theta, alpha):
    n, hid = h.shape

    def kernel(h_ref, h0_ref, adj_ref, ex0_ref, ex1_ref, fcw_ref, wsrc_ref,
               wdst_ref, coef_ref, e2n_ref, bw_ref, o_ref):
        h_ = h_ref[...]
        h0_ = h0_ref[...]
        adj_ = adj_ref[...]
        ex0_ = ex0_ref[...]
        ex1_ = ex1_ref[...]
        # AGAT.fc (no bias)
        z = jnp.dot(h_, fcw_ref[...], preferred_element_type=F32)               # (N,H)
        # edge-attention logits
        s_src = jnp.dot(z, wsrc_ref[...], preferred_element_type=F32)           # (N,1)
        s_dst = jax.lax.dot_general(wdst_ref[...], z, (((1,), (1,)), ((), ())),
                                    preferred_element_type=F32)                 # (1,N)
        logits = s_src + s_dst + ex0_ * coef_ref[0, 0] + ex1_ * coef_ref[0, 1]
        logits = jnp.where(logits > 0, logits, 0.01 * logits)                   # F.leaky_relu default slope
        # masked softmax over source nodes u (columns are destination nodes v)
        masked = jnp.where(adj_ > 0, logits, -1e30)
        m = jnp.max(masked, axis=0, keepdims=True)
        p = jnp.exp(masked - m)          # non-edges underflow to 0 (self-loops present)
        inv = pl.reciprocal(jnp.sum(p, axis=0, keepdims=True), approx=True)
        attn = p * inv                                                           # (N,N)
        # message aggregation
        hmsg = jax.lax.dot_general(attn, z, (((0,), (0,)), ((), ())),
                                   preferred_element_type=F32)                   # (N,H)
        agg0 = jnp.sum(attn * ex0_, axis=0, keepdims=True)                       # (1,N)
        agg1 = jnp.sum(attn * ex1_, axis=0, keepdims=True)                       # (1,N)
        aggs = jnp.concatenate([agg0, agg1], axis=0)                             # (2,N)
        hedge = jax.lax.dot_general(aggs, e2n_ref[...], (((0,), (0,)), ((), ())),
                                    preferred_element_type=F32)                  # (N,H)
        hi = hmsg + hedge
        # BaseModule (GCNII-style) combine + residual + trailing ReLU
        bw = bw_ref[...]
        sw = (jnp.dot(hi, bw[:hid, :], preferred_element_type=F32)
              + jnp.dot(h0_, bw[hid:, :], preferred_element_type=F32))
        r = (1.0 - alpha) * hi + alpha * h0_
        o_ref[...] = jnp.maximum(theta * sw + (1.0 - theta) * r + h_, 0.0)

    return pl.pallas_call(
        kernel,
        grid=(1,),
        out_shape=jax.ShapeDtypeStruct((n, hid), F32),
        in_specs=[_vmem_spec((n, hid)), _vmem_spec((n, hid)),
                  _vmem_spec((n, n)), _vmem_spec((n, n)), _vmem_spec((n, n)),
                  _vmem_spec((hid, hid)), _vmem_spec((hid, 1)), _vmem_spec((1, hid)),
                  _SMEM_SPEC, _vmem_spec((2, hid)), _vmem_spec((2 * hid, hid))],
        out_specs=_vmem_spec((n, hid)),
        compiler_params=_ARB1,
    )(h, h0, adj, ex0, ex1, fc_w, w_src, w_dst, coef, e2n_eff, base_w)


# ----------------------------------------------------------------------------
# Head kernel: deepAGAT output fc + single-head MHA + classifier head.
# ----------------------------------------------------------------------------
def head_block(out1, h_fin, chain, fcA_w, fcA_b, w_qk, b_qk, w_v, b_v, w_o, b_o,
               fc0_w, fc0_b, fc1_w, fc1_b, fc2_w, fc2_b):
    n, hid = out1.shape
    nclass = fc2_w.shape[1]
    scale = 1.0 / math.sqrt(hid)

    def kernel(o1_ref, hf_ref, ch_ref, faw_ref, fab_ref, wqk_ref, bqk_ref,
               wv_ref, bv_ref, wo_ref, bo_ref, f0w_ref, f0b_ref,
               f1w_ref, f1b_ref, f2w_ref, f2b_ref, out_ref):
        o1 = o1_ref[...]
        # deepAGAT fcs[-1] (no activation)
        out2 = jnp.dot(hf_ref[...], faw_ref[...], preferred_element_type=F32) + fab_ref[...]
        # TODO(synk): MultiHeadAttention class was not included in the source;
        # implemented standard torch-multi-head-attention semantics
        # (ReLU-activated Q/K/V/O linears + scaled-dot-product attention, 1 head).
        qk = jnp.maximum(jnp.dot(o1, wqk_ref[...], preferred_element_type=F32)
                         + bqk_ref[...], 0.0)                                     # (N,2H)
        q = qk[:, :hid]
        k = qk[:, hid:]
        v = jnp.maximum(jnp.dot(out2, wv_ref[...], preferred_element_type=F32)
                        + bv_ref[...], 0.0)
        scores = jax.lax.dot_general(q, k, (((1,), (1,)), ((), ())),
                                     preferred_element_type=F32) * scale          # (N,N)
        ms = jnp.max(scores, axis=-1, keepdims=True)
        p = jnp.exp(scores - ms)
        attn = p * pl.reciprocal(jnp.sum(p, axis=-1, keepdims=True), approx=True)
        y = jnp.dot(attn, v, preferred_element_type=F32)
        mha = jnp.maximum(jnp.dot(y, wo_ref[...], preferred_element_type=F32)
                          + bo_ref[...], 0.0)
        # classifier on concat([mha, out2, chain]) via split-weight matmuls
        f0w = f0w_ref[...]
        t = (jnp.dot(mha, f0w[:hid, :], preferred_element_type=F32)
             + jnp.dot(out2, f0w[hid:2 * hid, :], preferred_element_type=F32)
             + jnp.dot(ch_ref[...], f0w[2 * hid:, :], preferred_element_type=F32)
             + f0b_ref[...])
        t = jnp.maximum(t, 0.0)                                                   # (dropout = identity)
        t = jnp.maximum(jnp.dot(t, f1w_ref[...], preferred_element_type=F32)
                        + f1b_ref[...], 0.0)
        out_ref[...] = jnp.dot(t, f2w_ref[...], preferred_element_type=F32) + f2b_ref[...]

    args = (out1, h_fin, chain, fcA_w, fcA_b, w_qk, b_qk, w_v, b_v, w_o, b_o,
            fc0_w, fc0_b, fc1_w, fc1_b, fc2_w, fc2_b)
    return pl.pallas_call(
        kernel,
        grid=(1,),
        out_shape=jax.ShapeDtypeStruct((n, nclass), F32),
        in_specs=[_vmem_spec(a.shape) for a in args],
        out_specs=_vmem_spec((n, nclass)),
        compiler_params=_ARB1,
    )(*args)


# ----------------------------------------------------------------------------
# Full MVSOPPIS forward (glue in plain JAX, compute in the fused kernels above).
# ----------------------------------------------------------------------------
def mvsoppis_forward(params, x, adj, e_dense, chain_embedding, *, nlayers, lamda, alpha):
    b, l, f = x.shape
    x = x.reshape(b * l, f).astype(F32)
    adj_f = adj.astype(F32)
    ex0 = e_dense[:, :, 0].astype(F32)
    ex1 = e_dense[:, :, 1].astype(F32)

    # Subgraphnet branch + deepAGAT input projection (one kernel, two outputs)
    output1, h = front_block(x, adj_f, params["sub_w"], params["sub_b"],
                             params["agat_fc0_w"], params["agat_fc0_b"])
    h0 = h

    # deepAGAT layer stack (one fused kernel per layer)
    for i in range(nlayers):
        lp = params["layers"][i]
        theta = min(1.0, math.log(lamda / (i + 1) + 1.0))
        # Fold the 2x2 fc_edge_for_att_calc mix into the attention coefficients
        # and the edge->node projection (tiny trace-time matmuls, no N^2 remix).
        coef = (lp["edge_fc_w"] @ lp["attn_w_e"].T).T          # (1, 2)
        e2n_eff = lp["edge_fc_w"] @ lp["e2n_w"]                # (2, H)
        h = agat_layer(h, h0, adj_f, ex0, ex1, lp["fc_w"],
                       lp["attn_w_src"], lp["attn_w_dst"], coef, e2n_eff,
                       lp["base_w"], theta=theta, alpha=alpha)

    # deepAGAT output fc + MHA(head_num=1) + classifier head (one kernel)
    out = head_block(output1, h, chain_embedding.astype(F32),
                     params["agat_fc1_w"], params["agat_fc1_b"],
                     params["mha_wqk"], params["mha_bqk"],
                     params["mha_wv"], params["mha_bv"],
                     params["mha_wo"], params["mha_bo"],
                     params["fc0_w"], params["fc0_b"],
                     params["fc1_w"], params["fc1_b"],
                     params["fc2_w"], params["fc2_b"])
    return out


# ----------------------------------------------------------------------------
# Deterministic parameter initialization (shapes from the module's __init__)
# ----------------------------------------------------------------------------
def init_params(key, nfeat, nhid, nclass, nlayers, prot_dim):
    keys = iter(jax.random.split(key, 32 + 8 * nlayers))

    def xav(shape):
        fan_in, fan_out = shape[0], shape[-1]
        std = math.sqrt(2.0) * math.sqrt(2.0 / (fan_in + fan_out))
        return std * jax.random.normal(next(keys), shape, F32)

    p = {
        "sub_w": xav((nfeat, nhid)), "sub_b": jnp.zeros((1, nhid), F32),
        "agat_fc0_w": xav((nfeat, nhid)), "agat_fc0_b": jnp.zeros((1, nhid), F32),
        "agat_fc1_w": xav((nhid, nhid)), "agat_fc1_b": jnp.zeros((1, nhid), F32),
        # MHA Q/K projections fused into one (nhid, 2*nhid) weight.
        "mha_wqk": xav((nhid, 2 * nhid)), "mha_bqk": jnp.zeros((1, 2 * nhid), F32),
        "mha_wv": xav((nhid, nhid)), "mha_bv": jnp.zeros((1, nhid), F32),
        "mha_wo": xav((nhid, nhid)), "mha_bo": jnp.zeros((1, nhid), F32),
        "fc0_w": xav((2 * nhid + prot_dim, 256)), "fc0_b": jnp.zeros((1, 256), F32),
        "fc1_w": xav((256, 128)), "fc1_b": jnp.zeros((1, 128), F32),
        "fc2_w": xav((128, nclass)), "fc2_b": jnp.zeros((1, nclass), F32),
        "layers": [],
    }
    stdv = 1.0 / math.sqrt(nhid)
    for _ in range(nlayers):
        p["layers"].append({
            "fc_w": xav((nhid, nhid)),
            "attn_w_src": xav((nhid, 1)),      # attn_fc weight split: [src | dst | edge]
            "attn_w_dst": xav((1, nhid)),
            "attn_w_e": xav((1, 2)),
            "edge_fc_w": xav((2, 2)),
            "e2n_w": xav((2, nhid)),
            "base_w": stdv * (2.0 * jax.random.uniform(next(keys), (2 * nhid, nhid), F32) - 1.0),
        })
    return p


if __name__ == "__main__":
    # Small config consistent with the module: nhidden=256 and ProtT5 dim 1024
    # imply the hardcoded fcs[0] input of 1536 (= 256 + 256 + 1024).
    B, L = 2, 8
    N = B * L
    NFEAT = 64          # INPUT_DIM / nfeat
    NHID = 256
    NCLASS = 2
    NLAYERS = 2
    PROT_DIM = 1024
    LAMDA, ALPHA = 1.5, 0.7

    key = jax.random.PRNGKey(0)
    kx, ka, ke, kc, kp = jax.random.split(key, 5)

    x = jax.random.normal(kx, (B, L, NFEAT), F32)
    adj = (jax.random.uniform(ka, (N, N)) < 0.3).astype(F32)
    adj = jnp.maximum(adj, jnp.eye(N, dtype=F32))          # self-loops: every node has in-edges
    e_dense = jax.random.normal(ke, (N, N, 2), F32) * adj[..., None]   # graph.edata['ex'] (dense)
    # TODO(synk): get_ProtT5_features loads a .npy embedding from disk; replaced with a
    # synthetic deterministic embedding of the same shape (N, 1024).
    chain_embedding = jax.random.normal(kc, (N, PROT_DIM), F32)

    params = init_params(kp, NFEAT, NHID, NCLASS, NLAYERS, PROT_DIM)

    fwd = jax.jit(functools.partial(mvsoppis_forward,
                                    nlayers=NLAYERS, lamda=LAMDA, alpha=ALPHA))
    out = fwd(params, x, adj, e_dense, chain_embedding)
    jax.block_until_ready(out)
    assert out.shape == (N, NCLASS) and out.dtype == F32
    print("KERNEL_OK")
</pallas_src>

<mosaic_0001>
module attributes {stable_mosaic.version = 11 : i64} {
  func.func @kernel(%arg0: i32, %arg1: memref<16x64xf32, #tpu.memory_space<vmem>>, %arg2: memref<16x16xf32, #tpu.memory_space<vmem>>, %arg3: memref<64x256xf32, #tpu.memory_space<vmem>>, %arg4: memref<1x256xf32, #tpu.memory_space<vmem>>, %arg5: memref<64x256xf32, #tpu.memory_space<vmem>>, %arg6: memref<1x256xf32, #tpu.memory_space<vmem>>, %arg7: memref<16x256xf32, #tpu.memory_space<vmem>>, %arg8: memref<16x256xf32, #tpu.memory_space<vmem>>) attributes {dimension_semantics = [#tpu.dimension_semantics<arbitrary>], iteration_bounds = array<i64: 1>, scalar_prefetch = 0 : i64, scratch_operands = 0 : i64, tpu.core_type = #tpu.core_type<tc>, window_params = [{pipeline_mode = #tpu.pipeline_mode<synchronous>, transform_indices = @transform_0, window_bounds = array<i64: 16, 64>}, {pipeline_mode = #tpu.pipeline_mode<synchronous>, transform_indices = @transform_1, window_bounds = array<i64: 16, 16>}, {pipeline_mode = #tpu.pipeline_mode<synchronous>, transform_indices = @transform_2, window_bounds = array<i64: 64, 256>}, {pipeline_mode = #tpu.pipeline_mode<synchronous>, transform_indices = @transform_3, window_bounds = array<i64: 1, 256>}, {pipeline_mode = #tpu.pipeline_mode<synchronous>, transform_indices = @transform_4, window_bounds = array<i64: 64, 256>}, {pipeline_mode = #tpu.pipeline_mode<synchronous>, transform_indices = @transform_5, window_bounds = array<i64: 1, 256>}, {pipeline_mode = #tpu.pipeline_mode<synchronous>, transform_indices = @transform_6, window_bounds = array<i64: 16, 256>}, {pipeline_mode = #tpu.pipeline_mode<synchronous>, transform_indices = @transform_7, window_bounds = array<i64: 16, 256>}]} {
    %c0 = arith.constant 0 : index
    %c0_0 = arith.constant 0 : index
    %0 = vector.load %arg1[%c0, %c0_0] : memref<16x64xf32, #tpu.memory_space<vmem>>, vector<16x64xf32>
    %c0_1 = arith.constant 0 : index
    %c0_2 = arith.constant 0 : index
    %1 = vector.load %arg2[%c0_1, %c0_2] : memref<16x16xf32, #tpu.memory_space<vmem>>, vector<16x16xf32>
    %cst = arith.constant dense<0.000000e+00> : vector<16xf32>
    %2 = vector.multi_reduction <add>, %1, %cst [1] : vector<16x16xf32> to vector<16xf32>
    %3 = vector.shape_cast %2 : vector<16xf32> to vector<16x1xf32>
    %cst_3 = arith.constant 1.000000e+00 : f32
    %4 = vector.broadcast %cst_3 : f32 to vector<16x1xf32>
    %5 = arith.maximumf %3, %4 : vector<16x1xf32>
    %cst_4 = arith.constant 1.000000e+00 : f32
    %6 = vector.broadcast %cst_4 : f32 to vector<16x1xf32>
    %7 = arith.divf %6, %5 : vector<16x1xf32>
    %8 = vector.broadcast %7 : vector<16x1xf32> to vector<16x16xf32>
    %9 = arith.mulf %1, %8 : vector<16x16xf32>
    %cst_5 = arith.constant dense<0.000000e+00> : vector<16x64xf32>
    %10 = tpu.matmul %9, %0, %cst_5 {dimension_numbers = #tpu.dot_dimension_numbers<[1], [0], [0], [1], [0, 0, 1, 1], [], []>} : vector<16x16xf32>, vector<16x64xf32>, vector<16x64xf32> -> vector<16x64xf32>
    %c0_6 = arith.constant 0 : index
    %c0_7 = arith.constant 0 : index
    %11 = vector.load %arg3[%c0_6, %c0_7] : memref<64x256xf32, #tpu.memory_space<vmem>>, vector<64x256xf32>
    %cst_8 = arith.constant dense<0.000000e+00> : vector<16x256xf32>
    %12 = tpu.matmul %10, %11, %cst_8 {dimension_numbers = #tpu.dot_dimension_numbers<[1], [0], [0], [1], [0, 0, 1, 1], [], []>} : vector<16x64xf32>, vector<64x256xf32>, vector<16x256xf32> -> vector<16x256xf32>
    %c0_9 = arith.constant 0 : index
    %c0_10 = arith.constant 0 : index
    %13 = vector.load %arg4[%c0_9, %c0_10] : memref<1x256xf32, #tpu.memory_space<vmem>>, vector<1x256xf32>
    %14 = vector.broadcast %13 : vector<1x256xf32> to vector<16x256xf32>
    %15 = arith.addf %12, %14 : vector<16x256xf32>
    %cst_11 = arith.constant -1.000000e+00 : f32
    %cst_12 = arith.constant 1.000000e+00 : f32
    %16 = vector.broadcast %cst_11 : f32 to vector<16x256xf32>
    %17 = arith.maximumf %16, %15 : vector<16x256xf32>
    %18 = vector.broadcast %cst_12 : f32 to vector<16x256xf32>
    %19 = arith.minimumf %18, %17 : vector<16x256xf32>
    %c0_13 = arith.constant 0 : index
    %c0_14 = arith.constant 0 : index
    %20 = vector.load %arg7[%c0_13, %c0_14] : memref<16x256xf32, #tpu.memory_space<vmem>>, vector<16x256xf32>
    tpu.vector_store %arg7[%c0_13, %c0_14], %19 {strides = array<i32>} : memref<16x256xf32, #tpu.memory_space<vmem>>, vector<16x256xf32>,
    %c0_15 = arith.constant 0 : index
    %c0_16 = arith.constant 0 : index
    %21 = vector.load %arg5[%c0_15, %c0_16] : memref<64x256xf32, #tpu.memory_space<vmem>>, vector<64x256xf32>
    %cst_17 = arith.constant dense<0.000000e+00> : vector<16x256xf32>
    %22 = tpu.matmul %0, %21, %cst_17 {dimension_numbers = #tpu.dot_dimension_numbers<[1], [0], [0], [1], [0, 0, 1, 1], [], []>} : vector<16x64xf32>, vector<64x256xf32>, vector<16x256xf32> -> vector<16x256xf32>
    %c0_18 = arith.constant 0 : index
    %c0_19 = arith.constant 0 : index
    %23 = vector.load %arg6[%c0_18, %c0_19] : memref<1x256xf32, #tpu.memory_space<vmem>>, vector<1x256xf32>
    %24 = vector.broadcast %23 : vector<1x256xf32> to vector<16x256xf32>
    %25 = arith.addf %22, %24 : vector<16x256xf32>
    %cst_20 = arith.constant 0.000000e+00 : f32
    %26 = vector.broadcast %cst_20 : f32 to vector<16x256xf32>
    %27 = arith.maximumf %25, %26 : vector<16x256xf32>
    %c0_21 = arith.constant 0 : index
    %c0_22 = arith.constant 0 : index
    %28 = vector.load %arg8[%c0_21, %c0_22] : memref<16x256xf32, #tpu.memory_space<vmem>>, vector<16x256xf32>
    tpu.vector_store %arg8[%c0_21, %c0_22], %27 {strides = array<i32>} : memref<16x256xf32, #tpu.memory_space<vmem>>, vector<16x256xf32>,
    return
  }
  func.func @transform_0(%arg0: i32) -> (i32, i32) {
    %c0_i32 = arith.constant 0 : i32
    %c0_i32_0 = arith.constant 0 : i32
    %c0_i32_1 = arith.constant 0 : i32
    return %c0_i32, %c0_i32_0 : i32, i32
  }
  func.func @transform_1(%arg0: i32) -> (i32, i32) {
    %c0_i32 = arith.constant 0 : i32
    %c0_i32_0 = arith.constant 0 : i32
    %c0_i32_1 = arith.constant 0 : i32
    return %c0_i32, %c0_i32_0 : i32, i32
  }
  func.func @transform_2(%arg0: i32) -> (i32, i32) {
    %c0_i32 = arith.constant 0 : i32
    %c0_i32_0 = arith.constant 0 : i32
    %c0_i32_1 = arith.constant 0 : i32
    return %c0_i32, %c0_i32_0 : i32, i32
  }
  func.func @transform_3(%arg0: i32) -> (i32, i32) {
    %c0_i32 = arith.constant 0 : i32
    %c0_i32_0 = arith.constant 0 : i32
    %c0_i32_1 = arith.constant 0 : i32
    return %c0_i32, %c0_i32_0 : i32, i32
  }
  func.func @transform_4(%arg0: i32) -> (i32, i32) {
    %c0_i32 = arith.constant 0 : i32
    %c0_i32_0 = arith.constant 0 : i32
    %c0_i32_1 = arith.constant 0 : i32
    return %c0_i32, %c0_i32_0 : i32, i32
  }
  func.func @transform_5(%arg0: i32) -> (i32, i32) {
    %c0_i32 = arith.constant 0 : i32
    %c0_i32_0 = arith.constant 0 : i32
    %c0_i32_1 = arith.constant 0 : i32
    return %c0_i32, %c0_i32_0 : i32, i32
  }
  func.func @transform_6(%arg0: i32) -> (i32, i32) {
    %c0_i32 = arith.constant 0 : i32
    %c0_i32_0 = arith.constant 0 : i32
    %c0_i32_1 = arith.constant 0 : i32
    return %c0_i32, %c0_i32_0 : i32, i32
  }
  func.func @transform_7(%arg0: i32) -> (i32, i32) {
    %c0_i32 = arith.constant 0 : i32
    %c0_i32_0 = arith.constant 0 : i32
    %c0_i32_1 = arith.constant 0 : i32
    return %c0_i32, %c0_i32_0 : i32, i32
  }
}

module attributes {stable_mosaic.version = 11 : i64} {
  func.func @kernel(%arg0: i32, %arg1: memref<16x256xf32, #tpu.memory_space<vmem>>, %arg2: memref<16x256xf32, #tpu.memory_space<vmem>>, %arg3: memref<16x16xf32, #tpu.memory_space<vmem>>, %arg4: memref<16x16xf32, #tpu.memory_space<vmem>>, %arg5: memref<16x16xf32, #tpu.memory_space<vmem>>, %arg6: memref<256x256xf32, #tpu.memory_space<vmem>>, %arg7: memref<256x1xf32, #tpu.memory_space<vmem>>, %arg8: memref<1x256xf32, #tpu.memory_space<vmem>>, %arg9: memref<1x2xf32, #tpu.memory_space<smem>>, %arg10: memref<2x256xf32, #tpu.memory_space<vmem>>, %arg11: memref<512x256xf32, #tpu.memory_space<vmem>>, %arg12: memref<16x256xf32, #tpu.memory_space<vmem>>) attributes {dimension_semantics = [#tpu.dimension_semantics<arbitrary>], iteration_bounds = array<i64: 1>, scalar_prefetch = 0 : i64, scratch_operands = 0 : i64, tpu.core_type = #tpu.core_type<tc>, window_params = [{pipeline_mode = #tpu.pipeline_mode<synchronous>, transform_indices = @transform_0, window_bounds = array<i64: 16, 256>}, {pipeline_mode = #tpu.pipeline_mode<synchronous>, transform_indices = @transform_1, window_bounds = array<i64: 16, 256>}, {pipeline_mode = #tpu.pipeline_mode<synchronous>, transform_indices = @transform_2, window_bounds = array<i64: 16, 16>}, {pipeline_mode = #tpu.pipeline_mode<synchronous>, transform_indices = @transform_3, window_bounds = array<i64: 16, 16>}, {pipeline_mode = #tpu.pipeline_mode<synchronous>, transform_indices = @transform_4, window_bounds = array<i64: 16, 16>}, {pipeline_mode = #tpu.pipeline_mode<synchronous>, transform_indices = @transform_5, window_bounds = array<i64: 256, 256>}, {pipeline_mode = #tpu.pipeline_mode<synchronous>, transform_indices = @transform_6, window_bounds = array<i64: 256, 1>}, {pipeline_mode = #tpu.pipeline_mode<synchronous>, transform_indices = @transform_7, window_bounds = array<i64: 1, 256>}, {transform_indices = @transform_8, window_bounds = array<i64: 1, 2>}, {pipeline_mode = #tpu.pipeline_mode<synchronous>, transform_indices = @transform_9, window_bounds = array<i64: 2, 256>}, {pipeline_mode = #tpu.pipeline_mode<synchronous>, transform_indices = @transform_10, window_bounds = array<i64: 512, 256>}, {pipeline_mode = #tpu.pipeline_mode<synchronous>, transform_indices = @transform_11, window_bounds = array<i64: 16, 256>}]} {
    %c0 = arith.constant 0 : index
    %c0_0 = arith.constant 0 : index
    %0 = vector.load %arg1[%c0, %c0_0] : memref<16x256xf32, #tpu.memory_space<vmem>>, vector<16x256xf32>
    %c0_1 = arith.constant 0 : index
    %c0_2 = arith.constant 0 : index
    %1 = vector.load %arg2[%c0_1, %c0_2] : memref<16x256xf32, #tpu.memory_space<vmem>>, vector<16x256xf32>
    %c0_3 = arith.constant 0 : index
    %c0_4 = arith.constant 0 : index
    %2 = vector.load %arg3[%c0_3, %c0_4] : memref<16x16xf32, #tpu.memory_space<vmem>>, vector<16x16xf32>
    %c0_5 = arith.constant 0 : index
    %c0_6 = arith.constant 0 : index
    %3 = vector.load %arg4[%c0_5, %c0_6] : memref<16x16xf32, #tpu.memory_space<vmem>>, vector<16x16xf32>
    %c0_7 = arith.constant 0 : index
    %c0_8 = arith.constant 0 : index
    %4 = vector.load %arg5[%c0_7, %c0_8] : memref<16x16xf32, #tpu.memory_space<vmem>>, vector<16x16xf32>
    %c0_9 = arith.constant 0 : index
    %c0_10 = arith.constant 0 : index
    %5 = vector.load %arg6[%c0_9, %c0_10] : memref<256x256xf32, #tpu.memory_space<vmem>>, vector<256x256xf32>
    %cst = arith.constant dense<0.000000e+00> : vector<16x256xf32>
    %6 = tpu.matmul %0, %5, %cst {dimension_numbers = #tpu.dot_dimension_numbers<[1], [0], [0], [1], [0, 0, 1, 1], [], []>} : vector<16x256xf32>, vector<256x256xf32>, vector<16x256xf32> -> vector<16x256xf32>
    %c0_11 = arith.constant 0 : index
    %c0_12 = arith.constant 0 : index
    %7 = vector.load %arg7[%c0_11, %c0_12] : memref<256x1xf32, #tpu.memory_space<vmem>>, vector<256x1xf32>
    %cst_13 = arith.constant dense<0.000000e+00> : vector<16x1xf32>
    %8 = tpu.matmul %6, %7, %cst_13 {dimension_numbers = #tpu.dot_dimension_numbers<[1], [0], [0], [1], [0, 0, 1, 1], [], []>} : vector<16x256xf32>, vector<256x1xf32>, vector<16x1xf32> -> vector<16x1xf32>
    %c0_14 = arith.constant 0 : index
    %c0_15 = arith.constant 0 : index
    %9 = vector.load %arg8[%c0_14, %c0_15] : memref<1x256xf32, #tpu.memory_space<vmem>>, vector<1x256xf32>
    %cst_16 = arith.constant dense<0.000000e+00> : vector<1x16xf32>
    %10 = tpu.matmul %9, %6, %cst_16 {dimension_numbers = #tpu.dot_dimension_numbers<[1], [1], [0], [0], [0, 0, 1, 0], [], []>} : vector<1x256xf32>, vector<16x256xf32>, vector<1x16xf32> -> vector<1x16xf32>
    %11 = vector.broadcast %8 : vector<16x1xf32> to vector<16x16xf32>
    %12 = vector.broadcast %10 : vector<1x16xf32> to vector<16x16xf32>
    %13 = arith.addf %11, %12 : vector<16x16xf32>
    %c0_17 = arith.constant 0 : index
    %c0_18 = arith.constant 0 : index
    %14 = memref.load %arg9[%c0_17, %c0_18] : memref<1x2xf32, #tpu.memory_space<smem>>
    %15 = vector.broadcast %14 : f32 to vector<16x16xf32>
    %16 = arith.mulf %3, %15 : vector<16x16xf32>
    %17 = arith.addf %13, %16 : vector<16x16xf32>
    %c0_19 = arith.constant 0 : index
    %c1 = arith.constant 1 : index
    %18 = memref.load %arg9[%c0_19, %c1] : memref<1x2xf32, #tpu.memory_space<smem>>
    %19 = vector.broadcast %18 : f32 to vector<16x16xf32>
    %20 = arith.mulf %4, %19 : vector<16x16xf32>
    %21 = arith.addf %17, %20 : vector<16x16xf32>
    %cst_20 = arith.constant 0.000000e+00 : f32
    %22 = vector.broadcast %cst_20 : f32 to vector<16x16xf32>
    %23 = arith.cmpf ogt, %21, %22 : vector<16x16xf32>
    %cst_21 = arith.constant 0.00999999977 : f32
    %24 = vector.broadcast %cst_21 : f32 to vector<16x16xf32>
    %25 = arith.mulf %24, %21 : vector<16x16xf32>
    %26 = arith.select %23, %21, %25 : vector<16x16xi1>, vector<16x16xf32>
    %cst_22 = arith.constant 0.000000e+00 : f32
    %27 = vector.broadcast %cst_22 : f32 to vector<16x16xf32>
    %28 = arith.cmpf ogt, %2, %27 : vector<16x16xf32>
    %cst_23 = arith.constant -1.000000e+30 : f32
    %29 = vector.broadcast %cst_23 : f32 to vector<16x16xf32>
    %30 = arith.select %28, %26, %29 : vector<16x16xi1>, vector<16x16xf32>
    %cst_24 = arith.constant dense<0xFF800000> : vector<16xf32>
    %31 = vector.multi_reduction <maximumf>, %30, %cst_24 [0] : vector<16x16xf32> to vector<16xf32>
    %32 = vector.shape_cast %31 : vector<16xf32> to vector<1x16xf32>
    %33 = vector.broadcast %32 : vector<1x16xf32> to vector<16x16xf32>
    %34 = arith.subf %30, %33 : vector<16x16xf32>
    %35 = math.exp %34 : vector<16x16xf32>
    %cst_25 = arith.constant dense<0.000000e+00> : vector<16xf32>
    %36 = vector.multi_reduction <add>, %35, %cst_25 [0] : vector<16x16xf32> to vector<16xf32>
    %37 = vector.shape_cast %36 : vector<16xf32> to vector<1x16xf32>
    %38 = tpu.reciprocal %37 {approx = true} : vector<1x16xf32> -> vector<1x16xf32>
    %39 = vector.broadcast %38 : vector<1x16xf32> to vector<16x16xf32>
    %40 = arith.mulf %35, %39 : vector<16x16xf32>
    %cst_26 = arith.constant dense<0.000000e+00> : vector<16x256xf32>
    %41 = tpu.matmul %40, %6, %cst_26 {dimension_numbers = #tpu.dot_dimension_numbers<[0], [0], [1], [1], [0, 1, 1, 1], [], []>} : vector<16x16xf32>, vector<16x256xf32>, vector<16x256xf32> -> vector<16x256xf32>
    %42 = arith.mulf %40, %3 : vector<16x16xf32>
    %cst_27 = arith.constant dense<0.000000e+00> : vector<16xf32>
    %43 = vector.multi_reduction <add>, %42, %cst_27 [0] : vector<16x16xf32> to vector<16xf32>
    %44 = vector.shape_cast %43 : vector<16xf32> to vector<1x16xf32>
    %45 = arith.mulf %40, %4 : vector<16x16xf32>
    %cst_28 = arith.constant dense<0.000000e+00> : vector<16xf32>
    %46 = vector.multi_reduction <add>, %45, %cst_28 [0] : vector<16x16xf32> to vector<16xf32>
    %47 = vector.shape_cast %46 : vector<16xf32> to vector<1x16xf32>
    %48 = tpu.concatenate %44, %47 in 0 : vector<1x16xf32>, vector<1x16xf32> -> vector<2x16xf32>
    %c0_29 = arith.constant 0 : index
    %c0_30 = arith.constant 0 : index
    %49 = vector.load %arg10[%c0_29, %c0_30] : memref<2x256xf32, #tpu.memory_space<vmem>>, vector<2x256xf32>
    %cst_31 = arith.constant dense<0.000000e+00> : vector<16x256xf32>
    %50 = tpu.matmul %48, %49, %cst_31 {dimension_numbers = #tpu.dot_dimension_numbers<[0], [0], [1], [1], [0, 1, 1, 1], [], []>} : vector<2x16xf32>, vector<2x256xf32>, vector<16x256xf32> -> vector<16x256xf32>
    %51 = arith.addf %41, %50 : vector<16x256xf32>
    %c0_32 = arith.constant 0 : index
    %c0_33 = arith.constant 0 : index
    %52 = vector.load %arg11[%c0_32, %c0_33] : memref<512x256xf32, #tpu.memory_space<vmem>>, vector<512x256xf32>
    %53 = vector.extract_strided_slice %52 {offsets = [0, 0], sizes = [256, 256], strides = [1, 1]} : vector<512x256xf32> to vector<256x256xf32>
    %cst_34 = arith.constant dense<0.000000e+00> : vector<16x256xf32>
    %54 = tpu.matmul %51, %53, %cst_34 {dimension_numbers = #tpu.dot_dimension_numbers<[1], [0], [0], [1], [0, 0, 1, 1], [], []>} : vector<16x256xf32>, vector<256x256xf32>, vector<16x256xf32> -> vector<16x256xf32>
    %55 = vector.extract_strided_slice %52 {offsets = [256, 0], sizes = [256, 256], strides = [1, 1]} : vector<512x256xf32> to vector<256x256xf32>
    %cst_35 = arith.constant dense<0.000000e+00> : vector<16x256xf32>
    %56 = tpu.matmul %1, %55, %cst_35 {dimension_numbers = #tpu.dot_dimension_numbers<[1], [0], [0], [1], [0, 0, 1, 1], [], []>} : vector<16x256xf32>, vector<256x256xf32>, vector<16x256xf32> -> vector<16x256xf32>
    %57 = arith.addf %54, %56 : vector<16x256xf32>
    %cst_36 = arith.constant 3.000000e-01 : f32
    %58 = vector.broadcast %cst_36 : f32 to vector<16x256xf32>
    %59 = arith.mulf %58, %51 : vector<16x256xf32>
    %cst_37 = arith.constant 0.699999988 : f32
    %60 = vector.broadcast %cst_37 : f32 to vector<16x256xf32>
    %61 = arith.mulf %60, %1 : vector<16x256xf32>
    %62 = arith.addf %59, %61 : vector<16x256xf32>
    %cst_38 = arith.constant 0.559615791 : f32
    %63 = vector.broadcast %cst_38 : f32 to vector<16x256xf32>
    %64 = arith.mulf %63, %57 : vector<16x256xf32>
    %cst_39 = arith.constant 0.440384209 : f32
    %65 = vector.broadcast %cst_39 : f32 to vector<16x256xf32>
    %66 = arith.mulf %65, %62 : vector<16x256xf32>
    %67 = arith.addf %64, %66 : vector<16x256xf32>
    %68 = arith.addf %67, %0 : vector<16x256xf32>
    %cst_40 = arith.constant 0.000000e+00 : f32
    %69 = vector.broadcast %cst_40 : f32 to vector<16x256xf32>
    %70 = arith.maximumf %68, %69 : vector<16x256xf32>
    %c0_41 = arith.constant 0 : index
    %c0_42 = arith.constant 0 : index
    %71 = vector.load %arg12[%c0_41, %c0_42] : memref<16x256xf32, #tpu.memory_space<vmem>>, vector<16x256xf32>
    tpu.vector_store %arg12[%c0_41, %c0_42], %70 {strides = array<i32>} : memref<16x256xf32, #tpu.memory_space<vmem>>, vector<16x256xf32>,
    return
  }
  func.func @transform_0(%arg0: i32) -> (i32, i32) {
    %c0_i32 = arith.constant 0 : i32
    %c0_i32_0 = arith.constant 0 : i32
    %c0_i32_1 = arith.constant 0 : i32
    return %c0_i32, %c0_i32_0 : i32, i32
  }
  func.func @transform_1(%arg0: i32) -> (i32, i32) {
    %c0_i32 = arith.constant 0 : i32
    %c0_i32_0 = arith.constant 0 : i32
    %c0_i32_1 = arith.constant 0 : i32
    return %c0_i32, %c0_i32_0 : i32, i32
  }
  func.func @transform_2(%arg0: i32) -> (i32, i32) {
    %c0_i32 = arith.constant 0 : i32
    %c0_i32_0 = arith.constant 0 : i32
    %c0_i32_1 = arith.constant 0 : i32
    return %c0_i32, %c0_i32_0 : i32, i32
  }
  func.func @transform_3(%arg0: i32) -> (i32, i32) {
    %c0_i32 = arith.constant 0 : i32
    %c0_i32_0 = arith.constant 0 : i32
    %c0_i32_1 = arith.constant 0 : i32
    return %c0_i32, %c0_i32_0 : i32, i32
  }
  func.func @transform_4(%arg0: i32) -> (i32, i32) {
    %c0_i32 = arith.constant 0 : i32
    %c0_i32_0 = arith.constant 0 : i32
    %c0_i32_1 = arith.constant 0 : i32
    return %c0_i32, %c0_i32_0 : i32, i32
  }
  func.func @transform_5(%arg0: i32) -> (i32, i32) {
    %c0_i32 = arith.constant 0 : i32
    %c0_i32_0 = arith.constant 0 : i32
    %c0_i32_1 = arith.constant 0 : i32
    return %c0_i32, %c0_i32_0 : i32, i32
  }
  func.func @transform_6(%arg0: i32) -> (i32, i32) {
    %c0_i32 = arith.constant 0 : i32
    %c0_i32_0 = arith.constant 0 : i32
    %c0_i32_1 = arith.constant 0 : i32
    return %c0_i32, %c0_i32_0 : i32, i32
  }
  func.func @transform_7(%arg0: i32) -> (i32, i32) {
    %c0_i32 = arith.constant 0 : i32
    %c0_i32_0 = arith.constant 0 : i32
    %c0_i32_1 = arith.constant 0 : i32
    return %c0_i32, %c0_i32_0 : i32, i32
  }
  func.func @transform_8(%arg0: i32) -> (i32, i32) {
    %c0_i32 = arith.constant 0 : i32
    %c0_i32_0 = arith.constant 0 : i32
    %c0_i32_1 = arith.constant 0 : i32
    return %c0_i32, %c0_i32_0 : i32, i32
  }
  func.func @transform_9(%arg0: i32) -> (i32, i32) {
    %c0_i32 = arith.constant 0 : i32
    %c0_i32_0 = arith.constant 0 : i32
    %c0_i32_1 = arith.constant 0 : i32
    return %c0_i32, %c0_i32_0 : i32, i32
  }
  func.func @transform_10(%arg0: i32) -> (i32, i32) {
    %c0_i32 = arith.constant 0 : i32
    %c0_i32_0 = arith.constant 0 : i32
    %c0_i32_1 = arith.constant 0 : i32
    return %c0_i32, %c0_i32_0 : i32, i32
  }
  func.func @transform_11(%arg0: i32) -> (i32, i32) {
    %c0_i32 = arith.constant 0 : i32
    %c0_i32_0 = arith.constant 0 : i32
    %c0_i32_1 = arith.constant 0 : i32
    return %c0_i32, %c0_i32_0 : i32, i32
  }
}

module attributes {stable_mosaic.version = 11 : i64} {
  func.func @kernel(%arg0: i32, %arg1: memref<16x256xf32, #tpu.memory_space<vmem>>, %arg2: memref<16x256xf32, #tpu.memory_space<vmem>>, %arg3: memref<16x16xf32, #tpu.memory_space<vmem>>, %arg4: memref<16x16xf32, #tpu.memory_space<vmem>>, %arg5: memref<16x16xf32, #tpu.memory_space<vmem>>, %arg6: memref<256x256xf32, #tpu.memory_space<vmem>>, %arg7: memref<256x1xf32, #tpu.memory_space<vmem>>, %arg8: memref<1x256xf32, #tpu.memory_space<vmem>>, %arg9: memref<1x2xf32, #tpu.memory_space<smem>>, %arg10: memref<2x256xf32, #tpu.memory_space<vmem>>, %arg11: memref<512x256xf32, #tpu.memory_space<vmem>>, %arg12: memref<16x256xf32, #tpu.memory_space<vmem>>) attributes {dimension_semantics = [#tpu.dimension_semantics<arbitrary>], iteration_bounds = array<i64: 1>, scalar_prefetch = 0 : i64, scratch_operands = 0 : i64, tpu.core_type = #tpu.core_type<tc>, window_params = [{pipeline_mode = #tpu.pipeline_mode<synchronous>, transform_indices = @transform_0, window_bounds = array<i64: 16, 256>}, {pipeline_mode = #tpu.pipeline_mode<synchronous>, transform_indices = @transform_1, window_bounds = array<i64: 16, 256>}, {pipeline_mode = #tpu.pipeline_mode<synchronous>, transform_indices = @transform_2, window_bounds = array<i64: 16, 16>}, {pipeline_mode = #tpu.pipeline_mode<synchronous>, transform_indices = @transform_3, window_bounds = array<i64: 16, 16>}, {pipeline_mode = #tpu.pipeline_mode<synchronous>, transform_indices = @transform_4, window_bounds = array<i64: 16, 16>}, {pipeline_mode = #tpu.pipeline_mode<synchronous>, transform_indices = @transform_5, window_bounds = array<i64: 256, 256>}, {pipeline_mode = #tpu.pipeline_mode<synchronous>, transform_indices = @transform_6, window_bounds = array<i64: 256, 1>}, {pipeline_mode = #tpu.pipeline_mode<synchronous>, transform_indices = @transform_7, window_bounds = array<i64: 1, 256>}, {transform_indices = @transform_8, window_bounds = array<i64: 1, 2>}, {pipeline_mode = #tpu.pipeline_mode<synchronous>, transform_indices = @transform_9, window_bounds = array<i64: 2, 256>}, {pipeline_mode = #tpu.pipeline_mode<synchronous>, transform_indices = @transform_10, window_bounds = array<i64: 512, 256>}, {pipeline_mode = #tpu.pipeline_mode<synchronous>, transform_indices = @transform_11, window_bounds = array<i64: 16, 256>}]} {
    %c0 = arith.constant 0 : index
    %c0_0 = arith.constant 0 : index
    %0 = vector.load %arg1[%c0, %c0_0] : memref<16x256xf32, #tpu.memory_space<vmem>>, vector<16x256xf32>
    %c0_1 = arith.constant 0 : index
    %c0_2 = arith.constant 0 : index
    %1 = vector.load %arg2[%c0_1, %c0_2] : memref<16x256xf32, #tpu.memory_space<vmem>>, vector<16x256xf32>
    %c0_3 = arith.constant 0 : index
    %c0_4 = arith.constant 0 : index
    %2 = vector.load %arg3[%c0_3, %c0_4] : memref<16x16xf32, #tpu.memory_space<vmem>>, vector<16x16xf32>
    %c0_5 = arith.constant 0 : index
    %c0_6 = arith.constant 0 : index
    %3 = vector.load %arg4[%c0_5, %c0_6] : memref<16x16xf32, #tpu.memory_space<vmem>>, vector<16x16xf32>
    %c0_7 = arith.constant 0 : index
    %c0_8 = arith.constant 0 : index
    %4 = vector.load %arg5[%c0_7, %c0_8] : memref<16x16xf32, #tpu.memory_space<vmem>>, vector<16x16xf32>
    %c0_9 = arith.constant 0 : index
    %c0_10 = arith.constant 0 : index
    %5 = vector.load %arg6[%c0_9, %c0_10] : memref<256x256xf32, #tpu.memory_space<vmem>>, vector<256x256xf32>
    %cst = arith.constant dense<0.000000e+00> : vector<16x256xf32>
    %6 = tpu.matmul %0, %5, %cst {dimension_numbers = #tpu.dot_dimension_numbers<[1], [0], [0], [1], [0, 0, 1, 1], [], []>} : vector<16x256xf32>, vector<256x256xf32>, vector<16x256xf32> -> vector<16x256xf32>
    %c0_11 = arith.constant 0 : index
    %c0_12 = arith.constant 0 : index
    %7 = vector.load %arg7[%c0_11, %c0_12] : memref<256x1xf32, #tpu.memory_space<vmem>>, vector<256x1xf32>
    %cst_13 = arith.constant dense<0.000000e+00> : vector<16x1xf32>
    %8 = tpu.matmul %6, %7, %cst_13 {dimension_numbers = #tpu.dot_dimension_numbers<[1], [0], [0], [1], [0, 0, 1, 1], [], []>} : vector<16x256xf32>, vector<256x1xf32>, vector<16x1xf32> -> vector<16x1xf32>
    %c0_14 = arith.constant 0 : index
    %c0_15 = arith.constant 0 : index
    %9 = vector.load %arg8[%c0_14, %c0_15] : memref<1x256xf32, #tpu.memory_space<vmem>>, vector<1x256xf32>
    %cst_16 = arith.constant dense<0.000000e+00> : vector<1x16xf32>
    %10 = tpu.matmul %9, %6, %cst_16 {dimension_numbers = #tpu.dot_dimension_numbers<[1], [1], [0], [0], [0, 0, 1, 0], [], []>} : vector<1x256xf32>, vector<16x256xf32>, vector<1x16xf32> -> vector<1x16xf32>
    %11 = vector.broadcast %8 : vector<16x1xf32> to vector<16x16xf32>
    %12 = vector.broadcast %10 : vector<1x16xf32> to vector<16x16xf32>
    %13 = arith.addf %11, %12 : vector<16x16xf32>
    %c0_17 = arith.constant 0 : index
    %c0_18 = arith.constant 0 : index
    %14 = memref.load %arg9[%c0_17, %c0_18] : memref<1x2xf32, #tpu.memory_space<smem>>
    %15 = vector.broadcast %14 : f32 to vector<16x16xf32>
    %16 = arith.mulf %3, %15 : vector<16x16xf32>
    %17 = arith.addf %13, %16 : vector<16x16xf32>
    %c0_19 = arith.constant 0 : index
    %c1 = arith.constant 1 : index
    %18 = memref.load %arg9[%c0_19, %c1] : memref<1x2xf32, #tpu.memory_space<smem>>
    %19 = vector.broadcast %18 : f32 to vector<16x16xf32>
    %20 = arith.mulf %4, %19 : vector<16x16xf32>
    %21 = arith.addf %17, %20 : vector<16x16xf32>
    %cst_20 = arith.constant 0.000000e+00 : f32
    %22 = vector.broadcast %cst_20 : f32 to vector<16x16xf32>
    %23 = arith.cmpf ogt, %21, %22 : vector<16x16xf32>
    %cst_21 = arith.constant 0.00999999977 : f32
    %24 = vector.broadcast %cst_21 : f32 to vector<16x16xf32>
    %25 = arith.mulf %24, %21 : vector<16x16xf32>
    %26 = arith.select %23, %21, %25 : vector<16x16xi1>, vector<16x16xf32>
    %cst_22 = arith.constant 0.000000e+00 : f32
    %27 = vector.broadcast %cst_22 : f32 to vector<16x16xf32>
    %28 = arith.cmpf ogt, %2, %27 : vector<16x16xf32>
    %cst_23 = arith.constant -1.000000e+30 : f32
    %29 = vector.broadcast %cst_23 : f32 to vector<16x16xf32>
    %30 = arith.select %28, %26, %29 : vector<16x16xi1>, vector<16x16xf32>
    %cst_24 = arith.constant dense<0xFF800000> : vector<16xf32>
    %31 = vector.multi_reduction <maximumf>, %30, %cst_24 [0] : vector<16x16xf32> to vector<16xf32>
    %32 = vector.shape_cast %31 : vector<16xf32> to vector<1x16xf32>
    %33 = vector.broadcast %32 : vector<1x16xf32> to vector<16x16xf32>
    %34 = arith.subf %30, %33 : vector<16x16xf32>
    %35 = math.exp %34 : vector<16x16xf32>
    %cst_25 = arith.constant dense<0.000000e+00> : vector<16xf32>
    %36 = vector.multi_reduction <add>, %35, %cst_25 [0] : vector<16x16xf32> to vector<16xf32>
    %37 = vector.shape_cast %36 : vector<16xf32> to vector<1x16xf32>
    %38 = tpu.reciprocal %37 {approx = true} : vector<1x16xf32> -> vector<1x16xf32>
    %39 = vector.broadcast %38 : vector<1x16xf32> to vector<16x16xf32>
    %40 = arith.mulf %35, %39 : vector<16x16xf32>
    %cst_26 = arith.constant dense<0.000000e+00> : vector<16x256xf32>
    %41 = tpu.matmul %40, %6, %cst_26 {dimension_numbers = #tpu.dot_dimension_numbers<[0], [0], [1], [1], [0, 1, 1, 1], [], []>} : vector<16x16xf32>, vector<16x256xf32>, vector<16x256xf32> -> vector<16x256xf32>
    %42 = arith.mulf %40, %3 : vector<16x16xf32>
    %cst_27 = arith.constant dense<0.000000e+00> : vector<16xf32>
    %43 = vector.multi_reduction <add>, %42, %cst_27 [0] : vector<16x16xf32> to vector<16xf32>
    %44 = vector.shape_cast %43 : vector<16xf32> to vector<1x16xf32>
    %45 = arith.mulf %40, %4 : vector<16x16xf32>
    %cst_28 = arith.constant dense<0.000000e+00> : vector<16xf32>
    %46 = vector.multi_reduction <add>, %45, %cst_28 [0] : vector<16x16xf32> to vector<16xf32>
    %47 = vector.shape_cast %46 : vector<16xf32> to vector<1x16xf32>
    %48 = tpu.concatenate %44, %47 in 0 : vector<1x16xf32>, vector<1x16xf32> -> vector<2x16xf32>
    %c0_29 = arith.constant 0 : index
    %c0_30 = arith.constant 0 : index
    %49 = vector.load %arg10[%c0_29, %c0_30] : memref<2x256xf32, #tpu.memory_space<vmem>>, vector<2x256xf32>
    %cst_31 = arith.constant dense<0.000000e+00> : vector<16x256xf32>
    %50 = tpu.matmul %48, %49, %cst_31 {dimension_numbers = #tpu.dot_dimension_numbers<[0], [0], [1], [1], [0, 1, 1, 1], [], []>} : vector<2x16xf32>, vector<2x256xf32>, vector<16x256xf32> -> vector<16x256xf32>
    %51 = arith.addf %41, %50 : vector<16x256xf32>
    %c0_32 = arith.constant 0 : index
    %c0_33 = arith.constant 0 : index
    %52 = vector.load %arg11[%c0_32, %c0_33] : memref<512x256xf32, #tpu.memory_space<vmem>>, vector<512x256xf32>
    %53 = vector.extract_strided_slice %52 {offsets = [0, 0], sizes = [256, 256], strides = [1, 1]} : vector<512x256xf32> to vector<256x256xf32>
    %cst_34 = arith.constant dense<0.000000e+00> : vector<16x256xf32>
    %54 = tpu.matmul %51, %53, %cst_34 {dimension_numbers = #tpu.dot_dimension_numbers<[1], [0], [0], [1], [0, 0, 1, 1], [], []>} : vector<16x256xf32>, vector<256x256xf32>, vector<16x256xf32> -> vector<16x256xf32>
    %55 = vector.extract_strided_slice %52 {offsets = [256, 0], sizes = [256, 256], strides = [1, 1]} : vector<512x256xf32> to vector<256x256xf32>
    %cst_35 = arith.constant dense<0.000000e+00> : vector<16x256xf32>
    %56 = tpu.matmul %1, %55, %cst_35 {dimension_numbers = #tpu.dot_dimension_numbers<[1], [0], [0], [1], [0, 0, 1, 1], [], []>} : vector<16x256xf32>, vector<256x256xf32>, vector<16x256xf32> -> vector<16x256xf32>
    %57 = arith.addf %54, %56 : vector<16x256xf32>
    %cst_36 = arith.constant 3.000000e-01 : f32
    %58 = vector.broadcast %cst_36 : f32 to vector<16x256xf32>
    %59 = arith.mulf %58, %51 : vector<16x256xf32>
    %cst_37 = arith.constant 0.699999988 : f32
    %60 = vector.broadcast %cst_37 : f32 to vector<16x256xf32>
    %61 = arith.mulf %60, %1 : vector<16x256xf32>
    %62 = arith.addf %59, %61 : vector<16x256xf32>
    %cst_38 = arith.constant 0.91629076 : f32
    %63 = vector.broadcast %cst_38 : f32 to vector<16x256xf32>
    %64 = arith.mulf %63, %57 : vector<16x256xf32>
    %cst_39 = arith.constant 0.0837092697 : f32
    %65 = vector.broadcast %cst_39 : f32 to vector<16x256xf32>
    %66 = arith.mulf %65, %62 : vector<16x256xf32>
    %67 = arith.addf %64, %66 : vector<16x256xf32>
    %68 = arith.addf %67, %0 : vector<16x256xf32>
    %cst_40 = arith.constant 0.000000e+00 : f32
    %69 = vector.broadcast %cst_40 : f32 to vector<16x256xf32>
    %70 = arith.maximumf %68, %69 : vector<16x256xf32>
    %c0_41 = arith.constant 0 : index
    %c0_42 = arith.constant 0 : index
    %71 = vector.load %arg12[%c0_41, %c0_42] : memref<16x256xf32, #tpu.memory_space<vmem>>, vector<16x256xf32>
    tpu.vector_store %arg12[%c0_41, %c0_42], %70 {strides = array<i32>} : memref<16x256xf32, #tpu.memory_space<vmem>>, vector<16x256xf32>,
    return
  }
  func.func @transform_0(%arg0: i32) -> (i32, i32) {
    %c0_i32 = arith.constant 0 : i32
    %c0_i32_0 = arith.constant 0 : i32
    %c0_i32_1 = arith.constant 0 : i32
    return %c0_i32, %c0_i32_0 : i32, i32
  }
  func.func @transform_1(%arg0: i32) -> (i32, i32) {
    %c0_i32 = arith.constant 0 : i32
    %c0_i32_0 = arith.constant 0 : i32
    %c0_i32_1 = arith.constant 0 : i32
    return %c0_i32, %c0_i32_0 : i32, i32
  }
  func.func @transform_2(%arg0: i32) -> (i32, i32) {
    %c0_i32 = arith.constant 0 : i32
    %c0_i32_0 = arith.constant 0 : i32
    %c0_i32_1 = arith.constant 0 : i32
    return %c0_i32, %c0_i32_0 : i32, i32
  }
  func.func @transform_3(%arg0: i32) -> (i32, i32) {
    %c0_i32 = arith.constant 0 : i32
    %c0_i32_0 = arith.constant 0 : i32
    %c0_i32_1 = arith.constant 0 : i32
    return %c0_i32, %c0_i32_0 : i32, i32
  }
  func.func @transform_4(%arg0: i32) -> (i32, i32) {
    %c0_i32 = arith.constant 0 : i32
    %c0_i32_0 = arith.constant 0 : i32
    %c0_i32_1 = arith.constant 0 : i32
    return %c0_i32, %c0_i32_0 : i32, i32
  }
  func.func @transform_5(%arg0: i32) -> (i32, i32) {
    %c0_i32 = arith.constant 0 : i32
    %c0_i32_0 = arith.constant 0 : i32
    %c0_i32_1 = arith.constant 0 : i32
    return %c0_i32, %c0_i32_0 : i32, i32
  }
  func.func @transform_6(%arg0: i32) -> (i32, i32) {
    %c0_i32 = arith.constant 0 : i32
    %c0_i32_0 = arith.constant 0 : i32
    %c0_i32_1 = arith.constant 0 : i32
    return %c0_i32, %c0_i32_0 : i32, i32
  }
  func.func @transform_7(%arg0: i32) -> (i32, i32) {
    %c0_i32 = arith.constant 0 : i32
    %c0_i32_0 = arith.constant 0 : i32
    %c0_i32_1 = arith.constant 0 : i32
    return %c0_i32, %c0_i32_0 : i32, i32
  }
  func.func @transform_8(%arg0: i32) -> (i32, i32) {
    %c0_i32 = arith.constant 0 : i32
    %c0_i32_0 = arith.constant 0 : i32
    %c0_i32_1 = arith.constant 0 : i32
    return %c0_i32, %c0_i32_0 : i32, i32
  }
  func.func @transform_9(%arg0: i32) -> (i32, i32) {
    %c0_i32 = arith.constant 0 : i32
    %c0_i32_0 = arith.constant 0 : i32
    %c0_i32_1 = arith.constant 0 : i32
    return %c0_i32, %c0_i32_0 : i32, i32
  }
  func.func @transform_10(%arg0: i32) -> (i32, i32) {
    %c0_i32 = arith.constant 0 : i32
    %c0_i32_0 = arith.constant 0 : i32
    %c0_i32_1 = arith.constant 0 : i32
    return %c0_i32, %c0_i32_0 : i32, i32
  }
  func.func @transform_11(%arg0: i32) -> (i32, i32) {
    %c0_i32 = arith.constant 0 : i32
    %c0_i32_0 = arith.constant 0 : i32
    %c0_i32_1 = arith.constant 0 : i32
    return %c0_i32, %c0_i32_0 : i32, i32
  }
}

module attributes {stable_mosaic.version = 11 : i64} {
  func.func @kernel(%arg0: i32, %arg1: memref<16x256xf32, #tpu.memory_space<vmem>>, %arg2: memref<16x256xf32, #tpu.memory_space<vmem>>, %arg3: memref<16x1024xf32, #tpu.memory_space<vmem>>, %arg4: memref<256x256xf32, #tpu.memory_space<vmem>>, %arg5: memref<1x256xf32, #tpu.memory_space<vmem>>, %arg6: memref<256x512xf32, #tpu.memory_space<vmem>>, %arg7: memref<1x512xf32, #tpu.memory_space<vmem>>, %arg8: memref<256x256xf32, #tpu.memory_space<vmem>>, %arg9: memref<1x256xf32, #tpu.memory_space<vmem>>, %arg10: memref<256x256xf32, #tpu.memory_space<vmem>>, %arg11: memref<1x256xf32, #tpu.memory_space<vmem>>, %arg12: memref<1536x256xf32, #tpu.memory_space<vmem>>, %arg13: memref<1x256xf32, #tpu.memory_space<vmem>>, %arg14: memref<256x128xf32, #tpu.memory_space<vmem>>, %arg15: memref<1x128xf32, #tpu.memory_space<vmem>>, %arg16: memref<128x2xf32, #tpu.memory_space<vmem>>, %arg17: memref<1x2xf32, #tpu.memory_space<vmem>>, %arg18: memref<16x2xf32, #tpu.memory_space<vmem>>) attributes {dimension_semantics = [#tpu.dimension_semantics<arbitrary>], iteration_bounds = array<i64: 1>, scalar_prefetch = 0 : i64, scratch_operands = 0 : i64, tpu.core_type = #tpu.core_type<tc>, window_params = [{pipeline_mode = #tpu.pipeline_mode<synchronous>, transform_indices = @transform_0, window_bounds = array<i64: 16, 256>}, {pipeline_mode = #tpu.pipeline_mode<synchronous>, transform_indices = @transform_1, window_bounds = array<i64: 16, 256>}, {pipeline_mode = #tpu.pipeline_mode<synchronous>, transform_indices = @transform_2, window_bounds = array<i64: 16, 1024>}, {pipeline_mode = #tpu.pipeline_mode<synchronous>, transform_indices = @transform_3, window_bounds = array<i64: 256, 256>}, {pipeline_mode = #tpu.pipeline_mode<synchronous>, transform_indices = @transform_4, window_bounds = array<i64: 1, 256>}, {pipeline_mode = #tpu.pipeline_mode<synchronous>, transform_indices = @transform_5, window_bounds = array<i64: 256, 512>}, {pipeline_mode = #tpu.pipeline_mode<synchronous>, transform_indices = @transform_6, window_bounds = array<i64: 1, 512>}, {pipeline_mode = #tpu.pipeline_mode<synchronous>, transform_indices = @transform_7, window_bounds = array<i64: 256, 256>}, {pipeline_mode = #tpu.pipeline_mode<synchronous>, transform_indices = @transform_8, window_bounds = array<i64: 1, 256>}, {pipeline_mode = #tpu.pipeline_mode<synchronous>, transform_indices = @transform_9, window_bounds = array<i64: 256, 256>}, {pipeline_mode = #tpu.pipeline_mode<synchronous>, transform_indices = @transform_10, window_bounds = array<i64: 1, 256>}, {pipeline_mode = #tpu.pipeline_mode<synchronous>, transform_indices = @transform_11, window_bounds = array<i64: 1536, 256>}, {pipeline_mode = #tpu.pipeline_mode<synchronous>, transform_indices = @transform_12, window_bounds = array<i64: 1, 256>}, {pipeline_mode = #tpu.pipeline_mode<synchronous>, transform_indices = @transform_13, window_bounds = array<i64: 256, 128>}, {pipeline_mode = #tpu.pipeline_mode<synchronous>, transform_indices = @transform_14, window_bounds = array<i64: 1, 128>}, {pipeline_mode = #tpu.pipeline_mode<synchronous>, transform_indices = @transform_15, window_bounds = array<i64: 128, 2>}, {pipeline_mode = #tpu.pipeline_mode<synchronous>, transform_indices = @transform_16, window_bounds = array<i64: 1, 2>}, {pipeline_mode = #tpu.pipeline_mode<synchronous>, transform_indices = @transform_17, window_bounds = array<i64: 16, 2>}]} {
    %c0 = arith.constant 0 : index
    %c0_0 = arith.constant 0 : index
    %0 = vector.load %arg1[%c0, %c0_0] : memref<16x256xf32, #tpu.memory_space<vmem>>, vector<16x256xf32>
    %c0_1 = arith.constant 0 : index
    %c0_2 = arith.constant 0 : index
    %1 = vector.load %arg2[%c0_1, %c0_2] : memref<16x256xf32, #tpu.memory_space<vmem>>, vector<16x256xf32>
    %c0_3 = arith.constant 0 : index
    %c0_4 = arith.constant 0 : index
    %2 = vector.load %arg4[%c0_3, %c0_4] : memref<256x256xf32, #tpu.memory_space<vmem>>, vector<256x256xf32>
    %cst = arith.constant dense<0.000000e+00> : vector<16x256xf32>
    %3 = tpu.matmul %1, %2, %cst {dimension_numbers = #tpu.dot_dimension_numbers<[1], [0], [0], [1], [0, 0, 1, 1], [], []>} : vector<16x256xf32>, vector<256x256xf32>, vector<16x256xf32> -> vector<16x256xf32>
    %c0_5 = arith.constant 0 : index
    %c0_6 = arith.constant 0 : index
    %4 = vector.load %arg5[%c0_5, %c0_6] : memref<1x256xf32, #tpu.memory_space<vmem>>, vector<1x256xf32>
    %5 = vector.broadcast %4 : vector<1x256xf32> to vector<16x256xf32>
    %6 = arith.addf %3, %5 : vector<16x256xf32>
    %c0_7 = arith.constant 0 : index
    %c0_8 = arith.constant 0 : index
    %7 = vector.load %arg6[%c0_7, %c0_8] : memref<256x512xf32, #tpu.memory_space<vmem>>, vector<256x512xf32>
    %cst_9 = arith.constant dense<0.000000e+00> : vector<16x512xf32>
    %8 = tpu.matmul %0, %7, %cst_9 {dimension_numbers = #tpu.dot_dimension_numbers<[1], [0], [0], [1], [0, 0, 1, 1], [], []>} : vector<16x256xf32>, vector<256x512xf32>, vector<16x512xf32> -> vector<16x512xf32>
    %c0_10 = arith.constant 0 : index
    %c0_11 = arith.constant 0 : index
    %9 = vector.load %arg7[%c0_10, %c0_11] : memref<1x512xf32, #tpu.memory_space<vmem>>, vector<1x512xf32>
    %10 = vector.broadcast %9 : vector<1x512xf32> to vector<16x512xf32>
    %11 = arith.addf %8, %10 : vector<16x512xf32>
    %cst_12 = arith.constant 0.000000e+00 : f32
    %12 = vector.broadcast %cst_12 : f32 to vector<16x512xf32>
    %13 = arith.maximumf %11, %12 : vector<16x512xf32>
    %14 = vector.extract_strided_slice %13 {offsets = [0, 0], sizes = [16, 256], strides = [1, 1]} : vector<16x512xf32> to vector<16x256xf32>
    %15 = vector.extract_strided_slice %13 {offsets = [0, 256], sizes = [16, 256], strides = [1, 1]} : vector<16x512xf32> to vector<16x256xf32>
    %c0_13 = arith.constant 0 : index
    %c0_14 = arith.constant 0 : index
    %16 = vector.load %arg8[%c0_13, %c0_14] : memref<256x256xf32, #tpu.memory_space<vmem>>, vector<256x256xf32>
    %cst_15 = arith.constant dense<0.000000e+00> : vector<16x256xf32>
    %17 = tpu.matmul %6, %16, %cst_15 {dimension_numbers = #tpu.dot_dimension_numbers<[1], [0], [0], [1], [0, 0, 1, 1], [], []>} : vector<16x256xf32>, vector<256x256xf32>, vector<16x256xf32> -> vector<16x256xf32>
    %c0_16 = arith.constant 0 : index
    %c0_17 = arith.constant 0 : index
    %18 = vector.load %arg9[%c0_16, %c0_17] : memref<1x256xf32, #tpu.memory_space<vmem>>, vector<1x256xf32>
    %19 = vector.broadcast %18 : vector<1x256xf32> to vector<16x256xf32>
    %20 = arith.addf %17, %19 : vector<16x256xf32>
    %cst_18 = arith.constant 0.000000e+00 : f32
    %21 = vector.broadcast %cst_18 : f32 to vector<16x256xf32>
    %22 = arith.maximumf %20, %21 : vector<16x256xf32>
    %cst_19 = arith.constant dense<0.000000e+00> : vector<16x16xf32>
    %23 = tpu.matmul %14, %15, %cst_19 {dimension_numbers = #tpu.dot_dimension_numbers<[1], [1], [0], [0], [0, 0, 1, 0], [], []>} : vector<16x256xf32>, vector<16x256xf32>, vector<16x16xf32> -> vector<16x16xf32>
    %cst_20 = arith.constant 6.250000e-02 : f32
    %24 = vector.broadcast %cst_20 : f32 to vector<16x16xf32>
    %25 = arith.mulf %23, %24 : vector<16x16xf32>
    %cst_21 = arith.constant dense<0xFF800000> : vector<16xf32>
    %26 = vector.multi_reduction <maximumf>, %25, %cst_21 [1] : vector<16x16xf32> to vector<16xf32>
    %27 = vector.shape_cast %26 : vector<16xf32> to vector<16x1xf32>
    %28 = vector.broadcast %27 : vector<16x1xf32> to vector<16x16xf32>
    %29 = arith.subf %25, %28 : vector<16x16xf32>
    %30 = math.exp %29 : vector<16x16xf32>
    %cst_22 = arith.constant dense<0.000000e+00> : vector<16xf32>
    %31 = vector.multi_reduction <add>, %30, %cst_22 [1] : vector<16x16xf32> to vector<16xf32>
    %32 = vector.shape_cast %31 : vector<16xf32> to vector<16x1xf32>
    %33 = tpu.reciprocal %32 {approx = true} : vector<16x1xf32> -> vector<16x1xf32>
    %34 = vector.broadcast %33 : vector<16x1xf32> to vector<16x16xf32>
    %35 = arith.mulf %30, %34 : vector<16x16xf32>
    %cst_23 = arith.constant dense<0.000000e+00> : vector<16x256xf32>
    %36 = tpu.matmul %35, %22, %cst_23 {dimension_numbers = #tpu.dot_dimension_numbers<[1], [0], [0], [1], [0, 0, 1, 1], [], []>} : vector<16x16xf32>, vector<16x256xf32>, vector<16x256xf32> -> vector<16x256xf32>
    %c0_24 = arith.constant 0 : index
    %c0_25 = arith.constant 0 : index
    %37 = vector.load %arg10[%c0_24, %c0_25] : memref<256x256xf32, #tpu.memory_space<vmem>>, vector<256x256xf32>
    %cst_26 = arith.constant dense<0.000000e+00> : vector<16x256xf32>
    %38 = tpu.matmul %36, %37, %cst_26 {dimension_numbers = #tpu.dot_dimension_numbers<[1], [0], [0], [1], [0, 0, 1, 1], [], []>} : vector<16x256xf32>, vector<256x256xf32>, vector<16x256xf32> -> vector<16x256xf32>
    %c0_27 = arith.constant 0 : index
    %c0_28 = arith.constant 0 : index
    %39 = vector.load %arg11[%c0_27, %c0_28] : memref<1x256xf32, #tpu.memory_space<vmem>>, vector<1x256xf32>
    %40 = vector.broadcast %39 : vector<1x256xf32> to vector<16x256xf32>
    %41 = arith.addf %38, %40 : vector<16x256xf32>
    %cst_29 = arith.constant 0.000000e+00 : f32
    %42 = vector.broadcast %cst_29 : f32 to vector<16x256xf32>
    %43 = arith.maximumf %41, %42 : vector<16x256xf32>
    %c0_30 = arith.constant 0 : index
    %c0_31 = arith.constant 0 : index
    %44 = vector.load %arg12[%c0_30, %c0_31] : memref<1536x256xf32, #tpu.memory_space<vmem>>, vector<1536x256xf32>
    %45 = vector.extract_strided_slice %44 {offsets = [0, 0], sizes = [256, 256], strides = [1, 1]} : vector<1536x256xf32> to vector<256x256xf32>
    %cst_32 = arith.constant dense<0.000000e+00> : vector<16x256xf32>
    %46 = tpu.matmul %43, %45, %cst_32 {dimension_numbers = #tpu.dot_dimension_numbers<[1], [0], [0], [1], [0, 0, 1, 1], [], []>} : vector<16x256xf32>, vector<256x256xf32>, vector<16x256xf32> -> vector<16x256xf32>
    %47 = vector.extract_strided_slice %44 {offsets = [256, 0], sizes = [256, 256], strides = [1, 1]} : vector<1536x256xf32> to vector<256x256xf32>
    %cst_33 = arith.constant dense<0.000000e+00> : vector<16x256xf32>
    %48 = tpu.matmul %6, %47, %cst_33 {dimension_numbers = #tpu.dot_dimension_numbers<[1], [0], [0], [1], [0, 0, 1, 1], [], []>} : vector<16x256xf32>, vector<256x256xf32>, vector<16x256xf32> -> vector<16x256xf32>
    %49 = arith.addf %46, %48 : vector<16x256xf32>
    %c0_34 = arith.constant 0 : index
    %c0_35 = arith.constant 0 : index
    %50 = vector.load %arg3[%c0_34, %c0_35] : memref<16x1024xf32, #tpu.memory_space<vmem>>, vector<16x1024xf32>
    %51 = vector.extract_strided_slice %44 {offsets = [512, 0], sizes = [1024, 256], strides = [1, 1]} : vector<1536x256xf32> to vector<1024x256xf32>
    %cst_36 = arith.constant dense<0.000000e+00> : vector<16x256xf32>
    %52 = tpu.matmul %50, %51, %cst_36 {dimension_numbers = #tpu.dot_dimension_numbers<[1], [0], [0], [1], [0, 0, 1, 1], [], []>} : vector<16x1024xf32>, vector<1024x256xf32>, vector<16x256xf32> -> vector<16x256xf32>
    %53 = arith.addf %49, %52 : vector<16x256xf32>
    %c0_37 = arith.constant 0 : index
    %c0_38 = arith.constant 0 : index
    %54 = vector.load %arg13[%c0_37, %c0_38] : memref<1x256xf32, #tpu.memory_space<vmem>>, vector<1x256xf32>
    %55 = vector.broadcast %54 : vector<1x256xf32> to vector<16x256xf32>
    %56 = arith.addf %53, %55 : vector<16x256xf32>
    %cst_39 = arith.constant 0.000000e+00 : f32
    %57 = vector.broadcast %cst_39 : f32 to vector<16x256xf32>
    %58 = arith.maximumf %56, %57 : vector<16x256xf32>
    %c0_40 = arith.constant 0 : index
    %c0_41 = arith.constant 0 : index
    %59 = vector.load %arg14[%c0_40, %c0_41] : memref<256x128xf32, #tpu.memory_space<vmem>>, vector<256x128xf32>
    %cst_42 = arith.constant dense<0.000000e+00> : vector<16x128xf32>
    %60 = tpu.matmul %58, %59, %cst_42 {dimension_numbers = #tpu.dot_dimension_numbers<[1], [0], [0], [1], [0, 0, 1, 1], [], []>} : vector<16x256xf32>, vector<256x128xf32>, vector<16x128xf32> -> vector<16x128xf32>
    %c0_43 = arith.constant 0 : index
    %c0_44 = arith.constant 0 : index
    %61 = vector.load %arg15[%c0_43, %c0_44] : memref<1x128xf32, #tpu.memory_space<vmem>>, vector<1x128xf32>
    %62 = vector.broadcast %61 : vector<1x128xf32> to vector<16x128xf32>
    %63 = arith.addf %60, %62 : vector<16x128xf32>
    %cst_45 = arith.constant 0.000000e+00 : f32
    %64 = vector.broadcast %cst_45 : f32 to vector<16x128xf32>
    %65 = arith.maximumf %63, %64 : vector<16x128xf32>
    %c0_46 = arith.constant 0 : index
    %c0_47 = arith.constant 0 : index
    %66 = vector.load %arg16[%c0_46, %c0_47] : memref<128x2xf32, #tpu.memory_space<vmem>>, vector<128x2xf32>
    %cst_48 = arith.constant dense<0.000000e+00> : vector<16x2xf32>
    %67 = tpu.matmul %65, %66, %cst_48 {dimension_numbers = #tpu.dot_dimension_numbers<[1], [0], [0], [1], [0, 0, 1, 1], [], []>} : vector<16x128xf32>, vector<128x2xf32>, vector<16x2xf32> -> vector<16x2xf32>
    %c0_49 = arith.constant 0 : index
    %c0_50 = arith.constant 0 : index
    %68 = vector.load %arg17[%c0_49, %c0_50] : memref<1x2xf32, #tpu.memory_space<vmem>>, vector<1x2xf32>
    %69 = vector.broadcast %68 : vector<1x2xf32> to vector<16x2xf32>
    %70 = arith.addf %67, %69 : vector<16x2xf32>
    %c0_51 = arith.constant 0 : index
    %c0_52 = arith.constant 0 : index
    %71 = vector.load %arg18[%c0_51, %c0_52] : memref<16x2xf32, #tpu.memory_space<vmem>>, vector<16x2xf32>
    tpu.vector_store %arg18[%c0_51, %c0_52], %70 {strides = array<i32>} : memref<16x2xf32, #tpu.memory_space<vmem>>, vector<16x2xf32>,
    return
  }
  func.func @transform_0(%arg0: i32) -> (i32, i32) {
    %c0_i32 = arith.constant 0 : i32
    %c0_i32_0 = arith.constant 0 : i32
    %c0_i32_1 = arith.constant 0 : i32
    return %c0_i32, %c0_i32_0 : i32, i32
  }
  func.func @transform_1(%arg0: i32) -> (i32, i32) {
    %c0_i32 = arith.constant 0 : i32
    %c0_i32_0 = arith.constant 0 : i32
    %c0_i32_1 = arith.constant 0 : i32
    return %c0_i32, %c0_i32_0 : i32, i32
  }
  func.func @transform_2(%arg0: i32) -> (i32, i32) {
    %c0_i32 = arith.constant 0 : i32
    %c0_i32_0 = arith.constant 0 : i32
    %c0_i32_1 = arith.constant 0 : i32
    return %c0_i32, %c0_i32_0 : i32, i32
  }
  func.func @transform_3(%arg0: i32) -> (i32, i32) {
    %c0_i32 = arith.constant 0 : i32
    %c0_i32_0 = arith.constant 0 : i32
    %c0_i32_1 = arith.constant 0 : i32
    return %c0_i32, %c0_i32_0 : i32, i32
  }
  func.func @transform_4(%arg0: i32) -> (i32, i32) {
    %c0_i32 = arith.constant 0 : i32
    %c0_i32_0 = arith.constant 0 : i32
    %c0_i32_1 = arith.constant 0 : i32
    return %c0_i32, %c0_i32_0 : i32, i32
  }
  func.func @transform_5(%arg0: i32) -> (i32, i32) {
    %c0_i32 = arith.constant 0 : i32
    %c0_i32_0 = arith.constant 0 : i32
    %c0_i32_1 = arith.constant 0 : i32
    return %c0_i32, %c0_i32_0 : i32, i32
  }
  func.func @transform_6(%arg0: i32) -> (i32, i32) {
    %c0_i32 = arith.constant 0 : i32
    %c0_i32_0 = arith.constant 0 : i32
    %c0_i32_1 = arith.constant 0 : i32
    return %c0_i32, %c0_i32_0 : i32, i32
  }
  func.func @transform_7(%arg0: i32) -> (i32, i32) {
    %c0_i32 = arith.constant 0 : i32
    %c0_i32_0 = arith.constant 0 : i32
    %c0_i32_1 = arith.constant 0 : i32
    return %c0_i32, %c0_i32_0 : i32, i32
  }
  func.func @transform_8(%arg0: i32) -> (i32, i32) {
    %c0_i32 = arith.constant 0 : i32
    %c0_i32_0 = arith.constant 0 : i32
    %c0_i32_1 = arith.constant 0 : i32
    return %c0_i32, %c0_i32_0 : i32, i32
  }
  func.func @transform_9(%arg0: i32) -> (i32, i32) {
    %c0_i32 = arith.constant 0 : i32
    %c0_i32_0 = arith.constant 0 : i32
    %c0_i32_1 = arith.constant 0 : i32
    return %c0_i32, %c0_i32_0 : i32, i32
  }
  func.func @transform_10(%arg0: i32) -> (i32, i32) {
    %c0_i32 = arith.constant 0 : i32
    %c0_i32_0 = arith.constant 0 : i32
    %c0_i32_1 = arith.constant 0 : i32
    return %c0_i32, %c0_i32_0 : i32, i32
  }
  func.func @transform_11(%arg0: i32) -> (i32, i32) {
    %c0_i32 = arith.constant 0 : i32
    %c0_i32_0 = arith.constant 0 : i32
    %c0_i32_1 = arith.constant 0 : i32
    return %c0_i32, %c0_i32_0 : i32, i32
  }
  func.func @transform_12(%arg0: i32) -> (i32, i32) {
    %c0_i32 = arith.constant 0 : i32
    %c0_i32_0 = arith.constant 0 : i32
    %c0_i32_1 = arith.constant 0 : i32
    return %c0_i32, %c0_i32_0 : i32, i32
  }
  func.func @transform_13(%arg0: i32) -> (i32, i32) {
    %c0_i32 = arith.constant 0 : i32
    %c0_i32_0 = arith.constant 0 : i32
    %c0_i32_1 = arith.constant 0 : i32
    return %c0_i32, %c0_i32_0 : i32, i32
  }
  func.func @transform_14(%arg0: i32) -> (i32, i32) {
    %c0_i32 = arith.constant 0 : i32
    %c0_i32_0 = arith.constant 0 : i32
    %c0_i32_1 = arith.constant 0 : i32
    return %c0_i32, %c0_i32_0 : i32, i32
  }
  func.func @transform_15(%arg0: i32) -> (i32, i32) {
    %c0_i32 = arith.constant 0 : i32
    %c0_i32_0 = arith.constant 0 : i32
    %c0_i32_1 = arith.constant 0 : i32
    return %c0_i32, %c0_i32_0 : i32, i32
  }
  func.func @transform_16(%arg0: i32) -> (i32, i32) {
    %c0_i32 = arith.constant 0 : i32
    %c0_i32_0 = arith.constant 0 : i32
    %c0_i32_1 = arith.constant 0 : i32
    return %c0_i32, %c0_i32_0 : i32, i32
  }
  func.func @transform_17(%arg0: i32) -> (i32, i32) {
    %c0_i32 = arith.constant 0 : i32
    %c0_i32_0 = arith.constant 0 : i32
    %c0_i32_1 = arith.constant 0 : i32
    return %c0_i32, %c0_i32_0 : i32, i32
  }
}

</mosaic_0001>

<llo_original>
// kernel: mvsoppis_forward.4
$region0: #{mvsoppis_forward.4}
  #allocation0 [shape = 'u32[]', space=smem, size = 0x4, offset = 0x4, fixed_abs, tag = 'smem constant byte address 0x4 - core index']
  #allocation1 [shape = 'u32[144,128]{1,0:T(1,128)}', space=vmem, size = 0x12000, scoped, tag = 'internal scratch']
  %s0 = inlined_call_operand.hbm [shape: f32[16,64], index: 0, kind: input, shape index: {}]
  %s1 = inlined_call_operand.hbm [shape: f32[16,16], index: 1, kind: input, shape index: {}]
  %s2 = inlined_call_operand.hbm [shape: f32[64,256], index: 2, kind: input, shape index: {}]
  %s3 = inlined_call_operand.hbm [shape: f32[1,256], index: 3, kind: input, shape index: {}]
  %s4 = inlined_call_operand.hbm [shape: f32[64,256], index: 4, kind: input, shape index: {}]
  %s5 = inlined_call_operand.hbm [shape: f32[1,256], index: 5, kind: input, shape index: {}]
  %s6 = inlined_call_operand.vmem [shape: f32[16,256], index: 6, kind: output, shape index: {0}]
  %s7 = inlined_call_operand.vmem [shape: f32[16,256], index: 7, kind: output, shape index: {1}]
  %8 = xla_tuple %s6, %s7
  %s9 = sld [smem:[#allocation0]]
  $region66: #{mvsoppis_forward.4} parent=0
    _
  %s11 = ssub.s32 1, %s9
  %s12 = scalar_select 0, %s11, %s9
  $region1: #{mvsoppis_forward.4} parent=0
    #allocation2 [shape = 'u8[8192]{0}', space=vmem, size = 0x2000, scoped, tag = 'input window, operand 0, single buffered']
    #allocation3 [shape = 's32[1]{0}', space=sflag, size = 0x4, scoped, tag = 'scoped memory for mvsoppis_forward.4']
    #allocation4 [shape = 'u8[8192]{0}', space=vmem, size = 0x2000, scoped, tag = 'input window, operand 1, single buffered']
    #allocation5 [shape = 's32[1]{0}', space=sflag, size = 0x4, scoped, tag = 'scoped memory for mvsoppis_forward.4']
    #allocation6 [shape = 'u8[65536]{0}', space=vmem, size = 0x10000, scoped, tag = 'input window, operand 2, single buffered']
    #allocation7 [shape = 'u8[1024]{0}', space=vmem, size = 0x400, scoped, tag = 'input window, operand 3, single buffered']
    #allocation8 [shape = 's32[1]{0}', space=sflag, size = 0x4, scoped, tag = 'scoped memory for mvsoppis_forward.4']
    #allocation9 [shape = 'u8[65536]{0}', space=vmem, size = 0x10000, scoped, tag = 'input window, operand 4, single buffered']
    #allocation10 [shape = 'u8[1024]{0}', space=vmem, size = 0x400, scoped, tag = 'input window, operand 5, single buffered']
    #allocation11 [shape = 's32[1]{0}', space=sflag, size = 0x4, scoped, tag = 'scoped memory for mvsoppis_forward.4']
    %13 = vsyncpa [#allocation3], 0
    %14 = vsyncpa [#allocation5], 0
    %15 = vsyncpa [#allocation8], 0
    %16 = vsyncpa [#allocation11], 0
    // Predicated region
    $region2: #{mvsoppis_forward.4} parent=1 // pred_check
      _
    $region3: #{mvsoppis_forward.4} parent=1 // pred_check_branch
      %18 = sbr.rel (0) target = $region5
    $region4: #{mvsoppis_forward.4} parent=1 // pred_region
      %s20 = ssub.s32 256, 256
      %21 = vsyncadd [#allocation3], %s20
      %s22 = sshll.u32 [#allocation2], 4
      %s23 = int_to_ptr.vmem [resolvable:$true] %s22
      %28 = dma.hbm_to_vmem [thread:$0]  %s0, 256, %s23, [#allocation3], 128, 128, 8
    $region5: #{mvsoppis_forward.4} parent=1 // pred_fallthru
      _
    // Predicated region
    $region6: #{mvsoppis_forward.4} parent=1 // pred_check
      _
    $region7: #{mvsoppis_forward.4} parent=1 // pred_check_branch
      %30 = sbr.rel (0) target = $region9
    $region8: #{mvsoppis_forward.4} parent=1 // pred_region
      %s32 = ssub.s32 256, 256
      %33 = vsyncadd [#allocation5], %s32
      %s34 = sshll.u32 [#allocation4], 4
      %s35 = int_to_ptr.vmem [resolvable:$true] %s34
      %40 = dma.hbm_to_vmem [thread:$0]  %s1, 256, %s35, [#allocation5], 128, 128, 8
    $region9: #{mvsoppis_forward.4} parent=1 // pred_fallthru
      _
    // Predicated region
    $region10: #{mvsoppis_forward.4} parent=1 // pred_check
      _
    $region11: #{mvsoppis_forward.4} parent=1 // pred_check_branch
      %42 = sbr.rel (0) target = $region13
    $region12: #{mvsoppis_forward.4} parent=1 // pred_region
      %s44 = ssub.s32 2048, 2048
      %45 = vsyncadd [#allocation5], %s44
      %s46 = sshll.u32 [#allocation6], 4
      %s47 = int_to_ptr.vmem [resolvable:$true] %s46
      %52 = dma.hbm_to_vmem [thread:$0]  %s2, 2048, %s47, [#allocation5], 256, 256, 16
    $region13: #{mvsoppis_forward.4} parent=1 // pred_fallthru
      _
    // Predicated region
    $region14: #{mvsoppis_forward.4} parent=1 // pred_check
      _
    $region15: #{mvsoppis_forward.4} parent=1 // pred_check_branch
      %54 = sbr.rel (0) target = $region17
    $region16: #{mvsoppis_forward.4} parent=1 // pred_region
      %s56 = ssub.s32 32, 32
      %57 = vsyncadd [#allocation8], %s56
      %s59 = sshll.u32 [#allocation7], 4
      %s60 = int_to_ptr.vmem [resolvable:$true] %s59
      %62 = dma.hbm_to_vmem [thread:$0]  %s3, 32, %s60, [#allocation8]
    $region17: #{mvsoppis_forward.4} parent=1 // pred_fallthru
      _
    // Predicated region
    $region18: #{mvsoppis_forward.4} parent=1 // pred_check
      _
    $region19: #{mvsoppis_forward.4} parent=1 // pred_check_branch
      %64 = sbr.rel (0) target = $region21
    $region20: #{mvsoppis_forward.4} parent=1 // pred_region
      %s66 = ssub.s32 2048, 2048
      %67 = vsyncadd [#allocation8], %s66
      %s68 = sshll.u32 [#allocation9], 4
      %s69 = int_to_ptr.vmem [resolvable:$true] %s68
      %74 = dma.hbm_to_vmem [thread:$0]  %s4, 2048, %s69, [#allocation8], 256, 256, 16
    $region21: #{mvsoppis_forward.4} parent=1 // pred_fallthru
      _
    // Predicated region
    $region22: #{mvsoppis_forward.4} parent=1 // pred_check
      _
    $region23: #{mvsoppis_forward.4} parent=1 // pred_check_branch
      %76 = sbr.rel (0) target = $region25
    $region24: #{mvsoppis_forward.4} parent=1 // pred_region
      %s78 = ssub.s32 32, 32
      %79 = vsyncadd [#allocation11], %s78
      %s81 = sshll.u32 [#allocation10], 4
      %s82 = int_to_ptr.vmem [resolvable:$true] %s81
      %84 = dma.hbm_to_vmem [thread:$0]  %s5, 32, %s82, [#allocation11]
    $region25: #{mvsoppis_forward.4} parent=1 // pred_fallthru
      _
    // Predicated region
    $region26: #{mvsoppis_forward.4} parent=1 // pred_check
      _
    $region27: #{mvsoppis_forward.4} parent=1 // pred_check_branch
      %86 = sbr.rel (0) target = $region29
    $region28: #{mvsoppis_forward.4} parent=1 // pred_region
      %87 = dma.done [#allocation3], 256
    $region29: #{mvsoppis_forward.4} parent=1 // pred_fallthru
      _
    // Predicated region
    $region30: #{mvsoppis_forward.4} parent=1 // pred_check
      _
    $region31: #{mvsoppis_forward.4} parent=1 // pred_check_branch
      %89 = sbr.rel (0) target = $region33
    $region32: #{mvsoppis_forward.4} parent=1 // pred_region
      %90 = dma.done [#allocation5], 256
    $region33: #{mvsoppis_forward.4} parent=1 // pred_fallthru
      _
    // Predicated region
    $region34: #{mvsoppis_forward.4} parent=1 // pred_check
      _
    $region35: #{mvsoppis_forward.4} parent=1 // pred_check_branch
      %92 = sbr.rel (0) target = $region37
    $region36: #{mvsoppis_forward.4} parent=1 // pred_region
      %93 = dma.done [#allocation5], 2048
    $region37: #{mvsoppis_forward.4} parent=1 // pred_fallthru
      _
    // Predicated region
    $region38: #{mvsoppis_forward.4} parent=1 // pred_check
      _
    $region39: #{mvsoppis_forward.4} parent=1 // pred_check_branch
      %95 = sbr.rel (0) target = $region41
    $region40: #{mvsoppis_forward.4} parent=1 // pred_region
      %96 = dma.done [#allocation8], 32
    $region41: #{mvsoppis_forward.4} parent=1 // pred_fallthru
      _
    // Predicated region
    $region42: #{mvsoppis_forward.4} parent=1 // pred_check
      _
    $region43: #{mvsoppis_forward.4} parent=1 // pred_check_branch
      %98 = sbr.rel (0) target = $region45
    $region44: #{mvsoppis_forward.4} parent=1 // pred_region
      %99 = dma.done [#allocation8], 2048
    $region45: #{mvsoppis_forward.4} parent=1 // pred_fallthru
      _
    // Predicated region
    $region46: #{mvsoppis_forward.4} parent=1 // pred_check
      _
    $region47: #{mvsoppis_forward.4} parent=1 // pred_check_branch
      %101 = sbr.rel (0) target = $region49
    $region48: #{mvsoppis_forward.4} parent=1 // pred_region
      %102 = dma.done [#allocation11], 32
    $region49: #{mvsoppis_forward.4} parent=1 // pred_fallthru
      _
    %v103 = vld [vmem:[#allocation2] sm:$0xff]
    %v104 = vld [vmem:[#allocation2 + $0x8] sm:$0xff]
    %v105 = vld [vmem:[#allocation4] sm:$0xff]
    %v106 = vld [vmem:[#allocation4 + $0x8] sm:$0xff]
    %vm107 = vcmask 130048
    %v108 = vsel %vm107, %v105, 0.0
    %109 = vadd.xlane.f32.xlu0 %v108
    %v110 = vpop.xlane.xlu0 %109
    %v111 = vsel %vm107, %v106, 0.0
    %112 = vadd.xlane.f32.xlu0 %v111
    %v113 = vpop.xlane.xlu0 %112
    %v114 = vmax.f32 %v110, 1.0
    %v115 = vmax.f32 %v113, 1.0
    %v116 = vrcp.pop %v114
    %v117 = vmul.f32 1.0, %v116
    %v118 = vrcp.pop %v115
    %v119 = vmul.f32 1.0, %v118
    %v120 = vmul.f32 %v105, %v117
    %v121 = vmul.f32 %v106, %v119
    %v123 = vsel %vm107, %v120, 0
    %v126 = vsel %vm107, %v121, 0
    %128 = vmatprep.subr.mxu0 0.0
    %129 = vmatpush1.msra.mxu0 %v103
    %130 = vmatprep.subr.mxu0 0.0
    %131 = vmatpush1.msra.mxu0 %v104
    %132 = vmatprep.subr.mxu0 0.0
    %133 = vmatpush1.msra.mxu0 0.0
    %134 = vmatprep.subr.mxu0 0.0
    %135 = vmatpush1.msra.mxu0 0.0
    %136 = vmatprep.subr.mxu0 0.0
    %137 = vmatpush1.msra.mxu0 0.0
    %138 = vmatprep.subr.mxu0 0.0
    %139 = vmatpush1.msra.mxu0 0.0
    %140 = vmatprep.subr.mxu0 0.0
    %141 = vmatpush1.msra.mxu0 0.0
    %142 = vmatprep.subr.mxu0 0.0
    %143 = vmatpush1.msra.mxu0 0.0
    %144 = vmatprep.subr.mxu0 0.0
    %145 = vmatpush1.msra.mxu0 0.0
    %146 = vmatprep.subr.mxu0 0.0
    %147 = vmatpush1.msra.mxu0 0.0
    %148 = vmatprep.subr.mxu0 0.0
    %149 = vmatpush1.msra.mxu0 0.0
    %150 = vmatprep.subr.mxu0 0.0
    %151 = vmatpush1.msra.mxu0 0.0
    %152 = vmatprep.subr.mxu0 0.0
    %153 = vmatpush1.msra.mxu0 0.0
    %154 = vmatprep.subr.mxu0 0.0
    %155 = vmatpush1.msra.mxu0 0.0
    %156 = vmatprep.subr.mxu0 0.0
    %157 = vmatpush1.msra.mxu0 0.0
    %158 = vmatprep.subr.mxu0 0.0
    %159 = vmatpush1.msra.mxu0 0.0
    %160 = vmatprep.subr.mxu0 0.0
    %161 = vmatpush1.msra.mxu0 0.0
    %162 = vmatprep.subr.mxu0 0.0
    %163 = vmatpush1.msra.mxu0 0.0
    %164 = vmatprep.subr.mxu0 0.0
    %165 = vmatpush1.msra.mxu0 0.0
    %166 = vmatprep.subr.mxu0 0.0
    %167 = vmatpush1.msra.mxu0 0.0
    %168 = vmatprep.subr.mxu0 0.0
    %169 = vmatpush1.msra.mxu0 0.0
    %170 = vmatprep.subr.mxu0 0.0
    %171 = vmatpush1.msra.mxu0 0.0
    %172 = vmatprep.subr.mxu0 0.0
    %173 = vmatpush1.msra.mxu0 0.0
    %174 = vmatprep.subr.mxu0 0.0
    %175 = vmatpush1.msra.mxu0 0.0
    %176 = vmatprep.subr.mxu0 0.0
    %177 = vmatpush1.msra.mxu0 0.0
    %178 = vmatprep.subr.mxu0 0.0
    %179 = vmatpush1.msra.mxu0 0.0
    %180 = vmatprep.subr.mxu0 0.0
    %181 = vmatpush1.msra.mxu0 0.0
    %182 = vmatprep.subr.mxu0 0.0
    %183 = vmatpush1.msra.mxu0 0.0
    %184 = vmatprep.subr.mxu0 0.0
    %185 = vmatpush1.msra.mxu0 0.0
    %186 = vmatprep.subr.mxu0 0.0
    %187 = vmatpush1.msra.mxu0 0.0
    %188 = vmatprep.subr.mxu0 0.0
    %189 = vmatpush1.msra.mxu0 0.0
    %190 = vmatprep.subr.mxu0 0.0
    %191 = vmatpush1.msra.mxu0 0.0
    %192 = vmatprep.mubr.f32.mxu0 0.0
    %193 = vmatmul.mubr.f32.gmra.mrb[0].mxu0 %v123
    %v194 = vpop.f32.mrb[0].mxu0
    %v195 = vadd.f32 0.0, %v194
    %v196 = vpop.f32.mrb[0].mxu0
    %197 = vmatprep.mubr.f32.mxu0 0.0
    %198 = vmatmul.mubr.f32.gmra.mrb[0].mxu0 %v126
    %v199 = vpop.f32.mrb[0].mxu0
    %v200 = vadd.f32 0.0, %v199
    %v201 = vpop.f32.mrb[0].mxu0
    %202 = vdwg.mxu0
    %v203 = vld [vmem:[#allocation6] sm:$0xff]
    %v204 = vld [vmem:[#allocation6 + $0x8] sm:$0xff]
    %v205 = vld [vmem:[#allocation6 + $0x10] sm:$0xff]
    %v206 = vld [vmem:[#allocation6 + $0x18] sm:$0xff]
    %v207 = vld [vmem:[#allocation6 + $0x20] sm:$0xff]
    %v208 = vld [vmem:[#allocation6 + $0x28] sm:$0xff]
    %v209 = vld [vmem:[#allocation6 + $0x30] sm:$0xff]
    %v210 = vld [vmem:[#allocation6 + $0x38] sm:$0xff]
    %v211 = vld [vmem:[#allocation6 + $0x40] sm:$0xff]
    %v212 = vld [vmem:[#allocation6 + $0x48] sm:$0xff]
    %v213 = vld [vmem:[#allocation6 + $0x50] sm:$0xff]
    %v214 = vld [vmem:[#allocation6 + $0x58] sm:$0xff]
    %v215 = vld [vmem:[#allocation6 + $0x60] sm:$0xff]
    %v216 = vld [vmem:[#allocation6 + $0x68] sm:$0xff]
    %v217 = vld [vmem:[#allocation6 + $0x70] sm:$0xff]
    %v218 = vld [vmem:[#allocation6 + $0x78] sm:$0xff]
    %v219 = vld [vmem:[#allocation7] sm:$0x3]
    %v221 = vlaneseq
    %v222 = vshrl.u32 %v221, 7
    %v223 = vsub.s32 0, %v222
    %v224 = vrot.slane %v219, %v223
    %v225 = vlaneseq
    %v226 = vshrl.u32 %v225, 7
    %v227 = vsub.s32 1, %v226
    %v228 = vrot.slane %v219, %v227
    %vm231 = vcmask 523264
    %v233 = vsel %vm231, %v195, 0
    %v236 = vsel %vm231, %v200, 0
    %238 = vmatprep.subr.mxu0 %v204
    %239 = vmatpush1.msra.mxu0 %v203
    %240 = vmatprep.subr.mxu0 %v206
    %241 = vmatpush1.msra.mxu0 %v205
    %242 = vmatprep.subr.mxu0 %v208
    %243 = vmatpush1.msra.mxu0 %v207
    %244 = vmatprep.subr.mxu0 %v210
    %245 = vmatpush1.msra.mxu0 %v209
    %246 = vmatprep.subr.mxu0 %v212
    %247 = vmatpush1.msra.mxu0 %v211
    %248 = vmatprep.subr.mxu0 %v214
    %249 = vmatpush1.msra.mxu0 %v213
    %250 = vmatprep.subr.mxu0 %v216
    %251 = vmatpush1.msra.mxu0 %v215
    %252 = vmatprep.subr.mxu0 %v218
    %253 = vmatpush1.msra.mxu0 %v217
    %254 = vmatprep.subr.mxu0 0.0
    %255 = vmatpush1.msra.mxu0 0.0
    %256 = vmatprep.subr.mxu0 0.0
    %257 = vmatpush1.msra.mxu0 0.0
    %258 = vmatprep.subr.mxu0 0.0
    %259 = vmatpush1.msra.mxu0 0.0
    %260 = vmatprep.subr.mxu0 0.0
    %261 = vmatpush1.msra.mxu0 0.0
    %262 = vmatprep.subr.mxu0 0.0
    %263 = vmatpush1.msra.mxu0 0.0
    %264 = vmatprep.subr.mxu0 0.0
    %265 = vmatpush1.msra.mxu0 0.0
    %266 = vmatprep.subr.mxu0 0.0
    %267 = vmatpush1.msra.mxu0 0.0
    %268 = vmatprep.subr.mxu0 0.0
    %269 = vmatpush1.msra.mxu0 0.0
    %270 = vmatprep.subr.mxu0 0.0
    %271 = vmatpush1.msra.mxu0 0.0
    %272 = vmatprep.subr.mxu0 0.0
    %273 = vmatpush1.msra.mxu0 0.0
    %274 = vmatprep.subr.mxu0 0.0
    %275 = vmatpush1.msra.mxu0 0.0
    %276 = vmatprep.subr.mxu0 0.0
    %277 = vmatpush1.msra.mxu0 0.0
    %278 = vmatprep.subr.mxu0 0.0
    %279 = vmatpush1.msra.mxu0 0.0
    %280 = vmatprep.subr.mxu0 0.0
    %281 = vmatpush1.msra.mxu0 0.0
    %282 = vmatprep.subr.mxu0 0.0
    %283 = vmatpush1.msra.mxu0 0.0
    %284 = vmatprep.subr.mxu0 0.0
    %285 = vmatpush1.msra.mxu0 0.0
    %286 = vmatprep.subr.mxu0 0.0
    %287 = vmatpush1.msra.mxu0 0.0
    %288 = vmatprep.subr.mxu0 0.0
    %289 = vmatpush1.msra.mxu0 0.0
    %290 = vmatprep.subr.mxu0 0.0
    %291 = vmatpush1.msra.mxu0 0.0
    %292 = vmatprep.subr.mxu0 0.0
    %293 = vmatpush1.msra.mxu0 0.0
    %294 = vmatprep.subr.mxu0 0.0
    %295 = vmatpush1.msra.mxu0 0.0
    %296 = vmatprep.subr.mxu0 0.0
    %297 = vmatpush1.msra.mxu0 0.0
    %298 = vmatprep.subr.mxu0 0.0
    %299 = vmatpush1.msra.mxu0 0.0
    %300 = vmatprep.subr.mxu0 0.0
    %301 = vmatpush1.msra.mxu0 0.0
    %302 = vmatprep.mubr.f32.mxu0 0.0
    %303 = vmatmul.mubr.f32.gmra.mrb[0].mxu0 %v233
    %v304 = vpop.f32.mrb[0].mxu0
    %v305 = vadd.f32 %v224, %v304
    %v306 = vpop.f32.mrb[0].mxu0
    %v307 = vadd.f32 %v228, %v306
    %308 = vmatprep.mubr.f32.mxu0 0.0
    %309 = vmatmul.mubr.f32.gmra.mrb[0].mxu0 %v236
    %v310 = vpop.f32.mrb[0].mxu0
    %v311 = vadd.f32 %v224, %v310
    %v312 = vpop.f32.mrb[0].mxu0
    %v313 = vadd.f32 %v228, %v312
    %314 = vdwg.mxu0
    %v315 = vmax.f32 %v305, -1.0
    %v316 = vmax.f32 %v307, -1.0
    %v317 = vmax.f32 %v311, -1.0
    %v318 = vmax.f32 %v313, -1.0
    %v319 = vmin.f32 %v315, 1.0
    %v320 = vmin.f32 %v316, 1.0
    %v321 = vmin.f32 %v317, 1.0
    %v322 = vmin.f32 %v318, 1.0
    %323 = vst [vmem:[%s6] sm:$0xff] %v319
    %324 = vst [vmem:[%s6 + $0x8] sm:$0xff] %v320
    %325 = vst [vmem:[%s6 + $0x10] sm:$0xff] %v321
    %326 = vst [vmem:[%s6 + $0x18] sm:$0xff] %v322
    %v327 = vld [vmem:[#allocation9] sm:$0xff]
    %v328 = vld [vmem:[#allocation9 + $0x8] sm:$0xff]
    %v329 = vld [vmem:[#allocation9 + $0x10] sm:$0xff]
    %v330 = vld [vmem:[#allocation9 + $0x18] sm:$0xff]
    %v331 = vld [vmem:[#allocation9 + $0x20] sm:$0xff]
    %v332 = vld [vmem:[#allocation9 + $0x28] sm:$0xff]
    %v333 = vld [vmem:[#allocation9 + $0x30] sm:$0xff]
    %v334 = vld [vmem:[#allocation9 + $0x38] sm:$0xff]
    %v335 = vld [vmem:[#allocation9 + $0x40] sm:$0xff]
    %v336 = vld [vmem:[#allocation9 + $0x48] sm:$0xff]
    %v337 = vld [vmem:[#allocation9 + $0x50] sm:$0xff]
    %v338 = vld [vmem:[#allocation9 + $0x58] sm:$0xff]
    %v339 = vld [vmem:[#allocation9 + $0x60] sm:$0xff]
    %v340 = vld [vmem:[#allocation9 + $0x68] sm:$0xff]
    %v341 = vld [vmem:[#allocation9 + $0x70] sm:$0xff]
    %v342 = vld [vmem:[#allocation9 + $0x78] sm:$0xff]
    %v343 = vld [vmem:[#allocation10] sm:$0x3]
    %v345 = vlaneseq
    %v346 = vshrl.u32 %v345, 7
    %v347 = vsub.s32 0, %v346
    %v348 = vrot.slane %v343, %v347
    %v349 = vlaneseq
    %v350 = vshrl.u32 %v349, 7
    %v351 = vsub.s32 1, %v350
    %v352 = vrot.slane %v343, %v351
    %v356 = vsel %vm231, %v103, 0
    %v359 = vsel %vm231, %v104, 0
    %361 = vmatprep.subr.mxu0 %v328
    %362 = vmatpush1.msra.mxu0 %v327
    %363 = vmatprep.subr.mxu0 %v330
    %364 = vmatpush1.msra.mxu0 %v329
    %365 = vmatprep.subr.mxu0 %v332
    %366 = vmatpush1.msra.mxu0 %v331
    %367 = vmatprep.subr.mxu0 %v334
    %368 = vmatpush1.msra.mxu0 %v333
    %369 = vmatprep.subr.mxu0 %v336
    %370 = vmatpush1.msra.mxu0 %v335
    %371 = vmatprep.subr.mxu0 %v338
    %372 = vmatpush1.msra.mxu0 %v337
    %373 = vmatprep.subr.mxu0 %v340
    %374 = vmatpush1.msra.mxu0 %v339
    %375 = vmatprep.subr.mxu0 %v342
    %376 = vmatpush1.msra.mxu0 %v341
    %377 = vmatprep.subr.mxu0 0.0
    %378 = vmatpush1.msra.mxu0 0.0
    %379 = vmatprep.subr.mxu0 0.0
    %380 = vmatpush1.msra.mxu0 0.0
    %381 = vmatprep.subr.mxu0 0.0
    %382 = vmatpush1.msra.mxu0 0.0
    %383 = vmatprep.subr.mxu0 0.0
    %384 = vmatpush1.msra.mxu0 0.0
    %385 = vmatprep.subr.mxu0 0.0
    %386 = vmatpush1.msra.mxu0 0.0
    %387 = vmatprep.subr.mxu0 0.0
    %388 = vmatpush1.msra.mxu0 0.0
    %389 = vmatprep.subr.mxu0 0.0
    %390 = vmatpush1.msra.mxu0 0.0
    %391 = vmatprep.subr.mxu0 0.0
    %392 = vmatpush1.msra.mxu0 0.0
    %393 = vmatprep.subr.mxu0 0.0
    %394 = vmatpush1.msra.mxu0 0.0
    %395 = vmatprep.subr.mxu0 0.0
    %396 = vmatpush1.msra.mxu0 0.0
    %397 = vmatprep.subr.mxu0 0.0
    %398 = vmatpush1.msra.mxu0 0.0
    %399 = vmatprep.subr.mxu0 0.0
    %400 = vmatpush1.msra.mxu0 0.0
    %401 = vmatprep.subr.mxu0 0.0
    %402 = vmatpush1.msra.mxu0 0.0
    %403 = vmatprep.subr.mxu0 0.0
    %404 = vmatpush1.msra.mxu0 0.0
    %405 = vmatprep.subr.mxu0 0.0
    %406 = vmatpush1.msra.mxu0 0.0
    %407 = vmatprep.subr.mxu0 0.0
    %408 = vmatpush1.msra.mxu0 0.0
    %409 = vmatprep.subr.mxu0 0.0
    %410 = vmatpush1.msra.mxu0 0.0
    %411 = vmatprep.subr.mxu0 0.0
    %412 = vmatpush1.msra.mxu0 0.0
    %413 = vmatprep.subr.mxu0 0.0
    %414 = vmatpush1.msra.mxu0 0.0
    %415 = vmatprep.subr.mxu0 0.0
    %416 = vmatpush1.msra.mxu0 0.0
    %417 = vmatprep.subr.mxu0 0.0
    %418 = vmatpush1.msra.mxu0 0.0
    %419 = vmatprep.subr.mxu0 0.0
    %420 = vmatpush1.msra.mxu0 0.0
    %421 = vmatprep.subr.mxu0 0.0
    %422 = vmatpush1.msra.mxu0 0.0
    %423 = vmatprep.subr.mxu0 0.0
    %424 = vmatpush1.msra.mxu0 0.0
    %425 = vmatprep.mubr.f32.mxu0 0.0
    %426 = vmatmul.mubr.f32.gmra.mrb[0].mxu0 %v356
    %v427 = vpop.f32.mrb[0].mxu0
    %v428 = vadd.f32 %v348, %v427
    %v429 = vpop.f32.mrb[0].mxu0
    %v430 = vadd.f32 %v352, %v429
    %431 = vmatprep.mubr.f32.mxu0 0.0
    %432 = vmatmul.mubr.f32.gmra.mrb[0].mxu0 %v359
    %v433 = vpop.f32.mrb[0].mxu0
    %v434 = vadd.f32 %v348, %v433
    %v435 = vpop.f32.mrb[0].mxu0
    %v436 = vadd.f32 %v352, %v435
    %437 = vdwg.mxu0
    %v438 = vmax.f32 %v428, 0.0
    %v439 = vmax.f32 %v430, 0.0
    %v440 = vmax.f32 %v434, 0.0
    %v441 = vmax.f32 %v436, 0.0
    %442 = vst [vmem:[%s7] sm:$0xff] %v438
    %443 = vst [vmem:[%s7 + $0x8] sm:$0xff] %v439
    %444 = vst [vmem:[%s7 + $0x10] sm:$0xff] %v440
    %445 = vst [vmem:[%s7 + $0x18] sm:$0xff] %v441
    // Predicated region
    $region50: #{mvsoppis_forward.4} parent=1 // pred_check
      _
    $region51: #{mvsoppis_forward.4} parent=1 // pred_check_branch
      %447 = sbr.rel (0) target = $region53
    $region52: #{mvsoppis_forward.4} parent=1 // pred_region
      _
    $region53: #{mvsoppis_forward.4} parent=1 // pred_fallthru
      _
    // Predicated region
    $region54: #{mvsoppis_forward.4} parent=1 // pred_check
      _
    $region55: #{mvsoppis_forward.4} parent=1 // pred_check_branch
      %449 = sbr.rel (0) target = $region57
    $region56: #{mvsoppis_forward.4} parent=1 // pred_region
      _
    $region57: #{mvsoppis_forward.4} parent=1 // pred_fallthru
      _
    // Predicated region
    $region58: #{mvsoppis_forward.4} parent=1 // pred_check
      _
    $region59: #{mvsoppis_forward.4} parent=1 // pred_check_branch
      %451 = sbr.rel (0) target = $region61
    $region60: #{mvsoppis_forward.4} parent=1 // pred_region
      _
    $region61: #{mvsoppis_forward.4} parent=1 // pred_fallthru
      _
    // Predicated region
    $region62: #{mvsoppis_forward.4} parent=1 // pred_check
      _
    $region63: #{mvsoppis_forward.4} parent=1 // pred_check_branch
      %453 = sbr.rel (0) target = $region65
    $region64: #{mvsoppis_forward.4} parent=1 // pred_region
      _
    $region65: #{mvsoppis_forward.4} parent=1 // pred_fallthru
      _
    %454 = vsyncpa [#allocation3], 1
    %455 = vsyncpa [#allocation5], 1
    %456 = vsyncpa [#allocation8], 1
    %457 = vsyncpa [#allocation11], 1

// kernel: mvsoppis_forward.6
$region0: #{mvsoppis_forward.6}
  #allocation0 [shape = 'u32[]', space=smem, size = 0x4, offset = 0x4, fixed_abs, tag = 'smem constant byte address 0x4 - core index']
  #allocation1 [shape = 'u32[144,128]{1,0:T(1,128)}', space=vmem, size = 0x12000, scoped, tag = 'internal scratch']
  %s0 = inlined_call_operand.vmem [shape: f32[16,256], index: 0, kind: input, shape index: {}]
  %s1 = inlined_call_operand.vmem [shape: f32[16,256], index: 1, kind: input, shape index: {}]
  %s2 = inlined_call_operand.hbm [shape: f32[16,16], index: 2, kind: input, shape index: {}]
  %s3 = inlined_call_operand.vmem [shape: f32[16,16], index: 3, kind: input, shape index: {}]
  %s4 = inlined_call_operand.vmem [shape: f32[16,16], index: 4, kind: input, shape index: {}]
  %s5 = inlined_call_operand.hbm [shape: f32[256,256], index: 5, kind: input, shape index: {}]
  %s6 = inlined_call_operand.vmem [shape: f32[256,1], index: 6, kind: input, shape index: {}]
  %s7 = inlined_call_operand.hbm [shape: f32[1,256], index: 7, kind: input, shape index: {}]
  %s8 = inlined_call_operand.vmem [shape: f32[1,2], index: 8, kind: input, shape index: {}]
  %s9 = inlined_call_operand.vmem [shape: f32[2,256], index: 9, kind: input, shape index: {}]
  %s10 = inlined_call_operand.hbm [shape: f32[512,256], index: 10, kind: input, shape index: {}]
  %s11 = inlined_call_operand.vmem [shape: f32[16,256], index: 11, kind: output, shape index: {}]
  %s12 = sld [smem:[#allocation0]]
  $region74: #{mvsoppis_forward.6} parent=0
    _
  %s14 = ssub.s32 1, %s12
  %s15 = scalar_select 0, %s14, %s12
  $region1: #{mvsoppis_forward.6} parent=0
    #allocation2 [shape = 'u8[8192]{0}', space=vmem, size = 0x2000, scoped, tag = 'input window, operand 2, single buffered']
    #allocation3 [shape = 's32[1]{0}', space=sflag, size = 0x4, scoped, tag = 'scoped memory for mvsoppis_forward.6']
    #allocation4 [shape = 's32[1]{0}', space=sflag, size = 0x4, scoped, tag = 'scoped memory for mvsoppis_forward.6']
    #allocation5 [shape = 'u8[262144]{0}', space=vmem, size = 0x40000, scoped, tag = 'input window, operand 5, single buffered']
    #allocation6 [shape = 's32[1]{0}', space=sflag, size = 0x4, scoped, tag = 'scoped memory for mvsoppis_forward.6']
    #allocation7 [shape = 'u8[1024]{0}', space=vmem, size = 0x400, scoped, tag = 'input window, operand 7, single buffered']
    #allocation8 [shape = 'u8[512]{0}', space=smem, size = 0x200, scoped, tag = 'input window, operand 8, single buffered']
    #allocation9 [shape = 'u8[524288]{0}', space=vmem, size = 0x80000, scoped, tag = 'input window, operand 10, single buffered']
    #allocation10 [shape = 's32[1]{0}', space=sflag, size = 0x4, scoped, tag = 'scoped memory for mvsoppis_forward.6']
    %16 = vsyncpa [#allocation3], 0
    %17 = vsyncpa [#allocation6], 0
    %18 = vsyncpa [#allocation4], 0
    %19 = vsyncpa [#allocation10], 0
    // Predicated region
    $region2: #{mvsoppis_forward.6} parent=1 // pred_check
      _
    $region3: #{mvsoppis_forward.6} parent=1 // pred_check_branch
      %21 = sbr.rel (0) target = $region5
    $region4: #{mvsoppis_forward.6} parent=1 // pred_region
      _
    $region5: #{mvsoppis_forward.6} parent=1 // pred_fallthru
      _
    // Predicated region
    $region6: #{mvsoppis_forward.6} parent=1 // pred_check
      _
    $region7: #{mvsoppis_forward.6} parent=1 // pred_check_branch
      %23 = sbr.rel (0) target = $region9
    $region8: #{mvsoppis_forward.6} parent=1 // pred_region
      _
    $region9: #{mvsoppis_forward.6} parent=1 // pred_fallthru
      _
    // Predicated region
    $region10: #{mvsoppis_forward.6} parent=1 // pred_check
      _
    $region11: #{mvsoppis_forward.6} parent=1 // pred_check_branch
      %25 = sbr.rel (0) target = $region13
    $region12: #{mvsoppis_forward.6} parent=1 // pred_region
      %s27 = ssub.s32 256, 256
      %28 = vsyncadd [#allocation3], %s27
      %s29 = sshll.u32 [#allocation2], 4
      %s30 = int_to_ptr.vmem [resolvable:$true] %s29
      %35 = dma.hbm_to_vmem [thread:$0]  %s2, 256, %s30, [#allocation3], 128, 128, 8
    $region13: #{mvsoppis_forward.6} parent=1 // pred_fallthru
      _
    // Predicated region
    $region14: #{mvsoppis_forward.6} parent=1 // pred_check
      _
    $region15: #{mvsoppis_forward.6} parent=1 // pred_check_branch
      %37 = sbr.rel (0) target = $region17
    $region16: #{mvsoppis_forward.6} parent=1 // pred_region
      _
    $region17: #{mvsoppis_forward.6} parent=1 // pred_fallthru
      _
    // Predicated region
    $region18: #{mvsoppis_forward.6} parent=1 // pred_check
      _
    $region19: #{mvsoppis_forward.6} parent=1 // pred_check_branch
      %39 = sbr.rel (0) target = $region21
    $region20: #{mvsoppis_forward.6} parent=1 // pred_region
      _
    $region21: #{mvsoppis_forward.6} parent=1 // pred_fallthru
      _
    // Predicated region
    $region22: #{mvsoppis_forward.6} parent=1 // pred_check
      _
    $region23: #{mvsoppis_forward.6} parent=1 // pred_check_branch
      %41 = sbr.rel (0) target = $region25
    $region24: #{mvsoppis_forward.6} parent=1 // pred_region
      %s43 = ssub.s32 8192, 8192
      %44 = vsyncadd [#allocation6], %s43
      %s45 = sshll.u32 [#allocation5], 4
      %s46 = int_to_ptr.vmem [resolvable:$true] %s45
      %51 = dma.hbm_to_vmem [thread:$0]  %s5, 8192, %s46, [#allocation6], 256, 256, 16
    $region25: #{mvsoppis_forward.6} parent=1 // pred_fallthru
      _
    // Predicated region
    $region26: #{mvsoppis_forward.6} parent=1 // pred_check
      _
    $region27: #{mvsoppis_forward.6} parent=1 // pred_check_branch
      %53 = sbr.rel (0) target = $region29
    $region28: #{mvsoppis_forward.6} parent=1 // pred_region
      _
    $region29: #{mvsoppis_forward.6} parent=1 // pred_fallthru
      _
    // Predicated region
    $region30: #{mvsoppis_forward.6} parent=1 // pred_check
      _
    $region31: #{mvsoppis_forward.6} parent=1 // pred_check_branch
      %55 = sbr.rel (0) target = $region33
    $region32: #{mvsoppis_forward.6} parent=1 // pred_region
      %s57 = ssub.s32 32, 32
      %58 = vsyncadd [#allocation6], %s57
      %s60 = sshll.u32 [#allocation7], 4
      %s61 = int_to_ptr.vmem [resolvable:$true] %s60
      %63 = dma.hbm_to_vmem [thread:$0]  %s7, 32, %s61, [#allocation6]
    $region33: #{mvsoppis_forward.6} parent=1 // pred_fallthru
      _
    // Predicated region
    $region34: #{mvsoppis_forward.6} parent=1 // pred_check
      _
    $region35: #{mvsoppis_forward.6} parent=1 // pred_check_branch
      %65 = sbr.rel (0) target = $region37
    $region36: #{mvsoppis_forward.6} parent=1 // pred_region
      %s67 = ssub.s32 16, 16
      %68 = vsyncadd [#allocation4], %s67
      %s70 = sshll.u32 %s8, 4
      %s71 = int_to_ptr.vmem [resolvable:$true] %s70
      %73 = dma.vmem_to_smem %s71, 16, [#allocation8], [#allocation4]
    $region37: #{mvsoppis_forward.6} parent=1 // pred_fallthru
      _
    // Predicated region
    $region38: #{mvsoppis_forward.6} parent=1 // pred_check
      _
    $region39: #{mvsoppis_forward.6} parent=1 // pred_check_branch
      %75 = sbr.rel (0) target = $region41
    $region40: #{mvsoppis_forward.6} parent=1 // pred_region
      _
    $region41: #{mvsoppis_forward.6} parent=1 // pred_fallthru
      _
    // Predicated region
    $region42: #{mvsoppis_forward.6} parent=1 // pred_check
      _
    $region43: #{mvsoppis_forward.6} parent=1 // pred_check_branch
      %77 = sbr.rel (0) target = $region45
    $region44: #{mvsoppis_forward.6} parent=1 // pred_region
      %s79 = ssub.s32 16384, 16384
      %80 = vsyncadd [#allocation10], %s79
      %s81 = sshll.u32 [#allocation9], 4
      %s82 = int_to_ptr.vmem [resolvable:$true] %s81
      %87 = dma.hbm_to_vmem [thread:$0]  %s10, 16384, %s82, [#allocation10], 256, 256, 16
    $region45: #{mvsoppis_forward.6} parent=1 // pred_fallthru
      _
    // Predicated region
    $region46: #{mvsoppis_forward.6} parent=1 // pred_check
      _
    $region47: #{mvsoppis_forward.6} parent=1 // pred_check_branch
      %89 = sbr.rel (0) target = $region49
    $region48: #{mvsoppis_forward.6} parent=1 // pred_region
      %90 = dma.done [#allocation3], 256
    $region49: #{mvsoppis_forward.6} parent=1 // pred_fallthru
      _
    // Predicated region
    $region50: #{mvsoppis_forward.6} parent=1 // pred_check
      _
    $region51: #{mvsoppis_forward.6} parent=1 // pred_check_branch
      %92 = sbr.rel (0) target = $region53
    $region52: #{mvsoppis_forward.6} parent=1 // pred_region
      %93 = dma.done [#allocation6], 8192
    $region53: #{mvsoppis_forward.6} parent=1 // pred_fallthru
      _
    // Predicated region
    $region54: #{mvsoppis_forward.6} parent=1 // pred_check
      _
    $region55: #{mvsoppis_forward.6} parent=1 // pred_check_branch
      %95 = sbr.rel (0) target = $region57
    $region56: #{mvsoppis_forward.6} parent=1 // pred_region
      %96 = dma.done [#allocation6], 32
    $region57: #{mvsoppis_forward.6} parent=1 // pred_fallthru
      _
    // Predicated region
    $region58: #{mvsoppis_forward.6} parent=1 // pred_check
      _
    $region59: #{mvsoppis_forward.6} parent=1 // pred_check_branch
      %98 = sbr.rel (0) target = $region61
    $region60: #{mvsoppis_forward.6} parent=1 // pred_region
      %99 = dma.done [#allocation4], 16
    $region61: #{mvsoppis_forward.6} parent=1 // pred_fallthru
      _
    // Predicated region
    $region62: #{mvsoppis_forward.6} parent=1 // pred_check
      _
    $region63: #{mvsoppis_forward.6} parent=1 // pred_check_branch
      %101 = sbr.rel (0) target = $region65
    $region64: #{mvsoppis_forward.6} parent=1 // pred_region
      %102 = dma.done [#allocation10], 16384
    $region65: #{mvsoppis_forward.6} parent=1 // pred_fallthru
      _
    %103 = sfence
    %v104 = vld [vmem:[%s0] sm:$0xff]
    %v105 = vld [vmem:[%s0 + $0x8] sm:$0xff]
    %v106 = vld [vmem:[%s0 + $0x10] sm:$0xff]
    %v107 = vld [vmem:[%s0 + $0x18] sm:$0xff]
    %v108 = vld [vmem:[%s1] sm:$0xff]
    %v109 = vld [vmem:[%s1 + $0x8] sm:$0xff]
    %v110 = vld [vmem:[%s1 + $0x10] sm:$0xff]
    %v111 = vld [vmem:[%s1 + $0x18] sm:$0xff]
    %v112 = vld [vmem:[#allocation2] sm:$0xff]
    %v113 = vld [vmem:[#allocation2 + $0x8] sm:$0xff]
    %v114 = vld [vmem:[%s3] sm:$0xff]
    %v115 = vld [vmem:[%s3 + $0x8] sm:$0xff]
    %v116 = vld [vmem:[%s4] sm:$0xff]
    %v117 = vld [vmem:[%s4 + $0x8] sm:$0xff]
    %v118 = vld [vmem:[#allocation5] sm:$0xff]
    %v119 = vld [vmem:[#allocation5 + $0x8] sm:$0xff]
    %v120 = vld [vmem:[#allocation5 + $0x10] sm:$0xff]
    %v121 = vld [vmem:[#allocation5 + $0x18] sm:$0xff]
    %v122 = vld [vmem:[#allocation5 + $0x20] sm:$0xff]
    %v123 = vld [vmem:[#allocation5 + $0x28] sm:$0xff]
    %v124 = vld [vmem:[#allocation5 + $0x30] sm:$0xff]
    %v125 = vld [vmem:[#allocation5 + $0x38] sm:$0xff]
    %v126 = vld [vmem:[#allocation5 + $0x40] sm:$0xff]
    %v127 = vld [vmem:[#allocation5 + $0x48] sm:$0xff]
    %v128 = vld [vmem:[#allocation5 + $0x50] sm:$0xff]
    %v129 = vld [vmem:[#allocation5 + $0x58] sm:$0xff]
    %v130 = vld [vmem:[#allocation5 + $0x60] sm:$0xff]
    %v131 = vld [vmem:[#allocation5 + $0x68] sm:$0xff]
    %v132 = vld [vmem:[#allocation5 + $0x70] sm:$0xff]
    %v133 = vld [vmem:[#allocation5 + $0x78] sm:$0xff]
    %v134 = vld [vmem:[#allocation5 + $0x80] sm:$0xff]
    %v135 = vld [vmem:[#allocation5 + $0x88] sm:$0xff]
    %v136 = vld [vmem:[#allocation5 + $0x90] sm:$0xff]
    %v137 = vld [vmem:[#allocation5 + $0x98] sm:$0xff]
    %v138 = vld [vmem:[#allocation5 + $0xa0] sm:$0xff]
    %v139 = vld [vmem:[#allocation5 + $0xa8] sm:$0xff]
    %v140 = vld [vmem:[#allocation5 + $0xb0] sm:$0xff]
    %v141 = vld [vmem:[#allocation5 + $0xb8] sm:$0xff]
    %v142 = vld [vmem:[#allocation5 + $0xc0] sm:$0xff]
    %v143 = vld [vmem:[#allocation5 + $0xc8] sm:$0xff]
    %v144 = vld [vmem:[#allocation5 + $0xd0] sm:$0xff]
    %v145 = vld [vmem:[#allocation5 + $0xd8] sm:$0xff]
    %v146 = vld [vmem:[#allocation5 + $0xe0] sm:$0xff]
    %v147 = vld [vmem:[#allocation5 + $0xe8] sm:$0xff]
    %v148 = vld [vmem:[#allocation5 + $0xf0] sm:$0xff]
    %v149 = vld [vmem:[#allocation5 + $0xf8] sm:$0xff]
    %v150 = vld [vmem:[#allocation5 + $0x100] sm:$0xff]
    %v151 = vld [vmem:[#allocation5 + $0x108] sm:$0xff]
    %v152 = vld [vmem:[#allocation5 + $0x110] sm:$0xff]
    %v153 = vld [vmem:[#allocation5 + $0x118] sm:$0xff]
    %v154 = vld [vmem:[#allocation5 + $0x120] sm:$0xff]
    %v155 = vld [vmem:[#allocation5 + $0x128] sm:$0xff]
    %v156 = vld [vmem:[#allocation5 + $0x130] sm:$0xff]
    %v157 = vld [vmem:[#allocation5 + $0x138] sm:$0xff]
    %v158 = vld [vmem:[#allocation5 + $0x140] sm:$0xff]
    %v159 = vld [vmem:[#allocation5 + $0x148] sm:$0xff]
    %v160 = vld [vmem:[#allocation5 + $0x150] sm:$0xff]
    %v161 = vld [vmem:[#allocation5 + $0x158] sm:$0xff]
    %v162 = vld [vmem:[#allocation5 + $0x160] sm:$0xff]
    %v163 = vld [vmem:[#allocation5 + $0x168] sm:$0xff]
    %v164 = vld [vmem:[#allocation5 + $0x170] sm:$0xff]
    %v165 = vld [vmem:[#allocation5 + $0x178] sm:$0xff]
    %v166 = vld [vmem:[#allocation5 + $0x180] sm:$0xff]
    %v167 = vld [vmem:[#allocation5 + $0x188] sm:$0xff]
    %v168 = vld [vmem:[#allocation5 + $0x190] sm:$0xff]
    %v169 = vld [vmem:[#allocation5 + $0x198] sm:$0xff]
    %v170 = vld [vmem:[#allocation5 + $0x1a0] sm:$0xff]
    %v171 = vld [vmem:[#allocation5 + $0x1a8] sm:$0xff]
    %v172 = vld [vmem:[#allocation5 + $0x1b0] sm:$0xff]
    %v173 = vld [vmem:[#allocation5 + $0x1b8] sm:$0xff]
    %v174 = vld [vmem:[#allocation5 + $0x1c0] sm:$0xff]
    %v175 = vld [vmem:[#allocation5 + $0x1c8] sm:$0xff]
    %v176 = vld [vmem:[#allocation5 + $0x1d0] sm:$0xff]
    %v177 = vld [vmem:[#allocation5 + $0x1d8] sm:$0xff]
    %v178 = vld [vmem:[#allocation5 + $0x1e0] sm:$0xff]
    %v179 = vld [vmem:[#allocation5 + $0x1e8] sm:$0xff]
    %v180 = vld [vmem:[#allocation5 + $0x1f0] sm:$0xff]
    %v181 = vld [vmem:[#allocation5 + $0x1f8] sm:$0xff]
    %182 = vmatprep.subr.mxu0 %v119
    %183 = vmatpush1.msra.mxu0 %v118
    %184 = vmatprep.subr.mxu0 %v121
    %185 = vmatpush1.msra.mxu0 %v120
    %186 = vmatprep.subr.mxu0 %v123
    %187 = vmatpush1.msra.mxu0 %v122
    %188 = vmatprep.subr.mxu0 %v125
    %189 = vmatpush1.msra.mxu0 %v124
    %190 = vmatprep.subr.mxu0 %v127
    %191 = vmatpush1.msra.mxu0 %v126
    %192 = vmatprep.subr.mxu0 %v129
    %193 = vmatpush1.msra.mxu0 %v128
    %194 = vmatprep.subr.mxu0 %v131
    %195 = vmatpush1.msra.mxu0 %v130
    %196 = vmatprep.subr.mxu0 %v133
    %197 = vmatpush1.msra.mxu0 %v132
    %198 = vmatprep.subr.mxu0 %v135
    %199 = vmatpush1.msra.mxu0 %v134
    %200 = vmatprep.subr.mxu0 %v137
    %201 = vmatpush1.msra.mxu0 %v136
    %202 = vmatprep.subr.mxu0 %v139
    %203 = vmatpush1.msra.mxu0 %v138
    %204 = vmatprep.subr.mxu0 %v141
    %205 = vmatpush1.msra.mxu0 %v140
    %206 = vmatprep.subr.mxu0 %v143
    %207 = vmatpush1.msra.mxu0 %v142
    %208 = vmatprep.subr.mxu0 %v145
    %209 = vmatpush1.msra.mxu0 %v144
    %210 = vmatprep.subr.mxu0 %v147
    %211 = vmatpush1.msra.mxu0 %v146
    %212 = vmatprep.subr.mxu0 %v149
    %213 = vmatpush1.msra.mxu0 %v148
    %214 = vmatprep.subr.mxu0 %v151
    %215 = vmatpush1.msra.mxu0 %v150
    %216 = vmatprep.subr.mxu0 %v153
    %217 = vmatpush1.msra.mxu0 %v152
    %218 = vmatprep.subr.mxu0 %v155
    %219 = vmatpush1.msra.mxu0 %v154
    %220 = vmatprep.subr.mxu0 %v157
    %221 = vmatpush1.msra.mxu0 %v156
    %222 = vmatprep.subr.mxu0 %v159
    %223 = vmatpush1.msra.mxu0 %v158
    %224 = vmatprep.subr.mxu0 %v161
    %225 = vmatpush1.msra.mxu0 %v160
    %226 = vmatprep.subr.mxu0 %v163
    %227 = vmatpush1.msra.mxu0 %v162
    %228 = vmatprep.subr.mxu0 %v165
    %229 = vmatpush1.msra.mxu0 %v164
    %230 = vmatprep.subr.mxu0 %v167
    %231 = vmatpush1.msra.mxu0 %v166
    %232 = vmatprep.subr.mxu0 %v169
    %233 = vmatpush1.msra.mxu0 %v168
    %234 = vmatprep.subr.mxu0 %v171
    %235 = vmatpush1.msra.mxu0 %v170
    %236 = vmatprep.subr.mxu0 %v173
    %237 = vmatpush1.msra.mxu0 %v172
    %238 = vmatprep.subr.mxu0 %v175
    %239 = vmatpush1.msra.mxu0 %v174
    %240 = vmatprep.subr.mxu0 %v177
    %241 = vmatpush1.msra.mxu0 %v176
    %242 = vmatprep.subr.mxu0 %v179
    %243 = vmatpush1.msra.mxu0 %v178
    %244 = vmatprep.subr.mxu0 %v181
    %245 = vmatpush1.msra.mxu0 %v180
    %246 = vmatprep.mubr.f32.mxu0 %v105
    %247 = vmatmul.mubr.f32.gmra.mrb[0].mxu0 %v104
    %v248 = vpop.f32.mrb[0].mxu0
    %v249 = vadd.f32 0.0, %v248
    %v250 = vpop.f32.mrb[0].mxu0
    %v251 = vadd.f32 0.0, %v250
    %252 = vmatprep.mubr.f32.mxu0 %v107
    %253 = vmatmul.mubr.f32.gmra.mrb[0].mxu0 %v106
    %v254 = vpop.f32.mrb[0].mxu0
    %v255 = vadd.f32 0.0, %v254
    %v256 = vpop.f32.mrb[0].mxu0
    %v257 = vadd.f32 0.0, %v256
    %258 = vdwg.mxu0
    %v259 = vld [vmem:[%s6] sm:$0xff]
    %v260 = vld [vmem:[%s6 + $0x8] sm:$0xff]
    %v261 = vld [vmem:[%s6 + $0x10] sm:$0xff]
    %v262 = vld [vmem:[%s6 + $0x18] sm:$0xff]
    %v263 = vld [vmem:[%s6 + $0x20] sm:$0xff]
    %v264 = vld [vmem:[%s6 + $0x28] sm:$0xff]
    %v265 = vld [vmem:[%s6 + $0x30] sm:$0xff]
    %v266 = vld [vmem:[%s6 + $0x38] sm:$0xff]
    %v267 = vld [vmem:[%s6 + $0x40] sm:$0xff]
    %v268 = vld [vmem:[%s6 + $0x48] sm:$0xff]
    %v269 = vld [vmem:[%s6 + $0x50] sm:$0xff]
    %v270 = vld [vmem:[%s6 + $0x58] sm:$0xff]
    %v271 = vld [vmem:[%s6 + $0x60] sm:$0xff]
    %v272 = vld [vmem:[%s6 + $0x68] sm:$0xff]
    %v273 = vld [vmem:[%s6 + $0x70] sm:$0xff]
    %v274 = vld [vmem:[%s6 + $0x78] sm:$0xff]
    %v275 = vld [vmem:[%s6 + $0x80] sm:$0xff]
    %v276 = vld [vmem:[%s6 + $0x88] sm:$0xff]
    %v277 = vld [vmem:[%s6 + $0x90] sm:$0xff]
    %v278 = vld [vmem:[%s6 + $0x98] sm:$0xff]
    %v279 = vld [vmem:[%s6 + $0xa0] sm:$0xff]
    %v280 = vld [vmem:[%s6 + $0xa8] sm:$0xff]
    %v281 = vld [vmem:[%s6 + $0xb0] sm:$0xff]
    %v282 = vld [vmem:[%s6 + $0xb8] sm:$0xff]
    %v283 = vld [vmem:[%s6 + $0xc0] sm:$0xff]
    %v284 = vld [vmem:[%s6 + $0xc8] sm:$0xff]
    %v285 = vld [vmem:[%s6 + $0xd0] sm:$0xff]
    %v286 = vld [vmem:[%s6 + $0xd8] sm:$0xff]
    %v287 = vld [vmem:[%s6 + $0xe0] sm:$0xff]
    %v288 = vld [vmem:[%s6 + $0xe8] sm:$0xff]
    %v289 = vld [vmem:[%s6 + $0xf0] sm:$0xff]
    %v290 = vld [vmem:[%s6 + $0xf8] sm:$0xff]
    %291 = vmatprep.subr.mxu0 0.0
    %292 = vmatpush1.msra.mxu0 %v259
    %293 = vmatprep.subr.mxu0 0.0
    %294 = vmatpush1.msra.mxu0 %v260
    %295 = vmatprep.subr.mxu0 0.0
    %296 = vmatpush1.msra.mxu0 %v261
    %297 = vmatprep.subr.mxu0 0.0
    %298 = vmatpush1.msra.mxu0 %v262
    %299 = vmatprep.subr.mxu0 0.0
    %300 = vmatpush1.msra.mxu0 %v263
    %301 = vmatprep.subr.mxu0 0.0
    %302 = vmatpush1.msra.mxu0 %v264
    %303 = vmatprep.subr.mxu0 0.0
    %304 = vmatpush1.msra.mxu0 %v265
    %305 = vmatprep.subr.mxu0 0.0
    %306 = vmatpush1.msra.mxu0 %v266
    %307 = vmatprep.subr.mxu0 0.0
    %308 = vmatpush1.msra.mxu0 %v267
    %309 = vmatprep.subr.mxu0 0.0
    %310 = vmatpush1.msra.mxu0 %v268
    %311 = vmatprep.subr.mxu0 0.0
    %312 = vmatpush1.msra.mxu0 %v269
    %313 = vmatprep.subr.mxu0 0.0
    %314 = vmatpush1.msra.mxu0 %v270
    %315 = vmatprep.subr.mxu0 0.0
    %316 = vmatpush1.msra.mxu0 %v271
    %317 = vmatprep.subr.mxu0 0.0
    %318 = vmatpush1.msra.mxu0 %v272
    %319 = vmatprep.subr.mxu0 0.0
    %320 = vmatpush1.msra.mxu0 %v273
    %321 = vmatprep.subr.mxu0 0.0
    %322 = vmatpush1.msra.mxu0 %v274
    %323 = vmatprep.subr.mxu0 0.0
    %324 = vmatpush1.msra.mxu0 %v275
    %325 = vmatprep.subr.mxu0 0.0
    %326 = vmatpush1.msra.mxu0 %v276
    %327 = vmatprep.subr.mxu0 0.0
    %328 = vmatpush1.msra.mxu0 %v277
    %329 = vmatprep.subr.mxu0 0.0
    %330 = vmatpush1.msra.mxu0 %v278
    %331 = vmatprep.subr.mxu0 0.0
    %332 = vmatpush1.msra.mxu0 %v279
    %333 = vmatprep.subr.mxu0 0.0
    %334 = vmatpush1.msra.mxu0 %v280
    %335 = vmatprep.subr.mxu0 0.0
    %336 = vmatpush1.msra.mxu0 %v281
    %337 = vmatprep.subr.mxu0 0.0
    %338 = vmatpush1.msra.mxu0 %v282
    %339 = vmatprep.subr.mxu0 0.0
    %340 = vmatpush1.msra.mxu0 %v283
    %341 = vmatprep.subr.mxu0 0.0
    %342 = vmatpush1.msra.mxu0 %v284
    %343 = vmatprep.subr.mxu0 0.0
    %344 = vmatpush1.msra.mxu0 %v285
    %345 = vmatprep.subr.mxu0 0.0
    %346 = vmatpush1.msra.mxu0 %v286
    %347 = vmatprep.subr.mxu0 0.0
    %348 = vmatpush1.msra.mxu0 %v287
    %349 = vmatprep.subr.mxu0 0.0
    %350 = vmatpush1.msra.mxu0 %v288
    %351 = vmatprep.subr.mxu0 0.0
    %352 = vmatpush1.msra.mxu0 %v289
    %353 = vmatprep.subr.mxu0 0.0
    %354 = vmatpush1.msra.mxu0 %v290
    %355 = vmatprep.mubr.f32.mxu0 %v251
    %356 = vmatmul.mubr.f32.gmra.mrb[0].mxu0 %v249
    %v357 = vpop.f32.mrb[0].mxu0
    %v358 = vadd.f32 0.0, %v357
    %v359 = vpop.f32.mrb[0].mxu0
    %360 = vmatprep.mubr.f32.mxu0 %v257
    %361 = vmatmul.mubr.f32.gmra.mrb[0].mxu0 %v255
    %v362 = vpop.f32.mrb[0].mxu0
    %v363 = vadd.f32 0.0, %v362
    %v364 = vpop.f32.mrb[0].mxu0
    %365 = vdwg.mxu0
    %v366 = vld [vmem:[#allocation7] sm:$0x3]
    %v368 = vlaneseq
    %v369 = vshrl.u32 %v368, 7
    %v370 = vsub.s32 0, %v369
    %v371 = vrot.slane %v366, %v370
    %v372 = vlaneseq
    %v373 = vshrl.u32 %v372, 7
    %v374 = vsub.s32 1, %v373
    %v375 = vrot.slane %v366, %v374
    %378 = vmatprep.subr.mxu0 %v251
    %379 = vmatpush1.xpose.msra.mxu0 %v249
    %380 = vmatprep.subr.mxu0 %v257
    %381 = vmatpush1.xpose.msra.mxu0 %v255
    %382 = vmatprep.subr.mxu0 0.0
    %383 = vmatpush1.xpose.msra.mxu0 0.0
    %384 = vmatprep.subr.mxu0 0.0
    %385 = vmatpush1.xpose.msra.mxu0 0.0
    %386 = vmatprep.subr.mxu0 0.0
    %387 = vmatpush1.xpose.msra.mxu0 0.0
    %388 = vmatprep.subr.mxu0 0.0
    %389 = vmatpush1.xpose.msra.mxu0 0.0
    %390 = vmatprep.subr.mxu0 0.0
    %391 = vmatpush1.xpose.msra.mxu0 0.0
    %392 = vmatprep.subr.mxu0 0.0
    %393 = vmatpush1.xpose.msra.mxu0 0.0
    %394 = vmatprep.subr.mxu0 0.0
    %395 = vmatpush1.xpose.msra.mxu0 0.0
    %396 = vmatprep.subr.mxu0 0.0
    %397 = vmatpush1.xpose.msra.mxu0 0.0
    %398 = vmatprep.subr.mxu0 0.0
    %399 = vmatpush1.xpose.msra.mxu0 0.0
    %400 = vmatprep.subr.mxu0 0.0
    %401 = vmatpush1.xpose.msra.mxu0 0.0
    %402 = vmatprep.subr.mxu0 0.0
    %403 = vmatpush1.xpose.msra.mxu0 0.0
    %404 = vmatprep.subr.mxu0 0.0
    %405 = vmatpush1.xpose.msra.mxu0 0.0
    %406 = vmatprep.subr.mxu0 0.0
    %407 = vmatpush1.xpose.msra.mxu0 0.0
    %408 = vmatprep.subr.mxu0 0.0
    %409 = vmatpush1.xpose.msra.mxu0 0.0
    %410 = vmatprep.subr.mxu0 0.0
    %411 = vmatpush1.xpose.msra.mxu0 0.0
    %412 = vmatprep.subr.mxu0 0.0
    %413 = vmatpush1.xpose.msra.mxu0 0.0
    %414 = vmatprep.subr.mxu0 0.0
    %415 = vmatpush1.xpose.msra.mxu0 0.0
    %416 = vmatprep.subr.mxu0 0.0
    %417 = vmatpush1.xpose.msra.mxu0 0.0
    %418 = vmatprep.subr.mxu0 0.0
    %419 = vmatpush1.xpose.msra.mxu0 0.0
    %420 = vmatprep.subr.mxu0 0.0
    %421 = vmatpush1.xpose.msra.mxu0 0.0
    %422 = vmatprep.subr.mxu0 0.0
    %423 = vmatpush1.xpose.msra.mxu0 0.0
    %424 = vmatprep.subr.mxu0 0.0
    %425 = vmatpush1.xpose.msra.mxu0 0.0
    %426 = vmatprep.subr.mxu0 0.0
    %427 = vmatpush1.xpose.msra.mxu0 0.0
    %428 = vmatprep.subr.mxu0 0.0
    %429 = vmatpush1.xpose.msra.mxu0 0.0
    %430 = vmatprep.subr.mxu0 0.0
    %431 = vmatpush1.xpose.msra.mxu0 0.0
    %432 = vmatprep.subr.mxu0 0.0
    %433 = vmatpush1.xpose.msra.mxu0 0.0
    %434 = vmatprep.subr.mxu0 0.0
    %435 = vmatpush1.xpose.msra.mxu0 0.0
    %436 = vmatprep.subr.mxu0 0.0
    %437 = vmatpush1.xpose.msra.mxu0 0.0
    %438 = vmatprep.subr.mxu0 0.0
    %439 = vmatpush1.xpose.msra.mxu0 0.0
    %440 = vmatprep.subr.mxu0 0.0
    %441 = vmatpush1.xpose.msra.mxu0 0.0
    %442 = vmatprep.mubr.f32.mxu0 %v375
    %443 = vmatmul.mubr.f32.gmra.mrb[0].mxu0 %v371
    %v444 = vpop.f32.mrb[0].mxu0
    %v445 = vadd.f32 0.0, %v444
    %v446 = vpop.f32.mrb[0].mxu0
    %447 = vdwg.mxu0
    %449 = vset.pattern.permute.xlu0 0
    %450 = vperm.xlu0 %449, %v358
    %v451 = vpop.permute.xlu0 %450
    %454 = vset.pattern.permute.xlu0 0
    %455 = vperm.xlu0 %454, %v363
    %v456 = vpop.permute.xlu0 %455
    %v458 = vlaneseq
    %v459 = vshrl.u32 %v458, 7
    %v460 = vsub.s32 0, %v459
    %v461 = vrot.slane %v445, %v460
    %v462 = vadd.f32 %v451, %v461
    %v463 = vadd.f32 %v456, %v461
    %s464 = sld [smem:[#allocation8]]
    %v465 = vstv %s464
    %v466 = vmul.f32 %v114, %v465
    %v467 = vmul.f32 %v115, %v465
    %v468 = vadd.f32 %v462, %v466
    %v469 = vadd.f32 %v463, %v467
    %s470 = sld [smem:[#allocation8 + $0x1]]
    %v471 = vstv %s470
    %v472 = vmul.f32 %v116, %v471
    %v473 = vmul.f32 %v117, %v471
    %v474 = vadd.f32 %v468, %v472
    %v475 = vadd.f32 %v469, %v473
    %vm476 = vcmp.gt.f32.partialorder %v474, 0.0
    %vm477 = vcmp.gt.f32.partialorder %v475, 0.0
    %v478 = vmul.f32 %v474, 0.01
    %v479 = vmul.f32 %v475, 0.01
    %v480 = vsel %vm476, %v474, %v478
    %v481 = vsel %vm477, %v475, %v479
    %vm482 = vcmp.gt.f32.partialorder %v112, 0.0
    %vm483 = vcmp.gt.f32.partialorder %v113, 0.0
    %v484 = vsel %vm482, %v480, -1e+30
    %v485 = vsel %vm483, %v481, -1e+30
    %vm486 = vcmask 130048
    %v487 = vsel %vm486, %v484, -inf
    %v488 = vsel %vm486, %v485, -inf
    %v489 = vmax.f32 %v487, %v488
    %v490 = vrot.slane %v489, 4
    %v491 = vmax.f32 %v489, %v490
    %v492 = vrot.slane %v491, 2
    %v493 = vmax.f32 %v491, %v492
    %v494 = vrot.slane %v493, 1
    %v495 = vmax.f32 %v493, %v494
    %v496 = vsub.f32 %v484, %v495
    %v497 = vsub.f32 %v485, %v495
    %v498 = vmul.f32 %v496, 1.442695
    %v499 = vpow.pop %v498
    %v500 = vmul.f32 %v497, 1.442695
    %v501 = vpow.pop %v500
    %v502 = vsel %vm486, %v499, 0.0
    %v503 = vsel %vm486, %v501, 0.0
    %v504 = vadd.f32 %v502, %v503
    %v505 = vrot.slane %v504, 4
    %v506 = vadd.f32 %v504, %v505
    %v507 = vrot.slane %v506, 2
    %v508 = vadd.f32 %v506, %v507
    %v509 = vrot.slane %v508, 1
    %v510 = vadd.f32 %v508, %v509
    %v511 = vrcp.pop %v510
    %v512 = vmul.f32 %v499, %v511
    %v513 = vmul.f32 %v501, %v511
    %v514 = vmul.f32 %v512, %v114
    %v515 = vmul.f32 %v513, %v115
    %v516 = vsel %vm486, %v514, 0.0
    %v517 = vsel %vm486, %v515, 0.0
    %v518 = vadd.f32 %v516, %v517
    %v519 = vrot.slane %v518, 4
    %v520 = vadd.f32 %v518, %v519
    %v521 = vrot.slane %v520, 2
    %v522 = vadd.f32 %v520, %v521
    %v523 = vrot.slane %v522, 1
    %v524 = vadd.f32 %v522, %v523
    %v525 = vmul.f32 %v512, %v116
    %v526 = vmul.f32 %v513, %v117
    %v527 = vsel %vm486, %v525, 0.0
    %v528 = vsel %vm486, %v526, 0.0
    %v529 = vadd.f32 %v527, %v528
    %v530 = vrot.slane %v529, 4
    %v531 = vadd.f32 %v529, %v530
    %v532 = vrot.slane %v531, 2
    %v533 = vadd.f32 %v531, %v532
    %v534 = vrot.slane %v533, 1
    %v535 = vadd.f32 %v533, %v534
    %vm536 = vcmask 1040384
    %v537 = vsel %vm536, %v524, %v535
    %v538 = vld [vmem:[%s9] sm:$0xf]
    %539 = vxpose.xlu0.b32.start [1/16] %v537, 128
    %540 = vxpose.xlu0.b32.cont [2/16] 0.0, 128
    %541 = vxpose.xlu0.b32.cont [3/16] 0.0, 128
    %542 = vxpose.xlu0.b32.cont [4/16] 0.0, 128
    %543 = vxpose.xlu0.b32.cont [5/16] 0.0, 128
    %544 = vxpose.xlu0.b32.cont [6/16] 0.0, 128
    %545 = vxpose.xlu0.b32.cont [7/16] 0.0, 128
    %546 = vxpose.xlu0.b32.cont [8/16] 0.0, 128
    %547 = vxpose.xlu0.b32.cont [9/16] 0.0, 128
    %548 = vxpose.xlu0.b32.cont [10/16] 0.0, 128
    %549 = vxpose.xlu0.b32.cont [11/16] 0.0, 128
    %550 = vxpose.xlu0.b32.cont [12/16] 0.0, 128
    %551 = vxpose.xlu0.b32.cont [13/16] 0.0, 128
    %552 = vxpose.xlu0.b32.cont [14/16] 0.0, 128
    %553 = vxpose.xlu0.b32.cont [15/16] 0.0, 128
    %554 = vxpose.xlu0.b32.end [16/16] 0.0, 128
    %v555 = vpop.trf.xlu0
    %v556 = vpop.trf.xlu0
    %v557 = vpop.trf.xlu0
    %v558 = vpop.trf.xlu0
    %v559 = vpop.trf.xlu0
    %v560 = vpop.trf.xlu0
    %v561 = vpop.trf.xlu0
    %v562 = vpop.trf.xlu0
    %v563 = vpop.trf.xlu0
    %v564 = vpop.trf.xlu0
    %v565 = vpop.trf.xlu0
    %v566 = vpop.trf.xlu0
    %v567 = vpop.trf.xlu0
    %v568 = vpop.trf.xlu0
    %v569 = vpop.trf.xlu0
    %v570 = vpop.trf.xlu0
    %v573 = vunpack.c.l.s4 1983009808
    %v574 = vunpack.c.0.s8 %v573
    %v575 = vlaneseq
    %v576 = vshrl.u32 %v575, 7
    %v577 = vsub.s32 %v574, %v576
    %v578 = vrot.slane %v538, %v577
    %v579 = vcombine.high %v578, %v578
    %vm580 = vcmask 15360
    %v582 = vsel %vm580, %v555, 0
    %v585 = vsel %vm580, %v556, 0
    %vm587 = vcmask 1041408
    %v588 = vsel %vm587, %v578, 0
    %v590 = vsel %vm587, %v579, 0
    %592 = vmatprep.subr.mxu0 %v590
    %593 = vmatpush1.msra.mxu0 %v588
    %594 = vmatprep.subr.mxu0 0.0
    %595 = vmatpush1.msra.mxu0 0.0
    %596 = vmatprep.subr.mxu0 0.0
    %597 = vmatpush1.msra.mxu0 0.0
    %598 = vmatprep.subr.mxu0 0.0
    %599 = vmatpush1.msra.mxu0 0.0
    %600 = vmatprep.subr.mxu0 0.0
    %601 = vmatpush1.msra.mxu0 0.0
    %602 = vmatprep.subr.mxu0 0.0
    %603 = vmatpush1.msra.mxu0 0.0
    %604 = vmatprep.subr.mxu0 0.0
    %605 = vmatpush1.msra.mxu0 0.0
    %606 = vmatprep.subr.mxu0 0.0
    %607 = vmatpush1.msra.mxu0 0.0
    %608 = vmatprep.subr.mxu0 0.0
    %609 = vmatpush1.msra.mxu0 0.0
    %610 = vmatprep.subr.mxu0 0.0
    %611 = vmatpush1.msra.mxu0 0.0
    %612 = vmatprep.subr.mxu0 0.0
    %613 = vmatpush1.msra.mxu0 0.0
    %614 = vmatprep.subr.mxu0 0.0
    %615 = vmatpush1.msra.mxu0 0.0
    %616 = vmatprep.subr.mxu0 0.0
    %617 = vmatpush1.msra.mxu0 0.0
    %618 = vmatprep.subr.mxu0 0.0
    %619 = vmatpush1.msra.mxu0 0.0
    %620 = vmatprep.subr.mxu0 0.0
    %621 = vmatpush1.msra.mxu0 0.0
    %622 = vmatprep.subr.mxu0 0.0
    %623 = vmatpush1.msra.mxu0 0.0
    %624 = vmatprep.subr.mxu0 0.0
    %625 = vmatpush1.msra.mxu0 0.0
    %626 = vmatprep.subr.mxu0 0.0
    %627 = vmatpush1.msra.mxu0 0.0
    %628 = vmatprep.subr.mxu0 0.0
    %629 = vmatpush1.msra.mxu0 0.0
    %630 = vmatprep.subr.mxu0 0.0
    %631 = vmatpush1.msra.mxu0 0.0
    %632 = vmatprep.subr.mxu0 0.0
    %633 = vmatpush1.msra.mxu0 0.0
    %634 = vmatprep.subr.mxu0 0.0
    %635 = vmatpush1.msra.mxu0 0.0
    %636 = vmatprep.subr.mxu0 0.0
    %637 = vmatpush1.msra.mxu0 0.0
    %638 = vmatprep.subr.mxu0 0.0
    %639 = vmatpush1.msra.mxu0 0.0
    %640 = vmatprep.subr.mxu0 0.0
    %641 = vmatpush1.msra.mxu0 0.0
    %642 = vmatprep.subr.mxu0 0.0
    %643 = vmatpush1.msra.mxu0 0.0
    %644 = vmatprep.subr.mxu0 0.0
    %645 = vmatpush1.msra.mxu0 0.0
    %646 = vmatprep.subr.mxu0 0.0
    %647 = vmatpush1.msra.mxu0 0.0
    %648 = vmatprep.subr.mxu0 0.0
    %649 = vmatpush1.msra.mxu0 0.0
    %650 = vmatprep.subr.mxu0 0.0
    %651 = vmatpush1.msra.mxu0 0.0
    %652 = vmatprep.subr.mxu0 0.0
    %653 = vmatpush1.msra.mxu0 0.0
    %654 = vmatprep.subr.mxu0 0.0
    %655 = vmatpush1.msra.mxu0 0.0
    %656 = vmatprep.mubr.f32.mxu0 0.0
    %657 = vmatmul.mubr.f32.gmra.mrb[0].mxu0 %v582
    %v658 = vpop.f32.mrb[0].mxu0
    %v659 = vadd.f32 0.0, %v658
    %v660 = vpop.f32.mrb[0].mxu0
    %v661 = vadd.f32 0.0, %v660
    %662 = vmatprep.mubr.f32.mxu0 0.0
    %663 = vmatmul.mubr.f32.gmra.mrb[0].mxu0 %v585
    %v664 = vpop.f32.mrb[0].mxu0
    %v665 = vadd.f32 0.0, %v664
    %v666 = vpop.f32.mrb[0].mxu0
    %v667 = vadd.f32 0.0, %v666
    %668 = vdwg.mxu0
    %669 = vxpose.xlu0.b32.start [1/16] %v512, 128
    %670 = vxpose.xlu0.b32.cont [2/16] %v513, 128
    %671 = vxpose.xlu0.b32.cont [3/16] 0.0, 128
    %672 = vxpose.xlu0.b32.cont [4/16] 0.0, 128
    %673 = vxpose.xlu0.b32.cont [5/16] 0.0, 128
    %674 = vxpose.xlu0.b32.cont [6/16] 0.0, 128
    %675 = vxpose.xlu0.b32.cont [7/16] 0.0, 128
    %676 = vxpose.xlu0.b32.cont [8/16] 0.0, 128
    %677 = vxpose.xlu0.b32.cont [9/16] 0.0, 128
    %678 = vxpose.xlu0.b32.cont [10/16] 0.0, 128
    %679 = vxpose.xlu0.b32.cont [11/16] 0.0, 128
    %680 = vxpose.xlu0.b32.cont [12/16] 0.0, 128
    %681 = vxpose.xlu0.b32.cont [13/16] 0.0, 128
    %682 = vxpose.xlu0.b32.cont [14/16] 0.0, 128
    %683 = vxpose.xlu0.b32.cont [15/16] 0.0, 128
    %684 = vxpose.xlu0.b32.end [16/16] 0.0, 128
    %v685 = vpop.trf.xlu0
    %v686 = vpop.trf.xlu0
    %v687 = vpop.trf.xlu0
    %v688 = vpop.trf.xlu0
    %v689 = vpop.trf.xlu0
    %v690 = vpop.trf.xlu0
    %v691 = vpop.trf.xlu0
    %v692 = vpop.trf.xlu0
    %v693 = vpop.trf.xlu0
    %v694 = vpop.trf.xlu0
    %v695 = vpop.trf.xlu0
    %v696 = vpop.trf.xlu0
    %v697 = vpop.trf.xlu0
    %v698 = vpop.trf.xlu0
    %v699 = vpop.trf.xlu0
    %v700 = vpop.trf.xlu0
    %v702 = vsel %vm486, %v685, 0
    %v705 = vsel %vm486, %v686, 0
    %707 = vmatprep.subr.mxu0 %v251
    %708 = vmatpush1.msra.mxu0 %v249
    %709 = vmatprep.subr.mxu0 %v257
    %710 = vmatpush1.msra.mxu0 %v255
    %711 = vmatprep.subr.mxu0 0.0
    %712 = vmatpush1.msra.mxu0 0.0
    %713 = vmatprep.subr.mxu0 0.0
    %714 = vmatpush1.msra.mxu0 0.0
    %715 = vmatprep.subr.mxu0 0.0
    %716 = vmatpush1.msra.mxu0 0.0
    %717 = vmatprep.subr.mxu0 0.0
    %718 = vmatpush1.msra.mxu0 0.0
    %719 = vmatprep.subr.mxu0 0.0
    %720 = vmatpush1.msra.mxu0 0.0
    %721 = vmatprep.subr.mxu0 0.0
    %722 = vmatpush1.msra.mxu0 0.0
    %723 = vmatprep.subr.mxu0 0.0
    %724 = vmatpush1.msra.mxu0 0.0
    %725 = vmatprep.subr.mxu0 0.0
    %726 = vmatpush1.msra.mxu0 0.0
    %727 = vmatprep.subr.mxu0 0.0
    %728 = vmatpush1.msra.mxu0 0.0
    %729 = vmatprep.subr.mxu0 0.0
    %730 = vmatpush1.msra.mxu0 0.0
    %731 = vmatprep.subr.mxu0 0.0
    %732 = vmatpush1.msra.mxu0 0.0
    %733 = vmatprep.subr.mxu0 0.0
    %734 = vmatpush1.msra.mxu0 0.0
    %735 = vmatprep.subr.mxu0 0.0
    %736 = vmatpush1.msra.mxu0 0.0
    %737 = vmatprep.subr.mxu0 0.0
    %738 = vmatpush1.msra.mxu0 0.0
    %739 = vmatprep.subr.mxu0 0.0
    %740 = vmatpush1.msra.mxu0 0.0
    %741 = vmatprep.subr.mxu0 0.0
    %742 = vmatpush1.msra.mxu0 0.0
    %743 = vmatprep.subr.mxu0 0.0
    %744 = vmatpush1.msra.mxu0 0.0
    %745 = vmatprep.subr.mxu0 0.0
    %746 = vmatpush1.msra.mxu0 0.0
    %747 = vmatprep.subr.mxu0 0.0
    %748 = vmatpush1.msra.mxu0 0.0
    %749 = vmatprep.subr.mxu0 0.0
    %750 = vmatpush1.msra.mxu0 0.0
    %751 = vmatprep.subr.mxu0 0.0
    %752 = vmatpush1.msra.mxu0 0.0
    %753 = vmatprep.subr.mxu0 0.0
    %754 = vmatpush1.msra.mxu0 0.0
    %755 = vmatprep.subr.mxu0 0.0
    %756 = vmatpush1.msra.mxu0 0.0
    %757 = vmatprep.subr.mxu0 0.0
    %758 = vmatpush1.msra.mxu0 0.0
    %759 = vmatprep.subr.mxu0 0.0
    %760 = vmatpush1.msra.mxu0 0.0
    %761 = vmatprep.subr.mxu0 0.0
    %762 = vmatpush1.msra.mxu0 0.0
    %763 = vmatprep.subr.mxu0 0.0
    %764 = vmatpush1.msra.mxu0 0.0
    %765 = vmatprep.subr.mxu0 0.0
    %766 = vmatpush1.msra.mxu0 0.0
    %767 = vmatprep.subr.mxu0 0.0
    %768 = vmatpush1.msra.mxu0 0.0
    %769 = vmatprep.subr.mxu0 0.0
    %770 = vmatpush1.msra.mxu0 0.0
    %771 = vmatprep.mubr.f32.mxu0 0.0
    %772 = vmatmul.mubr.f32.gmra.mrb[0].mxu0 %v702
    %v773 = vpop.f32.mrb[0].mxu0
    %v774 = vadd.f32 %v659, %v773
    %v775 = vpop.f32.mrb[0].mxu0
    %v776 = vadd.f32 %v661, %v775
    %777 = vmatprep.mubr.f32.mxu0 0.0
    %778 = vmatmul.mubr.f32.gmra.mrb[0].mxu0 %v705
    %v779 = vpop.f32.mrb[0].mxu0
    %v780 = vadd.f32 %v665, %v779
    %v781 = vpop.f32.mrb[0].mxu0
    %v782 = vadd.f32 %v667, %v781
    %783 = vdwg.mxu0
    %v784 = vld [vmem:[#allocation9] sm:$0xff]
    %v785 = vld [vmem:[#allocation9 + $0x8] sm:$0xff]
    %v786 = vld [vmem:[#allocation9 + $0x10] sm:$0xff]
    %v787 = vld [vmem:[#allocation9 + $0x18] sm:$0xff]
    %v788 = vld [vmem:[#allocation9 + $0x20] sm:$0xff]
    %v789 = vld [vmem:[#allocation9 + $0x28] sm:$0xff]
    %v790 = vld [vmem:[#allocation9 + $0x30] sm:$0xff]
    %v791 = vld [vmem:[#allocation9 + $0x38] sm:$0xff]
    %v792 = vld [vmem:[#allocation9 + $0x40] sm:$0xff]
    %v793 = vld [vmem:[#allocation9 + $0x48] sm:$0xff]
    %v794 = vld [vmem:[#allocation9 + $0x50] sm:$0xff]
    %v795 = vld [vmem:[#allocation9 + $0x58] sm:$0xff]
    %v796 = vld [vmem:[#allocation9 + $0x60] sm:$0xff]
    %v797 = vld [vmem:[#allocation9 + $0x68] sm:$0xff]
    %v798 = vld [vmem:[#allocation9 + $0x70] sm:$0xff]
    %v799 = vld [vmem:[#allocation9 + $0x78] sm:$0xff]
    %v800 = vld [vmem:[#allocation9 + $0x80] sm:$0xff]
    %v801 = vld [vmem:[#allocation9 + $0x88] sm:$0xff]
    %v802 = vld [vmem:[#allocation9 + $0x90] sm:$0xff]
    %v803 = vld [vmem:[#allocation9 + $0x98] sm:$0xff]
    %v804 = vld [vmem:[#allocation9 + $0xa0] sm:$0xff]
    %v805 = vld [vmem:[#allocation9 + $0xa8] sm:$0xff]
    %v806 = vld [vmem:[#allocation9 + $0xb0] sm:$0xff]
    %v807 = vld [vmem:[#allocation9 + $0xb8] sm:$0xff]
    %v808 = vld [vmem:[#allocation9 + $0xc0] sm:$0xff]
    %v809 = vld [vmem:[#allocation9 + $0xc8] sm:$0xff]
    %v810 = vld [vmem:[#allocation9 + $0xd0] sm:$0xff]
    %v811 = vld [vmem:[#allocation9 + $0xd8] sm:$0xff]
    %v812 = vld [vmem:[#allocation9 + $0xe0] sm:$0xff]
    %v813 = vld [vmem:[#allocation9 + $0xe8] sm:$0xff]
    %v814 = vld [vmem:[#allocation9 + $0xf0] sm:$0xff]
    %v815 = vld [vmem:[#allocation9 + $0xf8] sm:$0xff]
    %v816 = vld [vmem:[#allocation9 + $0x100] sm:$0xff]
    %v817 = vld [vmem:[#allocation9 + $0x108] sm:$0xff]
    %v818 = vld [vmem:[#allocation9 + $0x110] sm:$0xff]
    %v819 = vld [vmem:[#allocation9 + $0x118] sm:$0xff]
    %v820 = vld [vmem:[#allocation9 + $0x120] sm:$0xff]
    %v821 = vld [vmem:[#allocation9 + $0x128] sm:$0xff]
    %v822 = vld [vmem:[#allocation9 + $0x130] sm:$0xff]
    %v823 = vld [vmem:[#allocation9 + $0x138] sm:$0xff]
    %v824 = vld [vmem:[#allocation9 + $0x140] sm:$0xff]
    %v825 = vld [vmem:[#allocation9 + $0x148] sm:$0xff]
    %v826 = vld [vmem:[#allocation9 + $0x150] sm:$0xff]
    %v827 = vld [vmem:[#allocation9 + $0x158] sm:$0xff]
    %v828 = vld [vmem:[#allocation9 + $0x160] sm:$0xff]
    %v829 = vld [vmem:[#allocation9 + $0x168] sm:$0xff]
    %v830 = vld [vmem:[#allocation9 + $0x170] sm:$0xff]
    %v831 = vld [vmem:[#allocation9 + $0x178] sm:$0xff]
    %v832 = vld [vmem:[#allocation9 + $0x180] sm:$0xff]
    %v833 = vld [vmem:[#allocation9 + $0x188] sm:$0xff]
    %v834 = vld [vmem:[#allocation9 + $0x190] sm:$0xff]
    %v835 = vld [vmem:[#allocation9 + $0x198] sm:$0xff]
    %v836 = vld [vmem:[#allocation9 + $0x1a0] sm:$0xff]
    %v837 = vld [vmem:[#allocation9 + $0x1a8] sm:$0xff]
    %v838 = vld [vmem:[#allocation9 + $0x1b0] sm:$0xff]
    %v839 = vld [vmem:[#allocation9 + $0x1b8] sm:$0xff]
    %v840 = vld [vmem:[#allocation9 + $0x1c0] sm:$0xff]
    %v841 = vld [vmem:[#allocation9 + $0x1c8] sm:$0xff]
    %v842 = vld [vmem:[#allocation9 + $0x1d0] sm:$0xff]
    %v843 = vld [vmem:[#allocation9 + $0x1d8] sm:$0xff]
    %v844 = vld [vmem:[#allocation9 + $0x1e0] sm:$0xff]
    %v845 = vld [vmem:[#allocation9 + $0x1e8] sm:$0xff]
    %v846 = vld [vmem:[#allocation9 + $0x1f0] sm:$0xff]
    %v847 = vld [vmem:[#allocation9 + $0x1f8] sm:$0xff]
    %v848 = vld [vmem:[#allocation9 + $0x200] sm:$0xff]
    %v849 = vld [vmem:[#allocation9 + $0x208] sm:$0xff]
    %v850 = vld [vmem:[#allocation9 + $0x210] sm:$0xff]
    %v851 = vld [vmem:[#allocation9 + $0x218] sm:$0xff]
    %v852 = vld [vmem:[#allocation9 + $0x220] sm:$0xff]
    %v853 = vld [vmem:[#allocation9 + $0x228] sm:$0xff]
    %v854 = vld [vmem:[#allocation9 + $0x230] sm:$0xff]
    %v855 = vld [vmem:[#allocation9 + $0x238] sm:$0xff]
    %v856 = vld [vmem:[#allocation9 + $0x240] sm:$0xff]
    %v857 = vld [vmem:[#allocation9 + $0x248] sm:$0xff]
    %v858 = vld [vmem:[#allocation9 + $0x250] sm:$0xff]
    %v859 = vld [vmem:[#allocation9 + $0x258] sm:$0xff]
    %v860 = vld [vmem:[#allocation9 + $0x260] sm:$0xff]
    %v861 = vld [vmem:[#allocation9 + $0x268] sm:$0xff]
    %v862 = vld [vmem:[#allocation9 + $0x270] sm:$0xff]
    %v863 = vld [vmem:[#allocation9 + $0x278] sm:$0xff]
    %v864 = vld [vmem:[#allocation9 + $0x280] sm:$0xff]
    %v865 = vld [vmem:[#allocation9 + $0x288] sm:$0xff]
    %v866 = vld [vmem:[#allocation9 + $0x290] sm:$0xff]
    %v867 = vld [vmem:[#allocation9 + $0x298] sm:$0xff]
    %v868 = vld [vmem:[#allocation9 + $0x2a0] sm:$0xff]
    %v869 = vld [vmem:[#allocation9 + $0x2a8] sm:$0xff]
    %v870 = vld [vmem:[#allocation9 + $0x2b0] sm:$0xff]
    %v871 = vld [vmem:[#allocation9 + $0x2b8] sm:$0xff]
    %v872 = vld [vmem:[#allocation9 + $0x2c0] sm:$0xff]
    %v873 = vld [vmem:[#allocation9 + $0x2c8] sm:$0xff]
    %v874 = vld [vmem:[#allocation9 + $0x2d0] sm:$0xff]
    %v875 = vld [vmem:[#allocation9 + $0x2d8] sm:$0xff]
    %v876 = vld [vmem:[#allocation9 + $0x2e0] sm:$0xff]
    %v877 = vld [vmem:[#allocation9 + $0x2e8] sm:$0xff]
    %v878 = vld [vmem:[#allocation9 + $0x2f0] sm:$0xff]
    %v879 = vld [vmem:[#allocation9 + $0x2f8] sm:$0xff]
    %v880 = vld [vmem:[#allocation9 + $0x300] sm:$0xff]
    %v881 = vld [vmem:[#allocation9 + $0x308] sm:$0xff]
    %v882 = vld [vmem:[#allocation9 + $0x310] sm:$0xff]
    %v883 = vld [vmem:[#allocation9 + $0x318] sm:$0xff]
    %v884 = vld [vmem:[#allocation9 + $0x320] sm:$0xff]
    %v885 = vld [vmem:[#allocation9 + $0x328] sm:$0xff]
    %v886 = vld [vmem:[#allocation9 + $0x330] sm:$0xff]
    %v887 = vld [vmem:[#allocation9 + $0x338] sm:$0xff]
    %v888 = vld [vmem:[#allocation9 + $0x340] sm:$0xff]
    %v889 = vld [vmem:[#allocation9 + $0x348] sm:$0xff]
    %v890 = vld [vmem:[#allocation9 + $0x350] sm:$0xff]
    %v891 = vld [vmem:[#allocation9 + $0x358] sm:$0xff]
    %v892 = vld [vmem:[#allocation9 + $0x360] sm:$0xff]
    %v893 = vld [vmem:[#allocation9 + $0x368] sm:$0xff]
    %v894 = vld [vmem:[#allocation9 + $0x370] sm:$0xff]
    %v895 = vld [vmem:[#allocation9 + $0x378] sm:$0xff]
    %v896 = vld [vmem:[#allocation9 + $0x380] sm:$0xff]
    %v897 = vld [vmem:[#allocation9 + $0x388] sm:$0xff]
    %v898 = vld [vmem:[#allocation9 + $0x390] sm:$0xff]
    %v899 = vld [vmem:[#allocation9 + $0x398] sm:$0xff]
    %v900 = vld [vmem:[#allocation9 + $0x3a0] sm:$0xff]
    %v901 = vld [vmem:[#allocation9 + $0x3a8] sm:$0xff]
    %v902 = vld [vmem:[#allocation9 + $0x3b0] sm:$0xff]
    %v903 = vld [vmem:[#allocation9 + $0x3b8] sm:$0xff]
    %v904 = vld [vmem:[#allocation9 + $0x3c0] sm:$0xff]
    %v905 = vld [vmem:[#allocation9 + $0x3c8] sm:$0xff]
    %v906 = vld [vmem:[#allocation9 + $0x3d0] sm:$0xff]
    %v907 = vld [vmem:[#allocation9 + $0x3d8] sm:$0xff]
    %v908 = vld [vmem:[#allocation9 + $0x3e0] sm:$0xff]
    %v909 = vld [vmem:[#allocation9 + $0x3e8] sm:$0xff]
    %v910 = vld [vmem:[#allocation9 + $0x3f0] sm:$0xff]
    %v911 = vld [vmem:[#allocation9 + $0x3f8] sm:$0xff]
    %912 = vmatprep.subr.mxu0 %v849
    %913 = vmatpush1.msra.mxu0 %v848
    %914 = vmatprep.subr.mxu0 %v851
    %915 = vmatpush1.msra.mxu0 %v850
    %916 = vmatprep.subr.mxu0 %v853
    %917 = vmatpush1.msra.mxu0 %v852
    %918 = vmatprep.subr.mxu0 %v855
    %919 = vmatpush1.msra.mxu0 %v854
    %920 = vmatprep.subr.mxu0 %v857
    %921 = vmatpush1.msra.mxu0 %v856
    %922 = vmatprep.subr.mxu0 %v859
    %923 = vmatpush1.msra.mxu0 %v858
    %924 = vmatprep.subr.mxu0 %v861
    %925 = vmatpush1.msra.mxu0 %v860
    %926 = vmatprep.subr.mxu0 %v863
    %927 = vmatpush1.msra.mxu0 %v862
    %928 = vmatprep.subr.mxu0 %v865
    %929 = vmatpush1.msra.mxu0 %v864
    %930 = vmatprep.subr.mxu0 %v867
    %931 = vmatpush1.msra.mxu0 %v866
    %932 = vmatprep.subr.mxu0 %v869
    %933 = vmatpush1.msra.mxu0 %v868
    %934 = vmatprep.subr.mxu0 %v871
    %935 = vmatpush1.msra.mxu0 %v870
    %936 = vmatprep.subr.mxu0 %v873
    %937 = vmatpush1.msra.mxu0 %v872
    %938 = vmatprep.subr.mxu0 %v875
    %939 = vmatpush1.msra.mxu0 %v874
    %940 = vmatprep.subr.mxu0 %v877
    %941 = vmatpush1.msra.mxu0 %v876
    %942 = vmatprep.subr.mxu0 %v879
    %943 = vmatpush1.msra.mxu0 %v878
    %944 = vmatprep.subr.mxu0 %v881
    %945 = vmatpush1.msra.mxu0 %v880
    %946 = vmatprep.subr.mxu0 %v883
    %947 = vmatpush1.msra.mxu0 %v882
    %948 = vmatprep.subr.mxu0 %v885
    %949 = vmatpush1.msra.mxu0 %v884
    %950 = vmatprep.subr.mxu0 %v887
    %951 = vmatpush1.msra.mxu0 %v886
    %952 = vmatprep.subr.mxu0 %v889
    %953 = vmatpush1.msra.mxu0 %v888
    %954 = vmatprep.subr.mxu0 %v891
    %955 = vmatpush1.msra.mxu0 %v890
    %956 = vmatprep.subr.mxu0 %v893
    %957 = vmatpush1.msra.mxu0 %v892
    %958 = vmatprep.subr.mxu0 %v895
    %959 = vmatpush1.msra.mxu0 %v894
    %960 = vmatprep.subr.mxu0 %v897
    %961 = vmatpush1.msra.mxu0 %v896
    %962 = vmatprep.subr.mxu0 %v899
    %963 = vmatpush1.msra.mxu0 %v898
    %964 = vmatprep.subr.mxu0 %v901
    %965 = vmatpush1.msra.mxu0 %v900
    %966 = vmatprep.subr.mxu0 %v903
    %967 = vmatpush1.msra.mxu0 %v902
    %968 = vmatprep.subr.mxu0 %v905
    %969 = vmatpush1.msra.mxu0 %v904
    %970 = vmatprep.subr.mxu0 %v907
    %971 = vmatpush1.msra.mxu0 %v906
    %972 = vmatprep.subr.mxu0 %v909
    %973 = vmatpush1.msra.mxu0 %v908
    %974 = vmatprep.subr.mxu0 %v911
    %975 = vmatpush1.msra.mxu0 %v910
    %976 = vmatprep.mubr.f32.mxu0 %v109
    %977 = vmatmul.mubr.f32.gmra.mrb[0].mxu0 %v108
    %v978 = vpop.f32.mrb[0].mxu0
    %v979 = vadd.f32 0.0, %v978
    %v980 = vpop.f32.mrb[0].mxu0
    %v981 = vadd.f32 0.0, %v980
    %982 = vmatprep.mubr.f32.mxu0 %v111
    %983 = vmatmul.mubr.f32.gmra.mrb[0].mxu0 %v110
    %v984 = vpop.f32.mrb[0].mxu0
    %v985 = vadd.f32 0.0, %v984
    %v986 = vpop.f32.mrb[0].mxu0
    %v987 = vadd.f32 0.0, %v986
    %988 = vdwg.mxu0
    %989 = vmatprep.subr.mxu0 %v785
    %990 = vmatpush1.msra.mxu0 %v784
    %991 = vmatprep.subr.mxu0 %v787
    %992 = vmatpush1.msra.mxu0 %v786
    %993 = vmatprep.subr.mxu0 %v789
    %994 = vmatpush1.msra.mxu0 %v788
    %995 = vmatprep.subr.mxu0 %v791
    %996 = vmatpush1.msra.mxu0 %v790
    %997 = vmatprep.subr.mxu0 %v793
    %998 = vmatpush1.msra.mxu0 %v792
    %999 = vmatprep.subr.mxu0 %v795
    %1000 = vmatpush1.msra.mxu0 %v794
    %1001 = vmatprep.subr.mxu0 %v797
    %1002 = vmatpush1.msra.mxu0 %v796
    %1003 = vmatprep.subr.mxu0 %v799
    %1004 = vmatpush1.msra.mxu0 %v798
    %1005 = vmatprep.subr.mxu0 %v801
    %1006 = vmatpush1.msra.mxu0 %v800
    %1007 = vmatprep.subr.mxu0 %v803
    %1008 = vmatpush1.msra.mxu0 %v802
    %1009 = vmatprep.subr.mxu0 %v805
    %1010 = vmatpush1.msra.mxu0 %v804
    %1011 = vmatprep.subr.mxu0 %v807
    %1012 = vmatpush1.msra.mxu0 %v806
    %1013 = vmatprep.subr.mxu0 %v809
    %1014 = vmatpush1.msra.mxu0 %v808
    %1015 = vmatprep.subr.mxu0 %v811
    %1016 = vmatpush1.msra.mxu0 %v810
    %1017 = vmatprep.subr.mxu0 %v813
    %1018 = vmatpush1.msra.mxu0 %v812
    %1019 = vmatprep.subr.mxu0 %v815
    %1020 = vmatpush1.msra.mxu0 %v814
    %1021 = vmatprep.subr.mxu0 %v817
    %1022 = vmatpush1.msra.mxu0 %v816
    %1023 = vmatprep.subr.mxu0 %v819
    %1024 = vmatpush1.msra.mxu0 %v818
    %1025 = vmatprep.subr.mxu0 %v821
    %1026 = vmatpush1.msra.mxu0 %v820
    %1027 = vmatprep.subr.mxu0 %v823
    %1028 = vmatpush1.msra.mxu0 %v822
    %1029 = vmatprep.subr.mxu0 %v825
    %1030 = vmatpush1.msra.mxu0 %v824
    %1031 = vmatprep.subr.mxu0 %v827
    %1032 = vmatpush1.msra.mxu0 %v826
    %1033 = vmatprep.subr.mxu0 %v829
    %1034 = vmatpush1.msra.mxu0 %v828
    %1035 = vmatprep.subr.mxu0 %v831
    %1036 = vmatpush1.msra.mxu0 %v830
    %1037 = vmatprep.subr.mxu0 %v833
    %1038 = vmatpush1.msra.mxu0 %v832
    %1039 = vmatprep.subr.mxu0 %v835
    %1040 = vmatpush1.msra.mxu0 %v834
    %1041 = vmatprep.subr.mxu0 %v837
    %1042 = vmatpush1.msra.mxu0 %v836
    %1043 = vmatprep.subr.mxu0 %v839
    %1044 = vmatpush1.msra.mxu0 %v838
    %1045 = vmatprep.subr.mxu0 %v841
    %1046 = vmatpush1.msra.mxu0 %v840
    %1047 = vmatprep.subr.mxu0 %v843
    %1048 = vmatpush1.msra.mxu0 %v842
    %1049 = vmatprep.subr.mxu0 %v845
    %1050 = vmatpush1.msra.mxu0 %v844
    %1051 = vmatprep.subr.mxu0 %v847
    %1052 = vmatpush1.msra.mxu0 %v846
    %1053 = vmatprep.mubr.f32.mxu0 %v776
    %1054 = vmatmul.mubr.f32.gmra.mrb[0].mxu0 %v774
    %v1055 = vpop.f32.mrb[0].mxu0
    %v1056 = vadd.f32 %v979, %v1055
    %v1057 = vpop.f32.mrb[0].mxu0
    %v1058 = vadd.f32 %v981, %v1057
    %1059 = vmatprep.mubr.f32.mxu0 %v782
    %1060 = vmatmul.mubr.f32.gmra.mrb[0].mxu0 %v780
    %v1061 = vpop.f32.mrb[0].mxu0
    %v1062 = vadd.f32 %v985, %v1061
    %v1063 = vpop.f32.mrb[0].mxu0
    %v1064 = vadd.f32 %v987, %v1063
    %1065 = vdwg.mxu0
    %v1066 = vmul.f32 %v774, 0.3
    %v1067 = vmul.f32 %v776, 0.3
    %v1068 = vmul.f32 %v780, 0.3
    %v1069 = vmul.f32 %v782, 0.3
    %v1070 = vmul.f32 %v108, 0.7
    %v1071 = vmul.f32 %v109, 0.7
    %v1072 = vmul.f32 %v110, 0.7
    %v1073 = vmul.f32 %v111, 0.7
    %v1074 = vadd.f32 %v1066, %v1070
    %v1075 = vadd.f32 %v1067, %v1071
    %v1076 = vadd.f32 %v1068, %v1072
    %v1077 = vadd.f32 %v1069, %v1073
    %v1078 = vmul.f32 %v1056, 0.5596158
    %v1079 = vmul.f32 %v1058, 0.5596158
    %v1080 = vmul.f32 %v1062, 0.5596158
    %v1081 = vmul.f32 %v1064, 0.5596158
    %v1082 = vmul.f32 %v1074, 0.4403842
    %v1083 = vmul.f32 %v1075, 0.4403842
    %v1084 = vmul.f32 %v1076, 0.4403842
    %v1085 = vmul.f32 %v1077, 0.4403842
    %v1086 = vadd.f32 %v1078, %v1082
    %v1087 = vadd.f32 %v1079, %v1083
    %v1088 = vadd.f32 %v1080, %v1084
    %v1089 = vadd.f32 %v1081, %v1085
    %v1090 = vadd.f32 %v1086, %v104
    %v1091 = vadd.f32 %v1087, %v105
    %v1092 = vadd.f32 %v1088, %v106
    %v1093 = vadd.f32 %v1089, %v107
    %v1094 = vmax.f32 %v1090, 0.0
    %v1095 = vmax.f32 %v1091, 0.0
    %v1096 = vmax.f32 %v1092, 0.0
    %v1097 = vmax.f32 %v1093, 0.0
    %1098 = vst [vmem:[%s11] sm:$0xff] %v1094
    %1099 = vst [vmem:[%s11 + $0x8] sm:$0xff] %v1095
    %1100 = vst [vmem:[%s11 + $0x10] sm:$0xff] %v1096
    %1101 = vst [vmem:[%s11 + $0x18] sm:$0xff] %v1097
    // Predicated region
    $region66: #{mvsoppis_forward.6} parent=1 // pred_check
      _
    $region67: #{mvsoppis_forward.6} parent=1 // pred_check_branch
      %1103 = sbr.rel (0) target = $region69
    $region68: #{mvsoppis_forward.6} parent=1 // pred_region
      _
    $region69: #{mvsoppis_forward.6} parent=1 // pred_fallthru
      _
    // Predicated region
    $region70: #{mvsoppis_forward.6} parent=1 // pred_check
      _
    $region71: #{mvsoppis_forward.6} parent=1 // pred_check_branch
      %1105 = sbr.rel (0) target = $region73
    $region72: #{mvsoppis_forward.6} parent=1 // pred_region
      _
    $region73: #{mvsoppis_forward.6} parent=1 // pred_fallthru
      _
    %1106 = vsyncpa [#allocation3], 1
    %1107 = vsyncpa [#allocation6], 1
    %1108 = vsyncpa [#allocation10], 1
    %1109 = vsyncpa [#allocation4], 1

// kernel: mvsoppis_forward.5
$region0: #{mvsoppis_forward.5}
  #allocation0 [shape = 'u32[]', space=smem, size = 0x4, offset = 0x4, fixed_abs, tag = 'smem constant byte address 0x4 - core index']
  #allocation1 [shape = 'u32[144,128]{1,0:T(1,128)}', space=vmem, size = 0x12000, scoped, tag = 'internal scratch']
  %s0 = inlined_call_operand.vmem [shape: f32[16,256], index: 0, kind: input, shape index: {}, may-alias: {0,1}]
  %s1 = inlined_call_operand.vmem [shape: f32[16,256], index: 1, kind: input, shape index: {}, may-alias: {0,1}]
  %s2 = inlined_call_operand.hbm [shape: f32[16,16], index: 2, kind: input, shape index: {}]
  %s3 = inlined_call_operand.vmem [shape: f32[16,16], index: 3, kind: input, shape index: {}]
  %s4 = inlined_call_operand.vmem [shape: f32[16,16], index: 4, kind: input, shape index: {}]
  %s5 = inlined_call_operand.hbm [shape: f32[256,256], index: 5, kind: input, shape index: {}]
  %s6 = inlined_call_operand.vmem [shape: f32[256,1], index: 6, kind: input, shape index: {}]
  %s7 = inlined_call_operand.hbm [shape: f32[1,256], index: 7, kind: input, shape index: {}]
  %s8 = inlined_call_operand.vmem [shape: f32[1,2], index: 8, kind: input, shape index: {}]
  %s9 = inlined_call_operand.vmem [shape: f32[2,256], index: 9, kind: input, shape index: {}]
  %s10 = inlined_call_operand.hbm [shape: f32[512,256], index: 10, kind: input, shape index: {}]
  %s11 = inlined_call_operand.vmem [shape: f32[16,256], index: 11, kind: output, shape index: {}]
  %s12 = sld [smem:[#allocation0]]
  $region74: #{mvsoppis_forward.5} parent=0
    _
  %s14 = ssub.s32 1, %s12
  %s15 = scalar_select 0, %s14, %s12
  $region1: #{mvsoppis_forward.5} parent=0
    #allocation2 [shape = 'u8[8192]{0}', space=vmem, size = 0x2000, scoped, tag = 'input window, operand 2, single buffered']
    #allocation3 [shape = 's32[1]{0}', space=sflag, size = 0x4, scoped, tag = 'scoped memory for mvsoppis_forward.5']
    #allocation4 [shape = 's32[1]{0}', space=sflag, size = 0x4, scoped, tag = 'scoped memory for mvsoppis_forward.5']
    #allocation5 [shape = 'u8[262144]{0}', space=vmem, size = 0x40000, scoped, tag = 'input window, operand 5, single buffered']
    #allocation6 [shape = 's32[1]{0}', space=sflag, size = 0x4, scoped, tag = 'scoped memory for mvsoppis_forward.5']
    #allocation7 [shape = 'u8[1024]{0}', space=vmem, size = 0x400, scoped, tag = 'input window, operand 7, single buffered']
    #allocation8 [shape = 'u8[512]{0}', space=smem, size = 0x200, scoped, tag = 'input window, operand 8, single buffered']
    #allocation9 [shape = 'u8[524288]{0}', space=vmem, size = 0x80000, scoped, tag = 'input window, operand 10, single buffered']
    #allocation10 [shape = 's32[1]{0}', space=sflag, size = 0x4, scoped, tag = 'scoped memory for mvsoppis_forward.5']
    %16 = vsyncpa [#allocation3], 0
    %17 = vsyncpa [#allocation6], 0
    %18 = vsyncpa [#allocation4], 0
    %19 = vsyncpa [#allocation10], 0
    // Predicated region
    $region2: #{mvsoppis_forward.5} parent=1 // pred_check
      _
    $region3: #{mvsoppis_forward.5} parent=1 // pred_check_branch
      %21 = sbr.rel (0) target = $region5
    $region4: #{mvsoppis_forward.5} parent=1 // pred_region
      _
    $region5: #{mvsoppis_forward.5} parent=1 // pred_fallthru
      _
    // Predicated region
    $region6: #{mvsoppis_forward.5} parent=1 // pred_check
      _
    $region7: #{mvsoppis_forward.5} parent=1 // pred_check_branch
      %23 = sbr.rel (0) target = $region9
    $region8: #{mvsoppis_forward.5} parent=1 // pred_region
      _
    $region9: #{mvsoppis_forward.5} parent=1 // pred_fallthru
      _
    // Predicated region
    $region10: #{mvsoppis_forward.5} parent=1 // pred_check
      _
    $region11: #{mvsoppis_forward.5} parent=1 // pred_check_branch
      %25 = sbr.rel (0) target = $region13
    $region12: #{mvsoppis_forward.5} parent=1 // pred_region
      %s27 = ssub.s32 256, 256
      %28 = vsyncadd [#allocation3], %s27
      %s29 = sshll.u32 [#allocation2], 4
      %s30 = int_to_ptr.vmem [resolvable:$true] %s29
      %35 = dma.hbm_to_vmem [thread:$0]  %s2, 256, %s30, [#allocation3], 128, 128, 8
    $region13: #{mvsoppis_forward.5} parent=1 // pred_fallthru
      _
    // Predicated region
    $region14: #{mvsoppis_forward.5} parent=1 // pred_check
      _
    $region15: #{mvsoppis_forward.5} parent=1 // pred_check_branch
      %37 = sbr.rel (0) target = $region17
    $region16: #{mvsoppis_forward.5} parent=1 // pred_region
      _
    $region17: #{mvsoppis_forward.5} parent=1 // pred_fallthru
      _
    // Predicated region
    $region18: #{mvsoppis_forward.5} parent=1 // pred_check
      _
    $region19: #{mvsoppis_forward.5} parent=1 // pred_check_branch
      %39 = sbr.rel (0) target = $region21
    $region20: #{mvsoppis_forward.5} parent=1 // pred_region
      _
    $region21: #{mvsoppis_forward.5} parent=1 // pred_fallthru
      _
    // Predicated region
    $region22: #{mvsoppis_forward.5} parent=1 // pred_check
      _
    $region23: #{mvsoppis_forward.5} parent=1 // pred_check_branch
      %41 = sbr.rel (0) target = $region25
    $region24: #{mvsoppis_forward.5} parent=1 // pred_region
      %s43 = ssub.s32 8192, 8192
      %44 = vsyncadd [#allocation6], %s43
      %s45 = sshll.u32 [#allocation5], 4
      %s46 = int_to_ptr.vmem [resolvable:$true] %s45
      %51 = dma.hbm_to_vmem [thread:$0]  %s5, 8192, %s46, [#allocation6], 256, 256, 16
    $region25: #{mvsoppis_forward.5} parent=1 // pred_fallthru
      _
    // Predicated region
    $region26: #{mvsoppis_forward.5} parent=1 // pred_check
      _
    $region27: #{mvsoppis_forward.5} parent=1 // pred_check_branch
      %53 = sbr.rel (0) target = $region29
    $region28: #{mvsoppis_forward.5} parent=1 // pred_region
      _
    $region29: #{mvsoppis_forward.5} parent=1 // pred_fallthru
      _
    // Predicated region
    $region30: #{mvsoppis_forward.5} parent=1 // pred_check
      _
    $region31: #{mvsoppis_forward.5} parent=1 // pred_check_branch
      %55 = sbr.rel (0) target = $region33
    $region32: #{mvsoppis_forward.5} parent=1 // pred_region
      %s57 = ssub.s32 32, 32
      %58 = vsyncadd [#allocation6], %s57
      %s60 = sshll.u32 [#allocation7], 4
      %s61 = int_to_ptr.vmem [resolvable:$true] %s60
      %63 = dma.hbm_to_vmem [thread:$0]  %s7, 32, %s61, [#allocation6]
    $region33: #{mvsoppis_forward.5} parent=1 // pred_fallthru
      _
    // Predicated region
    $region34: #{mvsoppis_forward.5} parent=1 // pred_check
      _
    $region35: #{mvsoppis_forward.5} parent=1 // pred_check_branch
      %65 = sbr.rel (0) target = $region37
    $region36: #{mvsoppis_forward.5} parent=1 // pred_region
      %s67 = ssub.s32 16, 16
      %68 = vsyncadd [#allocation4], %s67
      %s70 = sshll.u32 %s8, 4
      %s71 = int_to_ptr.vmem [resolvable:$true] %s70
      %73 = dma.vmem_to_smem %s71, 16, [#allocation8], [#allocation4]
    $region37: #{mvsoppis_forward.5} parent=1 // pred_fallthru
      _
    // Predicated region
    $region38: #{mvsoppis_forward.5} parent=1 // pred_check
      _
    $region39: #{mvsoppis_forward.5} parent=1 // pred_check_branch
      %75 = sbr.rel (0) target = $region41
    $region40: #{mvsoppis_forward.5} parent=1 // pred_region
      _
    $region41: #{mvsoppis_forward.5} parent=1 // pred_fallthru
      _
    // Predicated region
    $region42: #{mvsoppis_forward.5} parent=1 // pred_check
      _
    $region43: #{mvsoppis_forward.5} parent=1 // pred_check_branch
      %77 = sbr.rel (0) target = $region45
    $region44: #{mvsoppis_forward.5} parent=1 // pred_region
      %s79 = ssub.s32 16384, 16384
      %80 = vsyncadd [#allocation10], %s79
      %s81 = sshll.u32 [#allocation9], 4
      %s82 = int_to_ptr.vmem [resolvable:$true] %s81
      %87 = dma.hbm_to_vmem [thread:$0]  %s10, 16384, %s82, [#allocation10], 256, 256, 16
    $region45: #{mvsoppis_forward.5} parent=1 // pred_fallthru
      _
    // Predicated region
    $region46: #{mvsoppis_forward.5} parent=1 // pred_check
      _
    $region47: #{mvsoppis_forward.5} parent=1 // pred_check_branch
      %89 = sbr.rel (0) target = $region49
    $region48: #{mvsoppis_forward.5} parent=1 // pred_region
      %90 = dma.done [#allocation3], 256
    $region49: #{mvsoppis_forward.5} parent=1 // pred_fallthru
      _
    // Predicated region
    $region50: #{mvsoppis_forward.5} parent=1 // pred_check
      _
    $region51: #{mvsoppis_forward.5} parent=1 // pred_check_branch
      %92 = sbr.rel (0) target = $region53
    $region52: #{mvsoppis_forward.5} parent=1 // pred_region
      %93 = dma.done [#allocation6], 8192
    $region53: #{mvsoppis_forward.5} parent=1 // pred_fallthru
      _
    // Predicated region
    $region54: #{mvsoppis_forward.5} parent=1 // pred_check
      _
    $region55: #{mvsoppis_forward.5} parent=1 // pred_check_branch
      %95 = sbr.rel (0) target = $region57
    $region56: #{mvsoppis_forward.5} parent=1 // pred_region
      %96 = dma.done [#allocation6], 32
    $region57: #{mvsoppis_forward.5} parent=1 // pred_fallthru
      _
    // Predicated region
    $region58: #{mvsoppis_forward.5} parent=1 // pred_check
      _
    $region59: #{mvsoppis_forward.5} parent=1 // pred_check_branch
      %98 = sbr.rel (0) target = $region61
    $region60: #{mvsoppis_forward.5} parent=1 // pred_region
      %99 = dma.done [#allocation4], 16
    $region61: #{mvsoppis_forward.5} parent=1 // pred_fallthru
      _
    // Predicated region
    $region62: #{mvsoppis_forward.5} parent=1 // pred_check
      _
    $region63: #{mvsoppis_forward.5} parent=1 // pred_check_branch
      %101 = sbr.rel (0) target = $region65
    $region64: #{mvsoppis_forward.5} parent=1 // pred_region
      %102 = dma.done [#allocation10], 16384
    $region65: #{mvsoppis_forward.5} parent=1 // pred_fallthru
      _
    %103 = sfence
    %v104 = vld [vmem:[%s0] sm:$0xff]
    %v105 = vld [vmem:[%s0 + $0x8] sm:$0xff]
    %v106 = vld [vmem:[%s0 + $0x10] sm:$0xff]
    %v107 = vld [vmem:[%s0 + $0x18] sm:$0xff]
    %v108 = vld [vmem:[%s1] sm:$0xff]
    %v109 = vld [vmem:[%s1 + $0x8] sm:$0xff]
    %v110 = vld [vmem:[%s1 + $0x10] sm:$0xff]
    %v111 = vld [vmem:[%s1 + $0x18] sm:$0xff]
    %v112 = vld [vmem:[#allocation2] sm:$0xff]
    %v113 = vld [vmem:[#allocation2 + $0x8] sm:$0xff]
    %v114 = vld [vmem:[%s3] sm:$0xff]
    %v115 = vld [vmem:[%s3 + $0x8] sm:$0xff]
    %v116 = vld [vmem:[%s4] sm:$0xff]
    %v117 = vld [vmem:[%s4 + $0x8] sm:$0xff]
    %v118 = vld [vmem:[#allocation5] sm:$0xff]
    %v119 = vld [vmem:[#allocation5 + $0x8] sm:$0xff]
    %v120 = vld [vmem:[#allocation5 + $0x10] sm:$0xff]
    %v121 = vld [vmem:[#allocation5 + $0x18] sm:$0xff]
    %v122 = vld [vmem:[#allocation5 + $0x20] sm:$0xff]
    %v123 = vld [vmem:[#allocation5 + $0x28] sm:$0xff]
    %v124 = vld [vmem:[#allocation5 + $0x30] sm:$0xff]
    %v125 = vld [vmem:[#allocation5 + $0x38] sm:$0xff]
    %v126 = vld [vmem:[#allocation5 + $0x40] sm:$0xff]
    %v127 = vld [vmem:[#allocation5 + $0x48] sm:$0xff]
    %v128 = vld [vmem:[#allocation5 + $0x50] sm:$0xff]
    %v129 = vld [vmem:[#allocation5 + $0x58] sm:$0xff]
    %v130 = vld [vmem:[#allocation5 + $0x60] sm:$0xff]
    %v131 = vld [vmem:[#allocation5 + $0x68] sm:$0xff]
    %v132 = vld [vmem:[#allocation5 + $0x70] sm:$0xff]
    %v133 = vld [vmem:[#allocation5 + $0x78] sm:$0xff]
    %v134 = vld [vmem:[#allocation5 + $0x80] sm:$0xff]
    %v135 = vld [vmem:[#allocation5 + $0x88] sm:$0xff]
    %v136 = vld [vmem:[#allocation5 + $0x90] sm:$0xff]
    %v137 = vld [vmem:[#allocation5 + $0x98] sm:$0xff]
    %v138 = vld [vmem:[#allocation5 + $0xa0] sm:$0xff]
    %v139 = vld [vmem:[#allocation5 + $0xa8] sm:$0xff]
    %v140 = vld [vmem:[#allocation5 + $0xb0] sm:$0xff]
    %v141 = vld [vmem:[#allocation5 + $0xb8] sm:$0xff]
    %v142 = vld [vmem:[#allocation5 + $0xc0] sm:$0xff]
    %v143 = vld [vmem:[#allocation5 + $0xc8] sm:$0xff]
    %v144 = vld [vmem:[#allocation5 + $0xd0] sm:$0xff]
    %v145 = vld [vmem:[#allocation5 + $0xd8] sm:$0xff]
    %v146 = vld [vmem:[#allocation5 + $0xe0] sm:$0xff]
    %v147 = vld [vmem:[#allocation5 + $0xe8] sm:$0xff]
    %v148 = vld [vmem:[#allocation5 + $0xf0] sm:$0xff]
    %v149 = vld [vmem:[#allocation5 + $0xf8] sm:$0xff]
    %v150 = vld [vmem:[#allocation5 + $0x100] sm:$0xff]
    %v151 = vld [vmem:[#allocation5 + $0x108] sm:$0xff]
    %v152 = vld [vmem:[#allocation5 + $0x110] sm:$0xff]
    %v153 = vld [vmem:[#allocation5 + $0x118] sm:$0xff]
    %v154 = vld [vmem:[#allocation5 + $0x120] sm:$0xff]
    %v155 = vld [vmem:[#allocation5 + $0x128] sm:$0xff]
    %v156 = vld [vmem:[#allocation5 + $0x130] sm:$0xff]
    %v157 = vld [vmem:[#allocation5 + $0x138] sm:$0xff]
    %v158 = vld [vmem:[#allocation5 + $0x140] sm:$0xff]
    %v159 = vld [vmem:[#allocation5 + $0x148] sm:$0xff]
    %v160 = vld [vmem:[#allocation5 + $0x150] sm:$0xff]
    %v161 = vld [vmem:[#allocation5 + $0x158] sm:$0xff]
    %v162 = vld [vmem:[#allocation5 + $0x160] sm:$0xff]
    %v163 = vld [vmem:[#allocation5 + $0x168] sm:$0xff]
    %v164 = vld [vmem:[#allocation5 + $0x170] sm:$0xff]
    %v165 = vld [vmem:[#allocation5 + $0x178] sm:$0xff]
    %v166 = vld [vmem:[#allocation5 + $0x180] sm:$0xff]
    %v167 = vld [vmem:[#allocation5 + $0x188] sm:$0xff]
    %v168 = vld [vmem:[#allocation5 + $0x190] sm:$0xff]
    %v169 = vld [vmem:[#allocation5 + $0x198] sm:$0xff]
    %v170 = vld [vmem:[#allocation5 + $0x1a0] sm:$0xff]
    %v171 = vld [vmem:[#allocation5 + $0x1a8] sm:$0xff]
    %v172 = vld [vmem:[#allocation5 + $0x1b0] sm:$0xff]
    %v173 = vld [vmem:[#allocation5 + $0x1b8] sm:$0xff]
    %v174 = vld [vmem:[#allocation5 + $0x1c0] sm:$0xff]
    %v175 = vld [vmem:[#allocation5 + $0x1c8] sm:$0xff]
    %v176 = vld [vmem:[#allocation5 + $0x1d0] sm:$0xff]
    %v177 = vld [vmem:[#allocation5 + $0x1d8] sm:$0xff]
    %v178 = vld [vmem:[#allocation5 + $0x1e0] sm:$0xff]
    %v179 = vld [vmem:[#allocation5 + $0x1e8] sm:$0xff]
    %v180 = vld [vmem:[#allocation5 + $0x1f0] sm:$0xff]
    %v181 = vld [vmem:[#allocation5 + $0x1f8] sm:$0xff]
    %182 = vmatprep.subr.mxu0 %v119
    %183 = vmatpush1.msra.mxu0 %v118
    %184 = vmatprep.subr.mxu0 %v121
    %185 = vmatpush1.msra.mxu0 %v120
    %186 = vmatprep.subr.mxu0 %v123
    %187 = vmatpush1.msra.mxu0 %v122
    %188 = vmatprep.subr.mxu0 %v125
    %189 = vmatpush1.msra.mxu0 %v124
    %190 = vmatprep.subr.mxu0 %v127
    %191 = vmatpush1.msra.mxu0 %v126
    %192 = vmatprep.subr.mxu0 %v129
    %193 = vmatpush1.msra.mxu0 %v128
    %194 = vmatprep.subr.mxu0 %v131
    %195 = vmatpush1.msra.mxu0 %v130
    %196 = vmatprep.subr.mxu0 %v133
    %197 = vmatpush1.msra.mxu0 %v132
    %198 = vmatprep.subr.mxu0 %v135
    %199 = vmatpush1.msra.mxu0 %v134
    %200 = vmatprep.subr.mxu0 %v137
    %201 = vmatpush1.msra.mxu0 %v136
    %202 = vmatprep.subr.mxu0 %v139
    %203 = vmatpush1.msra.mxu0 %v138
    %204 = vmatprep.subr.mxu0 %v141
    %205 = vmatpush1.msra.mxu0 %v140
    %206 = vmatprep.subr.mxu0 %v143
    %207 = vmatpush1.msra.mxu0 %v142
    %208 = vmatprep.subr.mxu0 %v145
    %209 = vmatpush1.msra.mxu0 %v144
    %210 = vmatprep.subr.mxu0 %v147
    %211 = vmatpush1.msra.mxu0 %v146
    %212 = vmatprep.subr.mxu0 %v149
    %213 = vmatpush1.msra.mxu0 %v148
    %214 = vmatprep.subr.mxu0 %v151
    %215 = vmatpush1.msra.mxu0 %v150
    %216 = vmatprep.subr.mxu0 %v153
    %217 = vmatpush1.msra.mxu0 %v152
    %218 = vmatprep.subr.mxu0 %v155
    %219 = vmatpush1.msra.mxu0 %v154
    %220 = vmatprep.subr.mxu0 %v157
    %221 = vmatpush1.msra.mxu0 %v156
    %222 = vmatprep.subr.mxu0 %v159
    %223 = vmatpush1.msra.mxu0 %v158
    %224 = vmatprep.subr.mxu0 %v161
    %225 = vmatpush1.msra.mxu0 %v160
    %226 = vmatprep.subr.mxu0 %v163
    %227 = vmatpush1.msra.mxu0 %v162
    %228 = vmatprep.subr.mxu0 %v165
    %229 = vmatpush1.msra.mxu0 %v164
    %230 = vmatprep.subr.mxu0 %v167
    %231 = vmatpush1.msra.mxu0 %v166
    %232 = vmatprep.subr.mxu0 %v169
    %233 = vmatpush1.msra.mxu0 %v168
    %234 = vmatprep.subr.mxu0 %v171
    %235 = vmatpush1.msra.mxu0 %v170
    %236 = vmatprep.subr.mxu0 %v173
    %237 = vmatpush1.msra.mxu0 %v172
    %238 = vmatprep.subr.mxu0 %v175
    %239 = vmatpush1.msra.mxu0 %v174
    %240 = vmatprep.subr.mxu0 %v177
    %241 = vmatpush1.msra.mxu0 %v176
    %242 = vmatprep.subr.mxu0 %v179
    %243 = vmatpush1.msra.mxu0 %v178
    %244 = vmatprep.subr.mxu0 %v181
    %245 = vmatpush1.msra.mxu0 %v180
    %246 = vmatprep.mubr.f32.mxu0 %v105
    %247 = vmatmul.mubr.f32.gmra.mrb[0].mxu0 %v104
    %v248 = vpop.f32.mrb[0].mxu0
    %v249 = vadd.f32 0.0, %v248
    %v250 = vpop.f32.mrb[0].mxu0
    %v251 = vadd.f32 0.0, %v250
    %252 = vmatprep.mubr.f32.mxu0 %v107
    %253 = vmatmul.mubr.f32.gmra.mrb[0].mxu0 %v106
    %v254 = vpop.f32.mrb[0].mxu0
    %v255 = vadd.f32 0.0, %v254
    %v256 = vpop.f32.mrb[0].mxu0
    %v257 = vadd.f32 0.0, %v256
    %258 = vdwg.mxu0
    %v259 = vld [vmem:[%s6] sm:$0xff]
    %v260 = vld [vmem:[%s6 + $0x8] sm:$0xff]
    %v261 = vld [vmem:[%s6 + $0x10] sm:$0xff]
    %v262 = vld [vmem:[%s6 + $0x18] sm:$0xff]
    %v263 = vld [vmem:[%s6 + $0x20] sm:$0xff]
    %v264 = vld [vmem:[%s6 + $0x28] sm:$0xff]
    %v265 = vld [vmem:[%s6 + $0x30] sm:$0xff]
    %v266 = vld [vmem:[%s6 + $0x38] sm:$0xff]
    %v267 = vld [vmem:[%s6 + $0x40] sm:$0xff]
    %v268 = vld [vmem:[%s6 + $0x48] sm:$0xff]
    %v269 = vld [vmem:[%s6 + $0x50] sm:$0xff]
    %v270 = vld [vmem:[%s6 + $0x58] sm:$0xff]
    %v271 = vld [vmem:[%s6 + $0x60] sm:$0xff]
    %v272 = vld [vmem:[%s6 + $0x68] sm:$0xff]
    %v273 = vld [vmem:[%s6 + $0x70] sm:$0xff]
    %v274 = vld [vmem:[%s6 + $0x78] sm:$0xff]
    %v275 = vld [vmem:[%s6 + $0x80] sm:$0xff]
    %v276 = vld [vmem:[%s6 + $0x88] sm:$0xff]
    %v277 = vld [vmem:[%s6 + $0x90] sm:$0xff]
    %v278 = vld [vmem:[%s6 + $0x98] sm:$0xff]
    %v279 = vld [vmem:[%s6 + $0xa0] sm:$0xff]
    %v280 = vld [vmem:[%s6 + $0xa8] sm:$0xff]
    %v281 = vld [vmem:[%s6 + $0xb0] sm:$0xff]
    %v282 = vld [vmem:[%s6 + $0xb8] sm:$0xff]
    %v283 = vld [vmem:[%s6 + $0xc0] sm:$0xff]
    %v284 = vld [vmem:[%s6 + $0xc8] sm:$0xff]
    %v285 = vld [vmem:[%s6 + $0xd0] sm:$0xff]
    %v286 = vld [vmem:[%s6 + $0xd8] sm:$0xff]
    %v287 = vld [vmem:[%s6 + $0xe0] sm:$0xff]
    %v288 = vld [vmem:[%s6 + $0xe8] sm:$0xff]
    %v289 = vld [vmem:[%s6 + $0xf0] sm:$0xff]
    %v290 = vld [vmem:[%s6 + $0xf8] sm:$0xff]
    %291 = vmatprep.subr.mxu0 0.0
    %292 = vmatpush1.msra.mxu0 %v259
    %293 = vmatprep.subr.mxu0 0.0
    %294 = vmatpush1.msra.mxu0 %v260
    %295 = vmatprep.subr.mxu0 0.0
    %296 = vmatpush1.msra.mxu0 %v261
    %297 = vmatprep.subr.mxu0 0.0
    %298 = vmatpush1.msra.mxu0 %v262
    %299 = vmatprep.subr.mxu0 0.0
    %300 = vmatpush1.msra.mxu0 %v263
    %301 = vmatprep.subr.mxu0 0.0
    %302 = vmatpush1.msra.mxu0 %v264
    %303 = vmatprep.subr.mxu0 0.0
    %304 = vmatpush1.msra.mxu0 %v265
    %305 = vmatprep.subr.mxu0 0.0
    %306 = vmatpush1.msra.mxu0 %v266
    %307 = vmatprep.subr.mxu0 0.0
    %308 = vmatpush1.msra.mxu0 %v267
    %309 = vmatprep.subr.mxu0 0.0
    %310 = vmatpush1.msra.mxu0 %v268
    %311 = vmatprep.subr.mxu0 0.0
    %312 = vmatpush1.msra.mxu0 %v269
    %313 = vmatprep.subr.mxu0 0.0
    %314 = vmatpush1.msra.mxu0 %v270
    %315 = vmatprep.subr.mxu0 0.0
    %316 = vmatpush1.msra.mxu0 %v271
    %317 = vmatprep.subr.mxu0 0.0
    %318 = vmatpush1.msra.mxu0 %v272
    %319 = vmatprep.subr.mxu0 0.0
    %320 = vmatpush1.msra.mxu0 %v273
    %321 = vmatprep.subr.mxu0 0.0
    %322 = vmatpush1.msra.mxu0 %v274
    %323 = vmatprep.subr.mxu0 0.0
    %324 = vmatpush1.msra.mxu0 %v275
    %325 = vmatprep.subr.mxu0 0.0
    %326 = vmatpush1.msra.mxu0 %v276
    %327 = vmatprep.subr.mxu0 0.0
    %328 = vmatpush1.msra.mxu0 %v277
    %329 = vmatprep.subr.mxu0 0.0
    %330 = vmatpush1.msra.mxu0 %v278
    %331 = vmatprep.subr.mxu0 0.0
    %332 = vmatpush1.msra.mxu0 %v279
    %333 = vmatprep.subr.mxu0 0.0
    %334 = vmatpush1.msra.mxu0 %v280
    %335 = vmatprep.subr.mxu0 0.0
    %336 = vmatpush1.msra.mxu0 %v281
    %337 = vmatprep.subr.mxu0 0.0
    %338 = vmatpush1.msra.mxu0 %v282
    %339 = vmatprep.subr.mxu0 0.0
    %340 = vmatpush1.msra.mxu0 %v283
    %341 = vmatprep.subr.mxu0 0.0
    %342 = vmatpush1.msra.mxu0 %v284
    %343 = vmatprep.subr.mxu0 0.0
    %344 = vmatpush1.msra.mxu0 %v285
    %345 = vmatprep.subr.mxu0 0.0
    %346 = vmatpush1.msra.mxu0 %v286
    %347 = vmatprep.subr.mxu0 0.0
    %348 = vmatpush1.msra.mxu0 %v287
    %349 = vmatprep.subr.mxu0 0.0
    %350 = vmatpush1.msra.mxu0 %v288
    %351 = vmatprep.subr.mxu0 0.0
    %352 = vmatpush1.msra.mxu0 %v289
    %353 = vmatprep.subr.mxu0 0.0
    %354 = vmatpush1.msra.mxu0 %v290
    %355 = vmatprep.mubr.f32.mxu0 %v251
    %356 = vmatmul.mubr.f32.gmra.mrb[0].mxu0 %v249
    %v357 = vpop.f32.mrb[0].mxu0
    %v358 = vadd.f32 0.0, %v357
    %v359 = vpop.f32.mrb[0].mxu0
    %360 = vmatprep.mubr.f32.mxu0 %v257
    %361 = vmatmul.mubr.f32.gmra.mrb[0].mxu0 %v255
    %v362 = vpop.f32.mrb[0].mxu0
    %v363 = vadd.f32 0.0, %v362
    %v364 = vpop.f32.mrb[0].mxu0
    %365 = vdwg.mxu0
    %v366 = vld [vmem:[#allocation7] sm:$0x3]
    %v368 = vlaneseq
    %v369 = vshrl.u32 %v368, 7
    %v370 = vsub.s32 0, %v369
    %v371 = vrot.slane %v366, %v370
    %v372 = vlaneseq
    %v373 = vshrl.u32 %v372, 7
    %v374 = vsub.s32 1, %v373
    %v375 = vrot.slane %v366, %v374
    %378 = vmatprep.subr.mxu0 %v251
    %379 = vmatpush1.xpose.msra.mxu0 %v249
    %380 = vmatprep.subr.mxu0 %v257
    %381 = vmatpush1.xpose.msra.mxu0 %v255
    %382 = vmatprep.subr.mxu0 0.0
    %383 = vmatpush1.xpose.msra.mxu0 0.0
    %384 = vmatprep.subr.mxu0 0.0
    %385 = vmatpush1.xpose.msra.mxu0 0.0
    %386 = vmatprep.subr.mxu0 0.0
    %387 = vmatpush1.xpose.msra.mxu0 0.0
    %388 = vmatprep.subr.mxu0 0.0
    %389 = vmatpush1.xpose.msra.mxu0 0.0
    %390 = vmatprep.subr.mxu0 0.0
    %391 = vmatpush1.xpose.msra.mxu0 0.0
    %392 = vmatprep.subr.mxu0 0.0
    %393 = vmatpush1.xpose.msra.mxu0 0.0
    %394 = vmatprep.subr.mxu0 0.0
    %395 = vmatpush1.xpose.msra.mxu0 0.0
    %396 = vmatprep.subr.mxu0 0.0
    %397 = vmatpush1.xpose.msra.mxu0 0.0
    %398 = vmatprep.subr.mxu0 0.0
    %399 = vmatpush1.xpose.msra.mxu0 0.0
    %400 = vmatprep.subr.mxu0 0.0
    %401 = vmatpush1.xpose.msra.mxu0 0.0
    %402 = vmatprep.subr.mxu0 0.0
    %403 = vmatpush1.xpose.msra.mxu0 0.0
    %404 = vmatprep.subr.mxu0 0.0
    %405 = vmatpush1.xpose.msra.mxu0 0.0
    %406 = vmatprep.subr.mxu0 0.0
    %407 = vmatpush1.xpose.msra.mxu0 0.0
    %408 = vmatprep.subr.mxu0 0.0
    %409 = vmatpush1.xpose.msra.mxu0 0.0
    %410 = vmatprep.subr.mxu0 0.0
    %411 = vmatpush1.xpose.msra.mxu0 0.0
    %412 = vmatprep.subr.mxu0 0.0
    %413 = vmatpush1.xpose.msra.mxu0 0.0
    %414 = vmatprep.subr.mxu0 0.0
    %415 = vmatpush1.xpose.msra.mxu0 0.0
    %416 = vmatprep.subr.mxu0 0.0
    %417 = vmatpush1.xpose.msra.mxu0 0.0
    %418 = vmatprep.subr.mxu0 0.0
    %419 = vmatpush1.xpose.msra.mxu0 0.0
    %420 = vmatprep.subr.mxu0 0.0
    %421 = vmatpush1.xpose.msra.mxu0 0.0
    %422 = vmatprep.subr.mxu0 0.0
    %423 = vmatpush1.xpose.msra.mxu0 0.0
    %424 = vmatprep.subr.mxu0 0.0
    %425 = vmatpush1.xpose.msra.mxu0 0.0
    %426 = vmatprep.subr.mxu0 0.0
    %427 = vmatpush1.xpose.msra.mxu0 0.0
    %428 = vmatprep.subr.mxu0 0.0
    %429 = vmatpush1.xpose.msra.mxu0 0.0
    %430 = vmatprep.subr.mxu0 0.0
    %431 = vmatpush1.xpose.msra.mxu0 0.0
    %432 = vmatprep.subr.mxu0 0.0
    %433 = vmatpush1.xpose.msra.mxu0 0.0
    %434 = vmatprep.subr.mxu0 0.0
    %435 = vmatpush1.xpose.msra.mxu0 0.0
    %436 = vmatprep.subr.mxu0 0.0
    %437 = vmatpush1.xpose.msra.mxu0 0.0
    %438 = vmatprep.subr.mxu0 0.0
    %439 = vmatpush1.xpose.msra.mxu0 0.0
    %440 = vmatprep.subr.mxu0 0.0
    %441 = vmatpush1.xpose.msra.mxu0 0.0
    %442 = vmatprep.mubr.f32.mxu0 %v375
    %443 = vmatmul.mubr.f32.gmra.mrb[0].mxu0 %v371
    %v444 = vpop.f32.mrb[0].mxu0
    %v445 = vadd.f32 0.0, %v444
    %v446 = vpop.f32.mrb[0].mxu0
    %447 = vdwg.mxu0
    %449 = vset.pattern.permute.xlu0 0
    %450 = vperm.xlu0 %449, %v358
    %v451 = vpop.permute.xlu0 %450
    %454 = vset.pattern.permute.xlu0 0
    %455 = vperm.xlu0 %454, %v363
    %v456 = vpop.permute.xlu0 %455
    %v458 = vlaneseq
    %v459 = vshrl.u32 %v458, 7
    %v460 = vsub.s32 0, %v459
    %v461 = vrot.slane %v445, %v460
    %v462 = vadd.f32 %v451, %v461
    %v463 = vadd.f32 %v456, %v461
    %s464 = sld [smem:[#allocation8]]
    %v465 = vstv %s464
    %v466 = vmul.f32 %v114, %v465
    %v467 = vmul.f32 %v115, %v465
    %v468 = vadd.f32 %v462, %v466
    %v469 = vadd.f32 %v463, %v467
    %s470 = sld [smem:[#allocation8 + $0x1]]
    %v471 = vstv %s470
    %v472 = vmul.f32 %v116, %v471
    %v473 = vmul.f32 %v117, %v471
    %v474 = vadd.f32 %v468, %v472
    %v475 = vadd.f32 %v469, %v473
    %vm476 = vcmp.gt.f32.partialorder %v474, 0.0
    %vm477 = vcmp.gt.f32.partialorder %v475, 0.0
    %v478 = vmul.f32 %v474, 0.01
    %v479 = vmul.f32 %v475, 0.01
    %v480 = vsel %vm476, %v474, %v478
    %v481 = vsel %vm477, %v475, %v479
    %vm482 = vcmp.gt.f32.partialorder %v112, 0.0
    %vm483 = vcmp.gt.f32.partialorder %v113, 0.0
    %v484 = vsel %vm482, %v480, -1e+30
    %v485 = vsel %vm483, %v481, -1e+30
    %vm486 = vcmask 130048
    %v487 = vsel %vm486, %v484, -inf
    %v488 = vsel %vm486, %v485, -inf
    %v489 = vmax.f32 %v487, %v488
    %v490 = vrot.slane %v489, 4
    %v491 = vmax.f32 %v489, %v490
    %v492 = vrot.slane %v491, 2
    %v493 = vmax.f32 %v491, %v492
    %v494 = vrot.slane %v493, 1
    %v495 = vmax.f32 %v493, %v494
    %v496 = vsub.f32 %v484, %v495
    %v497 = vsub.f32 %v485, %v495
    %v498 = vmul.f32 %v496, 1.442695
    %v499 = vpow.pop %v498
    %v500 = vmul.f32 %v497, 1.442695
    %v501 = vpow.pop %v500
    %v502 = vsel %vm486, %v499, 0.0
    %v503 = vsel %vm486, %v501, 0.0
    %v504 = vadd.f32 %v502, %v503
    %v505 = vrot.slane %v504, 4
    %v506 = vadd.f32 %v504, %v505
    %v507 = vrot.slane %v506, 2
    %v508 = vadd.f32 %v506, %v507
    %v509 = vrot.slane %v508, 1
    %v510 = vadd.f32 %v508, %v509
    %v511 = vrcp.pop %v510
    %v512 = vmul.f32 %v499, %v511
    %v513 = vmul.f32 %v501, %v511
    %v514 = vmul.f32 %v512, %v114
    %v515 = vmul.f32 %v513, %v115
    %v516 = vsel %vm486, %v514, 0.0
    %v517 = vsel %vm486, %v515, 0.0
    %v518 = vadd.f32 %v516, %v517
    %v519 = vrot.slane %v518, 4
    %v520 = vadd.f32 %v518, %v519
    %v521 = vrot.slane %v520, 2
    %v522 = vadd.f32 %v520, %v521
    %v523 = vrot.slane %v522, 1
    %v524 = vadd.f32 %v522, %v523
    %v525 = vmul.f32 %v512, %v116
    %v526 = vmul.f32 %v513, %v117
    %v527 = vsel %vm486, %v525, 0.0
    %v528 = vsel %vm486, %v526, 0.0
    %v529 = vadd.f32 %v527, %v528
    %v530 = vrot.slane %v529, 4
    %v531 = vadd.f32 %v529, %v530
    %v532 = vrot.slane %v531, 2
    %v533 = vadd.f32 %v531, %v532
    %v534 = vrot.slane %v533, 1
    %v535 = vadd.f32 %v533, %v534
    %vm536 = vcmask 1040384
    %v537 = vsel %vm536, %v524, %v535
    %v538 = vld [vmem:[%s9] sm:$0xf]
    %539 = vxpose.xlu0.b32.start [1/16] %v537, 128
    %540 = vxpose.xlu0.b32.cont [2/16] 0.0, 128
    %541 = vxpose.xlu0.b32.cont [3/16] 0.0, 128
    %542 = vxpose.xlu0.b32.cont [4/16] 0.0, 128
    %543 = vxpose.xlu0.b32.cont [5/16] 0.0, 128
    %544 = vxpose.xlu0.b32.cont [6/16] 0.0, 128
    %545 = vxpose.xlu0.b32.cont [7/16] 0.0, 128
    %546 = vxpose.xlu0.b32.cont [8/16] 0.0, 128
    %547 = vxpose.xlu0.b32.cont [9/16] 0.0, 128
    %548 = vxpose.xlu0.b32.cont [10/16] 0.0, 128
    %549 = vxpose.xlu0.b32.cont [11/16] 0.0, 128
    %550 = vxpose.xlu0.b32.cont [12/16] 0.0, 128
    %551 = vxpose.xlu0.b32.cont [13/16] 0.0, 128
    %552 = vxpose.xlu0.b32.cont [14/16] 0.0, 128
    %553 = vxpose.xlu0.b32.cont [15/16] 0.0, 128
    %554 = vxpose.xlu0.b32.end [16/16] 0.0, 128
    %v555 = vpop.trf.xlu0
    %v556 = vpop.trf.xlu0
    %v557 = vpop.trf.xlu0
    %v558 = vpop.trf.xlu0
    %v559 = vpop.trf.xlu0
    %v560 = vpop.trf.xlu0
    %v561 = vpop.trf.xlu0
    %v562 = vpop.trf.xlu0
    %v563 = vpop.trf.xlu0
    %v564 = vpop.trf.xlu0
    %v565 = vpop.trf.xlu0
    %v566 = vpop.trf.xlu0
    %v567 = vpop.trf.xlu0
    %v568 = vpop.trf.xlu0
    %v569 = vpop.trf.xlu0
    %v570 = vpop.trf.xlu0
    %v573 = vunpack.c.l.s4 1983009808
    %v574 = vunpack.c.0.s8 %v573
    %v575 = vlaneseq
    %v576 = vshrl.u32 %v575, 7
    %v577 = vsub.s32 %v574, %v576
    %v578 = vrot.slane %v538, %v577
    %v579 = vcombine.high %v578, %v578
    %vm580 = vcmask 15360
    %v582 = vsel %vm580, %v555, 0
    %v585 = vsel %vm580, %v556, 0
    %vm587 = vcmask 1041408
    %v588 = vsel %vm587, %v578, 0
    %v590 = vsel %vm587, %v579, 0
    %592 = vmatprep.subr.mxu0 %v590
    %593 = vmatpush1.msra.mxu0 %v588
    %594 = vmatprep.subr.mxu0 0.0
    %595 = vmatpush1.msra.mxu0 0.0
    %596 = vmatprep.subr.mxu0 0.0
    %597 = vmatpush1.msra.mxu0 0.0
    %598 = vmatprep.subr.mxu0 0.0
    %599 = vmatpush1.msra.mxu0 0.0
    %600 = vmatprep.subr.mxu0 0.0
    %601 = vmatpush1.msra.mxu0 0.0
    %602 = vmatprep.subr.mxu0 0.0
    %603 = vmatpush1.msra.mxu0 0.0
    %604 = vmatprep.subr.mxu0 0.0
    %605 = vmatpush1.msra.mxu0 0.0
    %606 = vmatprep.subr.mxu0 0.0
    %607 = vmatpush1.msra.mxu0 0.0
    %608 = vmatprep.subr.mxu0 0.0
    %609 = vmatpush1.msra.mxu0 0.0
    %610 = vmatprep.subr.mxu0 0.0
    %611 = vmatpush1.msra.mxu0 0.0
    %612 = vmatprep.subr.mxu0 0.0
    %613 = vmatpush1.msra.mxu0 0.0
    %614 = vmatprep.subr.mxu0 0.0
    %615 = vmatpush1.msra.mxu0 0.0
    %616 = vmatprep.subr.mxu0 0.0
    %617 = vmatpush1.msra.mxu0 0.0
    %618 = vmatprep.subr.mxu0 0.0
    %619 = vmatpush1.msra.mxu0 0.0
    %620 = vmatprep.subr.mxu0 0.0
    %621 = vmatpush1.msra.mxu0 0.0
    %622 = vmatprep.subr.mxu0 0.0
    %623 = vmatpush1.msra.mxu0 0.0
    %624 = vmatprep.subr.mxu0 0.0
    %625 = vmatpush1.msra.mxu0 0.0
    %626 = vmatprep.subr.mxu0 0.0
    %627 = vmatpush1.msra.mxu0 0.0
    %628 = vmatprep.subr.mxu0 0.0
    %629 = vmatpush1.msra.mxu0 0.0
    %630 = vmatprep.subr.mxu0 0.0
    %631 = vmatpush1.msra.mxu0 0.0
    %632 = vmatprep.subr.mxu0 0.0
    %633 = vmatpush1.msra.mxu0 0.0
    %634 = vmatprep.subr.mxu0 0.0
    %635 = vmatpush1.msra.mxu0 0.0
    %636 = vmatprep.subr.mxu0 0.0
    %637 = vmatpush1.msra.mxu0 0.0
    %638 = vmatprep.subr.mxu0 0.0
    %639 = vmatpush1.msra.mxu0 0.0
    %640 = vmatprep.subr.mxu0 0.0
    %641 = vmatpush1.msra.mxu0 0.0
    %642 = vmatprep.subr.mxu0 0.0
    %643 = vmatpush1.msra.mxu0 0.0
    %644 = vmatprep.subr.mxu0 0.0
    %645 = vmatpush1.msra.mxu0 0.0
    %646 = vmatprep.subr.mxu0 0.0
    %647 = vmatpush1.msra.mxu0 0.0
    %648 = vmatprep.subr.mxu0 0.0
    %649 = vmatpush1.msra.mxu0 0.0
    %650 = vmatprep.subr.mxu0 0.0
    %651 = vmatpush1.msra.mxu0 0.0
    %652 = vmatprep.subr.mxu0 0.0
    %653 = vmatpush1.msra.mxu0 0.0
    %654 = vmatprep.subr.mxu0 0.0
    %655 = vmatpush1.msra.mxu0 0.0
    %656 = vmatprep.mubr.f32.mxu0 0.0
    %657 = vmatmul.mubr.f32.gmra.mrb[0].mxu0 %v582
    %v658 = vpop.f32.mrb[0].mxu0
    %v659 = vadd.f32 0.0, %v658
    %v660 = vpop.f32.mrb[0].mxu0
    %v661 = vadd.f32 0.0, %v660
    %662 = vmatprep.mubr.f32.mxu0 0.0
    %663 = vmatmul.mubr.f32.gmra.mrb[0].mxu0 %v585
    %v664 = vpop.f32.mrb[0].mxu0
    %v665 = vadd.f32 0.0, %v664
    %v666 = vpop.f32.mrb[0].mxu0
    %v667 = vadd.f32 0.0, %v666
    %668 = vdwg.mxu0
    %669 = vxpose.xlu0.b32.start [1/16] %v512, 128
    %670 = vxpose.xlu0.b32.cont [2/16] %v513, 128
    %671 = vxpose.xlu0.b32.cont [3/16] 0.0, 128
    %672 = vxpose.xlu0.b32.cont [4/16] 0.0, 128
    %673 = vxpose.xlu0.b32.cont [5/16] 0.0, 128
    %674 = vxpose.xlu0.b32.cont [6/16] 0.0, 128
    %675 = vxpose.xlu0.b32.cont [7/16] 0.0, 128
    %676 = vxpose.xlu0.b32.cont [8/16] 0.0, 128
    %677 = vxpose.xlu0.b32.cont [9/16] 0.0, 128
    %678 = vxpose.xlu0.b32.cont [10/16] 0.0, 128
    %679 = vxpose.xlu0.b32.cont [11/16] 0.0, 128
    %680 = vxpose.xlu0.b32.cont [12/16] 0.0, 128
    %681 = vxpose.xlu0.b32.cont [13/16] 0.0, 128
    %682 = vxpose.xlu0.b32.cont [14/16] 0.0, 128
    %683 = vxpose.xlu0.b32.cont [15/16] 0.0, 128
    %684 = vxpose.xlu0.b32.end [16/16] 0.0, 128
    %v685 = vpop.trf.xlu0
    %v686 = vpop.trf.xlu0
    %v687 = vpop.trf.xlu0
    %v688 = vpop.trf.xlu0
    %v689 = vpop.trf.xlu0
    %v690 = vpop.trf.xlu0
    %v691 = vpop.trf.xlu0
    %v692 = vpop.trf.xlu0
    %v693 = vpop.trf.xlu0
    %v694 = vpop.trf.xlu0
    %v695 = vpop.trf.xlu0
    %v696 = vpop.trf.xlu0
    %v697 = vpop.trf.xlu0
    %v698 = vpop.trf.xlu0
    %v699 = vpop.trf.xlu0
    %v700 = vpop.trf.xlu0
    %v702 = vsel %vm486, %v685, 0
    %v705 = vsel %vm486, %v686, 0
    %707 = vmatprep.subr.mxu0 %v251
    %708 = vmatpush1.msra.mxu0 %v249
    %709 = vmatprep.subr.mxu0 %v257
    %710 = vmatpush1.msra.mxu0 %v255
    %711 = vmatprep.subr.mxu0 0.0
    %712 = vmatpush1.msra.mxu0 0.0
    %713 = vmatprep.subr.mxu0 0.0
    %714 = vmatpush1.msra.mxu0 0.0
    %715 = vmatprep.subr.mxu0 0.0
    %716 = vmatpush1.msra.mxu0 0.0
    %717 = vmatprep.subr.mxu0 0.0
    %718 = vmatpush1.msra.mxu0 0.0
    %719 = vmatprep.subr.mxu0 0.0
    %720 = vmatpush1.msra.mxu0 0.0
    %721 = vmatprep.subr.mxu0 0.0
    %722 = vmatpush1.msra.mxu0 0.0
    %723 = vmatprep.subr.mxu0 0.0
    %724 = vmatpush1.msra.mxu0 0.0
    %725 = vmatprep.subr.mxu0 0.0
    %726 = vmatpush1.msra.mxu0 0.0
    %727 = vmatprep.subr.mxu0 0.0
    %728 = vmatpush1.msra.mxu0 0.0
    %729 = vmatprep.subr.mxu0 0.0
    %730 = vmatpush1.msra.mxu0 0.0
    %731 = vmatprep.subr.mxu0 0.0
    %732 = vmatpush1.msra.mxu0 0.0
    %733 = vmatprep.subr.mxu0 0.0
    %734 = vmatpush1.msra.mxu0 0.0
    %735 = vmatprep.subr.mxu0 0.0
    %736 = vmatpush1.msra.mxu0 0.0
    %737 = vmatprep.subr.mxu0 0.0
    %738 = vmatpush1.msra.mxu0 0.0
    %739 = vmatprep.subr.mxu0 0.0
    %740 = vmatpush1.msra.mxu0 0.0
    %741 = vmatprep.subr.mxu0 0.0
    %742 = vmatpush1.msra.mxu0 0.0
    %743 = vmatprep.subr.mxu0 0.0
    %744 = vmatpush1.msra.mxu0 0.0
    %745 = vmatprep.subr.mxu0 0.0
    %746 = vmatpush1.msra.mxu0 0.0
    %747 = vmatprep.subr.mxu0 0.0
    %748 = vmatpush1.msra.mxu0 0.0
    %749 = vmatprep.subr.mxu0 0.0
    %750 = vmatpush1.msra.mxu0 0.0
    %751 = vmatprep.subr.mxu0 0.0
    %752 = vmatpush1.msra.mxu0 0.0
    %753 = vmatprep.subr.mxu0 0.0
    %754 = vmatpush1.msra.mxu0 0.0
    %755 = vmatprep.subr.mxu0 0.0
    %756 = vmatpush1.msra.mxu0 0.0
    %757 = vmatprep.subr.mxu0 0.0
    %758 = vmatpush1.msra.mxu0 0.0
    %759 = vmatprep.subr.mxu0 0.0
    %760 = vmatpush1.msra.mxu0 0.0
    %761 = vmatprep.subr.mxu0 0.0
    %762 = vmatpush1.msra.mxu0 0.0
    %763 = vmatprep.subr.mxu0 0.0
    %764 = vmatpush1.msra.mxu0 0.0
    %765 = vmatprep.subr.mxu0 0.0
    %766 = vmatpush1.msra.mxu0 0.0
    %767 = vmatprep.subr.mxu0 0.0
    %768 = vmatpush1.msra.mxu0 0.0
    %769 = vmatprep.subr.mxu0 0.0
    %770 = vmatpush1.msra.mxu0 0.0
    %771 = vmatprep.mubr.f32.mxu0 0.0
    %772 = vmatmul.mubr.f32.gmra.mrb[0].mxu0 %v702
    %v773 = vpop.f32.mrb[0].mxu0
    %v774 = vadd.f32 %v659, %v773
    %v775 = vpop.f32.mrb[0].mxu0
    %v776 = vadd.f32 %v661, %v775
    %777 = vmatprep.mubr.f32.mxu0 0.0
    %778 = vmatmul.mubr.f32.gmra.mrb[0].mxu0 %v705
    %v779 = vpop.f32.mrb[0].mxu0
    %v780 = vadd.f32 %v665, %v779
    %v781 = vpop.f32.mrb[0].mxu0
    %v782 = vadd.f32 %v667, %v781
    %783 = vdwg.mxu0
    %v784 = vld [vmem:[#allocation9] sm:$0xff]
    %v785 = vld [vmem:[#allocation9 + $0x8] sm:$0xff]
    %v786 = vld [vmem:[#allocation9 + $0x10] sm:$0xff]
    %v787 = vld [vmem:[#allocation9 + $0x18] sm:$0xff]
    %v788 = vld [vmem:[#allocation9 + $0x20] sm:$0xff]
    %v789 = vld [vmem:[#allocation9 + $0x28] sm:$0xff]
    %v790 = vld [vmem:[#allocation9 + $0x30] sm:$0xff]
    %v791 = vld [vmem:[#allocation9 + $0x38] sm:$0xff]
    %v792 = vld [vmem:[#allocation9 + $0x40] sm:$0xff]
    %v793 = vld [vmem:[#allocation9 + $0x48] sm:$0xff]
    %v794 = vld [vmem:[#allocation9 + $0x50] sm:$0xff]
    %v795 = vld [vmem:[#allocation9 + $0x58] sm:$0xff]
    %v796 = vld [vmem:[#allocation9 + $0x60] sm:$0xff]
    %v797 = vld [vmem:[#allocation9 + $0x68] sm:$0xff]
    %v798 = vld [vmem:[#allocation9 + $0x70] sm:$0xff]
    %v799 = vld [vmem:[#allocation9 + $0x78] sm:$0xff]
    %v800 = vld [vmem:[#allocation9 + $0x80] sm:$0xff]
    %v801 = vld [vmem:[#allocation9 + $0x88] sm:$0xff]
    %v802 = vld [vmem:[#allocation9 + $0x90] sm:$0xff]
    %v803 = vld [vmem:[#allocation9 + $0x98] sm:$0xff]
    %v804 = vld [vmem:[#allocation9 + $0xa0] sm:$0xff]
    %v805 = vld [vmem:[#allocation9 + $0xa8] sm:$0xff]
    %v806 = vld [vmem:[#allocation9 + $0xb0] sm:$0xff]
    %v807 = vld [vmem:[#allocation9 + $0xb8] sm:$0xff]
    %v808 = vld [vmem:[#allocation9 + $0xc0] sm:$0xff]
    %v809 = vld [vmem:[#allocation9 + $0xc8] sm:$0xff]
    %v810 = vld [vmem:[#allocation9 + $0xd0] sm:$0xff]
    %v811 = vld [vmem:[#allocation9 + $0xd8] sm:$0xff]
    %v812 = vld [vmem:[#allocation9 + $0xe0] sm:$0xff]
    %v813 = vld [vmem:[#allocation9 + $0xe8] sm:$0xff]
    %v814 = vld [vmem:[#allocation9 + $0xf0] sm:$0xff]
    %v815 = vld [vmem:[#allocation9 + $0xf8] sm:$0xff]
    %v816 = vld [vmem:[#allocation9 + $0x100] sm:$0xff]
    %v817 = vld [vmem:[#allocation9 + $0x108] sm:$0xff]
    %v818 = vld [vmem:[#allocation9 + $0x110] sm:$0xff]
    %v819 = vld [vmem:[#allocation9 + $0x118] sm:$0xff]
    %v820 = vld [vmem:[#allocation9 + $0x120] sm:$0xff]
    %v821 = vld [vmem:[#allocation9 + $0x128] sm:$0xff]
    %v822 = vld [vmem:[#allocation9 + $0x130] sm:$0xff]
    %v823 = vld [vmem:[#allocation9 + $0x138] sm:$0xff]
    %v824 = vld [vmem:[#allocation9 + $0x140] sm:$0xff]
    %v825 = vld [vmem:[#allocation9 + $0x148] sm:$0xff]
    %v826 = vld [vmem:[#allocation9 + $0x150] sm:$0xff]
    %v827 = vld [vmem:[#allocation9 + $0x158] sm:$0xff]
    %v828 = vld [vmem:[#allocation9 + $0x160] sm:$0xff]
    %v829 = vld [vmem:[#allocation9 + $0x168] sm:$0xff]
    %v830 = vld [vmem:[#allocation9 + $0x170] sm:$0xff]
    %v831 = vld [vmem:[#allocation9 + $0x178] sm:$0xff]
    %v832 = vld [vmem:[#allocation9 + $0x180] sm:$0xff]
    %v833 = vld [vmem:[#allocation9 + $0x188] sm:$0xff]
    %v834 = vld [vmem:[#allocation9 + $0x190] sm:$0xff]
    %v835 = vld [vmem:[#allocation9 + $0x198] sm:$0xff]
    %v836 = vld [vmem:[#allocation9 + $0x1a0] sm:$0xff]
    %v837 = vld [vmem:[#allocation9 + $0x1a8] sm:$0xff]
    %v838 = vld [vmem:[#allocation9 + $0x1b0] sm:$0xff]
    %v839 = vld [vmem:[#allocation9 + $0x1b8] sm:$0xff]
    %v840 = vld [vmem:[#allocation9 + $0x1c0] sm:$0xff]
    %v841 = vld [vmem:[#allocation9 + $0x1c8] sm:$0xff]
    %v842 = vld [vmem:[#allocation9 + $0x1d0] sm:$0xff]
    %v843 = vld [vmem:[#allocation9 + $0x1d8] sm:$0xff]
    %v844 = vld [vmem:[#allocation9 + $0x1e0] sm:$0xff]
    %v845 = vld [vmem:[#allocation9 + $0x1e8] sm:$0xff]
    %v846 = vld [vmem:[#allocation9 + $0x1f0] sm:$0xff]
    %v847 = vld [vmem:[#allocation9 + $0x1f8] sm:$0xff]
    %v848 = vld [vmem:[#allocation9 + $0x200] sm:$0xff]
    %v849 = vld [vmem:[#allocation9 + $0x208] sm:$0xff]
    %v850 = vld [vmem:[#allocation9 + $0x210] sm:$0xff]
    %v851 = vld [vmem:[#allocation9 + $0x218] sm:$0xff]
    %v852 = vld [vmem:[#allocation9 + $0x220] sm:$0xff]
    %v853 = vld [vmem:[#allocation9 + $0x228] sm:$0xff]
    %v854 = vld [vmem:[#allocation9 + $0x230] sm:$0xff]
    %v855 = vld [vmem:[#allocation9 + $0x238] sm:$0xff]
    %v856 = vld [vmem:[#allocation9 + $0x240] sm:$0xff]
    %v857 = vld [vmem:[#allocation9 + $0x248] sm:$0xff]
    %v858 = vld [vmem:[#allocation9 + $0x250] sm:$0xff]
    %v859 = vld [vmem:[#allocation9 + $0x258] sm:$0xff]
    %v860 = vld [vmem:[#allocation9 + $0x260] sm:$0xff]
    %v861 = vld [vmem:[#allocation9 + $0x268] sm:$0xff]
    %v862 = vld [vmem:[#allocation9 + $0x270] sm:$0xff]
    %v863 = vld [vmem:[#allocation9 + $0x278] sm:$0xff]
    %v864 = vld [vmem:[#allocation9 + $0x280] sm:$0xff]
    %v865 = vld [vmem:[#allocation9 + $0x288] sm:$0xff]
    %v866 = vld [vmem:[#allocation9 + $0x290] sm:$0xff]
    %v867 = vld [vmem:[#allocation9 + $0x298] sm:$0xff]
    %v868 = vld [vmem:[#allocation9 + $0x2a0] sm:$0xff]
    %v869 = vld [vmem:[#allocation9 + $0x2a8] sm:$0xff]
    %v870 = vld [vmem:[#allocation9 + $0x2b0] sm:$0xff]
    %v871 = vld [vmem:[#allocation9 + $0x2b8] sm:$0xff]
    %v872 = vld [vmem:[#allocation9 + $0x2c0] sm:$0xff]
    %v873 = vld [vmem:[#allocation9 + $0x2c8] sm:$0xff]
    %v874 = vld [vmem:[#allocation9 + $0x2d0] sm:$0xff]
    %v875 = vld [vmem:[#allocation9 + $0x2d8] sm:$0xff]
    %v876 = vld [vmem:[#allocation9 + $0x2e0] sm:$0xff]
    %v877 = vld [vmem:[#allocation9 + $0x2e8] sm:$0xff]
    %v878 = vld [vmem:[#allocation9 + $0x2f0] sm:$0xff]
    %v879 = vld [vmem:[#allocation9 + $0x2f8] sm:$0xff]
    %v880 = vld [vmem:[#allocation9 + $0x300] sm:$0xff]
    %v881 = vld [vmem:[#allocation9 + $0x308] sm:$0xff]
    %v882 = vld [vmem:[#allocation9 + $0x310] sm:$0xff]
    %v883 = vld [vmem:[#allocation9 + $0x318] sm:$0xff]
    %v884 = vld [vmem:[#allocation9 + $0x320] sm:$0xff]
    %v885 = vld [vmem:[#allocation9 + $0x328] sm:$0xff]
    %v886 = vld [vmem:[#allocation9 + $0x330] sm:$0xff]
    %v887 = vld [vmem:[#allocation9 + $0x338] sm:$0xff]
    %v888 = vld [vmem:[#allocation9 + $0x340] sm:$0xff]
    %v889 = vld [vmem:[#allocation9 + $0x348] sm:$0xff]
    %v890 = vld [vmem:[#allocation9 + $0x350] sm:$0xff]
    %v891 = vld [vmem:[#allocation9 + $0x358] sm:$0xff]
    %v892 = vld [vmem:[#allocation9 + $0x360] sm:$0xff]
    %v893 = vld [vmem:[#allocation9 + $0x368] sm:$0xff]
    %v894 = vld [vmem:[#allocation9 + $0x370] sm:$0xff]
    %v895 = vld [vmem:[#allocation9 + $0x378] sm:$0xff]
    %v896 = vld [vmem:[#allocation9 + $0x380] sm:$0xff]
    %v897 = vld [vmem:[#allocation9 + $0x388] sm:$0xff]
    %v898 = vld [vmem:[#allocation9 + $0x390] sm:$0xff]
    %v899 = vld [vmem:[#allocation9 + $0x398] sm:$0xff]
    %v900 = vld [vmem:[#allocation9 + $0x3a0] sm:$0xff]
    %v901 = vld [vmem:[#allocation9 + $0x3a8] sm:$0xff]
    %v902 = vld [vmem:[#allocation9 + $0x3b0] sm:$0xff]
    %v903 = vld [vmem:[#allocation9 + $0x3b8] sm:$0xff]
    %v904 = vld [vmem:[#allocation9 + $0x3c0] sm:$0xff]
    %v905 = vld [vmem:[#allocation9 + $0x3c8] sm:$0xff]
    %v906 = vld [vmem:[#allocation9 + $0x3d0] sm:$0xff]
    %v907 = vld [vmem:[#allocation9 + $0x3d8] sm:$0xff]
    %v908 = vld [vmem:[#allocation9 + $0x3e0] sm:$0xff]
    %v909 = vld [vmem:[#allocation9 + $0x3e8] sm:$0xff]
    %v910 = vld [vmem:[#allocation9 + $0x3f0] sm:$0xff]
    %v911 = vld [vmem:[#allocation9 + $0x3f8] sm:$0xff]
    %912 = vmatprep.subr.mxu0 %v849
    %913 = vmatpush1.msra.mxu0 %v848
    %914 = vmatprep.subr.mxu0 %v851
    %915 = vmatpush1.msra.mxu0 %v850
    %916 = vmatprep.subr.mxu0 %v853
    %917 = vmatpush1.msra.mxu0 %v852
    %918 = vmatprep.subr.mxu0 %v855
    %919 = vmatpush1.msra.mxu0 %v854
    %920 = vmatprep.subr.mxu0 %v857
    %921 = vmatpush1.msra.mxu0 %v856
    %922 = vmatprep.subr.mxu0 %v859
    %923 = vmatpush1.msra.mxu0 %v858
    %924 = vmatprep.subr.mxu0 %v861
    %925 = vmatpush1.msra.mxu0 %v860
    %926 = vmatprep.subr.mxu0 %v863
    %927 = vmatpush1.msra.mxu0 %v862
    %928 = vmatprep.subr.mxu0 %v865
    %929 = vmatpush1.msra.mxu0 %v864
    %930 = vmatprep.subr.mxu0 %v867
    %931 = vmatpush1.msra.mxu0 %v866
    %932 = vmatprep.subr.mxu0 %v869
    %933 = vmatpush1.msra.mxu0 %v868
    %934 = vmatprep.subr.mxu0 %v871
    %935 = vmatpush1.msra.mxu0 %v870
    %936 = vmatprep.subr.mxu0 %v873
    %937 = vmatpush1.msra.mxu0 %v872
    %938 = vmatprep.subr.mxu0 %v875
    %939 = vmatpush1.msra.mxu0 %v874
    %940 = vmatprep.subr.mxu0 %v877
    %941 = vmatpush1.msra.mxu0 %v876
    %942 = vmatprep.subr.mxu0 %v879
    %943 = vmatpush1.msra.mxu0 %v878
    %944 = vmatprep.subr.mxu0 %v881
    %945 = vmatpush1.msra.mxu0 %v880
    %946 = vmatprep.subr.mxu0 %v883
    %947 = vmatpush1.msra.mxu0 %v882
    %948 = vmatprep.subr.mxu0 %v885
    %949 = vmatpush1.msra.mxu0 %v884
    %950 = vmatprep.subr.mxu0 %v887
    %951 = vmatpush1.msra.mxu0 %v886
    %952 = vmatprep.subr.mxu0 %v889
    %953 = vmatpush1.msra.mxu0 %v888
    %954 = vmatprep.subr.mxu0 %v891
    %955 = vmatpush1.msra.mxu0 %v890
    %956 = vmatprep.subr.mxu0 %v893
    %957 = vmatpush1.msra.mxu0 %v892
    %958 = vmatprep.subr.mxu0 %v895
    %959 = vmatpush1.msra.mxu0 %v894
    %960 = vmatprep.subr.mxu0 %v897
    %961 = vmatpush1.msra.mxu0 %v896
    %962 = vmatprep.subr.mxu0 %v899
    %963 = vmatpush1.msra.mxu0 %v898
    %964 = vmatprep.subr.mxu0 %v901
    %965 = vmatpush1.msra.mxu0 %v900
    %966 = vmatprep.subr.mxu0 %v903
    %967 = vmatpush1.msra.mxu0 %v902
    %968 = vmatprep.subr.mxu0 %v905
    %969 = vmatpush1.msra.mxu0 %v904
    %970 = vmatprep.subr.mxu0 %v907
    %971 = vmatpush1.msra.mxu0 %v906
    %972 = vmatprep.subr.mxu0 %v909
    %973 = vmatpush1.msra.mxu0 %v908
    %974 = vmatprep.subr.mxu0 %v911
    %975 = vmatpush1.msra.mxu0 %v910
    %976 = vmatprep.mubr.f32.mxu0 %v109
    %977 = vmatmul.mubr.f32.gmra.mrb[0].mxu0 %v108
    %v978 = vpop.f32.mrb[0].mxu0
    %v979 = vadd.f32 0.0, %v978
    %v980 = vpop.f32.mrb[0].mxu0
    %v981 = vadd.f32 0.0, %v980
    %982 = vmatprep.mubr.f32.mxu0 %v111
    %983 = vmatmul.mubr.f32.gmra.mrb[0].mxu0 %v110
    %v984 = vpop.f32.mrb[0].mxu0
    %v985 = vadd.f32 0.0, %v984
    %v986 = vpop.f32.mrb[0].mxu0
    %v987 = vadd.f32 0.0, %v986
    %988 = vdwg.mxu0
    %989 = vmatprep.subr.mxu0 %v785
    %990 = vmatpush1.msra.mxu0 %v784
    %991 = vmatprep.subr.mxu0 %v787
    %992 = vmatpush1.msra.mxu0 %v786
    %993 = vmatprep.subr.mxu0 %v789
    %994 = vmatpush1.msra.mxu0 %v788
    %995 = vmatprep.subr.mxu0 %v791
    %996 = vmatpush1.msra.mxu0 %v790
    %997 = vmatprep.subr.mxu0 %v793
    %998 = vmatpush1.msra.mxu0 %v792
    %999 = vmatprep.subr.mxu0 %v795
    %1000 = vmatpush1.msra.mxu0 %v794
    %1001 = vmatprep.subr.mxu0 %v797
    %1002 = vmatpush1.msra.mxu0 %v796
    %1003 = vmatprep.subr.mxu0 %v799
    %1004 = vmatpush1.msra.mxu0 %v798
    %1005 = vmatprep.subr.mxu0 %v801
    %1006 = vmatpush1.msra.mxu0 %v800
    %1007 = vmatprep.subr.mxu0 %v803
    %1008 = vmatpush1.msra.mxu0 %v802
    %1009 = vmatprep.subr.mxu0 %v805
    %1010 = vmatpush1.msra.mxu0 %v804
    %1011 = vmatprep.subr.mxu0 %v807
    %1012 = vmatpush1.msra.mxu0 %v806
    %1013 = vmatprep.subr.mxu0 %v809
    %1014 = vmatpush1.msra.mxu0 %v808
    %1015 = vmatprep.subr.mxu0 %v811
    %1016 = vmatpush1.msra.mxu0 %v810
    %1017 = vmatprep.subr.mxu0 %v813
    %1018 = vmatpush1.msra.mxu0 %v812
    %1019 = vmatprep.subr.mxu0 %v815
    %1020 = vmatpush1.msra.mxu0 %v814
    %1021 = vmatprep.subr.mxu0 %v817
    %1022 = vmatpush1.msra.mxu0 %v816
    %1023 = vmatprep.subr.mxu0 %v819
    %1024 = vmatpush1.msra.mxu0 %v818
    %1025 = vmatprep.subr.mxu0 %v821
    %1026 = vmatpush1.msra.mxu0 %v820
    %1027 = vmatprep.subr.mxu0 %v823
    %1028 = vmatpush1.msra.mxu0 %v822
    %1029 = vmatprep.subr.mxu0 %v825
    %1030 = vmatpush1.msra.mxu0 %v824
    %1031 = vmatprep.subr.mxu0 %v827
    %1032 = vmatpush1.msra.mxu0 %v826
    %1033 = vmatprep.subr.mxu0 %v829
    %1034 = vmatpush1.msra.mxu0 %v828
    %1035 = vmatprep.subr.mxu0 %v831
    %1036 = vmatpush1.msra.mxu0 %v830
    %1037 = vmatprep.subr.mxu0 %v833
    %1038 = vmatpush1.msra.mxu0 %v832
    %1039 = vmatprep.subr.mxu0 %v835
    %1040 = vmatpush1.msra.mxu0 %v834
    %1041 = vmatprep.subr.mxu0 %v837
    %1042 = vmatpush1.msra.mxu0 %v836
    %1043 = vmatprep.subr.mxu0 %v839
    %1044 = vmatpush1.msra.mxu0 %v838
    %1045 = vmatprep.subr.mxu0 %v841
    %1046 = vmatpush1.msra.mxu0 %v840
    %1047 = vmatprep.subr.mxu0 %v843
    %1048 = vmatpush1.msra.mxu0 %v842
    %1049 = vmatprep.subr.mxu0 %v845
    %1050 = vmatpush1.msra.mxu0 %v844
    %1051 = vmatprep.subr.mxu0 %v847
    %1052 = vmatpush1.msra.mxu0 %v846
    %1053 = vmatprep.mubr.f32.mxu0 %v776
    %1054 = vmatmul.mubr.f32.gmra.mrb[0].mxu0 %v774
    %v1055 = vpop.f32.mrb[0].mxu0
    %v1056 = vadd.f32 %v979, %v1055
    %v1057 = vpop.f32.mrb[0].mxu0
    %v1058 = vadd.f32 %v981, %v1057
    %1059 = vmatprep.mubr.f32.mxu0 %v782
    %1060 = vmatmul.mubr.f32.gmra.mrb[0].mxu0 %v780
    %v1061 = vpop.f32.mrb[0].mxu0
    %v1062 = vadd.f32 %v985, %v1061
    %v1063 = vpop.f32.mrb[0].mxu0
    %v1064 = vadd.f32 %v987, %v1063
    %1065 = vdwg.mxu0
    %v1066 = vmul.f32 %v774, 0.3
    %v1067 = vmul.f32 %v776, 0.3
    %v1068 = vmul.f32 %v780, 0.3
    %v1069 = vmul.f32 %v782, 0.3
    %v1070 = vmul.f32 %v108, 0.7
    %v1071 = vmul.f32 %v109, 0.7
    %v1072 = vmul.f32 %v110, 0.7
    %v1073 = vmul.f32 %v111, 0.7
    %v1074 = vadd.f32 %v1066, %v1070
    %v1075 = vadd.f32 %v1067, %v1071
    %v1076 = vadd.f32 %v1068, %v1072
    %v1077 = vadd.f32 %v1069, %v1073
    %v1078 = vmul.f32 %v1056, 0.91629076
    %v1079 = vmul.f32 %v1058, 0.91629076
    %v1080 = vmul.f32 %v1062, 0.91629076
    %v1081 = vmul.f32 %v1064, 0.91629076
    %v1082 = vmul.f32 %v1074, 0.08370927
    %v1083 = vmul.f32 %v1075, 0.08370927
    %v1084 = vmul.f32 %v1076, 0.08370927
    %v1085 = vmul.f32 %v1077, 0.08370927
    %v1086 = vadd.f32 %v1078, %v1082
    %v1087 = vadd.f32 %v1079, %v1083
    %v1088 = vadd.f32 %v1080, %v1084
    %v1089 = vadd.f32 %v1081, %v1085
    %v1090 = vadd.f32 %v1086, %v104
    %v1091 = vadd.f32 %v1087, %v105
    %v1092 = vadd.f32 %v1088, %v106
    %v1093 = vadd.f32 %v1089, %v107
    %v1094 = vmax.f32 %v1090, 0.0
    %v1095 = vmax.f32 %v1091, 0.0
    %v1096 = vmax.f32 %v1092, 0.0
    %v1097 = vmax.f32 %v1093, 0.0
    %1098 = vst [vmem:[%s11] sm:$0xff] %v1094
    %1099 = vst [vmem:[%s11 + $0x8] sm:$0xff] %v1095
    %1100 = vst [vmem:[%s11 + $0x10] sm:$0xff] %v1096
    %1101 = vst [vmem:[%s11 + $0x18] sm:$0xff] %v1097
    // Predicated region
    $region66: #{mvsoppis_forward.5} parent=1 // pred_check
      _
    $region67: #{mvsoppis_forward.5} parent=1 // pred_check_branch
      %1103 = sbr.rel (0) target = $region69
    $region68: #{mvsoppis_forward.5} parent=1 // pred_region
      _
    $region69: #{mvsoppis_forward.5} parent=1 // pred_fallthru
      _
    // Predicated region
    $region70: #{mvsoppis_forward.5} parent=1 // pred_check
      _
    $region71: #{mvsoppis_forward.5} parent=1 // pred_check_branch
      %1105 = sbr.rel (0) target = $region73
    $region72: #{mvsoppis_forward.5} parent=1 // pred_region
      _
    $region73: #{mvsoppis_forward.5} parent=1 // pred_fallthru
      _
    %1106 = vsyncpa [#allocation3], 1
    %1107 = vsyncpa [#allocation6], 1
    %1108 = vsyncpa [#allocation10], 1
    %1109 = vsyncpa [#allocation4], 1

// kernel: mvsoppis_forward.7
$region0: #{mvsoppis_forward.7}
  #allocation0 [shape = 'u32[]', space=smem, size = 0x4, offset = 0x4, fixed_abs, tag = 'smem constant byte address 0x4 - core index']
  #allocation1 [shape = 'u32[144,128]{1,0:T(1,128)}', space=vmem, size = 0x12000, scoped, tag = 'internal scratch']
  %s0 = inlined_call_operand.vmem [shape: f32[16,256], index: 0, kind: input, shape index: {}]
  %s1 = inlined_call_operand.vmem [shape: f32[16,256], index: 1, kind: input, shape index: {}]
  %s2 = inlined_call_operand.vmem [shape: f32[16,1024], index: 2, kind: input, shape index: {}]
  %s3 = inlined_call_operand.vmem [shape: f32[256,256], index: 3, kind: input, shape index: {}]
  %s4 = inlined_call_operand.vmem [shape: f32[1,256], index: 4, kind: input, shape index: {}]
  %s5 = inlined_call_operand.vmem [shape: f32[256,512], index: 5, kind: input, shape index: {}]
  %s6 = inlined_call_operand.vmem [shape: f32[1,512], index: 6, kind: input, shape index: {}]
  %s7 = inlined_call_operand.hbm [shape: f32[256,256], index: 7, kind: input, shape index: {}]
  %s8 = inlined_call_operand.vmem [shape: f32[1,256], index: 8, kind: input, shape index: {}]
  %s9 = inlined_call_operand.hbm [shape: f32[256,256], index: 9, kind: input, shape index: {}]
  %s10 = inlined_call_operand.vmem [shape: f32[1,256], index: 10, kind: input, shape index: {}]
  %s11 = inlined_call_operand.vmem [shape: f32[1536,256], index: 11, kind: input, shape index: {}]
  %s12 = inlined_call_operand.vmem [shape: f32[1,256], index: 12, kind: input, shape index: {}]
  %s13 = inlined_call_operand.vmem [shape: f32[256,128], index: 13, kind: input, shape index: {}]
  %s14 = inlined_call_operand.vmem [shape: f32[1,128], index: 14, kind: input, shape index: {}]
  %s15 = inlined_call_operand.vmem [shape: f32[128,2], index: 15, kind: input, shape index: {}]
  %s16 = inlined_call_operand.vmem [shape: f32[1,2], index: 16, kind: input, shape index: {}]
  %s17 = inlined_call_operand.vmem [shape: f32[16,2], index: 17, kind: output, shape index: {}]
  %s18 = sld [smem:[#allocation0]]
  $region86: #{mvsoppis_forward.7} parent=0
    _
  %s20 = ssub.s32 1, %s18
  %s21 = scalar_select 0, %s20, %s18
  $region1: #{mvsoppis_forward.7} parent=0
    #allocation2 [shape = 'u8[262144]{0}', space=vmem, size = 0x40000, scoped, tag = 'input window, operand 7, single buffered']
    #allocation3 [shape = 's32[1]{0}', space=sflag, size = 0x4, scoped, tag = 'scoped memory for mvsoppis_forward.7']
    #allocation4 [shape = 'u8[262144]{0}', space=vmem, size = 0x40000, scoped, tag = 'input window, operand 9, single buffered']
    #allocation5 [shape = 's32[1]{0}', space=sflag, size = 0x4, scoped, tag = 'scoped memory for mvsoppis_forward.7']
    %22 = vsyncpa [#allocation3], 0
    %23 = vsyncpa [#allocation5], 0
    // Predicated region
    $region2: #{mvsoppis_forward.7} parent=1 // pred_check
      _
    $region3: #{mvsoppis_forward.7} parent=1 // pred_check_branch
      %25 = sbr.rel (0) target = $region5
    $region4: #{mvsoppis_forward.7} parent=1 // pred_region
      _
    $region5: #{mvsoppis_forward.7} parent=1 // pred_fallthru
      _
    // Predicated region
    $region6: #{mvsoppis_forward.7} parent=1 // pred_check
      _
    $region7: #{mvsoppis_forward.7} parent=1 // pred_check_branch
      %27 = sbr.rel (0) target = $region9
    $region8: #{mvsoppis_forward.7} parent=1 // pred_region
      _
    $region9: #{mvsoppis_forward.7} parent=1 // pred_fallthru
      _
    // Predicated region
    $region10: #{mvsoppis_forward.7} parent=1 // pred_check
      _
    $region11: #{mvsoppis_forward.7} parent=1 // pred_check_branch
      %29 = sbr.rel (0) target = $region13
    $region12: #{mvsoppis_forward.7} parent=1 // pred_region
      _
    $region13: #{mvsoppis_forward.7} parent=1 // pred_fallthru
      _
    // Predicated region
    $region14: #{mvsoppis_forward.7} parent=1 // pred_check
      _
    $region15: #{mvsoppis_forward.7} parent=1 // pred_check_branch
      %31 = sbr.rel (0) target = $region17
    $region16: #{mvsoppis_forward.7} parent=1 // pred_region
      _
    $region17: #{mvsoppis_forward.7} parent=1 // pred_fallthru
      _
    // Predicated region
    $region18: #{mvsoppis_forward.7} parent=1 // pred_check
      _
    $region19: #{mvsoppis_forward.7} parent=1 // pred_check_branch
      %33 = sbr.rel (0) target = $region21
    $region20: #{mvsoppis_forward.7} parent=1 // pred_region
      _
    $region21: #{mvsoppis_forward.7} parent=1 // pred_fallthru
      _
    // Predicated region
    $region22: #{mvsoppis_forward.7} parent=1 // pred_check
      _
    $region23: #{mvsoppis_forward.7} parent=1 // pred_check_branch
      %35 = sbr.rel (0) target = $region25
    $region24: #{mvsoppis_forward.7} parent=1 // pred_region
      _
    $region25: #{mvsoppis_forward.7} parent=1 // pred_fallthru
      _
    // Predicated region
    $region26: #{mvsoppis_forward.7} parent=1 // pred_check
      _
    $region27: #{mvsoppis_forward.7} parent=1 // pred_check_branch
      %37 = sbr.rel (0) target = $region29
    $region28: #{mvsoppis_forward.7} parent=1 // pred_region
      _
    $region29: #{mvsoppis_forward.7} parent=1 // pred_fallthru
      _
    // Predicated region
    $region30: #{mvsoppis_forward.7} parent=1 // pred_check
      _
    $region31: #{mvsoppis_forward.7} parent=1 // pred_check_branch
      %39 = sbr.rel (0) target = $region33
    $region32: #{mvsoppis_forward.7} parent=1 // pred_region
      %s41 = ssub.s32 8192, 8192
      %42 = vsyncadd [#allocation3], %s41
      %s43 = sshll.u32 [#allocation2], 4
      %s44 = int_to_ptr.vmem [resolvable:$true] %s43
      %49 = dma.hbm_to_vmem [thread:$0]  %s7, 8192, %s44, [#allocation3], 256, 256, 16
    $region33: #{mvsoppis_forward.7} parent=1 // pred_fallthru
      _
    // Predicated region
    $region34: #{mvsoppis_forward.7} parent=1 // pred_check
      _
    $region35: #{mvsoppis_forward.7} parent=1 // pred_check_branch
      %51 = sbr.rel (0) target = $region37
    $region36: #{mvsoppis_forward.7} parent=1 // pred_region
      _
    $region37: #{mvsoppis_forward.7} parent=1 // pred_fallthru
      _
    // Predicated region
    $region38: #{mvsoppis_forward.7} parent=1 // pred_check
      _
    $region39: #{mvsoppis_forward.7} parent=1 // pred_check_branch
      %53 = sbr.rel (0) target = $region41
    $region40: #{mvsoppis_forward.7} parent=1 // pred_region
      %s55 = ssub.s32 8192, 8192
      %56 = vsyncadd [#allocation5], %s55
      %s57 = sshll.u32 [#allocation4], 4
      %s58 = int_to_ptr.vmem [resolvable:$true] %s57
      %63 = dma.hbm_to_vmem [thread:$0]  %s9, 8192, %s58, [#allocation5], 256, 256, 16
    $region41: #{mvsoppis_forward.7} parent=1 // pred_fallthru
      _
    // Predicated region
    $region42: #{mvsoppis_forward.7} parent=1 // pred_check
      _
    $region43: #{mvsoppis_forward.7} parent=1 // pred_check_branch
      %65 = sbr.rel (0) target = $region45
    $region44: #{mvsoppis_forward.7} parent=1 // pred_region
      _
    $region45: #{mvsoppis_forward.7} parent=1 // pred_fallthru
      _
    // Predicated region
    $region46: #{mvsoppis_forward.7} parent=1 // pred_check
      _
    $region47: #{mvsoppis_forward.7} parent=1 // pred_check_branch
      %67 = sbr.rel (0) target = $region49
    $region48: #{mvsoppis_forward.7} parent=1 // pred_region
      _
    $region49: #{mvsoppis_forward.7} parent=1 // pred_fallthru
      _
    // Predicated region
    $region50: #{mvsoppis_forward.7} parent=1 // pred_check
      _
    $region51: #{mvsoppis_forward.7} parent=1 // pred_check_branch
      %69 = sbr.rel (0) target = $region53
    $region52: #{mvsoppis_forward.7} parent=1 // pred_region
      _
    $region53: #{mvsoppis_forward.7} parent=1 // pred_fallthru
      _
    // Predicated region
    $region54: #{mvsoppis_forward.7} parent=1 // pred_check
      _
    $region55: #{mvsoppis_forward.7} parent=1 // pred_check_branch
      %71 = sbr.rel (0) target = $region57
    $region56: #{mvsoppis_forward.7} parent=1 // pred_region
      _
    $region57: #{mvsoppis_forward.7} parent=1 // pred_fallthru
      _
    // Predicated region
    $region58: #{mvsoppis_forward.7} parent=1 // pred_check
      _
    $region59: #{mvsoppis_forward.7} parent=1 // pred_check_branch
      %73 = sbr.rel (0) target = $region61
    $region60: #{mvsoppis_forward.7} parent=1 // pred_region
      _
    $region61: #{mvsoppis_forward.7} parent=1 // pred_fallthru
      _
    // Predicated region
    $region62: #{mvsoppis_forward.7} parent=1 // pred_check
      _
    $region63: #{mvsoppis_forward.7} parent=1 // pred_check_branch
      %75 = sbr.rel (0) target = $region65
    $region64: #{mvsoppis_forward.7} parent=1 // pred_region
      _
    $region65: #{mvsoppis_forward.7} parent=1 // pred_fallthru
      _
    // Predicated region
    $region66: #{mvsoppis_forward.7} parent=1 // pred_check
      _
    $region67: #{mvsoppis_forward.7} parent=1 // pred_check_branch
      %77 = sbr.rel (0) target = $region69
    $region68: #{mvsoppis_forward.7} parent=1 // pred_region
      _
    $region69: #{mvsoppis_forward.7} parent=1 // pred_fallthru
      _
    // Predicated region
    $region70: #{mvsoppis_forward.7} parent=1 // pred_check
      _
    $region71: #{mvsoppis_forward.7} parent=1 // pred_check_branch
      %79 = sbr.rel (0) target = $region73
    $region72: #{mvsoppis_forward.7} parent=1 // pred_region
      %80 = dma.done [#allocation3], 8192
    $region73: #{mvsoppis_forward.7} parent=1 // pred_fallthru
      _
    // Predicated region
    $region74: #{mvsoppis_forward.7} parent=1 // pred_check
      _
    $region75: #{mvsoppis_forward.7} parent=1 // pred_check_branch
      %82 = sbr.rel (0) target = $region77
    $region76: #{mvsoppis_forward.7} parent=1 // pred_region
      %83 = dma.done [#allocation5], 8192
    $region77: #{mvsoppis_forward.7} parent=1 // pred_fallthru
      _
    %v84 = vld [vmem:[%s0] sm:$0xff]
    %v85 = vld [vmem:[%s0 + $0x8] sm:$0xff]
    %v86 = vld [vmem:[%s0 + $0x10] sm:$0xff]
    %v87 = vld [vmem:[%s0 + $0x18] sm:$0xff]
    %v88 = vld [vmem:[%s1] sm:$0xff]
    %v89 = vld [vmem:[%s1 + $0x8] sm:$0xff]
    %v90 = vld [vmem:[%s1 + $0x10] sm:$0xff]
    %v91 = vld [vmem:[%s1 + $0x18] sm:$0xff]
    %v92 = vld [vmem:[%s3] sm:$0xff]
    %v93 = vld [vmem:[%s3 + $0x8] sm:$0xff]
    %v94 = vld [vmem:[%s3 + $0x10] sm:$0xff]
    %v95 = vld [vmem:[%s3 + $0x18] sm:$0xff]
    %v96 = vld [vmem:[%s3 + $0x20] sm:$0xff]
    %v97 = vld [vmem:[%s3 + $0x28] sm:$0xff]
    %v98 = vld [vmem:[%s3 + $0x30] sm:$0xff]
    %v99 = vld [vmem:[%s3 + $0x38] sm:$0xff]
    %v100 = vld [vmem:[%s3 + $0x40] sm:$0xff]
    %v101 = vld [vmem:[%s3 + $0x48] sm:$0xff]
    %v102 = vld [vmem:[%s3 + $0x50] sm:$0xff]
    %v103 = vld [vmem:[%s3 + $0x58] sm:$0xff]
    %v104 = vld [vmem:[%s3 + $0x60] sm:$0xff]
    %v105 = vld [vmem:[%s3 + $0x68] sm:$0xff]
    %v106 = vld [vmem:[%s3 + $0x70] sm:$0xff]
    %v107 = vld [vmem:[%s3 + $0x78] sm:$0xff]
    %v108 = vld [vmem:[%s3 + $0x80] sm:$0xff]
    %v109 = vld [vmem:[%s3 + $0x88] sm:$0xff]
    %v110 = vld [vmem:[%s3 + $0x90] sm:$0xff]
    %v111 = vld [vmem:[%s3 + $0x98] sm:$0xff]
    %v112 = vld [vmem:[%s3 + $0xa0] sm:$0xff]
    %v113 = vld [vmem:[%s3 + $0xa8] sm:$0xff]
    %v114 = vld [vmem:[%s3 + $0xb0] sm:$0xff]
    %v115 = vld [vmem:[%s3 + $0xb8] sm:$0xff]
    %v116 = vld [vmem:[%s3 + $0xc0] sm:$0xff]
    %v117 = vld [vmem:[%s3 + $0xc8] sm:$0xff]
    %v118 = vld [vmem:[%s3 + $0xd0] sm:$0xff]
    %v119 = vld [vmem:[%s3 + $0xd8] sm:$0xff]
    %v120 = vld [vmem:[%s3 + $0xe0] sm:$0xff]
    %v121 = vld [vmem:[%s3 + $0xe8] sm:$0xff]
    %v122 = vld [vmem:[%s3 + $0xf0] sm:$0xff]
    %v123 = vld [vmem:[%s3 + $0xf8] sm:$0xff]
    %v124 = vld [vmem:[%s3 + $0x100] sm:$0xff]
    %v125 = vld [vmem:[%s3 + $0x108] sm:$0xff]
    %v126 = vld [vmem:[%s3 + $0x110] sm:$0xff]
    %v127 = vld [vmem:[%s3 + $0x118] sm:$0xff]
    %v128 = vld [vmem:[%s3 + $0x120] sm:$0xff]
    %v129 = vld [vmem:[%s3 + $0x128] sm:$0xff]
    %v130 = vld [vmem:[%s3 + $0x130] sm:$0xff]
    %v131 = vld [vmem:[%s3 + $0x138] sm:$0xff]
    %v132 = vld [vmem:[%s3 + $0x140] sm:$0xff]
    %v133 = vld [vmem:[%s3 + $0x148] sm:$0xff]
    %v134 = vld [vmem:[%s3 + $0x150] sm:$0xff]
    %v135 = vld [vmem:[%s3 + $0x158] sm:$0xff]
    %v136 = vld [vmem:[%s3 + $0x160] sm:$0xff]
    %v137 = vld [vmem:[%s3 + $0x168] sm:$0xff]
    %v138 = vld [vmem:[%s3 + $0x170] sm:$0xff]
    %v139 = vld [vmem:[%s3 + $0x178] sm:$0xff]
    %v140 = vld [vmem:[%s3 + $0x180] sm:$0xff]
    %v141 = vld [vmem:[%s3 + $0x188] sm:$0xff]
    %v142 = vld [vmem:[%s3 + $0x190] sm:$0xff]
    %v143 = vld [vmem:[%s3 + $0x198] sm:$0xff]
    %v144 = vld [vmem:[%s3 + $0x1a0] sm:$0xff]
    %v145 = vld [vmem:[%s3 + $0x1a8] sm:$0xff]
    %v146 = vld [vmem:[%s3 + $0x1b0] sm:$0xff]
    %v147 = vld [vmem:[%s3 + $0x1b8] sm:$0xff]
    %v148 = vld [vmem:[%s3 + $0x1c0] sm:$0xff]
    %v149 = vld [vmem:[%s3 + $0x1c8] sm:$0xff]
    %v150 = vld [vmem:[%s3 + $0x1d0] sm:$0xff]
    %v151 = vld [vmem:[%s3 + $0x1d8] sm:$0xff]
    %v152 = vld [vmem:[%s3 + $0x1e0] sm:$0xff]
    %v153 = vld [vmem:[%s3 + $0x1e8] sm:$0xff]
    %v154 = vld [vmem:[%s3 + $0x1f0] sm:$0xff]
    %v155 = vld [vmem:[%s3 + $0x1f8] sm:$0xff]
    %v156 = vld [vmem:[%s4] sm:$0x3]
    %v158 = vlaneseq
    %v159 = vshrl.u32 %v158, 7
    %v160 = vsub.s32 0, %v159
    %v161 = vrot.slane %v156, %v160
    %v162 = vlaneseq
    %v163 = vshrl.u32 %v162, 7
    %v164 = vsub.s32 1, %v163
    %v165 = vrot.slane %v156, %v164
    %168 = vmatprep.subr.mxu0 %v93
    %169 = vmatpush1.msra.mxu0 %v92
    %170 = vmatprep.subr.mxu0 %v95
    %171 = vmatpush1.msra.mxu0 %v94
    %172 = vmatprep.subr.mxu0 %v97
    %173 = vmatpush1.msra.mxu0 %v96
    %174 = vmatprep.subr.mxu0 %v99
    %175 = vmatpush1.msra.mxu0 %v98
    %176 = vmatprep.subr.mxu0 %v101
    %177 = vmatpush1.msra.mxu0 %v100
    %178 = vmatprep.subr.mxu0 %v103
    %179 = vmatpush1.msra.mxu0 %v102
    %180 = vmatprep.subr.mxu0 %v105
    %181 = vmatpush1.msra.mxu0 %v104
    %182 = vmatprep.subr.mxu0 %v107
    %183 = vmatpush1.msra.mxu0 %v106
    %184 = vmatprep.subr.mxu0 %v109
    %185 = vmatpush1.msra.mxu0 %v108
    %186 = vmatprep.subr.mxu0 %v111
    %187 = vmatpush1.msra.mxu0 %v110
    %188 = vmatprep.subr.mxu0 %v113
    %189 = vmatpush1.msra.mxu0 %v112
    %190 = vmatprep.subr.mxu0 %v115
    %191 = vmatpush1.msra.mxu0 %v114
    %192 = vmatprep.subr.mxu0 %v117
    %193 = vmatpush1.msra.mxu0 %v116
    %194 = vmatprep.subr.mxu0 %v119
    %195 = vmatpush1.msra.mxu0 %v118
    %196 = vmatprep.subr.mxu0 %v121
    %197 = vmatpush1.msra.mxu0 %v120
    %198 = vmatprep.subr.mxu0 %v123
    %199 = vmatpush1.msra.mxu0 %v122
    %200 = vmatprep.subr.mxu0 %v125
    %201 = vmatpush1.msra.mxu0 %v124
    %202 = vmatprep.subr.mxu0 %v127
    %203 = vmatpush1.msra.mxu0 %v126
    %204 = vmatprep.subr.mxu0 %v129
    %205 = vmatpush1.msra.mxu0 %v128
    %206 = vmatprep.subr.mxu0 %v131
    %207 = vmatpush1.msra.mxu0 %v130
    %208 = vmatprep.subr.mxu0 %v133
    %209 = vmatpush1.msra.mxu0 %v132
    %210 = vmatprep.subr.mxu0 %v135
    %211 = vmatpush1.msra.mxu0 %v134
    %212 = vmatprep.subr.mxu0 %v137
    %213 = vmatpush1.msra.mxu0 %v136
    %214 = vmatprep.subr.mxu0 %v139
    %215 = vmatpush1.msra.mxu0 %v138
    %216 = vmatprep.subr.mxu0 %v141
    %217 = vmatpush1.msra.mxu0 %v140
    %218 = vmatprep.subr.mxu0 %v143
    %219 = vmatpush1.msra.mxu0 %v142
    %220 = vmatprep.subr.mxu0 %v145
    %221 = vmatpush1.msra.mxu0 %v144
    %222 = vmatprep.subr.mxu0 %v147
    %223 = vmatpush1.msra.mxu0 %v146
    %224 = vmatprep.subr.mxu0 %v149
    %225 = vmatpush1.msra.mxu0 %v148
    %226 = vmatprep.subr.mxu0 %v151
    %227 = vmatpush1.msra.mxu0 %v150
    %228 = vmatprep.subr.mxu0 %v153
    %229 = vmatpush1.msra.mxu0 %v152
    %230 = vmatprep.subr.mxu0 %v155
    %231 = vmatpush1.msra.mxu0 %v154
    %232 = vmatprep.mubr.f32.mxu0 %v89
    %233 = vmatmul.mubr.f32.gmra.mrb[0].mxu0 %v88
    %v234 = vpop.f32.mrb[0].mxu0
    %v235 = vadd.f32 %v161, %v234
    %v236 = vpop.f32.mrb[0].mxu0
    %v237 = vadd.f32 %v165, %v236
    %238 = vmatprep.mubr.f32.mxu0 %v91
    %239 = vmatmul.mubr.f32.gmra.mrb[0].mxu0 %v90
    %v240 = vpop.f32.mrb[0].mxu0
    %v241 = vadd.f32 %v161, %v240
    %v242 = vpop.f32.mrb[0].mxu0
    %v243 = vadd.f32 %v165, %v242
    %244 = vdwg.mxu0
    %v245 = vld [vmem:[%s5] sm:$0xff]
    %v246 = vld [vmem:[%s5 + $0x8] sm:$0xff]
    %v247 = vld [vmem:[%s5 + $0x10] sm:$0xff]
    %v248 = vld [vmem:[%s5 + $0x18] sm:$0xff]
    %v249 = vld [vmem:[%s5 + $0x20] sm:$0xff]
    %v250 = vld [vmem:[%s5 + $0x28] sm:$0xff]
    %v251 = vld [vmem:[%s5 + $0x30] sm:$0xff]
    %v252 = vld [vmem:[%s5 + $0x38] sm:$0xff]
    %v253 = vld [vmem:[%s5 + $0x40] sm:$0xff]
    %v254 = vld [vmem:[%s5 + $0x48] sm:$0xff]
    %v255 = vld [vmem:[%s5 + $0x50] sm:$0xff]
    %v256 = vld [vmem:[%s5 + $0x58] sm:$0xff]
    %v257 = vld [vmem:[%s5 + $0x60] sm:$0xff]
    %v258 = vld [vmem:[%s5 + $0x68] sm:$0xff]
    %v259 = vld [vmem:[%s5 + $0x70] sm:$0xff]
    %v260 = vld [vmem:[%s5 + $0x78] sm:$0xff]
    %v261 = vld [vmem:[%s5 + $0x80] sm:$0xff]
    %v262 = vld [vmem:[%s5 + $0x88] sm:$0xff]
    %v263 = vld [vmem:[%s5 + $0x90] sm:$0xff]
    %v264 = vld [vmem:[%s5 + $0x98] sm:$0xff]
    %v265 = vld [vmem:[%s5 + $0xa0] sm:$0xff]
    %v266 = vld [vmem:[%s5 + $0xa8] sm:$0xff]
    %v267 = vld [vmem:[%s5 + $0xb0] sm:$0xff]
    %v268 = vld [vmem:[%s5 + $0xb8] sm:$0xff]
    %v269 = vld [vmem:[%s5 + $0xc0] sm:$0xff]
    %v270 = vld [vmem:[%s5 + $0xc8] sm:$0xff]
    %v271 = vld [vmem:[%s5 + $0xd0] sm:$0xff]
    %v272 = vld [vmem:[%s5 + $0xd8] sm:$0xff]
    %v273 = vld [vmem:[%s5 + $0xe0] sm:$0xff]
    %v274 = vld [vmem:[%s5 + $0xe8] sm:$0xff]
    %v275 = vld [vmem:[%s5 + $0xf0] sm:$0xff]
    %v276 = vld [vmem:[%s5 + $0xf8] sm:$0xff]
    %v277 = vld [vmem:[%s5 + $0x100] sm:$0xff]
    %v278 = vld [vmem:[%s5 + $0x108] sm:$0xff]
    %v279 = vld [vmem:[%s5 + $0x110] sm:$0xff]
    %v280 = vld [vmem:[%s5 + $0x118] sm:$0xff]
    %v281 = vld [vmem:[%s5 + $0x120] sm:$0xff]
    %v282 = vld [vmem:[%s5 + $0x128] sm:$0xff]
    %v283 = vld [vmem:[%s5 + $0x130] sm:$0xff]
    %v284 = vld [vmem:[%s5 + $0x138] sm:$0xff]
    %v285 = vld [vmem:[%s5 + $0x140] sm:$0xff]
    %v286 = vld [vmem:[%s5 + $0x148] sm:$0xff]
    %v287 = vld [vmem:[%s5 + $0x150] sm:$0xff]
    %v288 = vld [vmem:[%s5 + $0x158] sm:$0xff]
    %v289 = vld [vmem:[%s5 + $0x160] sm:$0xff]
    %v290 = vld [vmem:[%s5 + $0x168] sm:$0xff]
    %v291 = vld [vmem:[%s5 + $0x170] sm:$0xff]
    %v292 = vld [vmem:[%s5 + $0x178] sm:$0xff]
    %v293 = vld [vmem:[%s5 + $0x180] sm:$0xff]
    %v294 = vld [vmem:[%s5 + $0x188] sm:$0xff]
    %v295 = vld [vmem:[%s5 + $0x190] sm:$0xff]
    %v296 = vld [vmem:[%s5 + $0x198] sm:$0xff]
    %v297 = vld [vmem:[%s5 + $0x1a0] sm:$0xff]
    %v298 = vld [vmem:[%s5 + $0x1a8] sm:$0xff]
    %v299 = vld [vmem:[%s5 + $0x1b0] sm:$0xff]
    %v300 = vld [vmem:[%s5 + $0x1b8] sm:$0xff]
    %v301 = vld [vmem:[%s5 + $0x1c0] sm:$0xff]
    %v302 = vld [vmem:[%s5 + $0x1c8] sm:$0xff]
    %v303 = vld [vmem:[%s5 + $0x1d0] sm:$0xff]
    %v304 = vld [vmem:[%s5 + $0x1d8] sm:$0xff]
    %v305 = vld [vmem:[%s5 + $0x1e0] sm:$0xff]
    %v306 = vld [vmem:[%s5 + $0x1e8] sm:$0xff]
    %v307 = vld [vmem:[%s5 + $0x1f0] sm:$0xff]
    %v308 = vld [vmem:[%s5 + $0x1f8] sm:$0xff]
    %v309 = vld [vmem:[%s5 + $0x200] sm:$0xff]
    %v310 = vld [vmem:[%s5 + $0x208] sm:$0xff]
    %v311 = vld [vmem:[%s5 + $0x210] sm:$0xff]
    %v312 = vld [vmem:[%s5 + $0x218] sm:$0xff]
    %v313 = vld [vmem:[%s5 + $0x220] sm:$0xff]
    %v314 = vld [vmem:[%s5 + $0x228] sm:$0xff]
    %v315 = vld [vmem:[%s5 + $0x230] sm:$0xff]
    %v316 = vld [vmem:[%s5 + $0x238] sm:$0xff]
    %v317 = vld [vmem:[%s5 + $0x240] sm:$0xff]
    %v318 = vld [vmem:[%s5 + $0x248] sm:$0xff]
    %v319 = vld [vmem:[%s5 + $0x250] sm:$0xff]
    %v320 = vld [vmem:[%s5 + $0x258] sm:$0xff]
    %v321 = vld [vmem:[%s5 + $0x260] sm:$0xff]
    %v322 = vld [vmem:[%s5 + $0x268] sm:$0xff]
    %v323 = vld [vmem:[%s5 + $0x270] sm:$0xff]
    %v324 = vld [vmem:[%s5 + $0x278] sm:$0xff]
    %v325 = vld [vmem:[%s5 + $0x280] sm:$0xff]
    %v326 = vld [vmem:[%s5 + $0x288] sm:$0xff]
    %v327 = vld [vmem:[%s5 + $0x290] sm:$0xff]
    %v328 = vld [vmem:[%s5 + $0x298] sm:$0xff]
    %v329 = vld [vmem:[%s5 + $0x2a0] sm:$0xff]
    %v330 = vld [vmem:[%s5 + $0x2a8] sm:$0xff]
    %v331 = vld [vmem:[%s5 + $0x2b0] sm:$0xff]
    %v332 = vld [vmem:[%s5 + $0x2b8] sm:$0xff]
    %v333 = vld [vmem:[%s5 + $0x2c0] sm:$0xff]
    %v334 = vld [vmem:[%s5 + $0x2c8] sm:$0xff]
    %v335 = vld [vmem:[%s5 + $0x2d0] sm:$0xff]
    %v336 = vld [vmem:[%s5 + $0x2d8] sm:$0xff]
    %v337 = vld [vmem:[%s5 + $0x2e0] sm:$0xff]
    %v338 = vld [vmem:[%s5 + $0x2e8] sm:$0xff]
    %v339 = vld [vmem:[%s5 + $0x2f0] sm:$0xff]
    %v340 = vld [vmem:[%s5 + $0x2f8] sm:$0xff]
    %v341 = vld [vmem:[%s5 + $0x300] sm:$0xff]
    %v342 = vld [vmem:[%s5 + $0x308] sm:$0xff]
    %v343 = vld [vmem:[%s5 + $0x310] sm:$0xff]
    %v344 = vld [vmem:[%s5 + $0x318] sm:$0xff]
    %v345 = vld [vmem:[%s5 + $0x320] sm:$0xff]
    %v346 = vld [vmem:[%s5 + $0x328] sm:$0xff]
    %v347 = vld [vmem:[%s5 + $0x330] sm:$0xff]
    %v348 = vld [vmem:[%s5 + $0x338] sm:$0xff]
    %v349 = vld [vmem:[%s5 + $0x340] sm:$0xff]
    %v350 = vld [vmem:[%s5 + $0x348] sm:$0xff]
    %v351 = vld [vmem:[%s5 + $0x350] sm:$0xff]
    %v352 = vld [vmem:[%s5 + $0x358] sm:$0xff]
    %v353 = vld [vmem:[%s5 + $0x360] sm:$0xff]
    %v354 = vld [vmem:[%s5 + $0x368] sm:$0xff]
    %v355 = vld [vmem:[%s5 + $0x370] sm:$0xff]
    %v356 = vld [vmem:[%s5 + $0x378] sm:$0xff]
    %v357 = vld [vmem:[%s5 + $0x380] sm:$0xff]
    %v358 = vld [vmem:[%s5 + $0x388] sm:$0xff]
    %v359 = vld [vmem:[%s5 + $0x390] sm:$0xff]
    %v360 = vld [vmem:[%s5 + $0x398] sm:$0xff]
    %v361 = vld [vmem:[%s5 + $0x3a0] sm:$0xff]
    %v362 = vld [vmem:[%s5 + $0x3a8] sm:$0xff]
    %v363 = vld [vmem:[%s5 + $0x3b0] sm:$0xff]
    %v364 = vld [vmem:[%s5 + $0x3b8] sm:$0xff]
    %v365 = vld [vmem:[%s5 + $0x3c0] sm:$0xff]
    %v366 = vld [vmem:[%s5 + $0x3c8] sm:$0xff]
    %v367 = vld [vmem:[%s5 + $0x3d0] sm:$0xff]
    %v368 = vld [vmem:[%s5 + $0x3d8] sm:$0xff]
    %v369 = vld [vmem:[%s5 + $0x3e0] sm:$0xff]
    %v370 = vld [vmem:[%s5 + $0x3e8] sm:$0xff]
    %v371 = vld [vmem:[%s5 + $0x3f0] sm:$0xff]
    %v372 = vld [vmem:[%s5 + $0x3f8] sm:$0xff]
    %v373 = vld [vmem:[%s6] sm:$0xf]
    %v375 = vlaneseq
    %v376 = vshrl.u32 %v375, 7
    %v377 = vsub.s32 0, %v376
    %v378 = vrot.slane %v373, %v377
    %v379 = vlaneseq
    %v380 = vshrl.u32 %v379, 7
    %v381 = vsub.s32 1, %v380
    %v382 = vrot.slane %v373, %v381
    %v383 = vlaneseq
    %v384 = vshrl.u32 %v383, 7
    %v385 = vsub.s32 2, %v384
    %v386 = vrot.slane %v373, %v385
    %v387 = vlaneseq
    %v388 = vshrl.u32 %v387, 7
    %v389 = vsub.s32 3, %v388
    %v390 = vrot.slane %v373, %v389
    %395 = vmatprep.subr.mxu0 %v246
    %396 = vmatpush1.msra.mxu0 %v245
    %397 = vmatprep.subr.mxu0 %v250
    %398 = vmatpush1.msra.mxu0 %v249
    %399 = vmatprep.subr.mxu0 %v254
    %400 = vmatpush1.msra.mxu0 %v253
    %401 = vmatprep.subr.mxu0 %v258
    %402 = vmatpush1.msra.mxu0 %v257
    %403 = vmatprep.subr.mxu0 %v262
    %404 = vmatpush1.msra.mxu0 %v261
    %405 = vmatprep.subr.mxu0 %v266
    %406 = vmatpush1.msra.mxu0 %v265
    %407 = vmatprep.subr.mxu0 %v270
    %408 = vmatpush1.msra.mxu0 %v269
    %409 = vmatprep.subr.mxu0 %v274
    %410 = vmatpush1.msra.mxu0 %v273
    %411 = vmatprep.subr.mxu0 %v278
    %412 = vmatpush1.msra.mxu0 %v277
    %413 = vmatprep.subr.mxu0 %v282
    %414 = vmatpush1.msra.mxu0 %v281
    %415 = vmatprep.subr.mxu0 %v286
    %416 = vmatpush1.msra.mxu0 %v285
    %417 = vmatprep.subr.mxu0 %v290
    %418 = vmatpush1.msra.mxu0 %v289
    %419 = vmatprep.subr.mxu0 %v294
    %420 = vmatpush1.msra.mxu0 %v293
    %421 = vmatprep.subr.mxu0 %v298
    %422 = vmatpush1.msra.mxu0 %v297
    %423 = vmatprep.subr.mxu0 %v302
    %424 = vmatpush1.msra.mxu0 %v301
    %425 = vmatprep.subr.mxu0 %v306
    %426 = vmatpush1.msra.mxu0 %v305
    %427 = vmatprep.subr.mxu0 %v310
    %428 = vmatpush1.msra.mxu0 %v309
    %429 = vmatprep.subr.mxu0 %v314
    %430 = vmatpush1.msra.mxu0 %v313
    %431 = vmatprep.subr.mxu0 %v318
    %432 = vmatpush1.msra.mxu0 %v317
    %433 = vmatprep.subr.mxu0 %v322
    %434 = vmatpush1.msra.mxu0 %v321
    %435 = vmatprep.subr.mxu0 %v326
    %436 = vmatpush1.msra.mxu0 %v325
    %437 = vmatprep.subr.mxu0 %v330
    %438 = vmatpush1.msra.mxu0 %v329
    %439 = vmatprep.subr.mxu0 %v334
    %440 = vmatpush1.msra.mxu0 %v333
    %441 = vmatprep.subr.mxu0 %v338
    %442 = vmatpush1.msra.mxu0 %v337
    %443 = vmatprep.subr.mxu0 %v342
    %444 = vmatpush1.msra.mxu0 %v341
    %445 = vmatprep.subr.mxu0 %v346
    %446 = vmatpush1.msra.mxu0 %v345
    %447 = vmatprep.subr.mxu0 %v350
    %448 = vmatpush1.msra.mxu0 %v349
    %449 = vmatprep.subr.mxu0 %v354
    %450 = vmatpush1.msra.mxu0 %v353
    %451 = vmatprep.subr.mxu0 %v358
    %452 = vmatpush1.msra.mxu0 %v357
    %453 = vmatprep.subr.mxu0 %v362
    %454 = vmatpush1.msra.mxu0 %v361
    %455 = vmatprep.subr.mxu0 %v366
    %456 = vmatpush1.msra.mxu0 %v365
    %457 = vmatprep.subr.mxu0 %v370
    %458 = vmatpush1.msra.mxu0 %v369
    %459 = vmatprep.mubr.f32.mxu0 %v85
    %460 = vmatmul.mubr.f32.gmra.mrb[0].mxu0 %v84
    %v461 = vpop.f32.mrb[0].mxu0
    %v462 = vadd.f32 %v378, %v461
    %v463 = vpop.f32.mrb[0].mxu0
    %v464 = vadd.f32 %v382, %v463
    %465 = vmatprep.mubr.f32.mxu0 %v87
    %466 = vmatmul.mubr.f32.gmra.mrb[0].mxu0 %v86
    %v467 = vpop.f32.mrb[0].mxu0
    %v468 = vadd.f32 %v378, %v467
    %v469 = vpop.f32.mrb[0].mxu0
    %v470 = vadd.f32 %v382, %v469
    %471 = vdwg.mxu0
    %472 = vmatprep.subr.mxu0 %v248
    %473 = vmatpush1.msra.mxu0 %v247
    %474 = vmatprep.subr.mxu0 %v252
    %475 = vmatpush1.msra.mxu0 %v251
    %476 = vmatprep.subr.mxu0 %v256
    %477 = vmatpush1.msra.mxu0 %v255
    %478 = vmatprep.subr.mxu0 %v260
    %479 = vmatpush1.msra.mxu0 %v259
    %480 = vmatprep.subr.mxu0 %v264
    %481 = vmatpush1.msra.mxu0 %v263
    %482 = vmatprep.subr.mxu0 %v268
    %483 = vmatpush1.msra.mxu0 %v267
    %484 = vmatprep.subr.mxu0 %v272
    %485 = vmatpush1.msra.mxu0 %v271
    %486 = vmatprep.subr.mxu0 %v276
    %487 = vmatpush1.msra.mxu0 %v275
    %488 = vmatprep.subr.mxu0 %v280
    %489 = vmatpush1.msra.mxu0 %v279
    %490 = vmatprep.subr.mxu0 %v284
    %491 = vmatpush1.msra.mxu0 %v283
    %492 = vmatprep.subr.mxu0 %v288
    %493 = vmatpush1.msra.mxu0 %v287
    %494 = vmatprep.subr.mxu0 %v292
    %495 = vmatpush1.msra.mxu0 %v291
    %496 = vmatprep.subr.mxu0 %v296
    %497 = vmatpush1.msra.mxu0 %v295
    %498 = vmatprep.subr.mxu0 %v300
    %499 = vmatpush1.msra.mxu0 %v299
    %500 = vmatprep.subr.mxu0 %v304
    %501 = vmatpush1.msra.mxu0 %v303
    %502 = vmatprep.subr.mxu0 %v308
    %503 = vmatpush1.msra.mxu0 %v307
    %504 = vmatprep.subr.mxu0 %v312
    %505 = vmatpush1.msra.mxu0 %v311
    %506 = vmatprep.subr.mxu0 %v316
    %507 = vmatpush1.msra.mxu0 %v315
    %508 = vmatprep.subr.mxu0 %v320
    %509 = vmatpush1.msra.mxu0 %v319
    %510 = vmatprep.subr.mxu0 %v324
    %511 = vmatpush1.msra.mxu0 %v323
    %512 = vmatprep.subr.mxu0 %v328
    %513 = vmatpush1.msra.mxu0 %v327
    %514 = vmatprep.subr.mxu0 %v332
    %515 = vmatpush1.msra.mxu0 %v331
    %516 = vmatprep.subr.mxu0 %v336
    %517 = vmatpush1.msra.mxu0 %v335
    %518 = vmatprep.subr.mxu0 %v340
    %519 = vmatpush1.msra.mxu0 %v339
    %520 = vmatprep.subr.mxu0 %v344
    %521 = vmatpush1.msra.mxu0 %v343
    %522 = vmatprep.subr.mxu0 %v348
    %523 = vmatpush1.msra.mxu0 %v347
    %524 = vmatprep.subr.mxu0 %v352
    %525 = vmatpush1.msra.mxu0 %v351
    %526 = vmatprep.subr.mxu0 %v356
    %527 = vmatpush1.msra.mxu0 %v355
    %528 = vmatprep.subr.mxu0 %v360
    %529 = vmatpush1.msra.mxu0 %v359
    %530 = vmatprep.subr.mxu0 %v364
    %531 = vmatpush1.msra.mxu0 %v363
    %532 = vmatprep.subr.mxu0 %v368
    %533 = vmatpush1.msra.mxu0 %v367
    %534 = vmatprep.subr.mxu0 %v372
    %535 = vmatpush1.msra.mxu0 %v371
    %536 = vmatprep.mubr.f32.mxu0 %v85
    %537 = vmatmul.mubr.f32.gmra.mrb[0].mxu0 %v84
    %v538 = vpop.f32.mrb[0].mxu0
    %v539 = vadd.f32 %v386, %v538
    %v540 = vpop.f32.mrb[0].mxu0
    %v541 = vadd.f32 %v390, %v540
    %542 = vmatprep.mubr.f32.mxu0 %v87
    %543 = vmatmul.mubr.f32.gmra.mrb[0].mxu0 %v86
    %v544 = vpop.f32.mrb[0].mxu0
    %v545 = vadd.f32 %v386, %v544
    %v546 = vpop.f32.mrb[0].mxu0
    %v547 = vadd.f32 %v390, %v546
    %548 = vdwg.mxu0
    %v549 = vmax.f32 %v462, 0.0
    %v550 = vmax.f32 %v464, 0.0
    %v551 = vmax.f32 %v539, 0.0
    %v552 = vmax.f32 %v541, 0.0
    %v553 = vmax.f32 %v468, 0.0
    %v554 = vmax.f32 %v470, 0.0
    %v555 = vmax.f32 %v545, 0.0
    %v556 = vmax.f32 %v547, 0.0
    %v557 = vld [vmem:[#allocation2] sm:$0xff]
    %v558 = vld [vmem:[#allocation2 + $0x8] sm:$0xff]
    %v559 = vld [vmem:[#allocation2 + $0x10] sm:$0xff]
    %v560 = vld [vmem:[#allocation2 + $0x18] sm:$0xff]
    %v561 = vld [vmem:[#allocation2 + $0x20] sm:$0xff]
    %v562 = vld [vmem:[#allocation2 + $0x28] sm:$0xff]
    %v563 = vld [vmem:[#allocation2 + $0x30] sm:$0xff]
    %v564 = vld [vmem:[#allocation2 + $0x38] sm:$0xff]
    %v565 = vld [vmem:[#allocation2 + $0x40] sm:$0xff]
    %v566 = vld [vmem:[#allocation2 + $0x48] sm:$0xff]
    %v567 = vld [vmem:[#allocation2 + $0x50] sm:$0xff]
    %v568 = vld [vmem:[#allocation2 + $0x58] sm:$0xff]
    %v569 = vld [vmem:[#allocation2 + $0x60] sm:$0xff]
    %v570 = vld [vmem:[#allocation2 + $0x68] sm:$0xff]
    %v571 = vld [vmem:[#allocation2 + $0x70] sm:$0xff]
    %v572 = vld [vmem:[#allocation2 + $0x78] sm:$0xff]
    %v573 = vld [vmem:[#allocation2 + $0x80] sm:$0xff]
    %v574 = vld [vmem:[#allocation2 + $0x88] sm:$0xff]
    %v575 = vld [vmem:[#allocation2 + $0x90] sm:$0xff]
    %v576 = vld [vmem:[#allocation2 + $0x98] sm:$0xff]
    %v577 = vld [vmem:[#allocation2 + $0xa0] sm:$0xff]
    %v578 = vld [vmem:[#allocation2 + $0xa8] sm:$0xff]
    %v579 = vld [vmem:[#allocation2 + $0xb0] sm:$0xff]
    %v580 = vld [vmem:[#allocation2 + $0xb8] sm:$0xff]
    %v581 = vld [vmem:[#allocation2 + $0xc0] sm:$0xff]
    %v582 = vld [vmem:[#allocation2 + $0xc8] sm:$0xff]
    %v583 = vld [vmem:[#allocation2 + $0xd0] sm:$0xff]
    %v584 = vld [vmem:[#allocation2 + $0xd8] sm:$0xff]
    %v585 = vld [vmem:[#allocation2 + $0xe0] sm:$0xff]
    %v586 = vld [vmem:[#allocation2 + $0xe8] sm:$0xff]
    %v587 = vld [vmem:[#allocation2 + $0xf0] sm:$0xff]
    %v588 = vld [vmem:[#allocation2 + $0xf8] sm:$0xff]
    %v589 = vld [vmem:[#allocation2 + $0x100] sm:$0xff]
    %v590 = vld [vmem:[#allocation2 + $0x108] sm:$0xff]
    %v591 = vld [vmem:[#allocation2 + $0x110] sm:$0xff]
    %v592 = vld [vmem:[#allocation2 + $0x118] sm:$0xff]
    %v593 = vld [vmem:[#allocation2 + $0x120] sm:$0xff]
    %v594 = vld [vmem:[#allocation2 + $0x128] sm:$0xff]
    %v595 = vld [vmem:[#allocation2 + $0x130] sm:$0xff]
    %v596 = vld [vmem:[#allocation2 + $0x138] sm:$0xff]
    %v597 = vld [vmem:[#allocation2 + $0x140] sm:$0xff]
    %v598 = vld [vmem:[#allocation2 + $0x148] sm:$0xff]
    %v599 = vld [vmem:[#allocation2 + $0x150] sm:$0xff]
    %v600 = vld [vmem:[#allocation2 + $0x158] sm:$0xff]
    %v601 = vld [vmem:[#allocation2 + $0x160] sm:$0xff]
    %v602 = vld [vmem:[#allocation2 + $0x168] sm:$0xff]
    %v603 = vld [vmem:[#allocation2 + $0x170] sm:$0xff]
    %v604 = vld [vmem:[#allocation2 + $0x178] sm:$0xff]
    %v605 = vld [vmem:[#allocation2 + $0x180] sm:$0xff]
    %v606 = vld [vmem:[#allocation2 + $0x188] sm:$0xff]
    %v607 = vld [vmem:[#allocation2 + $0x190] sm:$0xff]
    %v608 = vld [vmem:[#allocation2 + $0x198] sm:$0xff]
    %v609 = vld [vmem:[#allocation2 + $0x1a0] sm:$0xff]
    %v610 = vld [vmem:[#allocation2 + $0x1a8] sm:$0xff]
    %v611 = vld [vmem:[#allocation2 + $0x1b0] sm:$0xff]
    %v612 = vld [vmem:[#allocation2 + $0x1b8] sm:$0xff]
    %v613 = vld [vmem:[#allocation2 + $0x1c0] sm:$0xff]
    %v614 = vld [vmem:[#allocation2 + $0x1c8] sm:$0xff]
    %v615 = vld [vmem:[#allocation2 + $0x1d0] sm:$0xff]
    %v616 = vld [vmem:[#allocation2 + $0x1d8] sm:$0xff]
    %v617 = vld [vmem:[#allocation2 + $0x1e0] sm:$0xff]
    %v618 = vld [vmem:[#allocation2 + $0x1e8] sm:$0xff]
    %v619 = vld [vmem:[#allocation2 + $0x1f0] sm:$0xff]
    %v620 = vld [vmem:[#allocation2 + $0x1f8] sm:$0xff]
    %v621 = vld [vmem:[%s8] sm:$0x3]
    %v623 = vlaneseq
    %v624 = vshrl.u32 %v623, 7
    %v625 = vsub.s32 0, %v624
    %v626 = vrot.slane %v621, %v625
    %v627 = vlaneseq
    %v628 = vshrl.u32 %v627, 7
    %v629 = vsub.s32 1, %v628
    %v630 = vrot.slane %v621, %v629
    %633 = vmatprep.subr.mxu0 %v558
    %634 = vmatpush1.msra.mxu0 %v557
    %635 = vmatprep.subr.mxu0 %v560
    %636 = vmatpush1.msra.mxu0 %v559
    %637 = vmatprep.subr.mxu0 %v562
    %638 = vmatpush1.msra.mxu0 %v561
    %639 = vmatprep.subr.mxu0 %v564
    %640 = vmatpush1.msra.mxu0 %v563
    %641 = vmatprep.subr.mxu0 %v566
    %642 = vmatpush1.msra.mxu0 %v565
    %643 = vmatprep.subr.mxu0 %v568
    %644 = vmatpush1.msra.mxu0 %v567
    %645 = vmatprep.subr.mxu0 %v570
    %646 = vmatpush1.msra.mxu0 %v569
    %647 = vmatprep.subr.mxu0 %v572
    %648 = vmatpush1.msra.mxu0 %v571
    %649 = vmatprep.subr.mxu0 %v574
    %650 = vmatpush1.msra.mxu0 %v573
    %651 = vmatprep.subr.mxu0 %v576
    %652 = vmatpush1.msra.mxu0 %v575
    %653 = vmatprep.subr.mxu0 %v578
    %654 = vmatpush1.msra.mxu0 %v577
    %655 = vmatprep.subr.mxu0 %v580
    %656 = vmatpush1.msra.mxu0 %v579
    %657 = vmatprep.subr.mxu0 %v582
    %658 = vmatpush1.msra.mxu0 %v581
    %659 = vmatprep.subr.mxu0 %v584
    %660 = vmatpush1.msra.mxu0 %v583
    %661 = vmatprep.subr.mxu0 %v586
    %662 = vmatpush1.msra.mxu0 %v585
    %663 = vmatprep.subr.mxu0 %v588
    %664 = vmatpush1.msra.mxu0 %v587
    %665 = vmatprep.subr.mxu0 %v590
    %666 = vmatpush1.msra.mxu0 %v589
    %667 = vmatprep.subr.mxu0 %v592
    %668 = vmatpush1.msra.mxu0 %v591
    %669 = vmatprep.subr.mxu0 %v594
    %670 = vmatpush1.msra.mxu0 %v593
    %671 = vmatprep.subr.mxu0 %v596
    %672 = vmatpush1.msra.mxu0 %v595
    %673 = vmatprep.subr.mxu0 %v598
    %674 = vmatpush1.msra.mxu0 %v597
    %675 = vmatprep.subr.mxu0 %v600
    %676 = vmatpush1.msra.mxu0 %v599
    %677 = vmatprep.subr.mxu0 %v602
    %678 = vmatpush1.msra.mxu0 %v601
    %679 = vmatprep.subr.mxu0 %v604
    %680 = vmatpush1.msra.mxu0 %v603
    %681 = vmatprep.subr.mxu0 %v606
    %682 = vmatpush1.msra.mxu0 %v605
    %683 = vmatprep.subr.mxu0 %v608
    %684 = vmatpush1.msra.mxu0 %v607
    %685 = vmatprep.subr.mxu0 %v610
    %686 = vmatpush1.msra.mxu0 %v609
    %687 = vmatprep.subr.mxu0 %v612
    %688 = vmatpush1.msra.mxu0 %v611
    %689 = vmatprep.subr.mxu0 %v614
    %690 = vmatpush1.msra.mxu0 %v613
    %691 = vmatprep.subr.mxu0 %v616
    %692 = vmatpush1.msra.mxu0 %v615
    %693 = vmatprep.subr.mxu0 %v618
    %694 = vmatpush1.msra.mxu0 %v617
    %695 = vmatprep.subr.mxu0 %v620
    %696 = vmatpush1.msra.mxu0 %v619
    %697 = vmatprep.mubr.f32.mxu0 %v237
    %698 = vmatmul.mubr.f32.gmra.mrb[0].mxu0 %v235
    %v699 = vpop.f32.mrb[0].mxu0
    %v700 = vadd.f32 %v626, %v699
    %v701 = vpop.f32.mrb[0].mxu0
    %v702 = vadd.f32 %v630, %v701
    %703 = vmatprep.mubr.f32.mxu0 %v243
    %704 = vmatmul.mubr.f32.gmra.mrb[0].mxu0 %v241
    %v705 = vpop.f32.mrb[0].mxu0
    %v706 = vadd.f32 %v626, %v705
    %v707 = vpop.f32.mrb[0].mxu0
    %v708 = vadd.f32 %v630, %v707
    %709 = vdwg.mxu0
    %v710 = vmax.f32 %v700, 0.0
    %v711 = vmax.f32 %v702, 0.0
    %v712 = vmax.f32 %v706, 0.0
    %v713 = vmax.f32 %v708, 0.0
    %714 = vmatprep.subr.mxu0 %v552
    %715 = vmatpush1.xpose.msra.mxu0 %v551
    %716 = vmatprep.subr.mxu0 %v556
    %717 = vmatpush1.xpose.msra.mxu0 %v555
    %718 = vmatprep.subr.mxu0 0.0
    %719 = vmatpush1.xpose.msra.mxu0 0.0
    %720 = vmatprep.subr.mxu0 0.0
    %721 = vmatpush1.xpose.msra.mxu0 0.0
    %722 = vmatprep.subr.mxu0 0.0
    %723 = vmatpush1.xpose.msra.mxu0 0.0
    %724 = vmatprep.subr.mxu0 0.0
    %725 = vmatpush1.xpose.msra.mxu0 0.0
    %726 = vmatprep.subr.mxu0 0.0
    %727 = vmatpush1.xpose.msra.mxu0 0.0
    %728 = vmatprep.subr.mxu0 0.0
    %729 = vmatpush1.xpose.msra.mxu0 0.0
    %730 = vmatprep.subr.mxu0 0.0
    %731 = vmatpush1.xpose.msra.mxu0 0.0
    %732 = vmatprep.subr.mxu0 0.0
    %733 = vmatpush1.xpose.msra.mxu0 0.0
    %734 = vmatprep.subr.mxu0 0.0
    %735 = vmatpush1.xpose.msra.mxu0 0.0
    %736 = vmatprep.subr.mxu0 0.0
    %737 = vmatpush1.xpose.msra.mxu0 0.0
    %738 = vmatprep.subr.mxu0 0.0
    %739 = vmatpush1.xpose.msra.mxu0 0.0
    %740 = vmatprep.subr.mxu0 0.0
    %741 = vmatpush1.xpose.msra.mxu0 0.0
    %742 = vmatprep.subr.mxu0 0.0
    %743 = vmatpush1.xpose.msra.mxu0 0.0
    %744 = vmatprep.subr.mxu0 0.0
    %745 = vmatpush1.xpose.msra.mxu0 0.0
    %746 = vmatprep.subr.mxu0 0.0
    %747 = vmatpush1.xpose.msra.mxu0 0.0
    %748 = vmatprep.subr.mxu0 0.0
    %749 = vmatpush1.xpose.msra.mxu0 0.0
    %750 = vmatprep.subr.mxu0 0.0
    %751 = vmatpush1.xpose.msra.mxu0 0.0
    %752 = vmatprep.subr.mxu0 0.0
    %753 = vmatpush1.xpose.msra.mxu0 0.0
    %754 = vmatprep.subr.mxu0 0.0
    %755 = vmatpush1.xpose.msra.mxu0 0.0
    %756 = vmatprep.subr.mxu0 0.0
    %757 = vmatpush1.xpose.msra.mxu0 0.0
    %758 = vmatprep.subr.mxu0 0.0
    %759 = vmatpush1.xpose.msra.mxu0 0.0
    %760 = vmatprep.subr.mxu0 0.0
    %761 = vmatpush1.xpose.msra.mxu0 0.0
    %762 = vmatprep.subr.mxu0 0.0
    %763 = vmatpush1.xpose.msra.mxu0 0.0
    %764 = vmatprep.subr.mxu0 0.0
    %765 = vmatpush1.xpose.msra.mxu0 0.0
    %766 = vmatprep.subr.mxu0 0.0
    %767 = vmatpush1.xpose.msra.mxu0 0.0
    %768 = vmatprep.subr.mxu0 0.0
    %769 = vmatpush1.xpose.msra.mxu0 0.0
    %770 = vmatprep.subr.mxu0 0.0
    %771 = vmatpush1.xpose.msra.mxu0 0.0
    %772 = vmatprep.subr.mxu0 0.0
    %773 = vmatpush1.xpose.msra.mxu0 0.0
    %774 = vmatprep.subr.mxu0 0.0
    %775 = vmatpush1.xpose.msra.mxu0 0.0
    %776 = vmatprep.subr.mxu0 0.0
    %777 = vmatpush1.xpose.msra.mxu0 0.0
    %778 = vmatprep.mubr.f32.mxu0 %v550
    %779 = vmatmul.mubr.f32.gmra.mrb[0].mxu0 %v549
    %v780 = vpop.f32.mrb[0].mxu0
    %v781 = vadd.f32 0.0, %v780
    %v782 = vpop.f32.mrb[0].mxu0
    %783 = vmatprep.mubr.f32.mxu0 %v554
    %784 = vmatmul.mubr.f32.gmra.mrb[0].mxu0 %v553
    %v785 = vpop.f32.mrb[0].mxu0
    %v786 = vadd.f32 0.0, %v785
    %v787 = vpop.f32.mrb[0].mxu0
    %788 = vdwg.mxu0
    %v789 = vmul.f32 %v781, 0.0625
    %v790 = vmul.f32 %v786, 0.0625
    %vm791 = vcmask 130048
    %v792 = vsel %vm791, %v789, -inf
    %793 = vmax.xlane.f32.xlu0 %v792
    %v794 = vpop.xlane.xlu0 %793
    %v795 = vsel %vm791, %v790, -inf
    %796 = vmax.xlane.f32.xlu0 %v795
    %v797 = vpop.xlane.xlu0 %796
    %v798 = vsub.f32 %v789, %v794
    %v799 = vsub.f32 %v790, %v797
    %v800 = vmul.f32 %v798, 1.442695
    %v801 = vpow.pop %v800
    %v802 = vmul.f32 %v799, 1.442695
    %v803 = vpow.pop %v802
    %v804 = vsel %vm791, %v801, 0.0
    %805 = vadd.xlane.f32.xlu0 %v804
    %v806 = vpop.xlane.xlu0 %805
    %v807 = vsel %vm791, %v803, 0.0
    %808 = vadd.xlane.f32.xlu0 %v807
    %v809 = vpop.xlane.xlu0 %808
    %v810 = vrcp.pop %v806
    %v811 = vrcp.pop %v809
    %v812 = vmul.f32 %v801, %v810
    %v813 = vmul.f32 %v803, %v811
    %v815 = vsel %vm791, %v812, 0
    %v818 = vsel %vm791, %v813, 0
    %820 = vmatprep.subr.mxu0 %v711
    %821 = vmatpush1.msra.mxu0 %v710
    %822 = vmatprep.subr.mxu0 %v713
    %823 = vmatpush1.msra.mxu0 %v712
    %824 = vmatprep.subr.mxu0 0.0
    %825 = vmatpush1.msra.mxu0 0.0
    %826 = vmatprep.subr.mxu0 0.0
    %827 = vmatpush1.msra.mxu0 0.0
    %828 = vmatprep.subr.mxu0 0.0
    %829 = vmatpush1.msra.mxu0 0.0
    %830 = vmatprep.subr.mxu0 0.0
    %831 = vmatpush1.msra.mxu0 0.0
    %832 = vmatprep.subr.mxu0 0.0
    %833 = vmatpush1.msra.mxu0 0.0
    %834 = vmatprep.subr.mxu0 0.0
    %835 = vmatpush1.msra.mxu0 0.0
    %836 = vmatprep.subr.mxu0 0.0
    %837 = vmatpush1.msra.mxu0 0.0
    %838 = vmatprep.subr.mxu0 0.0
    %839 = vmatpush1.msra.mxu0 0.0
    %840 = vmatprep.subr.mxu0 0.0
    %841 = vmatpush1.msra.mxu0 0.0
    %842 = vmatprep.subr.mxu0 0.0
    %843 = vmatpush1.msra.mxu0 0.0
    %844 = vmatprep.subr.mxu0 0.0
    %845 = vmatpush1.msra.mxu0 0.0
    %846 = vmatprep.subr.mxu0 0.0
    %847 = vmatpush1.msra.mxu0 0.0
    %848 = vmatprep.subr.mxu0 0.0
    %849 = vmatpush1.msra.mxu0 0.0
    %850 = vmatprep.subr.mxu0 0.0
    %851 = vmatpush1.msra.mxu0 0.0
    %852 = vmatprep.subr.mxu0 0.0
    %853 = vmatpush1.msra.mxu0 0.0
    %854 = vmatprep.subr.mxu0 0.0
    %855 = vmatpush1.msra.mxu0 0.0
    %856 = vmatprep.subr.mxu0 0.0
    %857 = vmatpush1.msra.mxu0 0.0
    %858 = vmatprep.subr.mxu0 0.0
    %859 = vmatpush1.msra.mxu0 0.0
    %860 = vmatprep.subr.mxu0 0.0
    %861 = vmatpush1.msra.mxu0 0.0
    %862 = vmatprep.subr.mxu0 0.0
    %863 = vmatpush1.msra.mxu0 0.0
    %864 = vmatprep.subr.mxu0 0.0
    %865 = vmatpush1.msra.mxu0 0.0
    %866 = vmatprep.subr.mxu0 0.0
    %867 = vmatpush1.msra.mxu0 0.0
    %868 = vmatprep.subr.mxu0 0.0
    %869 = vmatpush1.msra.mxu0 0.0
    %870 = vmatprep.subr.mxu0 0.0
    %871 = vmatpush1.msra.mxu0 0.0
    %872 = vmatprep.subr.mxu0 0.0
    %873 = vmatpush1.msra.mxu0 0.0
    %874 = vmatprep.subr.mxu0 0.0
    %875 = vmatpush1.msra.mxu0 0.0
    %876 = vmatprep.subr.mxu0 0.0
    %877 = vmatpush1.msra.mxu0 0.0
    %878 = vmatprep.subr.mxu0 0.0
    %879 = vmatpush1.msra.mxu0 0.0
    %880 = vmatprep.subr.mxu0 0.0
    %881 = vmatpush1.msra.mxu0 0.0
    %882 = vmatprep.subr.mxu0 0.0
    %883 = vmatpush1.msra.mxu0 0.0
    %884 = vmatprep.mubr.f32.mxu0 0.0
    %885 = vmatmul.mubr.f32.gmra.mrb[0].mxu0 %v815
    %v886 = vpop.f32.mrb[0].mxu0
    %v887 = vadd.f32 0.0, %v886
    %v888 = vpop.f32.mrb[0].mxu0
    %v889 = vadd.f32 0.0, %v888
    %890 = vmatprep.mubr.f32.mxu0 0.0
    %891 = vmatmul.mubr.f32.gmra.mrb[0].mxu0 %v818
    %v892 = vpop.f32.mrb[0].mxu0
    %v893 = vadd.f32 0.0, %v892
    %v894 = vpop.f32.mrb[0].mxu0
    %v895 = vadd.f32 0.0, %v894
    %896 = vdwg.mxu0
    %v897 = vld [vmem:[#allocation4] sm:$0xff]
    %v898 = vld [vmem:[#allocation4 + $0x8] sm:$0xff]
    %v899 = vld [vmem:[#allocation4 + $0x10] sm:$0xff]
    %v900 = vld [vmem:[#allocation4 + $0x18] sm:$0xff]
    %v901 = vld [vmem:[#allocation4 + $0x20] sm:$0xff]
    %v902 = vld [vmem:[#allocation4 + $0x28] sm:$0xff]
    %v903 = vld [vmem:[#allocation4 + $0x30] sm:$0xff]
    %v904 = vld [vmem:[#allocation4 + $0x38] sm:$0xff]
    %v905 = vld [vmem:[#allocation4 + $0x40] sm:$0xff]
    %v906 = vld [vmem:[#allocation4 + $0x48] sm:$0xff]
    %v907 = vld [vmem:[#allocation4 + $0x50] sm:$0xff]
    %v908 = vld [vmem:[#allocation4 + $0x58] sm:$0xff]
    %v909 = vld [vmem:[#allocation4 + $0x60] sm:$0xff]
    %v910 = vld [vmem:[#allocation4 + $0x68] sm:$0xff]
    %v911 = vld [vmem:[#allocation4 + $0x70] sm:$0xff]
    %v912 = vld [vmem:[#allocation4 + $0x78] sm:$0xff]
    %v913 = vld [vmem:[#allocation4 + $0x80] sm:$0xff]
    %v914 = vld [vmem:[#allocation4 + $0x88] sm:$0xff]
    %v915 = vld [vmem:[#allocation4 + $0x90] sm:$0xff]
    %v916 = vld [vmem:[#allocation4 + $0x98] sm:$0xff]
    %v917 = vld [vmem:[#allocation4 + $0xa0] sm:$0xff]
    %v918 = vld [vmem:[#allocation4 + $0xa8] sm:$0xff]
    %v919 = vld [vmem:[#allocation4 + $0xb0] sm:$0xff]
    %v920 = vld [vmem:[#allocation4 + $0xb8] sm:$0xff]
    %v921 = vld [vmem:[#allocation4 + $0xc0] sm:$0xff]
    %v922 = vld [vmem:[#allocation4 + $0xc8] sm:$0xff]
    %v923 = vld [vmem:[#allocation4 + $0xd0] sm:$0xff]
    %v924 = vld [vmem:[#allocation4 + $0xd8] sm:$0xff]
    %v925 = vld [vmem:[#allocation4 + $0xe0] sm:$0xff]
    %v926 = vld [vmem:[#allocation4 + $0xe8] sm:$0xff]
    %v927 = vld [vmem:[#allocation4 + $0xf0] sm:$0xff]
    %v928 = vld [vmem:[#allocation4 + $0xf8] sm:$0xff]
    %v929 = vld [vmem:[#allocation4 + $0x100] sm:$0xff]
    %v930 = vld [vmem:[#allocation4 + $0x108] sm:$0xff]
    %v931 = vld [vmem:[#allocation4 + $0x110] sm:$0xff]
    %v932 = vld [vmem:[#allocation4 + $0x118] sm:$0xff]
    %v933 = vld [vmem:[#allocation4 + $0x120] sm:$0xff]
    %v934 = vld [vmem:[#allocation4 + $0x128] sm:$0xff]
    %v935 = vld [vmem:[#allocation4 + $0x130] sm:$0xff]
    %v936 = vld [vmem:[#allocation4 + $0x138] sm:$0xff]
    %v937 = vld [vmem:[#allocation4 + $0x140] sm:$0xff]
    %v938 = vld [vmem:[#allocation4 + $0x148] sm:$0xff]
    %v939 = vld [vmem:[#allocation4 + $0x150] sm:$0xff]
    %v940 = vld [vmem:[#allocation4 + $0x158] sm:$0xff]
    %v941 = vld [vmem:[#allocation4 + $0x160] sm:$0xff]
    %v942 = vld [vmem:[#allocation4 + $0x168] sm:$0xff]
    %v943 = vld [vmem:[#allocation4 + $0x170] sm:$0xff]
    %v944 = vld [vmem:[#allocation4 + $0x178] sm:$0xff]
    %v945 = vld [vmem:[#allocation4 + $0x180] sm:$0xff]
    %v946 = vld [vmem:[#allocation4 + $0x188] sm:$0xff]
    %v947 = vld [vmem:[#allocation4 + $0x190] sm:$0xff]
    %v948 = vld [vmem:[#allocation4 + $0x198] sm:$0xff]
    %v949 = vld [vmem:[#allocation4 + $0x1a0] sm:$0xff]
    %v950 = vld [vmem:[#allocation4 + $0x1a8] sm:$0xff]
    %v951 = vld [vmem:[#allocation4 + $0x1b0] sm:$0xff]
    %v952 = vld [vmem:[#allocation4 + $0x1b8] sm:$0xff]
    %v953 = vld [vmem:[#allocation4 + $0x1c0] sm:$0xff]
    %v954 = vld [vmem:[#allocation4 + $0x1c8] sm:$0xff]
    %v955 = vld [vmem:[#allocation4 + $0x1d0] sm:$0xff]
    %v956 = vld [vmem:[#allocation4 + $0x1d8] sm:$0xff]
    %v957 = vld [vmem:[#allocation4 + $0x1e0] sm:$0xff]
    %v958 = vld [vmem:[#allocation4 + $0x1e8] sm:$0xff]
    %v959 = vld [vmem:[#allocation4 + $0x1f0] sm:$0xff]
    %v960 = vld [vmem:[#allocation4 + $0x1f8] sm:$0xff]
    %v961 = vld [vmem:[%s10] sm:$0x3]
    %v963 = vlaneseq
    %v964 = vshrl.u32 %v963, 7
    %v965 = vsub.s32 0, %v964
    %v966 = vrot.slane %v961, %v965
    %v967 = vlaneseq
    %v968 = vshrl.u32 %v967, 7
    %v969 = vsub.s32 1, %v968
    %v970 = vrot.slane %v961, %v969
    %973 = vmatprep.subr.mxu0 %v898
    %974 = vmatpush1.msra.mxu0 %v897
    %975 = vmatprep.subr.mxu0 %v900
    %976 = vmatpush1.msra.mxu0 %v899
    %977 = vmatprep.subr.mxu0 %v902
    %978 = vmatpush1.msra.mxu0 %v901
    %979 = vmatprep.subr.mxu0 %v904
    %980 = vmatpush1.msra.mxu0 %v903
    %981 = vmatprep.subr.mxu0 %v906
    %982 = vmatpush1.msra.mxu0 %v905
    %983 = vmatprep.subr.mxu0 %v908
    %984 = vmatpush1.msra.mxu0 %v907
    %985 = vmatprep.subr.mxu0 %v910
    %986 = vmatpush1.msra.mxu0 %v909
    %987 = vmatprep.subr.mxu0 %v912
    %988 = vmatpush1.msra.mxu0 %v911
    %989 = vmatprep.subr.mxu0 %v914
    %990 = vmatpush1.msra.mxu0 %v913
    %991 = vmatprep.subr.mxu0 %v916
    %992 = vmatpush1.msra.mxu0 %v915
    %993 = vmatprep.subr.mxu0 %v918
    %994 = vmatpush1.msra.mxu0 %v917
    %995 = vmatprep.subr.mxu0 %v920
    %996 = vmatpush1.msra.mxu0 %v919
    %997 = vmatprep.subr.mxu0 %v922
    %998 = vmatpush1.msra.mxu0 %v921
    %999 = vmatprep.subr.mxu0 %v924
    %1000 = vmatpush1.msra.mxu0 %v923
    %1001 = vmatprep.subr.mxu0 %v926
    %1002 = vmatpush1.msra.mxu0 %v925
    %1003 = vmatprep.subr.mxu0 %v928
    %1004 = vmatpush1.msra.mxu0 %v927
    %1005 = vmatprep.subr.mxu0 %v930
    %1006 = vmatpush1.msra.mxu0 %v929
    %1007 = vmatprep.subr.mxu0 %v932
    %1008 = vmatpush1.msra.mxu0 %v931
    %1009 = vmatprep.subr.mxu0 %v934
    %1010 = vmatpush1.msra.mxu0 %v933
    %1011 = vmatprep.subr.mxu0 %v936
    %1012 = vmatpush1.msra.mxu0 %v935
    %1013 = vmatprep.subr.mxu0 %v938
    %1014 = vmatpush1.msra.mxu0 %v937
    %1015 = vmatprep.subr.mxu0 %v940
    %1016 = vmatpush1.msra.mxu0 %v939
    %1017 = vmatprep.subr.mxu0 %v942
    %1018 = vmatpush1.msra.mxu0 %v941
    %1019 = vmatprep.subr.mxu0 %v944
    %1020 = vmatpush1.msra.mxu0 %v943
    %1021 = vmatprep.subr.mxu0 %v946
    %1022 = vmatpush1.msra.mxu0 %v945
    %1023 = vmatprep.subr.mxu0 %v948
    %1024 = vmatpush1.msra.mxu0 %v947
    %1025 = vmatprep.subr.mxu0 %v950
    %1026 = vmatpush1.msra.mxu0 %v949
    %1027 = vmatprep.subr.mxu0 %v952
    %1028 = vmatpush1.msra.mxu0 %v951
    %1029 = vmatprep.subr.mxu0 %v954
    %1030 = vmatpush1.msra.mxu0 %v953
    %1031 = vmatprep.subr.mxu0 %v956
    %1032 = vmatpush1.msra.mxu0 %v955
    %1033 = vmatprep.subr.mxu0 %v958
    %1034 = vmatpush1.msra.mxu0 %v957
    %1035 = vmatprep.subr.mxu0 %v960
    %1036 = vmatpush1.msra.mxu0 %v959
    %1037 = vmatprep.mubr.f32.mxu0 %v889
    %1038 = vmatmul.mubr.f32.gmra.mrb[0].mxu0 %v887
    %v1039 = vpop.f32.mrb[0].mxu0
    %v1040 = vadd.f32 %v966, %v1039
    %v1041 = vpop.f32.mrb[0].mxu0
    %v1042 = vadd.f32 %v970, %v1041
    %1043 = vmatprep.mubr.f32.mxu0 %v895
    %1044 = vmatmul.mubr.f32.gmra.mrb[0].mxu0 %v893
    %v1045 = vpop.f32.mrb[0].mxu0
    %v1046 = vadd.f32 %v966, %v1045
    %v1047 = vpop.f32.mrb[0].mxu0
    %v1048 = vadd.f32 %v970, %v1047
    %1049 = vdwg.mxu0
    %v1050 = vmax.f32 %v1040, 0.0
    %v1051 = vmax.f32 %v1042, 0.0
    %v1052 = vmax.f32 %v1046, 0.0
    %v1053 = vmax.f32 %v1048, 0.0
    %v1054 = vld [vmem:[%s11] sm:$0xff]
    %v1055 = vld [vmem:[%s11 + $0x8] sm:$0xff]
    %v1056 = vld [vmem:[%s11 + $0x10] sm:$0xff]
    %v1057 = vld [vmem:[%s11 + $0x18] sm:$0xff]
    %v1058 = vld [vmem:[%s11 + $0x20] sm:$0xff]
    %v1059 = vld [vmem:[%s11 + $0x28] sm:$0xff]
    %v1060 = vld [vmem:[%s11 + $0x30] sm:$0xff]
    %v1061 = vld [vmem:[%s11 + $0x38] sm:$0xff]
    %v1062 = vld [vmem:[%s11 + $0x40] sm:$0xff]
    %v1063 = vld [vmem:[%s11 + $0x48] sm:$0xff]
    %v1064 = vld [vmem:[%s11 + $0x50] sm:$0xff]
    %v1065 = vld [vmem:[%s11 + $0x58] sm:$0xff]
    %v1066 = vld [vmem:[%s11 + $0x60] sm:$0xff]
    %v1067 = vld [vmem:[%s11 + $0x68] sm:$0xff]
    %v1068 = vld [vmem:[%s11 + $0x70] sm:$0xff]
    %v1069 = vld [vmem:[%s11 + $0x78] sm:$0xff]
    %v1070 = vld [vmem:[%s11 + $0x80] sm:$0xff]
    %v1071 = vld [vmem:[%s11 + $0x88] sm:$0xff]
    %v1072 = vld [vmem:[%s11 + $0x90] sm:$0xff]
    %v1073 = vld [vmem:[%s11 + $0x98] sm:$0xff]
    %v1074 = vld [vmem:[%s11 + $0xa0] sm:$0xff]
    %v1075 = vld [vmem:[%s11 + $0xa8] sm:$0xff]
    %v1076 = vld [vmem:[%s11 + $0xb0] sm:$0xff]
    %v1077 = vld [vmem:[%s11 + $0xb8] sm:$0xff]
    %v1078 = vld [vmem:[%s11 + $0xc0] sm:$0xff]
    %v1079 = vld [vmem:[%s11 + $0xc8] sm:$0xff]
    %v1080 = vld [vmem:[%s11 + $0xd0] sm:$0xff]
    %v1081 = vld [vmem:[%s11 + $0xd8] sm:$0xff]
    %v1082 = vld [vmem:[%s11 + $0xe0] sm:$0xff]
    %v1083 = vld [vmem:[%s11 + $0xe8] sm:$0xff]
    %v1084 = vld [vmem:[%s11 + $0xf0] sm:$0xff]
    %v1085 = vld [vmem:[%s11 + $0xf8] sm:$0xff]
    %v1086 = vld [vmem:[%s11 + $0x100] sm:$0xff]
    %v1087 = vld [vmem:[%s11 + $0x108] sm:$0xff]
    %v1088 = vld [vmem:[%s11 + $0x110] sm:$0xff]
    %v1089 = vld [vmem:[%s11 + $0x118] sm:$0xff]
    %v1090 = vld [vmem:[%s11 + $0x120] sm:$0xff]
    %v1091 = vld [vmem:[%s11 + $0x128] sm:$0xff]
    %v1092 = vld [vmem:[%s11 + $0x130] sm:$0xff]
    %v1093 = vld [vmem:[%s11 + $0x138] sm:$0xff]
    %v1094 = vld [vmem:[%s11 + $0x140] sm:$0xff]
    %v1095 = vld [vmem:[%s11 + $0x148] sm:$0xff]
    %v1096 = vld [vmem:[%s11 + $0x150] sm:$0xff]
    %v1097 = vld [vmem:[%s11 + $0x158] sm:$0xff]
    %v1098 = vld [vmem:[%s11 + $0x160] sm:$0xff]
    %v1099 = vld [vmem:[%s11 + $0x168] sm:$0xff]
    %v1100 = vld [vmem:[%s11 + $0x170] sm:$0xff]
    %v1101 = vld [vmem:[%s11 + $0x178] sm:$0xff]
    %v1102 = vld [vmem:[%s11 + $0x180] sm:$0xff]
    %v1103 = vld [vmem:[%s11 + $0x188] sm:$0xff]
    %v1104 = vld [vmem:[%s11 + $0x190] sm:$0xff]
    %v1105 = vld [vmem:[%s11 + $0x198] sm:$0xff]
    %v1106 = vld [vmem:[%s11 + $0x1a0] sm:$0xff]
    %v1107 = vld [vmem:[%s11 + $0x1a8] sm:$0xff]
    %v1108 = vld [vmem:[%s11 + $0x1b0] sm:$0xff]
    %v1109 = vld [vmem:[%s11 + $0x1b8] sm:$0xff]
    %v1110 = vld [vmem:[%s11 + $0x1c0] sm:$0xff]
    %v1111 = vld [vmem:[%s11 + $0x1c8] sm:$0xff]
    %v1112 = vld [vmem:[%s11 + $0x1d0] sm:$0xff]
    %v1113 = vld [vmem:[%s11 + $0x1d8] sm:$0xff]
    %v1114 = vld [vmem:[%s11 + $0x1e0] sm:$0xff]
    %v1115 = vld [vmem:[%s11 + $0x1e8] sm:$0xff]
    %v1116 = vld [vmem:[%s11 + $0x1f0] sm:$0xff]
    %v1117 = vld [vmem:[%s11 + $0x1f8] sm:$0xff]
    %v1118 = vld [vmem:[%s11 + $0x200] sm:$0xff]
    %v1119 = vld [vmem:[%s11 + $0x208] sm:$0xff]
    %v1120 = vld [vmem:[%s11 + $0x210] sm:$0xff]
    %v1121 = vld [vmem:[%s11 + $0x218] sm:$0xff]
    %v1122 = vld [vmem:[%s11 + $0x220] sm:$0xff]
    %v1123 = vld [vmem:[%s11 + $0x228] sm:$0xff]
    %v1124 = vld [vmem:[%s11 + $0x230] sm:$0xff]
    %v1125 = vld [vmem:[%s11 + $0x238] sm:$0xff]
    %v1126 = vld [vmem:[%s11 + $0x240] sm:$0xff]
    %v1127 = vld [vmem:[%s11 + $0x248] sm:$0xff]
    %v1128 = vld [vmem:[%s11 + $0x250] sm:$0xff]
    %v1129 = vld [vmem:[%s11 + $0x258] sm:$0xff]
    %v1130 = vld [vmem:[%s11 + $0x260] sm:$0xff]
    %v1131 = vld [vmem:[%s11 + $0x268] sm:$0xff]
    %v1132 = vld [vmem:[%s11 + $0x270] sm:$0xff]
    %v1133 = vld [vmem:[%s11 + $0x278] sm:$0xff]
    %v1134 = vld [vmem:[%s11 + $0x280] sm:$0xff]
    %v1135 = vld [vmem:[%s11 + $0x288] sm:$0xff]
    %v1136 = vld [vmem:[%s11 + $0x290] sm:$0xff]
    %v1137 = vld [vmem:[%s11 + $0x298] sm:$0xff]
    %v1138 = vld [vmem:[%s11 + $0x2a0] sm:$0xff]
    %v1139 = vld [vmem:[%s11 + $0x2a8] sm:$0xff]
    %v1140 = vld [vmem:[%s11 + $0x2b0] sm:$0xff]
    %v1141 = vld [vmem:[%s11 + $0x2b8] sm:$0xff]
    %v1142 = vld [vmem:[%s11 + $0x2c0] sm:$0xff]
    %v1143 = vld [vmem:[%s11 + $0x2c8] sm:$0xff]
    %v1144 = vld [vmem:[%s11 + $0x2d0] sm:$0xff]
    %v1145 = vld [vmem:[%s11 + $0x2d8] sm:$0xff]
    %v1146 = vld [vmem:[%s11 + $0x2e0] sm:$0xff]
    %v1147 = vld [vmem:[%s11 + $0x2e8] sm:$0xff]
    %v1148 = vld [vmem:[%s11 + $0x2f0] sm:$0xff]
    %v1149 = vld [vmem:[%s11 + $0x2f8] sm:$0xff]
    %v1150 = vld [vmem:[%s11 + $0x300] sm:$0xff]
    %v1151 = vld [vmem:[%s11 + $0x308] sm:$0xff]
    %v1152 = vld [vmem:[%s11 + $0x310] sm:$0xff]
    %v1153 = vld [vmem:[%s11 + $0x318] sm:$0xff]
    %v1154 = vld [vmem:[%s11 + $0x320] sm:$0xff]
    %v1155 = vld [vmem:[%s11 + $0x328] sm:$0xff]
    %v1156 = vld [vmem:[%s11 + $0x330] sm:$0xff]
    %v1157 = vld [vmem:[%s11 + $0x338] sm:$0xff]
    %v1158 = vld [vmem:[%s11 + $0x340] sm:$0xff]
    %v1159 = vld [vmem:[%s11 + $0x348] sm:$0xff]
    %v1160 = vld [vmem:[%s11 + $0x350] sm:$0xff]
    %v1161 = vld [vmem:[%s11 + $0x358] sm:$0xff]
    %v1162 = vld [vmem:[%s11 + $0x360] sm:$0xff]
    %v1163 = vld [vmem:[%s11 + $0x368] sm:$0xff]
    %v1164 = vld [vmem:[%s11 + $0x370] sm:$0xff]
    %v1165 = vld [vmem:[%s11 + $0x378] sm:$0xff]
    %v1166 = vld [vmem:[%s11 + $0x380] sm:$0xff]
    %v1167 = vld [vmem:[%s11 + $0x388] sm:$0xff]
    %v1168 = vld [vmem:[%s11 + $0x390] sm:$0xff]
    %v1169 = vld [vmem:[%s11 + $0x398] sm:$0xff]
    %v1170 = vld [vmem:[%s11 + $0x3a0] sm:$0xff]
    %v1171 = vld [vmem:[%s11 + $0x3a8] sm:$0xff]
    %v1172 = vld [vmem:[%s11 + $0x3b0] sm:$0xff]
    %v1173 = vld [vmem:[%s11 + $0x3b8] sm:$0xff]
    %v1174 = vld [vmem:[%s11 + $0x3c0] sm:$0xff]
    %v1175 = vld [vmem:[%s11 + $0x3c8] sm:$0xff]
    %v1176 = vld [vmem:[%s11 + $0x3d0] sm:$0xff]
    %v1177 = vld [vmem:[%s11 + $0x3d8] sm:$0xff]
    %v1178 = vld [vmem:[%s11 + $0x3e0] sm:$0xff]
    %v1179 = vld [vmem:[%s11 + $0x3e8] sm:$0xff]
    %v1180 = vld [vmem:[%s11 + $0x3f0] sm:$0xff]
    %v1181 = vld [vmem:[%s11 + $0x3f8] sm:$0xff]
    %v1182 = vld [vmem:[%s11 + $0x400] sm:$0xff]
    %v1183 = vld [vmem:[%s11 + $0x408] sm:$0xff]
    %v1184 = vld [vmem:[%s11 + $0x410] sm:$0xff]
    %v1185 = vld [vmem:[%s11 + $0x418] sm:$0xff]
    %v1186 = vld [vmem:[%s11 + $0x420] sm:$0xff]
    %v1187 = vld [vmem:[%s11 + $0x428] sm:$0xff]
    %v1188 = vld [vmem:[%s11 + $0x430] sm:$0xff]
    %v1189 = vld [vmem:[%s11 + $0x438] sm:$0xff]
    %v1190 = vld [vmem:[%s11 + $0x440] sm:$0xff]
    %v1191 = vld [vmem:[%s11 + $0x448] sm:$0xff]
    %v1192 = vld [vmem:[%s11 + $0x450] sm:$0xff]
    %v1193 = vld [vmem:[%s11 + $0x458] sm:$0xff]
    %v1194 = vld [vmem:[%s11 + $0x460] sm:$0xff]
    %v1195 = vld [vmem:[%s11 + $0x468] sm:$0xff]
    %v1196 = vld [vmem:[%s11 + $0x470] sm:$0xff]
    %v1197 = vld [vmem:[%s11 + $0x478] sm:$0xff]
    %v1198 = vld [vmem:[%s11 + $0x480] sm:$0xff]
    %v1199 = vld [vmem:[%s11 + $0x488] sm:$0xff]
    %v1200 = vld [vmem:[%s11 + $0x490] sm:$0xff]
    %v1201 = vld [vmem:[%s11 + $0x498] sm:$0xff]
    %v1202 = vld [vmem:[%s11 + $0x4a0] sm:$0xff]
    %v1203 = vld [vmem:[%s11 + $0x4a8] sm:$0xff]
    %v1204 = vld [vmem:[%s11 + $0x4b0] sm:$0xff]
    %v1205 = vld [vmem:[%s11 + $0x4b8] sm:$0xff]
    %v1206 = vld [vmem:[%s11 + $0x4c0] sm:$0xff]
    %v1207 = vld [vmem:[%s11 + $0x4c8] sm:$0xff]
    %v1208 = vld [vmem:[%s11 + $0x4d0] sm:$0xff]
    %v1209 = vld [vmem:[%s11 + $0x4d8] sm:$0xff]
    %v1210 = vld [vmem:[%s11 + $0x4e0] sm:$0xff]
    %v1211 = vld [vmem:[%s11 + $0x4e8] sm:$0xff]
    %v1212 = vld [vmem:[%s11 + $0x4f0] sm:$0xff]
    %v1213 = vld [vmem:[%s11 + $0x4f8] sm:$0xff]
    %v1214 = vld [vmem:[%s11 + $0x500] sm:$0xff]
    %v1215 = vld [vmem:[%s11 + $0x508] sm:$0xff]
    %v1216 = vld [vmem:[%s11 + $0x510] sm:$0xff]
    %v1217 = vld [vmem:[%s11 + $0x518] sm:$0xff]
    %v1218 = vld [vmem:[%s11 + $0x520] sm:$0xff]
    %v1219 = vld [vmem:[%s11 + $0x528] sm:$0xff]
    %v1220 = vld [vmem:[%s11 + $0x530] sm:$0xff]
    %v1221 = vld [vmem:[%s11 + $0x538] sm:$0xff]
    %v1222 = vld [vmem:[%s11 + $0x540] sm:$0xff]
    %v1223 = vld [vmem:[%s11 + $0x548] sm:$0xff]
    %v1224 = vld [vmem:[%s11 + $0x550] sm:$0xff]
    %v1225 = vld [vmem:[%s11 + $0x558] sm:$0xff]
    %v1226 = vld [vmem:[%s11 + $0x560] sm:$0xff]
    %v1227 = vld [vmem:[%s11 + $0x568] sm:$0xff]
    %v1228 = vld [vmem:[%s11 + $0x570] sm:$0xff]
    %v1229 = vld [vmem:[%s11 + $0x578] sm:$0xff]
    %v1230 = vld [vmem:[%s11 + $0x580] sm:$0xff]
    %v1231 = vld [vmem:[%s11 + $0x588] sm:$0xff]
    %v1232 = vld [vmem:[%s11 + $0x590] sm:$0xff]
    %v1233 = vld [vmem:[%s11 + $0x598] sm:$0xff]
    %v1234 = vld [vmem:[%s11 + $0x5a0] sm:$0xff]
    %v1235 = vld [vmem:[%s11 + $0x5a8] sm:$0xff]
    %v1236 = vld [vmem:[%s11 + $0x5b0] sm:$0xff]
    %v1237 = vld [vmem:[%s11 + $0x5b8] sm:$0xff]
    %v1238 = vld [vmem:[%s11 + $0x5c0] sm:$0xff]
    %v1239 = vld [vmem:[%s11 + $0x5c8] sm:$0xff]
    %v1240 = vld [vmem:[%s11 + $0x5d0] sm:$0xff]
    %v1241 = vld [vmem:[%s11 + $0x5d8] sm:$0xff]
    %v1242 = vld [vmem:[%s11 + $0x5e0] sm:$0xff]
    %v1243 = vld [vmem:[%s11 + $0x5e8] sm:$0xff]
    %v1244 = vld [vmem:[%s11 + $0x5f0] sm:$0xff]
    %v1245 = vld [vmem:[%s11 + $0x5f8] sm:$0xff]
    %v1246 = vld [vmem:[%s11 + $0x600] sm:$0xff]
    %v1247 = vld [vmem:[%s11 + $0x608] sm:$0xff]
    %v1248 = vld [vmem:[%s11 + $0x610] sm:$0xff]
    %v1249 = vld [vmem:[%s11 + $0x618] sm:$0xff]
    %v1250 = vld [vmem:[%s11 + $0x620] sm:$0xff]
    %v1251 = vld [vmem:[%s11 + $0x628] sm:$0xff]
    %v1252 = vld [vmem:[%s11 + $0x630] sm:$0xff]
    %v1253 = vld [vmem:[%s11 + $0x638] sm:$0xff]
    %v1254 = vld [vmem:[%s11 + $0x640] sm:$0xff]
    %v1255 = vld [vmem:[%s11 + $0x648] sm:$0xff]
    %v1256 = vld [vmem:[%s11 + $0x650] sm:$0xff]
    %v1257 = vld [vmem:[%s11 + $0x658] sm:$0xff]
    %v1258 = vld [vmem:[%s11 + $0x660] sm:$0xff]
    %v1259 = vld [vmem:[%s11 + $0x668] sm:$0xff]
    %v1260 = vld [vmem:[%s11 + $0x670] sm:$0xff]
    %v1261 = vld [vmem:[%s11 + $0x678] sm:$0xff]
    %v1262 = vld [vmem:[%s11 + $0x680] sm:$0xff]
    %v1263 = vld [vmem:[%s11 + $0x688] sm:$0xff]
    %v1264 = vld [vmem:[%s11 + $0x690] sm:$0xff]
    %v1265 = vld [vmem:[%s11 + $0x698] sm:$0xff]
    %v1266 = vld [vmem:[%s11 + $0x6a0] sm:$0xff]
    %v1267 = vld [vmem:[%s11 + $0x6a8] sm:$0xff]
    %v1268 = vld [vmem:[%s11 + $0x6b0] sm:$0xff]
    %v1269 = vld [vmem:[%s11 + $0x6b8] sm:$0xff]
    %v1270 = vld [vmem:[%s11 + $0x6c0] sm:$0xff]
    %v1271 = vld [vmem:[%s11 + $0x6c8] sm:$0xff]
    %v1272 = vld [vmem:[%s11 + $0x6d0] sm:$0xff]
    %v1273 = vld [vmem:[%s11 + $0x6d8] sm:$0xff]
    %v1274 = vld [vmem:[%s11 + $0x6e0] sm:$0xff]
    %v1275 = vld [vmem:[%s11 + $0x6e8] sm:$0xff]
    %v1276 = vld [vmem:[%s11 + $0x6f0] sm:$0xff]
    %v1277 = vld [vmem:[%s11 + $0x6f8] sm:$0xff]
    %v1278 = vld [vmem:[%s11 + $0x700] sm:$0xff]
    %v1279 = vld [vmem:[%s11 + $0x708] sm:$0xff]
    %v1280 = vld [vmem:[%s11 + $0x710] sm:$0xff]
    %v1281 = vld [vmem:[%s11 + $0x718] sm:$0xff]
    %v1282 = vld [vmem:[%s11 + $0x720] sm:$0xff]
    %v1283 = vld [vmem:[%s11 + $0x728] sm:$0xff]
    %v1284 = vld [vmem:[%s11 + $0x730] sm:$0xff]
    %v1285 = vld [vmem:[%s11 + $0x738] sm:$0xff]
    %v1286 = vld [vmem:[%s11 + $0x740] sm:$0xff]
    %v1287 = vld [vmem:[%s11 + $0x748] sm:$0xff]
    %v1288 = vld [vmem:[%s11 + $0x750] sm:$0xff]
    %v1289 = vld [vmem:[%s11 + $0x758] sm:$0xff]
    %v1290 = vld [vmem:[%s11 + $0x760] sm:$0xff]
    %v1291 = vld [vmem:[%s11 + $0x768] sm:$0xff]
    %v1292 = vld [vmem:[%s11 + $0x770] sm:$0xff]
    %v1293 = vld [vmem:[%s11 + $0x778] sm:$0xff]
    %v1294 = vld [vmem:[%s11 + $0x780] sm:$0xff]
    %v1295 = vld [vmem:[%s11 + $0x788] sm:$0xff]
    %v1296 = vld [vmem:[%s11 + $0x790] sm:$0xff]
    %v1297 = vld [vmem:[%s11 + $0x798] sm:$0xff]
    %v1298 = vld [vmem:[%s11 + $0x7a0] sm:$0xff]
    %v1299 = vld [vmem:[%s11 + $0x7a8] sm:$0xff]
    %v1300 = vld [vmem:[%s11 + $0x7b0] sm:$0xff]
    %v1301 = vld [vmem:[%s11 + $0x7b8] sm:$0xff]
    %v1302 = vld [vmem:[%s11 + $0x7c0] sm:$0xff]
    %v1303 = vld [vmem:[%s11 + $0x7c8] sm:$0xff]
    %v1304 = vld [vmem:[%s11 + $0x7d0] sm:$0xff]
    %v1305 = vld [vmem:[%s11 + $0x7d8] sm:$0xff]
    %v1306 = vld [vmem:[%s11 + $0x7e0] sm:$0xff]
    %v1307 = vld [vmem:[%s11 + $0x7e8] sm:$0xff]
    %v1308 = vld [vmem:[%s11 + $0x7f0] sm:$0xff]
    %v1309 = vld [vmem:[%s11 + $0x7f8] sm:$0xff]
    %v1310 = vld [vmem:[%s11 + $0x800] sm:$0xff]
    %v1311 = vld [vmem:[%s11 + $0x808] sm:$0xff]
    %v1312 = vld [vmem:[%s11 + $0x810] sm:$0xff]
    %v1313 = vld [vmem:[%s11 + $0x818] sm:$0xff]
    %v1314 = vld [vmem:[%s11 + $0x820] sm:$0xff]
    %v1315 = vld [vmem:[%s11 + $0x828] sm:$0xff]
    %v1316 = vld [vmem:[%s11 + $0x830] sm:$0xff]
    %v1317 = vld [vmem:[%s11 + $0x838] sm:$0xff]
    %v1318 = vld [vmem:[%s11 + $0x840] sm:$0xff]
    %v1319 = vld [vmem:[%s11 + $0x848] sm:$0xff]
    %v1320 = vld [vmem:[%s11 + $0x850] sm:$0xff]
    %v1321 = vld [vmem:[%s11 + $0x858] sm:$0xff]
    %v1322 = vld [vmem:[%s11 + $0x860] sm:$0xff]
    %v1323 = vld [vmem:[%s11 + $0x868] sm:$0xff]
    %v1324 = vld [vmem:[%s11 + $0x870] sm:$0xff]
    %v1325 = vld [vmem:[%s11 + $0x878] sm:$0xff]
    %v1326 = vld [vmem:[%s11 + $0x880] sm:$0xff]
    %v1327 = vld [vmem:[%s11 + $0x888] sm:$0xff]
    %v1328 = vld [vmem:[%s11 + $0x890] sm:$0xff]
    %v1329 = vld [vmem:[%s11 + $0x898] sm:$0xff]
    %v1330 = vld [vmem:[%s11 + $0x8a0] sm:$0xff]
    %v1331 = vld [vmem:[%s11 + $0x8a8] sm:$0xff]
    %v1332 = vld [vmem:[%s11 + $0x8b0] sm:$0xff]
    %v1333 = vld [vmem:[%s11 + $0x8b8] sm:$0xff]
    %v1334 = vld [vmem:[%s11 + $0x8c0] sm:$0xff]
    %v1335 = vld [vmem:[%s11 + $0x8c8] sm:$0xff]
    %v1336 = vld [vmem:[%s11 + $0x8d0] sm:$0xff]
    %v1337 = vld [vmem:[%s11 + $0x8d8] sm:$0xff]
    %v1338 = vld [vmem:[%s11 + $0x8e0] sm:$0xff]
    %v1339 = vld [vmem:[%s11 + $0x8e8] sm:$0xff]
    %v1340 = vld [vmem:[%s11 + $0x8f0] sm:$0xff]
    %v1341 = vld [vmem:[%s11 + $0x8f8] sm:$0xff]
    %v1342 = vld [vmem:[%s11 + $0x900] sm:$0xff]
    %v1343 = vld [vmem:[%s11 + $0x908] sm:$0xff]
    %v1344 = vld [vmem:[%s11 + $0x910] sm:$0xff]
    %v1345 = vld [vmem:[%s11 + $0x918] sm:$0xff]
    %v1346 = vld [vmem:[%s11 + $0x920] sm:$0xff]
    %v1347 = vld [vmem:[%s11 + $0x928] sm:$0xff]
    %v1348 = vld [vmem:[%s11 + $0x930] sm:$0xff]
    %v1349 = vld [vmem:[%s11 + $0x938] sm:$0xff]
    %v1350 = vld [vmem:[%s11 + $0x940] sm:$0xff]
    %v1351 = vld [vmem:[%s11 + $0x948] sm:$0xff]
    %v1352 = vld [vmem:[%s11 + $0x950] sm:$0xff]
    %v1353 = vld [vmem:[%s11 + $0x958] sm:$0xff]
    %v1354 = vld [vmem:[%s11 + $0x960] sm:$0xff]
    %v1355 = vld [vmem:[%s11 + $0x968] sm:$0xff]
    %v1356 = vld [vmem:[%s11 + $0x970] sm:$0xff]
    %v1357 = vld [vmem:[%s11 + $0x978] sm:$0xff]
    %v1358 = vld [vmem:[%s11 + $0x980] sm:$0xff]
    %v1359 = vld [vmem:[%s11 + $0x988] sm:$0xff]
    %v1360 = vld [vmem:[%s11 + $0x990] sm:$0xff]
    %v1361 = vld [vmem:[%s11 + $0x998] sm:$0xff]
    %v1362 = vld [vmem:[%s11 + $0x9a0] sm:$0xff]
    %v1363 = vld [vmem:[%s11 + $0x9a8] sm:$0xff]
    %v1364 = vld [vmem:[%s11 + $0x9b0] sm:$0xff]
    %v1365 = vld [vmem:[%s11 + $0x9b8] sm:$0xff]
    %v1366 = vld [vmem:[%s11 + $0x9c0] sm:$0xff]
    %v1367 = vld [vmem:[%s11 + $0x9c8] sm:$0xff]
    %v1368 = vld [vmem:[%s11 + $0x9d0] sm:$0xff]
    %v1369 = vld [vmem:[%s11 + $0x9d8] sm:$0xff]
    %v1370 = vld [vmem:[%s11 + $0x9e0] sm:$0xff]
    %v1371 = vld [vmem:[%s11 + $0x9e8] sm:$0xff]
    %v1372 = vld [vmem:[%s11 + $0x9f0] sm:$0xff]
    %v1373 = vld [vmem:[%s11 + $0x9f8] sm:$0xff]
    %v1374 = vld [vmem:[%s11 + $0xa00] sm:$0xff]
    %v1375 = vld [vmem:[%s11 + $0xa08] sm:$0xff]
    %v1376 = vld [vmem:[%s11 + $0xa10] sm:$0xff]
    %v1377 = vld [vmem:[%s11 + $0xa18] sm:$0xff]
    %v1378 = vld [vmem:[%s11 + $0xa20] sm:$0xff]
    %v1379 = vld [vmem:[%s11 + $0xa28] sm:$0xff]
    %v1380 = vld [vmem:[%s11 + $0xa30] sm:$0xff]
    %v1381 = vld [vmem:[%s11 + $0xa38] sm:$0xff]
    %v1382 = vld [vmem:[%s11 + $0xa40] sm:$0xff]
    %v1383 = vld [vmem:[%s11 + $0xa48] sm:$0xff]
    %v1384 = vld [vmem:[%s11 + $0xa50] sm:$0xff]
    %v1385 = vld [vmem:[%s11 + $0xa58] sm:$0xff]
    %v1386 = vld [vmem:[%s11 + $0xa60] sm:$0xff]
    %v1387 = vld [vmem:[%s11 + $0xa68] sm:$0xff]
    %v1388 = vld [vmem:[%s11 + $0xa70] sm:$0xff]
    %v1389 = vld [vmem:[%s11 + $0xa78] sm:$0xff]
    %v1390 = vld [vmem:[%s11 + $0xa80] sm:$0xff]
    %v1391 = vld [vmem:[%s11 + $0xa88] sm:$0xff]
    %v1392 = vld [vmem:[%s11 + $0xa90] sm:$0xff]
    %v1393 = vld [vmem:[%s11 + $0xa98] sm:$0xff]
    %v1394 = vld [vmem:[%s11 + $0xaa0] sm:$0xff]
    %v1395 = vld [vmem:[%s11 + $0xaa8] sm:$0xff]
    %v1396 = vld [vmem:[%s11 + $0xab0] sm:$0xff]
    %v1397 = vld [vmem:[%s11 + $0xab8] sm:$0xff]
    %v1398 = vld [vmem:[%s11 + $0xac0] sm:$0xff]
    %v1399 = vld [vmem:[%s11 + $0xac8] sm:$0xff]
    %v1400 = vld [vmem:[%s11 + $0xad0] sm:$0xff]
    %v1401 = vld [vmem:[%s11 + $0xad8] sm:$0xff]
    %v1402 = vld [vmem:[%s11 + $0xae0] sm:$0xff]
    %v1403 = vld [vmem:[%s11 + $0xae8] sm:$0xff]
    %v1404 = vld [vmem:[%s11 + $0xaf0] sm:$0xff]
    %v1405 = vld [vmem:[%s11 + $0xaf8] sm:$0xff]
    %v1406 = vld [vmem:[%s11 + $0xb00] sm:$0xff]
    %v1407 = vld [vmem:[%s11 + $0xb08] sm:$0xff]
    %v1408 = vld [vmem:[%s11 + $0xb10] sm:$0xff]
    %v1409 = vld [vmem:[%s11 + $0xb18] sm:$0xff]
    %v1410 = vld [vmem:[%s11 + $0xb20] sm:$0xff]
    %v1411 = vld [vmem:[%s11 + $0xb28] sm:$0xff]
    %v1412 = vld [vmem:[%s11 + $0xb30] sm:$0xff]
    %v1413 = vld [vmem:[%s11 + $0xb38] sm:$0xff]
    %v1414 = vld [vmem:[%s11 + $0xb40] sm:$0xff]
    %v1415 = vld [vmem:[%s11 + $0xb48] sm:$0xff]
    %v1416 = vld [vmem:[%s11 + $0xb50] sm:$0xff]
    %v1417 = vld [vmem:[%s11 + $0xb58] sm:$0xff]
    %v1418 = vld [vmem:[%s11 + $0xb60] sm:$0xff]
    %v1419 = vld [vmem:[%s11 + $0xb68] sm:$0xff]
    %v1420 = vld [vmem:[%s11 + $0xb70] sm:$0xff]
    %v1421 = vld [vmem:[%s11 + $0xb78] sm:$0xff]
    %v1422 = vld [vmem:[%s11 + $0xb80] sm:$0xff]
    %v1423 = vld [vmem:[%s11 + $0xb88] sm:$0xff]
    %v1424 = vld [vmem:[%s11 + $0xb90] sm:$0xff]
    %v1425 = vld [vmem:[%s11 + $0xb98] sm:$0xff]
    %v1426 = vld [vmem:[%s11 + $0xba0] sm:$0xff]
    %v1427 = vld [vmem:[%s11 + $0xba8] sm:$0xff]
    %v1428 = vld [vmem:[%s11 + $0xbb0] sm:$0xff]
    %v1429 = vld [vmem:[%s11 + $0xbb8] sm:$0xff]
    %v1430 = vld [vmem:[%s11 + $0xbc0] sm:$0xff]
    %v1431 = vld [vmem:[%s11 + $0xbc8] sm:$0xff]
    %v1432 = vld [vmem:[%s11 + $0xbd0] sm:$0xff]
    %v1433 = vld [vmem:[%s11 + $0xbd8] sm:$0xff]
    %v1434 = vld [vmem:[%s11 + $0xbe0] sm:$0xff]
    %v1435 = vld [vmem:[%s11 + $0xbe8] sm:$0xff]
    %v1436 = vld [vmem:[%s11 + $0xbf0] sm:$0xff]
    %v1437 = vld [vmem:[%s11 + $0xbf8] sm:$0xff]
    %1438 = vmatprep.subr.mxu0 %v1119
    %1439 = vmatpush1.msra.mxu0 %v1118
    %1440 = vmatprep.subr.mxu0 %v1121
    %1441 = vmatpush1.msra.mxu0 %v1120
    %1442 = vmatprep.subr.mxu0 %v1123
    %1443 = vmatpush1.msra.mxu0 %v1122
    %1444 = vmatprep.subr.mxu0 %v1125
    %1445 = vmatpush1.msra.mxu0 %v1124
    %1446 = vmatprep.subr.mxu0 %v1127
    %1447 = vmatpush1.msra.mxu0 %v1126
    %1448 = vmatprep.subr.mxu0 %v1129
    %1449 = vmatpush1.msra.mxu0 %v1128
    %1450 = vmatprep.subr.mxu0 %v1131
    %1451 = vmatpush1.msra.mxu0 %v1130
    %1452 = vmatprep.subr.mxu0 %v1133
    %1453 = vmatpush1.msra.mxu0 %v1132
    %1454 = vmatprep.subr.mxu0 %v1135
    %1455 = vmatpush1.msra.mxu0 %v1134
    %1456 = vmatprep.subr.mxu0 %v1137
    %1457 = vmatpush1.msra.mxu0 %v1136
    %1458 = vmatprep.subr.mxu0 %v1139
    %1459 = vmatpush1.msra.mxu0 %v1138
    %1460 = vmatprep.subr.mxu0 %v1141
    %1461 = vmatpush1.msra.mxu0 %v1140
    %1462 = vmatprep.subr.mxu0 %v1143
    %1463 = vmatpush1.msra.mxu0 %v1142
    %1464 = vmatprep.subr.mxu0 %v1145
    %1465 = vmatpush1.msra.mxu0 %v1144
    %1466 = vmatprep.subr.mxu0 %v1147
    %1467 = vmatpush1.msra.mxu0 %v1146
    %1468 = vmatprep.subr.mxu0 %v1149
    %1469 = vmatpush1.msra.mxu0 %v1148
    %1470 = vmatprep.subr.mxu0 %v1151
    %1471 = vmatpush1.msra.mxu0 %v1150
    %1472 = vmatprep.subr.mxu0 %v1153
    %1473 = vmatpush1.msra.mxu0 %v1152
    %1474 = vmatprep.subr.mxu0 %v1155
    %1475 = vmatpush1.msra.mxu0 %v1154
    %1476 = vmatprep.subr.mxu0 %v1157
    %1477 = vmatpush1.msra.mxu0 %v1156
    %1478 = vmatprep.subr.mxu0 %v1159
    %1479 = vmatpush1.msra.mxu0 %v1158
    %1480 = vmatprep.subr.mxu0 %v1161
    %1481 = vmatpush1.msra.mxu0 %v1160
    %1482 = vmatprep.subr.mxu0 %v1163
    %1483 = vmatpush1.msra.mxu0 %v1162
    %1484 = vmatprep.subr.mxu0 %v1165
    %1485 = vmatpush1.msra.mxu0 %v1164
    %1486 = vmatprep.subr.mxu0 %v1167
    %1487 = vmatpush1.msra.mxu0 %v1166
    %1488 = vmatprep.subr.mxu0 %v1169
    %1489 = vmatpush1.msra.mxu0 %v1168
    %1490 = vmatprep.subr.mxu0 %v1171
    %1491 = vmatpush1.msra.mxu0 %v1170
    %1492 = vmatprep.subr.mxu0 %v1173
    %1493 = vmatpush1.msra.mxu0 %v1172
    %1494 = vmatprep.subr.mxu0 %v1175
    %1495 = vmatpush1.msra.mxu0 %v1174
    %1496 = vmatprep.subr.mxu0 %v1177
    %1497 = vmatpush1.msra.mxu0 %v1176
    %1498 = vmatprep.subr.mxu0 %v1179
    %1499 = vmatpush1.msra.mxu0 %v1178
    %1500 = vmatprep.subr.mxu0 %v1181
    %1501 = vmatpush1.msra.mxu0 %v1180
    %1502 = vmatprep.mubr.f32.mxu0 %v237
    %1503 = vmatmul.mubr.f32.gmra.mrb[0].mxu0 %v235
    %v1504 = vpop.f32.mrb[0].mxu0
    %v1505 = vadd.f32 0.0, %v1504
    %v1506 = vpop.f32.mrb[0].mxu0
    %v1507 = vadd.f32 0.0, %v1506
    %1508 = vmatprep.mubr.f32.mxu0 %v243
    %1509 = vmatmul.mubr.f32.gmra.mrb[0].mxu0 %v241
    %v1510 = vpop.f32.mrb[0].mxu0
    %v1511 = vadd.f32 0.0, %v1510
    %v1512 = vpop.f32.mrb[0].mxu0
    %v1513 = vadd.f32 0.0, %v1512
    %1514 = vdwg.mxu0
    %1515 = vmatprep.subr.mxu0 %v1055
    %1516 = vmatpush1.msra.mxu0 %v1054
    %1517 = vmatprep.subr.mxu0 %v1057
    %1518 = vmatpush1.msra.mxu0 %v1056
    %1519 = vmatprep.subr.mxu0 %v1059
    %1520 = vmatpush1.msra.mxu0 %v1058
    %1521 = vmatprep.subr.mxu0 %v1061
    %1522 = vmatpush1.msra.mxu0 %v1060
    %1523 = vmatprep.subr.mxu0 %v1063
    %1524 = vmatpush1.msra.mxu0 %v1062
    %1525 = vmatprep.subr.mxu0 %v1065
    %1526 = vmatpush1.msra.mxu0 %v1064
    %1527 = vmatprep.subr.mxu0 %v1067
    %1528 = vmatpush1.msra.mxu0 %v1066
    %1529 = vmatprep.subr.mxu0 %v1069
    %1530 = vmatpush1.msra.mxu0 %v1068
    %1531 = vmatprep.subr.mxu0 %v1071
    %1532 = vmatpush1.msra.mxu0 %v1070
    %1533 = vmatprep.subr.mxu0 %v1073
    %1534 = vmatpush1.msra.mxu0 %v1072
    %1535 = vmatprep.subr.mxu0 %v1075
    %1536 = vmatpush1.msra.mxu0 %v1074
    %1537 = vmatprep.subr.mxu0 %v1077
    %1538 = vmatpush1.msra.mxu0 %v1076
    %1539 = vmatprep.subr.mxu0 %v1079
    %1540 = vmatpush1.msra.mxu0 %v1078
    %1541 = vmatprep.subr.mxu0 %v1081
    %1542 = vmatpush1.msra.mxu0 %v1080
    %1543 = vmatprep.subr.mxu0 %v1083
    %1544 = vmatpush1.msra.mxu0 %v1082
    %1545 = vmatprep.subr.mxu0 %v1085
    %1546 = vmatpush1.msra.mxu0 %v1084
    %1547 = vmatprep.subr.mxu0 %v1087
    %1548 = vmatpush1.msra.mxu0 %v1086
    %1549 = vmatprep.subr.mxu0 %v1089
    %1550 = vmatpush1.msra.mxu0 %v1088
    %1551 = vmatprep.subr.mxu0 %v1091
    %1552 = vmatpush1.msra.mxu0 %v1090
    %1553 = vmatprep.subr.mxu0 %v1093
    %1554 = vmatpush1.msra.mxu0 %v1092
    %1555 = vmatprep.subr.mxu0 %v1095
    %1556 = vmatpush1.msra.mxu0 %v1094
    %1557 = vmatprep.subr.mxu0 %v1097
    %1558 = vmatpush1.msra.mxu0 %v1096
    %1559 = vmatprep.subr.mxu0 %v1099
    %1560 = vmatpush1.msra.mxu0 %v1098
    %1561 = vmatprep.subr.mxu0 %v1101
    %1562 = vmatpush1.msra.mxu0 %v1100
    %1563 = vmatprep.subr.mxu0 %v1103
    %1564 = vmatpush1.msra.mxu0 %v1102
    %1565 = vmatprep.subr.mxu0 %v1105
    %1566 = vmatpush1.msra.mxu0 %v1104
    %1567 = vmatprep.subr.mxu0 %v1107
    %1568 = vmatpush1.msra.mxu0 %v1106
    %1569 = vmatprep.subr.mxu0 %v1109
    %1570 = vmatpush1.msra.mxu0 %v1108
    %1571 = vmatprep.subr.mxu0 %v1111
    %1572 = vmatpush1.msra.mxu0 %v1110
    %1573 = vmatprep.subr.mxu0 %v1113
    %1574 = vmatpush1.msra.mxu0 %v1112
    %1575 = vmatprep.subr.mxu0 %v1115
    %1576 = vmatpush1.msra.mxu0 %v1114
    %1577 = vmatprep.subr.mxu0 %v1117
    %1578 = vmatpush1.msra.mxu0 %v1116
    %1579 = vmatprep.mubr.f32.mxu0 %v1051
    %1580 = vmatmul.mubr.f32.gmra.mrb[0].mxu0 %v1050
    %v1581 = vpop.f32.mrb[0].mxu0
    %v1582 = vadd.f32 %v1505, %v1581
    %v1583 = vpop.f32.mrb[0].mxu0
    %v1584 = vadd.f32 %v1507, %v1583
    %1585 = vmatprep.mubr.f32.mxu0 %v1053
    %1586 = vmatmul.mubr.f32.gmra.mrb[0].mxu0 %v1052
    %v1587 = vpop.f32.mrb[0].mxu0
    %v1588 = vadd.f32 %v1511, %v1587
    %v1589 = vpop.f32.mrb[0].mxu0
    %v1590 = vadd.f32 %v1513, %v1589
    %1591 = vdwg.mxu0
    %v1592 = vld [vmem:[%s2] sm:$0xff]
    %v1593 = vld [vmem:[%s2 + $0x8] sm:$0xff]
    %v1594 = vld [vmem:[%s2 + $0x10] sm:$0xff]
    %v1595 = vld [vmem:[%s2 + $0x18] sm:$0xff]
    %v1596 = vld [vmem:[%s2 + $0x20] sm:$0xff]
    %v1597 = vld [vmem:[%s2 + $0x28] sm:$0xff]
    %v1598 = vld [vmem:[%s2 + $0x30] sm:$0xff]
    %v1599 = vld [vmem:[%s2 + $0x38] sm:$0xff]
    %v1600 = vld [vmem:[%s2 + $0x40] sm:$0xff]
    %v1601 = vld [vmem:[%s2 + $0x48] sm:$0xff]
    %v1602 = vld [vmem:[%s2 + $0x50] sm:$0xff]
    %v1603 = vld [vmem:[%s2 + $0x58] sm:$0xff]
    %v1604 = vld [vmem:[%s2 + $0x60] sm:$0xff]
    %v1605 = vld [vmem:[%s2 + $0x68] sm:$0xff]
    %v1606 = vld [vmem:[%s2 + $0x70] sm:$0xff]
    %v1607 = vld [vmem:[%s2 + $0x78] sm:$0xff]
    %1608 = vmatprep.subr.mxu0 %v1183
    %1609 = vmatpush1.msra.mxu0 %v1182
    %1610 = vmatprep.subr.mxu0 %v1185
    %1611 = vmatpush1.msra.mxu0 %v1184
    %1612 = vmatprep.subr.mxu0 %v1187
    %1613 = vmatpush1.msra.mxu0 %v1186
    %1614 = vmatprep.subr.mxu0 %v1189
    %1615 = vmatpush1.msra.mxu0 %v1188
    %1616 = vmatprep.subr.mxu0 %v1191
    %1617 = vmatpush1.msra.mxu0 %v1190
    %1618 = vmatprep.subr.mxu0 %v1193
    %1619 = vmatpush1.msra.mxu0 %v1192
    %1620 = vmatprep.subr.mxu0 %v1195
    %1621 = vmatpush1.msra.mxu0 %v1194
    %1622 = vmatprep.subr.mxu0 %v1197
    %1623 = vmatpush1.msra.mxu0 %v1196
    %1624 = vmatprep.subr.mxu0 %v1199
    %1625 = vmatpush1.msra.mxu0 %v1198
    %1626 = vmatprep.subr.mxu0 %v1201
    %1627 = vmatpush1.msra.mxu0 %v1200
    %1628 = vmatprep.subr.mxu0 %v1203
    %1629 = vmatpush1.msra.mxu0 %v1202
    %1630 = vmatprep.subr.mxu0 %v1205
    %1631 = vmatpush1.msra.mxu0 %v1204
    %1632 = vmatprep.subr.mxu0 %v1207
    %1633 = vmatpush1.msra.mxu0 %v1206
    %1634 = vmatprep.subr.mxu0 %v1209
    %1635 = vmatpush1.msra.mxu0 %v1208
    %1636 = vmatprep.subr.mxu0 %v1211
    %1637 = vmatpush1.msra.mxu0 %v1210
    %1638 = vmatprep.subr.mxu0 %v1213
    %1639 = vmatpush1.msra.mxu0 %v1212
    %1640 = vmatprep.subr.mxu0 %v1215
    %1641 = vmatpush1.msra.mxu0 %v1214
    %1642 = vmatprep.subr.mxu0 %v1217
    %1643 = vmatpush1.msra.mxu0 %v1216
    %1644 = vmatprep.subr.mxu0 %v1219
    %1645 = vmatpush1.msra.mxu0 %v1218
    %1646 = vmatprep.subr.mxu0 %v1221
    %1647 = vmatpush1.msra.mxu0 %v1220
    %1648 = vmatprep.subr.mxu0 %v1223
    %1649 = vmatpush1.msra.mxu0 %v1222
    %1650 = vmatprep.subr.mxu0 %v1225
    %1651 = vmatpush1.msra.mxu0 %v1224
    %1652 = vmatprep.subr.mxu0 %v1227
    %1653 = vmatpush1.msra.mxu0 %v1226
    %1654 = vmatprep.subr.mxu0 %v1229
    %1655 = vmatpush1.msra.mxu0 %v1228
    %1656 = vmatprep.subr.mxu0 %v1231
    %1657 = vmatpush1.msra.mxu0 %v1230
    %1658 = vmatprep.subr.mxu0 %v1233
    %1659 = vmatpush1.msra.mxu0 %v1232
    %1660 = vmatprep.subr.mxu0 %v1235
    %1661 = vmatpush1.msra.mxu0 %v1234
    %1662 = vmatprep.subr.mxu0 %v1237
    %1663 = vmatpush1.msra.mxu0 %v1236
    %1664 = vmatprep.subr.mxu0 %v1239
    %1665 = vmatpush1.msra.mxu0 %v1238
    %1666 = vmatprep.subr.mxu0 %v1241
    %1667 = vmatpush1.msra.mxu0 %v1240
    %1668 = vmatprep.subr.mxu0 %v1243
    %1669 = vmatpush1.msra.mxu0 %v1242
    %1670 = vmatprep.subr.mxu0 %v1245
    %1671 = vmatpush1.msra.mxu0 %v1244
    %1672 = vmatprep.mubr.f32.mxu0 %v1593
    %1673 = vmatmul.mubr.f32.gmra.mrb[0].mxu0 %v1592
    %v1674 = vpop.f32.mrb[0].mxu0
    %v1675 = vadd.f32 0.0, %v1674
    %v1676 = vpop.f32.mrb[0].mxu0
    %v1677 = vadd.f32 0.0, %v1676
    %1678 = vmatprep.mubr.f32.mxu0 %v1601
    %1679 = vmatmul.mubr.f32.gmra.mrb[0].mxu0 %v1600
    %v1680 = vpop.f32.mrb[0].mxu0
    %v1681 = vadd.f32 0.0, %v1680
    %v1682 = vpop.f32.mrb[0].mxu0
    %v1683 = vadd.f32 0.0, %v1682
    %1684 = vdwg.mxu0
    %1685 = vmatprep.subr.mxu0 %v1247
    %1686 = vmatpush1.msra.mxu0 %v1246
    %1687 = vmatprep.subr.mxu0 %v1249
    %1688 = vmatpush1.msra.mxu0 %v1248
    %1689 = vmatprep.subr.mxu0 %v1251
    %1690 = vmatpush1.msra.mxu0 %v1250
    %1691 = vmatprep.subr.mxu0 %v1253
    %1692 = vmatpush1.msra.mxu0 %v1252
    %1693 = vmatprep.subr.mxu0 %v1255
    %1694 = vmatpush1.msra.mxu0 %v1254
    %1695 = vmatprep.subr.mxu0 %v1257
    %1696 = vmatpush1.msra.mxu0 %v1256
    %1697 = vmatprep.subr.mxu0 %v1259
    %1698 = vmatpush1.msra.mxu0 %v1258
    %1699 = vmatprep.subr.mxu0 %v1261
    %1700 = vmatpush1.msra.mxu0 %v1260
    %1701 = vmatprep.subr.mxu0 %v1263
    %1702 = vmatpush1.msra.mxu0 %v1262
    %1703 = vmatprep.subr.mxu0 %v1265
    %1704 = vmatpush1.msra.mxu0 %v1264
    %1705 = vmatprep.subr.mxu0 %v1267
    %1706 = vmatpush1.msra.mxu0 %v1266
    %1707 = vmatprep.subr.mxu0 %v1269
    %1708 = vmatpush1.msra.mxu0 %v1268
    %1709 = vmatprep.subr.mxu0 %v1271
    %1710 = vmatpush1.msra.mxu0 %v1270
    %1711 = vmatprep.subr.mxu0 %v1273
    %1712 = vmatpush1.msra.mxu0 %v1272
    %1713 = vmatprep.subr.mxu0 %v1275
    %1714 = vmatpush1.msra.mxu0 %v1274
    %1715 = vmatprep.subr.mxu0 %v1277
    %1716 = vmatpush1.msra.mxu0 %v1276
    %1717 = vmatprep.subr.mxu0 %v1279
    %1718 = vmatpush1.msra.mxu0 %v1278
    %1719 = vmatprep.subr.mxu0 %v1281
    %1720 = vmatpush1.msra.mxu0 %v1280
    %1721 = vmatprep.subr.mxu0 %v1283
    %1722 = vmatpush1.msra.mxu0 %v1282
    %1723 = vmatprep.subr.mxu0 %v1285
    %1724 = vmatpush1.msra.mxu0 %v1284
    %1725 = vmatprep.subr.mxu0 %v1287
    %1726 = vmatpush1.msra.mxu0 %v1286
    %1727 = vmatprep.subr.mxu0 %v1289
    %1728 = vmatpush1.msra.mxu0 %v1288
    %1729 = vmatprep.subr.mxu0 %v1291
    %1730 = vmatpush1.msra.mxu0 %v1290
    %1731 = vmatprep.subr.mxu0 %v1293
    %1732 = vmatpush1.msra.mxu0 %v1292
    %1733 = vmatprep.subr.mxu0 %v1295
    %1734 = vmatpush1.msra.mxu0 %v1294
    %1735 = vmatprep.subr.mxu0 %v1297
    %1736 = vmatpush1.msra.mxu0 %v1296
    %1737 = vmatprep.subr.mxu0 %v1299
    %1738 = vmatpush1.msra.mxu0 %v1298
    %1739 = vmatprep.subr.mxu0 %v1301
    %1740 = vmatpush1.msra.mxu0 %v1300
    %1741 = vmatprep.subr.mxu0 %v1303
    %1742 = vmatpush1.msra.mxu0 %v1302
    %1743 = vmatprep.subr.mxu0 %v1305
    %1744 = vmatpush1.msra.mxu0 %v1304
    %1745 = vmatprep.subr.mxu0 %v1307
    %1746 = vmatpush1.msra.mxu0 %v1306
    %1747 = vmatprep.subr.mxu0 %v1309
    %1748 = vmatpush1.msra.mxu0 %v1308
    %1749 = vmatprep.mubr.f32.mxu0 %v1595
    %1750 = vmatmul.mubr.f32.gmra.mrb[0].mxu0 %v1594
    %v1751 = vpop.f32.mrb[0].mxu0
    %v1752 = vadd.f32 %v1675, %v1751
    %v1753 = vpop.f32.mrb[0].mxu0
    %v1754 = vadd.f32 %v1677, %v1753
    %1755 = vmatprep.mubr.f32.mxu0 %v1603
    %1756 = vmatmul.mubr.f32.gmra.mrb[0].mxu0 %v1602
    %v1757 = vpop.f32.mrb[0].mxu0
    %v1758 = vadd.f32 %v1681, %v1757
    %v1759 = vpop.f32.mrb[0].mxu0
    %v1760 = vadd.f32 %v1683, %v1759
    %1761 = vdwg.mxu0
    %1762 = vmatprep.subr.mxu0 %v1311
    %1763 = vmatpush1.msra.mxu0 %v1310
    %1764 = vmatprep.subr.mxu0 %v1313
    %1765 = vmatpush1.msra.mxu0 %v1312
    %1766 = vmatprep.subr.mxu0 %v1315
    %1767 = vmatpush1.msra.mxu0 %v1314
    %1768 = vmatprep.subr.mxu0 %v1317
    %1769 = vmatpush1.msra.mxu0 %v1316
    %1770 = vmatprep.subr.mxu0 %v1319
    %1771 = vmatpush1.msra.mxu0 %v1318
    %1772 = vmatprep.subr.mxu0 %v1321
    %1773 = vmatpush1.msra.mxu0 %v1320
    %1774 = vmatprep.subr.mxu0 %v1323
    %1775 = vmatpush1.msra.mxu0 %v1322
    %1776 = vmatprep.subr.mxu0 %v1325
    %1777 = vmatpush1.msra.mxu0 %v1324
    %1778 = vmatprep.subr.mxu0 %v1327
    %1779 = vmatpush1.msra.mxu0 %v1326
    %1780 = vmatprep.subr.mxu0 %v1329
    %1781 = vmatpush1.msra.mxu0 %v1328
    %1782 = vmatprep.subr.mxu0 %v1331
    %1783 = vmatpush1.msra.mxu0 %v1330
    %1784 = vmatprep.subr.mxu0 %v1333
    %1785 = vmatpush1.msra.mxu0 %v1332
    %1786 = vmatprep.subr.mxu0 %v1335
    %1787 = vmatpush1.msra.mxu0 %v1334
    %1788 = vmatprep.subr.mxu0 %v1337
    %1789 = vmatpush1.msra.mxu0 %v1336
    %1790 = vmatprep.subr.mxu0 %v1339
    %1791 = vmatpush1.msra.mxu0 %v1338
    %1792 = vmatprep.subr.mxu0 %v1341
    %1793 = vmatpush1.msra.mxu0 %v1340
    %1794 = vmatprep.subr.mxu0 %v1343
    %1795 = vmatpush1.msra.mxu0 %v1342
    %1796 = vmatprep.subr.mxu0 %v1345
    %1797 = vmatpush1.msra.mxu0 %v1344
    %1798 = vmatprep.subr.mxu0 %v1347
    %1799 = vmatpush1.msra.mxu0 %v1346
    %1800 = vmatprep.subr.mxu0 %v1349
    %1801 = vmatpush1.msra.mxu0 %v1348
    %1802 = vmatprep.subr.mxu0 %v1351
    %1803 = vmatpush1.msra.mxu0 %v1350
    %1804 = vmatprep.subr.mxu0 %v1353
    %1805 = vmatpush1.msra.mxu0 %v1352
    %1806 = vmatprep.subr.mxu0 %v1355
    %1807 = vmatpush1.msra.mxu0 %v1354
    %1808 = vmatprep.subr.mxu0 %v1357
    %1809 = vmatpush1.msra.mxu0 %v1356
    %1810 = vmatprep.subr.mxu0 %v1359
    %1811 = vmatpush1.msra.mxu0 %v1358
    %1812 = vmatprep.subr.mxu0 %v1361
    %1813 = vmatpush1.msra.mxu0 %v1360
    %1814 = vmatprep.subr.mxu0 %v1363
    %1815 = vmatpush1.msra.mxu0 %v1362
    %1816 = vmatprep.subr.mxu0 %v1365
    %1817 = vmatpush1.msra.mxu0 %v1364
    %1818 = vmatprep.subr.mxu0 %v1367
    %1819 = vmatpush1.msra.mxu0 %v1366
    %1820 = vmatprep.subr.mxu0 %v1369
    %1821 = vmatpush1.msra.mxu0 %v1368
    %1822 = vmatprep.subr.mxu0 %v1371
    %1823 = vmatpush1.msra.mxu0 %v1370
    %1824 = vmatprep.subr.mxu0 %v1373
    %1825 = vmatpush1.msra.mxu0 %v1372
    %1826 = vmatprep.mubr.f32.mxu0 %v1597
    %1827 = vmatmul.mubr.f32.gmra.mrb[0].mxu0 %v1596
    %v1828 = vpop.f32.mrb[0].mxu0
    %v1829 = vadd.f32 %v1752, %v1828
    %v1830 = vpop.f32.mrb[0].mxu0
    %v1831 = vadd.f32 %v1754, %v1830
    %1832 = vmatprep.mubr.f32.mxu0 %v1605
    %1833 = vmatmul.mubr.f32.gmra.mrb[0].mxu0 %v1604
    %v1834 = vpop.f32.mrb[0].mxu0
    %v1835 = vadd.f32 %v1758, %v1834
    %v1836 = vpop.f32.mrb[0].mxu0
    %v1837 = vadd.f32 %v1760, %v1836
    %1838 = vdwg.mxu0
    %1839 = vmatprep.subr.mxu0 %v1375
    %1840 = vmatpush1.msra.mxu0 %v1374
    %1841 = vmatprep.subr.mxu0 %v1377
    %1842 = vmatpush1.msra.mxu0 %v1376
    %1843 = vmatprep.subr.mxu0 %v1379
    %1844 = vmatpush1.msra.mxu0 %v1378
    %1845 = vmatprep.subr.mxu0 %v1381
    %1846 = vmatpush1.msra.mxu0 %v1380
    %1847 = vmatprep.subr.mxu0 %v1383
    %1848 = vmatpush1.msra.mxu0 %v1382
    %1849 = vmatprep.subr.mxu0 %v1385
    %1850 = vmatpush1.msra.mxu0 %v1384
    %1851 = vmatprep.subr.mxu0 %v1387
    %1852 = vmatpush1.msra.mxu0 %v1386
    %1853 = vmatprep.subr.mxu0 %v1389
    %1854 = vmatpush1.msra.mxu0 %v1388
    %1855 = vmatprep.subr.mxu0 %v1391
    %1856 = vmatpush1.msra.mxu0 %v1390
    %1857 = vmatprep.subr.mxu0 %v1393
    %1858 = vmatpush1.msra.mxu0 %v1392
    %1859 = vmatprep.subr.mxu0 %v1395
    %1860 = vmatpush1.msra.mxu0 %v1394
    %1861 = vmatprep.subr.mxu0 %v1397
    %1862 = vmatpush1.msra.mxu0 %v1396
    %1863 = vmatprep.subr.mxu0 %v1399
    %1864 = vmatpush1.msra.mxu0 %v1398
    %1865 = vmatprep.subr.mxu0 %v1401
    %1866 = vmatpush1.msra.mxu0 %v1400
    %1867 = vmatprep.subr.mxu0 %v1403
    %1868 = vmatpush1.msra.mxu0 %v1402
    %1869 = vmatprep.subr.mxu0 %v1405
    %1870 = vmatpush1.msra.mxu0 %v1404
    %1871 = vmatprep.subr.mxu0 %v1407
    %1872 = vmatpush1.msra.mxu0 %v1406
    %1873 = vmatprep.subr.mxu0 %v1409
    %1874 = vmatpush1.msra.mxu0 %v1408
    %1875 = vmatprep.subr.mxu0 %v1411
    %1876 = vmatpush1.msra.mxu0 %v1410
    %1877 = vmatprep.subr.mxu0 %v1413
    %1878 = vmatpush1.msra.mxu0 %v1412
    %1879 = vmatprep.subr.mxu0 %v1415
    %1880 = vmatpush1.msra.mxu0 %v1414
    %1881 = vmatprep.subr.mxu0 %v1417
    %1882 = vmatpush1.msra.mxu0 %v1416
    %1883 = vmatprep.subr.mxu0 %v1419
    %1884 = vmatpush1.msra.mxu0 %v1418
    %1885 = vmatprep.subr.mxu0 %v1421
    %1886 = vmatpush1.msra.mxu0 %v1420
    %1887 = vmatprep.subr.mxu0 %v1423
    %1888 = vmatpush1.msra.mxu0 %v1422
    %1889 = vmatprep.subr.mxu0 %v1425
    %1890 = vmatpush1.msra.mxu0 %v1424
    %1891 = vmatprep.subr.mxu0 %v1427
    %1892 = vmatpush1.msra.mxu0 %v1426
    %1893 = vmatprep.subr.mxu0 %v1429
    %1894 = vmatpush1.msra.mxu0 %v1428
    %1895 = vmatprep.subr.mxu0 %v1431
    %1896 = vmatpush1.msra.mxu0 %v1430
    %1897 = vmatprep.subr.mxu0 %v1433
    %1898 = vmatpush1.msra.mxu0 %v1432
    %1899 = vmatprep.subr.mxu0 %v1435
    %1900 = vmatpush1.msra.mxu0 %v1434
    %1901 = vmatprep.subr.mxu0 %v1437
    %1902 = vmatpush1.msra.mxu0 %v1436
    %1903 = vmatprep.mubr.f32.mxu0 %v1599
    %1904 = vmatmul.mubr.f32.gmra.mrb[0].mxu0 %v1598
    %v1905 = vpop.f32.mrb[0].mxu0
    %v1906 = vadd.f32 %v1829, %v1905
    %v1907 = vpop.f32.mrb[0].mxu0
    %v1908 = vadd.f32 %v1831, %v1907
    %1909 = vmatprep.mubr.f32.mxu0 %v1607
    %1910 = vmatmul.mubr.f32.gmra.mrb[0].mxu0 %v1606
    %v1911 = vpop.f32.mrb[0].mxu0
    %v1912 = vadd.f32 %v1835, %v1911
    %v1913 = vpop.f32.mrb[0].mxu0
    %v1914 = vadd.f32 %v1837, %v1913
    %1915 = vdwg.mxu0
    %v1916 = vadd.f32 %v1582, %v1906
    %v1917 = vadd.f32 %v1584, %v1908
    %v1918 = vadd.f32 %v1588, %v1912
    %v1919 = vadd.f32 %v1590, %v1914
    %v1920 = vld [vmem:[%s12] sm:$0x3]
    %v1922 = vlaneseq
    %v1923 = vshrl.u32 %v1922, 7
    %v1924 = vsub.s32 0, %v1923
    %v1925 = vrot.slane %v1920, %v1924
    %v1926 = vlaneseq
    %v1927 = vshrl.u32 %v1926, 7
    %v1928 = vsub.s32 1, %v1927
    %v1929 = vrot.slane %v1920, %v1928
    %v1932 = vadd.f32 %v1916, %v1925
    %v1933 = vadd.f32 %v1917, %v1929
    %v1934 = vadd.f32 %v1918, %v1925
    %v1935 = vadd.f32 %v1919, %v1929
    %v1936 = vmax.f32 %v1932, 0.0
    %v1937 = vmax.f32 %v1933, 0.0
    %v1938 = vmax.f32 %v1934, 0.0
    %v1939 = vmax.f32 %v1935, 0.0
    %v1940 = vld [vmem:[%s13] sm:$0xff]
    %v1941 = vld [vmem:[%s13 + $0x8] sm:$0xff]
    %v1942 = vld [vmem:[%s13 + $0x10] sm:$0xff]
    %v1943 = vld [vmem:[%s13 + $0x18] sm:$0xff]
    %v1944 = vld [vmem:[%s13 + $0x20] sm:$0xff]
    %v1945 = vld [vmem:[%s13 + $0x28] sm:$0xff]
    %v1946 = vld [vmem:[%s13 + $0x30] sm:$0xff]
    %v1947 = vld [vmem:[%s13 + $0x38] sm:$0xff]
    %v1948 = vld [vmem:[%s13 + $0x40] sm:$0xff]
    %v1949 = vld [vmem:[%s13 + $0x48] sm:$0xff]
    %v1950 = vld [vmem:[%s13 + $0x50] sm:$0xff]
    %v1951 = vld [vmem:[%s13 + $0x58] sm:$0xff]
    %v1952 = vld [vmem:[%s13 + $0x60] sm:$0xff]
    %v1953 = vld [vmem:[%s13 + $0x68] sm:$0xff]
    %v1954 = vld [vmem:[%s13 + $0x70] sm:$0xff]
    %v1955 = vld [vmem:[%s13 + $0x78] sm:$0xff]
    %v1956 = vld [vmem:[%s13 + $0x80] sm:$0xff]
    %v1957 = vld [vmem:[%s13 + $0x88] sm:$0xff]
    %v1958 = vld [vmem:[%s13 + $0x90] sm:$0xff]
    %v1959 = vld [vmem:[%s13 + $0x98] sm:$0xff]
    %v1960 = vld [vmem:[%s13 + $0xa0] sm:$0xff]
    %v1961 = vld [vmem:[%s13 + $0xa8] sm:$0xff]
    %v1962 = vld [vmem:[%s13 + $0xb0] sm:$0xff]
    %v1963 = vld [vmem:[%s13 + $0xb8] sm:$0xff]
    %v1964 = vld [vmem:[%s13 + $0xc0] sm:$0xff]
    %v1965 = vld [vmem:[%s13 + $0xc8] sm:$0xff]
    %v1966 = vld [vmem:[%s13 + $0xd0] sm:$0xff]
    %v1967 = vld [vmem:[%s13 + $0xd8] sm:$0xff]
    %v1968 = vld [vmem:[%s13 + $0xe0] sm:$0xff]
    %v1969 = vld [vmem:[%s13 + $0xe8] sm:$0xff]
    %v1970 = vld [vmem:[%s13 + $0xf0] sm:$0xff]
    %v1971 = vld [vmem:[%s13 + $0xf8] sm:$0xff]
    %v1972 = vld [vmem:[%s14] sm:$0x1]
    %v1974 = vlaneseq
    %v1975 = vshrl.u32 %v1974, 7
    %v1976 = vsub.s32 0, %v1975
    %v1977 = vrot.slane %v1972, %v1976
    %1979 = vmatprep.subr.mxu0 0.0
    %1980 = vmatpush1.msra.mxu0 %v1940
    %1981 = vmatprep.subr.mxu0 0.0
    %1982 = vmatpush1.msra.mxu0 %v1941
    %1983 = vmatprep.subr.mxu0 0.0
    %1984 = vmatpush1.msra.mxu0 %v1942
    %1985 = vmatprep.subr.mxu0 0.0
    %1986 = vmatpush1.msra.mxu0 %v1943
    %1987 = vmatprep.subr.mxu0 0.0
    %1988 = vmatpush1.msra.mxu0 %v1944
    %1989 = vmatprep.subr.mxu0 0.0
    %1990 = vmatpush1.msra.mxu0 %v1945
    %1991 = vmatprep.subr.mxu0 0.0
    %1992 = vmatpush1.msra.mxu0 %v1946
    %1993 = vmatprep.subr.mxu0 0.0
    %1994 = vmatpush1.msra.mxu0 %v1947
    %1995 = vmatprep.subr.mxu0 0.0
    %1996 = vmatpush1.msra.mxu0 %v1948
    %1997 = vmatprep.subr.mxu0 0.0
    %1998 = vmatpush1.msra.mxu0 %v1949
    %1999 = vmatprep.subr.mxu0 0.0
    %2000 = vmatpush1.msra.mxu0 %v1950
    %2001 = vmatprep.subr.mxu0 0.0
    %2002 = vmatpush1.msra.mxu0 %v1951
    %2003 = vmatprep.subr.mxu0 0.0
    %2004 = vmatpush1.msra.mxu0 %v1952
    %2005 = vmatprep.subr.mxu0 0.0
    %2006 = vmatpush1.msra.mxu0 %v1953
    %2007 = vmatprep.subr.mxu0 0.0
    %2008 = vmatpush1.msra.mxu0 %v1954
    %2009 = vmatprep.subr.mxu0 0.0
    %2010 = vmatpush1.msra.mxu0 %v1955
    %2011 = vmatprep.subr.mxu0 0.0
    %2012 = vmatpush1.msra.mxu0 %v1956
    %2013 = vmatprep.subr.mxu0 0.0
    %2014 = vmatpush1.msra.mxu0 %v1957
    %2015 = vmatprep.subr.mxu0 0.0
    %2016 = vmatpush1.msra.mxu0 %v1958
    %2017 = vmatprep.subr.mxu0 0.0
    %2018 = vmatpush1.msra.mxu0 %v1959
    %2019 = vmatprep.subr.mxu0 0.0
    %2020 = vmatpush1.msra.mxu0 %v1960
    %2021 = vmatprep.subr.mxu0 0.0
    %2022 = vmatpush1.msra.mxu0 %v1961
    %2023 = vmatprep.subr.mxu0 0.0
    %2024 = vmatpush1.msra.mxu0 %v1962
    %2025 = vmatprep.subr.mxu0 0.0
    %2026 = vmatpush1.msra.mxu0 %v1963
    %2027 = vmatprep.subr.mxu0 0.0
    %2028 = vmatpush1.msra.mxu0 %v1964
    %2029 = vmatprep.subr.mxu0 0.0
    %2030 = vmatpush1.msra.mxu0 %v1965
    %2031 = vmatprep.subr.mxu0 0.0
    %2032 = vmatpush1.msra.mxu0 %v1966
    %2033 = vmatprep.subr.mxu0 0.0
    %2034 = vmatpush1.msra.mxu0 %v1967
    %2035 = vmatprep.subr.mxu0 0.0
    %2036 = vmatpush1.msra.mxu0 %v1968
    %2037 = vmatprep.subr.mxu0 0.0
    %2038 = vmatpush1.msra.mxu0 %v1969
    %2039 = vmatprep.subr.mxu0 0.0
    %2040 = vmatpush1.msra.mxu0 %v1970
    %2041 = vmatprep.subr.mxu0 0.0
    %2042 = vmatpush1.msra.mxu0 %v1971
    %2043 = vmatprep.mubr.f32.mxu0 %v1937
    %2044 = vmatmul.mubr.f32.gmra.mrb[0].mxu0 %v1936
    %v2045 = vpop.f32.mrb[0].mxu0
    %v2046 = vadd.f32 %v1977, %v2045
    %v2047 = vpop.f32.mrb[0].mxu0
    %2048 = vmatprep.mubr.f32.mxu0 %v1939
    %2049 = vmatmul.mubr.f32.gmra.mrb[0].mxu0 %v1938
    %v2050 = vpop.f32.mrb[0].mxu0
    %v2051 = vadd.f32 %v1977, %v2050
    %v2052 = vpop.f32.mrb[0].mxu0
    %2053 = vdwg.mxu0
    %v2054 = vmax.f32 %v2046, 0.0
    %v2055 = vmax.f32 %v2051, 0.0
    %v2056 = vld [vmem:[%s15] sm:$0xff]
    %v2057 = vld [vmem:[%s15 + $0x8] sm:$0xff]
    %v2058 = vld [vmem:[%s15 + $0x10] sm:$0xff]
    %v2059 = vld [vmem:[%s15 + $0x18] sm:$0xff]
    %v2060 = vld [vmem:[%s15 + $0x20] sm:$0xff]
    %v2061 = vld [vmem:[%s15 + $0x28] sm:$0xff]
    %v2062 = vld [vmem:[%s15 + $0x30] sm:$0xff]
    %v2063 = vld [vmem:[%s15 + $0x38] sm:$0xff]
    %v2064 = vld [vmem:[%s15 + $0x40] sm:$0xff]
    %v2065 = vld [vmem:[%s15 + $0x48] sm:$0xff]
    %v2066 = vld [vmem:[%s15 + $0x50] sm:$0xff]
    %v2067 = vld [vmem:[%s15 + $0x58] sm:$0xff]
    %v2068 = vld [vmem:[%s15 + $0x60] sm:$0xff]
    %v2069 = vld [vmem:[%s15 + $0x68] sm:$0xff]
    %v2070 = vld [vmem:[%s15 + $0x70] sm:$0xff]
    %v2071 = vld [vmem:[%s15 + $0x78] sm:$0xff]
    %v2072 = vld [vmem:[%s16] sm:$0x1]
    %v2074 = vlaneseq
    %v2075 = vshrl.u32 %v2074, 7
    %v2076 = vsub.s32 0, %v2075
    %v2077 = vrot.slane %v2072, %v2076
    %2079 = vmatprep.subr.mxu0 0.0
    %2080 = vmatpush1.msra.mxu0 %v2056
    %2081 = vmatprep.subr.mxu0 0.0
    %2082 = vmatpush1.msra.mxu0 %v2057
    %2083 = vmatprep.subr.mxu0 0.0
    %2084 = vmatpush1.msra.mxu0 %v2058
    %2085 = vmatprep.subr.mxu0 0.0
    %2086 = vmatpush1.msra.mxu0 %v2059
    %2087 = vmatprep.subr.mxu0 0.0
    %2088 = vmatpush1.msra.mxu0 %v2060
    %2089 = vmatprep.subr.mxu0 0.0
    %2090 = vmatpush1.msra.mxu0 %v2061
    %2091 = vmatprep.subr.mxu0 0.0
    %2092 = vmatpush1.msra.mxu0 %v2062
    %2093 = vmatprep.subr.mxu0 0.0
    %2094 = vmatpush1.msra.mxu0 %v2063
    %2095 = vmatprep.subr.mxu0 0.0
    %2096 = vmatpush1.msra.mxu0 %v2064
    %2097 = vmatprep.subr.mxu0 0.0
    %2098 = vmatpush1.msra.mxu0 %v2065
    %2099 = vmatprep.subr.mxu0 0.0
    %2100 = vmatpush1.msra.mxu0 %v2066
    %2101 = vmatprep.subr.mxu0 0.0
    %2102 = vmatpush1.msra.mxu0 %v2067
    %2103 = vmatprep.subr.mxu0 0.0
    %2104 = vmatpush1.msra.mxu0 %v2068
    %2105 = vmatprep.subr.mxu0 0.0
    %2106 = vmatpush1.msra.mxu0 %v2069
    %2107 = vmatprep.subr.mxu0 0.0
    %2108 = vmatpush1.msra.mxu0 %v2070
    %2109 = vmatprep.subr.mxu0 0.0
    %2110 = vmatpush1.msra.mxu0 %v2071
    %2111 = vmatprep.subr.mxu0 0.0
    %2112 = vmatpush1.msra.mxu0 0.0
    %2113 = vmatprep.subr.mxu0 0.0
    %2114 = vmatpush1.msra.mxu0 0.0
    %2115 = vmatprep.subr.mxu0 0.0
    %2116 = vmatpush1.msra.mxu0 0.0
    %2117 = vmatprep.subr.mxu0 0.0
    %2118 = vmatpush1.msra.mxu0 0.0
    %2119 = vmatprep.subr.mxu0 0.0
    %2120 = vmatpush1.msra.mxu0 0.0
    %2121 = vmatprep.subr.mxu0 0.0
    %2122 = vmatpush1.msra.mxu0 0.0
    %2123 = vmatprep.subr.mxu0 0.0
    %2124 = vmatpush1.msra.mxu0 0.0
    %2125 = vmatprep.subr.mxu0 0.0
    %2126 = vmatpush1.msra.mxu0 0.0
    %2127 = vmatprep.subr.mxu0 0.0
    %2128 = vmatpush1.msra.mxu0 0.0
    %2129 = vmatprep.subr.mxu0 0.0
    %2130 = vmatpush1.msra.mxu0 0.0
    %2131 = vmatprep.subr.mxu0 0.0
    %2132 = vmatpush1.msra.mxu0 0.0
    %2133 = vmatprep.subr.mxu0 0.0
    %2134 = vmatpush1.msra.mxu0 0.0
    %2135 = vmatprep.subr.mxu0 0.0
    %2136 = vmatpush1.msra.mxu0 0.0
    %2137 = vmatprep.subr.mxu0 0.0
    %2138 = vmatpush1.msra.mxu0 0.0
    %2139 = vmatprep.subr.mxu0 0.0
    %2140 = vmatpush1.msra.mxu0 0.0
    %2141 = vmatprep.subr.mxu0 0.0
    %2142 = vmatpush1.msra.mxu0 0.0
    %2143 = vmatprep.mubr.f32.mxu0 0.0
    %2144 = vmatmul.mubr.f32.gmra.mrb[0].mxu0 %v2054
    %v2145 = vpop.f32.mrb[0].mxu0
    %v2146 = vadd.f32 %v2077, %v2145
    %v2147 = vpop.f32.mrb[0].mxu0
    %2148 = vmatprep.mubr.f32.mxu0 0.0
    %2149 = vmatmul.mubr.f32.gmra.mrb[0].mxu0 %v2055
    %v2150 = vpop.f32.mrb[0].mxu0
    %v2151 = vadd.f32 %v2077, %v2150
    %v2152 = vpop.f32.mrb[0].mxu0
    %2153 = vdwg.mxu0
    %vm2154 = vcmask 15360
    %2155 = vst.msk [vmem:[%s17] sm:$0xff] %vm2154, %v2146
    %2156 = vst.msk [vmem:[%s17 + $0x8] sm:$0xff] %vm2154, %v2151
    // Predicated region
    $region78: #{mvsoppis_forward.7} parent=1 // pred_check
      _
    $region79: #{mvsoppis_forward.7} parent=1 // pred_check_branch
      %2158 = sbr.rel (0) target = $region81
    $region80: #{mvsoppis_forward.7} parent=1 // pred_region
      _
    $region81: #{mvsoppis_forward.7} parent=1 // pred_fallthru
      _
    // Predicated region
    $region82: #{mvsoppis_forward.7} parent=1 // pred_check
      _
    $region83: #{mvsoppis_forward.7} parent=1 // pred_check_branch
      %2160 = sbr.rel (0) target = $region85
    $region84: #{mvsoppis_forward.7} parent=1 // pred_region
      _
    $region85: #{mvsoppis_forward.7} parent=1 // pred_fallthru
      _
    %2161 = vsyncpa [#allocation3], 1
    %2162 = vsyncpa [#allocation5], 1

</llo_original>
